<compile_context>
chip_gen: v5e
topology: v5e:2x2
jax: 0.10.0
libtpu: 0.0.40
codegen_flags: <defaults>
</compile_context>

<pallas_src>
import math

import jax
import jax.numpy as jnp
from jax.experimental import pallas as pl
from jax.experimental.pallas import tpu as pltpu


# ----------------------------------------------------------------------------- utils
def _round_up(x, m):
    return ((x + m - 1) // m) * m


def xavier(key, shape):
    fan_in, fan_out = shape[0], shape[1]
    lim = math.sqrt(6.0 / (fan_in + fan_out))
    return jax.random.uniform(key, shape, jnp.float32, -lim, lim)


# ------------------------------------------------------------ kernel 1: pos-embedding add
def _pos_add_kernel(x_ref, pe_ref, o_ref):
    o_ref[...] = x_ref[...] + pe_ref[...]


def add_pos_embedding(x, pe):
    """x: (B, C, H, W); pe: (C, H, W).  Returns x + pe broadcast over batch."""
    B = x.shape[0]
    n = int(pe.size)
    lane = 128
    R = _round_up(n, lane) // lane
    TR = min(_round_up(R, 8), 2048)
    Rp = _round_up(R, TR)
    n_pad = Rp * lane
    xf = jnp.pad(x.reshape(B, n), ((0, 0), (0, n_pad - n))).reshape(B, Rp, lane)
    pef = jnp.pad(pe.reshape(1, n), ((0, 0), (0, n_pad - n))).reshape(1, Rp, lane)

    out = pl.pallas_call(
        _pos_add_kernel,
        out_shape=jax.ShapeDtypeStruct((B, Rp, lane), x.dtype),
        grid=(Rp // TR, B),                                    # batch innermost -> PE tile resident
        in_specs=[
            pl.BlockSpec((1, TR, lane), lambda t, b: (b, t, 0)),
            pl.BlockSpec((1, TR, lane), lambda t, b: (0, t, 0)),
        ],
        out_specs=pl.BlockSpec((1, TR, lane), lambda t, b: (b, t, 0)),
        compiler_params=pltpu.CompilerParams(
            dimension_semantics=("parallel", "arbitrary")),
    )(xf, pef)
    return out.reshape(B, n_pad)[:, :n].reshape(x.shape)


# ------------------------------------------------------------ kernel 2: matmul (K-tiled, bf16, bias/ReLU fused)
def _make_matmul_kernel(relu):
    def kernel(a_ref, b_ref, bias_ref, o_ref, acc_ref):
        @pl.when(pl.program_id(2) == 0)
        def _():
            acc_ref[...] = jnp.zeros_like(acc_ref)

        acc_ref[...] += jnp.dot(a_ref[...], b_ref[...],
                                preferred_element_type=jnp.float32)

        @pl.when(pl.program_id(2) == pl.num_programs(2) - 1)
        def _():
            y = acc_ref[...] + bias_ref[...]
            if relu:
                y = jnp.maximum(y, 0.0)
            o_ref[...] = y.astype(o_ref.dtype)
    return kernel


def matmul(a, b, bias=None, relu=False):
    """a: (M, K) f32, b: (K, N) f32, bias: (N,) or None -> (M, N) f32 (bf16 MXU inputs)."""
    M, K = a.shape
    N = b.shape[1]
    if bias is None:
        bias = jnp.zeros((N,), jnp.float32)
    tm = min(_round_up(M, 8), 256)
    tn = min(_round_up(N, 128), 256)
    tk = min(_round_up(K, 128), 512)
    Mp, Np, Kp = _round_up(M, tm), _round_up(N, tn), _round_up(K, tk)
    a_p = jnp.pad(a, ((0, Mp - M), (0, Kp - K))).astype(jnp.bfloat16)
    b_p = jnp.pad(b, ((0, Kp - K), (0, Np - N))).astype(jnp.bfloat16)
    bias_p = jnp.pad(bias.astype(jnp.float32), (0, Np - N)).reshape(1, Np)

    out = pl.pallas_call(
        _make_matmul_kernel(relu),
        out_shape=jax.ShapeDtypeStruct((Mp, Np), jnp.float32),
        grid=(Mp // tm, Np // tn, Kp // tk),                   # reduction axis last
        in_specs=[
            pl.BlockSpec((tm, tk), lambda i, j, k: (i, k)),
            pl.BlockSpec((tk, tn), lambda i, j, k: (k, j)),    # weight resident across i when N,K fit
            pl.BlockSpec((1, tn), lambda i, j, k: (0, j)),
        ],
        out_specs=pl.BlockSpec((tm, tn), lambda i, j, k: (i, j)),
        scratch_shapes=[pltpu.VMEM((tm, tn), jnp.float32)],
        compiler_params=pltpu.CompilerParams(
            dimension_semantics=("parallel", "parallel", "arbitrary")),
    )(a_p, b_p, bias_p)
    return out[:M, :N]


# ------------------------------------------------------------ kernel 3: packed-head attention
def _make_mha_kernel(heads, dh, scale):
    def kernel(q_ref, k_ref, v_ref, o_ref):
        q = q_ref[0]                                           # (Nq, heads*dh)
        k = k_ref[0]                                           # (Nk, heads*dh)
        v = v_ref[0]
        outs = []
        for h in range(heads):                                 # static per-head lane slices
            sl = slice(h * dh, (h + 1) * dh)
            s = jnp.dot(q[:, sl], k[:, sl].T,
                        preferred_element_type=jnp.float32) * scale
            s = s - jnp.max(s, axis=-1, keepdims=True)
            p = jnp.exp(s)
            p = p * pl.reciprocal(jnp.sum(p, axis=-1, keepdims=True), approx=True)
            outs.append(jnp.dot(p.astype(v.dtype), v[:, sl],
                                preferred_element_type=jnp.float32))
        o_ref[0] = jnp.concatenate(outs, axis=-1).astype(o_ref.dtype)
    return kernel


def sdpa(q, k, v, heads, scale):
    """q: (B, Nq, A), k/v: (B, Nk, A), heads packed along lanes -> (B, Nq, A) f32."""
    # TODO(synk): unblocked softmax over full Nk per step; add KV-tiled online softmax
    #             before scaling sequence length (v7x 64 MiB VMEM).
    B, Nq, A = q.shape
    Nk = k.shape[1]
    dh = A // heads
    qb, kb, vb = (t.astype(jnp.bfloat16) for t in (q, k, v))
    return pl.pallas_call(
        _make_mha_kernel(heads, dh, float(scale)),
        out_shape=jax.ShapeDtypeStruct((B, Nq, A), jnp.float32),
        grid=(B,),
        in_specs=[
            pl.BlockSpec((1, Nq, A), lambda i: (i, 0, 0)),
            pl.BlockSpec((1, Nk, A), lambda i: (i, 0, 0)),
            pl.BlockSpec((1, Nk, A), lambda i: (i, 0, 0)),
        ],
        out_specs=pl.BlockSpec((1, Nq, A), lambda i: (i, 0, 0)),
        compiler_params=pltpu.CompilerParams(dimension_semantics=("parallel",)),
    )(qb, kb, vb)


# ------------------------------------------------------------ kernel 4: (residual +) layernorm
def _make_ln_kernel(has_res):
    def kernel(*refs):
        if has_res:
            x_ref, r_ref, g_ref, b_ref, o_ref = refs
        else:
            x_ref, g_ref, b_ref, o_ref = refs
        x = x_ref[...].astype(jnp.float32)
        if has_res:
            x = x + r_ref[...].astype(jnp.float32)
        mu = jnp.mean(x, axis=-1, keepdims=True)
        xc = x - mu
        var = jnp.mean(xc * xc, axis=-1, keepdims=True)
        inv = jax.lax.rsqrt(var + 1e-5)
        o_ref[...] = (xc * inv * g_ref[...] + b_ref[...]).astype(o_ref.dtype)
    return kernel


def layernorm(x, gamma, beta, residual=None):
    """LayerNorm(x (+ residual)) over the last axis, fused residual add."""
    shp = x.shape
    D = shp[-1]
    xf = x.reshape(-1, D)
    M = xf.shape[0]
    tm = min(_round_up(M, 8), 512)
    Mp = _round_up(M, tm)
    args = [jnp.pad(xf, ((0, Mp - M), (0, 0)))]
    in_specs = [pl.BlockSpec((tm, D), lambda i: (i, 0))]
    if residual is not None:
        args.append(jnp.pad(residual.reshape(-1, D), ((0, Mp - M), (0, 0))))
        in_specs.append(pl.BlockSpec((tm, D), lambda i: (i, 0)))
    args += [gamma.reshape(1, D), beta.reshape(1, D)]
    in_specs += [pl.BlockSpec((1, D), lambda i: (0, 0)),
                 pl.BlockSpec((1, D), lambda i: (0, 0))]
    out = pl.pallas_call(
        _make_ln_kernel(residual is not None),
        out_shape=jax.ShapeDtypeStruct((Mp, D), x.dtype),
        grid=(Mp // tm,),
        in_specs=in_specs,
        out_specs=pl.BlockSpec((tm, D), lambda i: (i, 0)),
        compiler_params=pltpu.CompilerParams(dimension_semantics=("parallel",)),
    )(*args)
    return out[:M].reshape(shp)


# ------------------------------------------------------------ kernel 5: elementwise add (outer residuals)
def _add_kernel(a_ref, b_ref, o_ref):
    o_ref[...] = a_ref[...] + b_ref[...]


def ew_add(a, b):
    shp = a.shape
    n = int(a.size)
    lane = 128
    R = _round_up(n, lane) // lane
    TR = min(_round_up(R, 8), 2048)
    Rp = _round_up(R, TR)
    n_pad = Rp * lane
    af = jnp.pad(a.reshape(-1), (0, n_pad - n)).reshape(Rp, lane)
    bf = jnp.pad(b.reshape(-1), (0, n_pad - n)).reshape(Rp, lane)
    out = pl.pallas_call(
        _add_kernel,
        out_shape=jax.ShapeDtypeStruct((Rp, lane), a.dtype),
        grid=(Rp // TR,),
        in_specs=[pl.BlockSpec((TR, lane), lambda i: (i, 0)),
                  pl.BlockSpec((TR, lane), lambda i: (i, 0))],
        out_specs=pl.BlockSpec((TR, lane), lambda i: (i, 0)),
        compiler_params=pltpu.CompilerParams(dimension_semantics=("parallel",)),
    )(af, bf)
    return out.reshape(-1)[:n].reshape(shp)


# ------------------------------------------------------------ kernel 6: fused cosine-sim + add + Conv1 (1x1)
def _cos_add_conv_kernel(x1_ref, x2_ref, wt_ref, b_ref, o_ref):
    x1 = x1_ref[0].astype(jnp.float32)                         # (c, L)
    x2 = x2_ref[0].astype(jnp.float32)
    dot = jnp.sum(x1 * x2, axis=0, keepdims=True)
    n1 = jnp.sqrt(jnp.sum(x1 * x1, axis=0, keepdims=True))
    n2 = jnp.sqrt(jnp.sum(x2 * x2, axis=0, keepdims=True))
    sam = dot / (jnp.maximum(n1, 1e-8) * jnp.maximum(n2, 1e-8))   # (1, L)
    xc = jnp.concatenate([x1 + sam, x2 + sam], axis=0)            # (2c, L)
    y = jnp.dot(wt_ref[...], xc.astype(wt_ref.dtype),
                preferred_element_type=jnp.float32)               # (c, L)
    o_ref[0] = (y + b_ref[...]).astype(o_ref.dtype)


def cos_add_conv1(x1, x2, w, b):
    """Conv1( cat([x1, x2], ch) + cos(x1, x2)[:,None] ).  x1/x2: (B, c, L); w: (2c, c)."""
    B, c, L = x1.shape
    wt = w.T.astype(jnp.bfloat16)                              # (c, 2c)
    bias = b.reshape(c, 1)
    return pl.pallas_call(
        _cos_add_conv_kernel,
        out_shape=jax.ShapeDtypeStruct((B, c, L), x1.dtype),
        grid=(B,),
        in_specs=[pl.BlockSpec((1, c, L), lambda i: (i, 0, 0)),
                  pl.BlockSpec((1, c, L), lambda i: (i, 0, 0)),
                  pl.BlockSpec((c, 2 * c), lambda i: (0, 0)),
                  pl.BlockSpec((c, 1), lambda i: (0, 0))],
        out_specs=pl.BlockSpec((1, c, L), lambda i: (i, 0, 0)),
        compiler_params=pltpu.CompilerParams(dimension_semantics=("parallel",)),
    )(x1, x2, wt, bias)


# ------------------------------------------------------------ kernel 7: 1x1 conv on NCHW (+ bias/ReLU/residual)
def _make_convnchw_kernel(relu, has_res):
    def kernel(*refs):
        if has_res:
            x_ref, wt_ref, b_ref, r_ref, o_ref = refs
        else:
            x_ref, wt_ref, b_ref, o_ref = refs
        x = x_ref[0]                                           # (Cin, L)
        y = jnp.dot(wt_ref[...], x.astype(wt_ref.dtype),
                    preferred_element_type=jnp.float32)
        y = y + b_ref[...]
        if has_res:
            y = y + r_ref[0].astype(jnp.float32)
        if relu:
            y = jnp.maximum(y, 0.0)
        o_ref[0] = y.astype(o_ref.dtype)
    return kernel


def conv1x1_nchw(x, w, b, relu=False, residual=None):
    """x: (B, Cin, L); w: (Cin, Cout); b: (Cout,) -> (B, Cout, L).  Weight-stationary dot."""
    B, Cin, L = x.shape
    Cout = w.shape[1]
    wt = w.T.astype(jnp.bfloat16)
    bias = (b if b is not None else jnp.zeros((Cout,), jnp.float32)).reshape(Cout, 1)
    args = [x, wt, bias]
    in_specs = [pl.BlockSpec((1, Cin, L), lambda i: (i, 0, 0)),
                pl.BlockSpec((Cout, Cin), lambda i: (0, 0)),
                pl.BlockSpec((Cout, 1), lambda i: (0, 0))]
    if residual is not None:
        args.append(residual)
        in_specs.append(pl.BlockSpec((1, Cout, L), lambda i: (i, 0, 0)))
    return pl.pallas_call(
        _make_convnchw_kernel(relu, residual is not None),
        out_shape=jax.ShapeDtypeStruct((B, Cout, L), x.dtype),
        grid=(B,),
        in_specs=in_specs,
        out_specs=pl.BlockSpec((1, Cout, L), lambda i: (i, 0, 0)),
        compiler_params=pltpu.CompilerParams(dimension_semantics=("parallel",)),
    )(*args)


def conv3x3_nchw(x, w, b, hw, relu=False):
    """3x3 conv, stride 1, pad 1; x: (B, Cin, L=H*W); w: (Cin*9, Cout)."""
    # TODO(synk): im2col materializes 9x the activation in HBM; fold the 9 taps into a
    #             K-grid reduction with shifted index_maps for production image sizes.
    B, Cin, L = x.shape
    H, W = hw
    xs = x.reshape(B, Cin, H, W)
    xp = jnp.pad(xs, ((0, 0), (0, 0), (1, 1), (1, 1)))
    patches = [xp[:, :, dy:dy + H, dx:dx + W] for dy in range(3) for dx in range(3)]
    col = jnp.concatenate(patches, axis=1).reshape(B, Cin * 9, L)
    return conv1x1_nchw(col, w, b, relu=relu)


# ----------------------------------------------------------------------------- layers
def _fold_bn(w, b, bn):
    # BatchNorm is inference-mode only (running stats), folded into the conv.
    scale = bn["gamma"] / jnp.sqrt(bn["var"] + 1e-5)
    shift = bn["beta"] - bn["mean"] * scale
    return w * scale[None, :], (b if b is not None else 0.0) * scale + shift


def resblock_forward(params, x, hw):
    """x: (B, c, L).  left = 1x1-BN-ReLU -> 3x3-BN-ReLU -> 1x1-BN; relu(left + x)."""
    w1, b1 = _fold_bn(params["c1_w"], params["c1_b"], params["bn1"])
    h = conv1x1_nchw(x, w1, b1, relu=True)
    w2, b2 = _fold_bn(params["c2_w"], params["c2_b"], params["bn2"])
    h = conv3x3_nchw(h, w2, b2, hw, relu=True)
    w3, b3 = _fold_bn(params["c3_w"], params["c3_b"], params["bn3"])
    return conv1x1_nchw(h, w3, b3, relu=True, residual=x)      # fused +residual, ReLU


def multi_head_att(p, x, heads):
    """Self-attention MultiHeadAtt.forward(x, x, x); v = to_k(x) (faithful to the reference)."""
    B, N, D = x.shape
    a_dim = p["wq"].shape[1]
    w_qkv = jnp.concatenate([p["wq"], p["wk"], p["wk"]], axis=1)   # fused QKV (one launch)
    qkv = matmul(x.reshape(B * N, D), w_qkv)
    q = qkv[:, :a_dim].reshape(B, N, a_dim)
    k = qkv[:, a_dim:2 * a_dim].reshape(B, N, a_dim)
    v = qkv[:, 2 * a_dim:].reshape(B, N, a_dim)
    dh = a_dim // heads
    o = sdpa(q, k, v, heads, dh ** -0.5)
    o = matmul(o.reshape(B * N, a_dim), p["wo"], p["bo"])
    return o.reshape(B, N, D)


def transformer(p, x, heads):
    """Transformer.forward (post-norm, norm_first=False); dropout = identity."""
    att = multi_head_att(p["att"], x, heads)
    x = layernorm(att, p["norm1_g"], p["norm1_b"], residual=x)          # fused add+LN
    ff_h = matmul(x.reshape(-1, x.shape[-1]), p["ff"]["w1"], p["ff"]["b1"], relu=True)
    ff_o = matmul(ff_h, p["ff"]["w2"], p["ff"]["b2"]).reshape(x.shape)
    return layernorm(ff_o, p["norm2_g"], p["norm2_b"], residual=x)      # fused add+LN


def attentive_encoder(p, img1, img2, heads):
    B, c, h, w = img1.shape
    embed_h = p["w_embedding"][:h]                             # (h, c/2)  (reference swaps the tables)
    embed_w = p["h_embedding"][:w]                             # (w, c/2)
    pos = jnp.concatenate([
        jnp.broadcast_to(embed_w[None, :, :], (h, w, c // 2)),
        jnp.broadcast_to(embed_h[:, None, :], (h, w, c // 2)),
    ], axis=-1)
    pos = jnp.transpose(pos, (2, 0, 1))                        # (c, h, w)

    both = add_pos_embedding(jnp.concatenate([img1, img2], axis=0), pos)   # single launch
    both_seq = both.reshape(2 * B, c, h * w).transpose(0, 2, 1)            # (2B, HW, c)
    img1_seq, img2_seq = both_seq[:B], both_seq[B:]
    img_cat = jnp.concatenate([img1_seq, img2_seq], axis=-1)               # (B, HW, 2c)

    sa = both_seq                                                          # batched sa1|sa2
    for layer in p["layers"]:
        l, m = layer["l"], layer["m"]
        sa = ew_add(transformer(l, sa, heads), sa)                         # shared 'l', one batched pass
        cat = jnp.concatenate([sa[:B], sa[B:]], axis=-1)                   # (B, HW, 2c)
        cat = ew_add(transformer(m, cat, heads), img_cat)
        sa = jnp.concatenate([cat[:, :, :c], cat[:, :, c:]], axis=0)       # back to (2B, HW, c)

    sa1, sa2 = sa[:B], sa[B:]
    out1 = jnp.swapaxes(sa1.reshape(B, h, w, c), 1, 3)                     # faithful to .transpose(-1, 1)
    out2 = jnp.swapaxes(sa2.reshape(B, h, w, c), 1, 3)
    return out1, out2


def encoder_stub(p, img):
    # TODO(synk): pretrained ResNet/CLIP backbone not translatable; patch-embedding stand-in.
    B, C, H, W = img.shape
    pt = p["patch"]
    fs = H // pt
    x = img.reshape(B, C, fs, pt, fs, pt).transpose(0, 2, 4, 1, 3, 5)
    x = x.reshape(B * fs * fs, C * pt * pt)
    y = matmul(x, p["proj_w"], p["proj_b"])
    return y.reshape(B, fs, fs, p["proj_w"].shape[1]).transpose(0, 3, 1, 2)


def att_pool(p, query, kv, heads):
    """nn.MultiheadAttention (batch_first=False), need_weights=False."""
    L, B, E = query.shape
    S = kv.shape[0]
    dh = E // heads
    q = matmul(query.reshape(L * B, E), p["wq"], p["bq"])
    w_kv = jnp.concatenate([p["wk"], p["wv"]], axis=1)         # fused K|V projection
    b_kv = jnp.concatenate([p["bk"], p["bv"]])
    kvp = matmul(kv.reshape(S * B, E), w_kv, b_kv)
    k = kvp[:, :E].reshape(S, B, E).transpose(1, 0, 2)         # (B, S, E)
    v = kvp[:, E:].reshape(S, B, E).transpose(1, 0, 2)
    qb = q.reshape(L, B, E).transpose(1, 0, 2)                 # (B, L, E)
    o = sdpa(qb, k, v, heads, dh ** -0.5)
    o = o.transpose(1, 0, 2).reshape(L * B, E)
    o = matmul(o, p["wo"], p["bo"])
    return o.reshape(L, B, E)


def images_encoder_forward(params, img1, img2, heads):
    B = img1.shape[0]
    feats = encoder_stub(params["encoder"], jnp.concatenate([img1, img2], axis=0))
    x1, x2 = attentive_encoder(params["trans"], feats[:B], feats[B:], heads)

    _, c, H2, W2 = x1.shape
    L = H2 * W2
    # fused: cosine-similarity (channel axis) + broadcast add + Conv1 (1x1)
    x = cos_add_conv1(x1.reshape(B, c, L), x2.reshape(B, c, L),
                      params["conv1_w"], params["conv1_b"])
    x = resblock_forward(params["resblock"], x, (H2, W2))

    x_seq = x.reshape(B, c, L).transpose(2, 0, 1)              # (HW, B, c)
    queries = jnp.broadcast_to(params["img_queries"][:, None, :], (1, B, c))
    img_emb = att_pool(params["att_pool"], queries, x_seq, heads)
    img_emb = layernorm(img_emb, params["pool_norm_g"], params["pool_norm_b"])
    cls = img_emb[0]
    return cls, x_seq


# ----------------------------------------------------------------------------- init
def init_transformer(key, dim_q, dim_kv, a_dim, h_dim):
    ks = jax.random.split(key, 6)
    att = {"wq": xavier(ks[0], (dim_q, a_dim)),
           "wk": xavier(ks[1], (dim_kv, a_dim)),
           "wv": xavier(ks[2], (dim_kv, a_dim)),               # present but unused (reference bug: v = to_k)
           "wo": xavier(ks[3], (a_dim, dim_q)),
           "bo": jnp.zeros((dim_q,), jnp.float32)}
    ff = {"w1": xavier(ks[4], (dim_q, h_dim)), "b1": jnp.zeros((h_dim,), jnp.float32),
          "w2": xavier(ks[5], (h_dim, dim_q)), "b2": jnp.zeros((dim_q,), jnp.float32)}
    return {"att": att, "ff": ff,
            "norm1_g": jnp.ones((dim_q,), jnp.float32), "norm1_b": jnp.zeros((dim_q,), jnp.float32),
            "norm2_g": jnp.ones((dim_q,), jnp.float32), "norm2_b": jnp.zeros((dim_q,), jnp.float32)}


def init_attentive_encoder(key, n_layers, feat_size, channels, h_dim, a_dim):
    keys = jax.random.split(key, 2 + 2 * n_layers)
    p = {"h_embedding": xavier(keys[0], (feat_size, channels // 2)),
         "w_embedding": xavier(keys[1], (feat_size, channels // 2)),
         "layers": []}
    for i in range(n_layers):
        p["layers"].append({
            "l": init_transformer(keys[2 + 2 * i], channels, channels, a_dim, h_dim),
            "m": init_transformer(keys[3 + 2 * i], channels * 2, channels * 2, a_dim, h_dim)})
    return p


def init_resblock(key, c):
    half = c // 2
    ks = jax.random.split(key, 3)

    def bn(n):
        return {"gamma": jnp.ones((n,), jnp.float32), "beta": jnp.zeros((n,), jnp.float32),
                "mean": jnp.zeros((n,), jnp.float32), "var": jnp.ones((n,), jnp.float32)}

    return {"c1_w": xavier(ks[0], (c, half)), "c1_b": jnp.zeros((half,), jnp.float32), "bn1": bn(half),
            "c2_w": xavier(ks[1], (half * 9, half)), "c2_b": jnp.zeros((half,), jnp.float32), "bn2": bn(half),
            "c3_w": xavier(ks[2], (half, c)), "c3_b": jnp.zeros((c,), jnp.float32), "bn3": bn(c)}


def init_mha(key, e):
    ks = jax.random.split(key, 4)
    return {"wq": xavier(ks[0], (e, e)), "bq": jnp.zeros((e,), jnp.float32),
            "wk": xavier(ks[1], (e, e)), "bk": jnp.zeros((e,), jnp.float32),
            "wv": xavier(ks[2], (e, e)), "bv": jnp.zeros((e,), jnp.float32),
            "wo": xavier(ks[3], (e, e)), "bo": jnp.zeros((e,), jnp.float32)}


def init_images_encoder(key, d_model, h_dim, a_dim, n_layers, feat_size, in_channels, patch):
    ks = jax.random.split(key, 6)
    return {
        "encoder": {"patch": patch,
                    "proj_w": xavier(ks[0], (in_channels * patch * patch, d_model)),
                    "proj_b": jnp.zeros((d_model,), jnp.float32)},
        "trans": init_attentive_encoder(ks[1], n_layers, feat_size, d_model, h_dim, a_dim),
        "conv1_w": xavier(ks[2], (2 * d_model, d_model)),
        "conv1_b": jnp.zeros((d_model,), jnp.float32),
        "resblock": init_resblock(ks[3], d_model),
        "att_pool": init_mha(ks[4], d_model),
        "pool_norm_g": jnp.ones((d_model,), jnp.float32),
        "pool_norm_b": jnp.zeros((d_model,), jnp.float32),
        "img_queries": jax.random.normal(ks[5], (1, d_model), jnp.float32),
    }


# ----------------------------------------------------------------------------- main
if __name__ == "__main__":
    B, IN_C, IMG = 2, 3, 16
    PATCH = 2
    D_MODEL, NUM_HEADS, H_DIM, A_DIM, N_LAYERS = 32, 4, 64, 32, 1
    FEAT_SIZE = IMG // PATCH

    root = jax.random.PRNGKey(0)
    k_params, k_img1, k_img2 = jax.random.split(root, 3)
    params = init_images_encoder(k_params, D_MODEL, H_DIM, A_DIM,
                                 N_LAYERS, FEAT_SIZE, IN_C, PATCH)
    img1 = jax.random.normal(k_img1, (B, IN_C, IMG, IMG), jnp.float32)
    img2 = jax.random.normal(k_img2, (B, IN_C, IMG, IMG), jnp.float32)

    fwd = jax.jit(lambda a, b: images_encoder_forward(params, a, b, NUM_HEADS))
    cls, x_seq = fwd(img1, img2)
    cls = jax.block_until_ready(cls)
    x_seq = jax.block_until_ready(x_seq)

    assert cls.shape == (B, D_MODEL)
    assert x_seq.shape == (FEAT_SIZE * FEAT_SIZE, B, D_MODEL)
    assert bool(jnp.all(jnp.isfinite(cls))) and bool(jnp.all(jnp.isfinite(x_seq)))
    print("KERNEL_OK")
</pallas_src>

<mosaic_0001>
module attributes {stable_mosaic.version = 11 : i64} {
  func.func @kernel(%arg0: i32, %arg1: i32, %arg2: i32, %arg3: memref<8x128xbf16, #tpu.memory_space<vmem>>, %arg4: memref<128x128xbf16, #tpu.memory_space<vmem>>, %arg5: memref<1x128xf32, #tpu.memory_space<vmem>>, %arg6: memref<8x128xf32, #tpu.memory_space<vmem>>, %arg7: memref<8x128xf32, #tpu.memory_space<vmem>>) attributes {dimension_semantics = [#tpu.dimension_semantics<parallel>, #tpu.dimension_semantics<parallel>, #tpu.dimension_semantics<arbitrary>], iteration_bounds = array<i64: 1, 1, 1>, scalar_prefetch = 0 : i64, scratch_operands = 1 : i64, tpu.core_type = #tpu.core_type<tc>, window_params = [{transform_indices = @transform_0, window_bounds = array<i64: 8, 128>}, {transform_indices = @transform_1, window_bounds = array<i64: 128, 128>}, {transform_indices = @transform_2, window_bounds = array<i64: 1, 128>}, {transform_indices = @transform_3, window_bounds = array<i64: 8, 128>}]} {
    %c0_i32 = arith.constant 0 : i32
    %0 = arith.cmpi eq, %arg2, %c0_i32 : i32
    %1 = arith.extui %0 : i1 to i32
    %c0_i32_0 = arith.constant 0 : i32
    %2 = arith.cmpi ne, %1, %c0_i32_0 : i32
    scf.if %2 {
      %cst_10 = arith.constant 0.000000e+00 : f32
      %12 = vector.broadcast %cst_10 : f32 to vector<8x128xf32>
      %c0_11 = arith.constant 0 : index
      %c0_12 = arith.constant 0 : index
      %13 = vector.load %arg7[%c0_11, %c0_12] : memref<8x128xf32, #tpu.memory_space<vmem>>, vector<8x128xf32>
      tpu.vector_store %arg7[%c0_11, %c0_12], %12 {strides = array<i32>} : memref<8x128xf32, #tpu.memory_space<vmem>>, vector<8x128xf32>,
    } else {
    }
    %c0 = arith.constant 0 : index
    %c0_1 = arith.constant 0 : index
    %3 = vector.load %arg7[%c0, %c0_1] : memref<8x128xf32, #tpu.memory_space<vmem>>, vector<8x128xf32>
    %c0_2 = arith.constant 0 : index
    %c0_3 = arith.constant 0 : index
    %4 = vector.load %arg3[%c0_2, %c0_3] : memref<8x128xbf16, #tpu.memory_space<vmem>>, vector<8x128xbf16>
    %c0_4 = arith.constant 0 : index
    %c0_5 = arith.constant 0 : index
    %5 = vector.load %arg4[%c0_4, %c0_5] : memref<128x128xbf16, #tpu.memory_space<vmem>>, vector<128x128xbf16>
    %cst = arith.constant dense<0.000000e+00> : vector<8x128xf32>
    %6 = tpu.matmul %4, %5, %cst {dimension_numbers = #tpu.dot_dimension_numbers<[1], [0], [0], [1], [0, 0, 1, 1], [], []>} : vector<8x128xbf16>, vector<128x128xbf16>, vector<8x128xf32> -> vector<8x128xf32>
    %7 = arith.addf %3, %6 : vector<8x128xf32>
    %c0_6 = arith.constant 0 : index
    %c0_7 = arith.constant 0 : index
    %8 = vector.load %arg7[%c0_6, %c0_7] : memref<8x128xf32, #tpu.memory_space<vmem>>, vector<8x128xf32>
    tpu.vector_store %arg7[%c0_6, %c0_7], %7 {strides = array<i32>} : memref<8x128xf32, #tpu.memory_space<vmem>>, vector<8x128xf32>,
    %c0_i32_8 = arith.constant 0 : i32
    %9 = arith.cmpi eq, %arg2, %c0_i32_8 : i32
    %10 = arith.extui %9 : i1 to i32
    %c0_i32_9 = arith.constant 0 : i32
    %11 = arith.cmpi ne, %10, %c0_i32_9 : i32
    scf.if %11 {
      %c0_10 = arith.constant 0 : index
      %c0_11 = arith.constant 0 : index
      %12 = vector.load %arg7[%c0_10, %c0_11] : memref<8x128xf32, #tpu.memory_space<vmem>>, vector<8x128xf32>
      %c0_12 = arith.constant 0 : index
      %c0_13 = arith.constant 0 : index
      %13 = vector.load %arg5[%c0_12, %c0_13] : memref<1x128xf32, #tpu.memory_space<vmem>>, vector<1x128xf32>
      %14 = vector.broadcast %13 : vector<1x128xf32> to vector<8x128xf32>
      %15 = arith.addf %12, %14 : vector<8x128xf32>
      %c0_14 = arith.constant 0 : index
      %c0_15 = arith.constant 0 : index
      %16 = vector.load %arg6[%c0_14, %c0_15] : memref<8x128xf32, #tpu.memory_space<vmem>>, vector<8x128xf32>
      tpu.vector_store %arg6[%c0_14, %c0_15], %15 {strides = array<i32>} : memref<8x128xf32, #tpu.memory_space<vmem>>, vector<8x128xf32>,
    } else {
    }
    return
  }
  func.func @transform_0(%arg0: i32, %arg1: i32, %arg2: i32) -> (i32, i32) {
    %c0_i32 = arith.constant 0 : i32
    return %arg0, %arg2 : i32, i32
  }
  func.func @transform_1(%arg0: i32, %arg1: i32, %arg2: i32) -> (i32, i32) {
    %c0_i32 = arith.constant 0 : i32
    return %arg2, %arg1 : i32, i32
  }
  func.func @transform_2(%arg0: i32, %arg1: i32, %arg2: i32) -> (i32, i32) {
    %c0_i32 = arith.constant 0 : i32
    %c0_i32_0 = arith.constant 0 : i32
    return %c0_i32, %arg1 : i32, i32
  }
  func.func @transform_3(%arg0: i32, %arg1: i32, %arg2: i32) -> (i32, i32) {
    %c0_i32 = arith.constant 0 : i32
    return %arg0, %arg1 : i32, i32
  }
}

module attributes {stable_mosaic.version = 11 : i64} {
  func.func @kernel(%arg0: i32, %arg1: i32, %arg2: i32, %arg3: memref<256x128xbf16, #tpu.memory_space<vmem>>, %arg4: memref<128x128xbf16, #tpu.memory_space<vmem>>, %arg5: memref<1x128xf32, #tpu.memory_space<vmem>>, %arg6: memref<256x128xf32, #tpu.memory_space<vmem>>, %arg7: memref<256x128xf32, #tpu.memory_space<vmem>>) attributes {dimension_semantics = [#tpu.dimension_semantics<parallel>, #tpu.dimension_semantics<parallel>, #tpu.dimension_semantics<arbitrary>], iteration_bounds = array<i64: 1, 1, 1>, scalar_prefetch = 0 : i64, scratch_operands = 1 : i64, tpu.core_type = #tpu.core_type<tc>, window_params = [{transform_indices = @transform_0, window_bounds = array<i64: 256, 128>}, {transform_indices = @transform_1, window_bounds = array<i64: 128, 128>}, {transform_indices = @transform_2, window_bounds = array<i64: 1, 128>}, {transform_indices = @transform_3, window_bounds = array<i64: 256, 128>}]} {
    %c0_i32 = arith.constant 0 : i32
    %0 = arith.cmpi eq, %arg2, %c0_i32 : i32
    %1 = arith.extui %0 : i1 to i32
    %c0_i32_0 = arith.constant 0 : i32
    %2 = arith.cmpi ne, %1, %c0_i32_0 : i32
    scf.if %2 {
      %cst_10 = arith.constant 0.000000e+00 : f32
      %12 = vector.broadcast %cst_10 : f32 to vector<256x128xf32>
      %c0_11 = arith.constant 0 : index
      %c0_12 = arith.constant 0 : index
      %13 = vector.load %arg7[%c0_11, %c0_12] : memref<256x128xf32, #tpu.memory_space<vmem>>, vector<256x128xf32>
      tpu.vector_store %arg7[%c0_11, %c0_12], %12 {strides = array<i32>} : memref<256x128xf32, #tpu.memory_space<vmem>>, vector<256x128xf32>,
    } else {
    }
    %c0 = arith.constant 0 : index
    %c0_1 = arith.constant 0 : index
    %3 = vector.load %arg7[%c0, %c0_1] : memref<256x128xf32, #tpu.memory_space<vmem>>, vector<256x128xf32>
    %c0_2 = arith.constant 0 : index
    %c0_3 = arith.constant 0 : index
    %4 = vector.load %arg3[%c0_2, %c0_3] : memref<256x128xbf16, #tpu.memory_space<vmem>>, vector<256x128xbf16>
    %c0_4 = arith.constant 0 : index
    %c0_5 = arith.constant 0 : index
    %5 = vector.load %arg4[%c0_4, %c0_5] : memref<128x128xbf16, #tpu.memory_space<vmem>>, vector<128x128xbf16>
    %cst = arith.constant dense<0.000000e+00> : vector<256x128xf32>
    %6 = tpu.matmul %4, %5, %cst {dimension_numbers = #tpu.dot_dimension_numbers<[1], [0], [0], [1], [0, 0, 1, 1], [], []>} : vector<256x128xbf16>, vector<128x128xbf16>, vector<256x128xf32> -> vector<256x128xf32>
    %7 = arith.addf %3, %6 : vector<256x128xf32>
    %c0_6 = arith.constant 0 : index
    %c0_7 = arith.constant 0 : index
    %8 = vector.load %arg7[%c0_6, %c0_7] : memref<256x128xf32, #tpu.memory_space<vmem>>, vector<256x128xf32>
    tpu.vector_store %arg7[%c0_6, %c0_7], %7 {strides = array<i32>} : memref<256x128xf32, #tpu.memory_space<vmem>>, vector<256x128xf32>,
    %c0_i32_8 = arith.constant 0 : i32
    %9 = arith.cmpi eq, %arg2, %c0_i32_8 : i32
    %10 = arith.extui %9 : i1 to i32
    %c0_i32_9 = arith.constant 0 : i32
    %11 = arith.cmpi ne, %10, %c0_i32_9 : i32
    scf.if %11 {
      %c0_10 = arith.constant 0 : index
      %c0_11 = arith.constant 0 : index
      %12 = vector.load %arg7[%c0_10, %c0_11] : memref<256x128xf32, #tpu.memory_space<vmem>>, vector<256x128xf32>
      %c0_12 = arith.constant 0 : index
      %c0_13 = arith.constant 0 : index
      %13 = vector.load %arg5[%c0_12, %c0_13] : memref<1x128xf32, #tpu.memory_space<vmem>>, vector<1x128xf32>
      %14 = vector.broadcast %13 : vector<1x128xf32> to vector<256x128xf32>
      %15 = arith.addf %12, %14 : vector<256x128xf32>
      %c0_14 = arith.constant 0 : index
      %c0_15 = arith.constant 0 : index
      %16 = vector.load %arg6[%c0_14, %c0_15] : memref<256x128xf32, #tpu.memory_space<vmem>>, vector<256x128xf32>
      tpu.vector_store %arg6[%c0_14, %c0_15], %15 {strides = array<i32>} : memref<256x128xf32, #tpu.memory_space<vmem>>, vector<256x128xf32>,
    } else {
    }
    return
  }
  func.func @transform_0(%arg0: i32, %arg1: i32, %arg2: i32) -> (i32, i32) {
    %c0_i32 = arith.constant 0 : i32
    return %arg0, %arg2 : i32, i32
  }
  func.func @transform_1(%arg0: i32, %arg1: i32, %arg2: i32) -> (i32, i32) {
    %c0_i32 = arith.constant 0 : i32
    return %arg2, %arg1 : i32, i32
  }
  func.func @transform_2(%arg0: i32, %arg1: i32, %arg2: i32) -> (i32, i32) {
    %c0_i32 = arith.constant 0 : i32
    %c0_i32_0 = arith.constant 0 : i32
    return %c0_i32, %arg1 : i32, i32
  }
  func.func @transform_3(%arg0: i32, %arg1: i32, %arg2: i32) -> (i32, i32) {
    %c0_i32 = arith.constant 0 : i32
    return %arg0, %arg1 : i32, i32
  }
}

module attributes {stable_mosaic.version = 11 : i64} {
  func.func @_pos_add_kernel(%arg0: i32, %arg1: i32, %arg2: memref<1x16x128xf32, #tpu.memory_space<vmem>>, %arg3: memref<1x16x128xf32, #tpu.memory_space<vmem>>, %arg4: memref<1x16x128xf32, #tpu.memory_space<vmem>>) attributes {dimension_semantics = [#tpu.dimension_semantics<parallel>, #tpu.dimension_semantics<arbitrary>], iteration_bounds = array<i64: 1, 4>, scalar_prefetch = 0 : i64, scratch_operands = 0 : i64, tpu.core_type = #tpu.core_type<tc>, window_params = [{transform_indices = @transform_0, window_bounds = array<i64: 1, 16, 128>}, {transform_indices = @transform_1, window_bounds = array<i64: 1, 16, 128>}, {transform_indices = @transform_2, window_bounds = array<i64: 1, 16, 128>}]} {
    %c0 = arith.constant 0 : index
    %c0_0 = arith.constant 0 : index
    %c0_1 = arith.constant 0 : index
    %0 = vector.load %arg2[%c0, %c0_0, %c0_1] : memref<1x16x128xf32, #tpu.memory_space<vmem>>, vector<1x16x128xf32>
    %c0_2 = arith.constant 0 : index
    %c0_3 = arith.constant 0 : index
    %c0_4 = arith.constant 0 : index
    %1 = vector.load %arg3[%c0_2, %c0_3, %c0_4] : memref<1x16x128xf32, #tpu.memory_space<vmem>>, vector<1x16x128xf32>
    %2 = arith.addf %0, %1 : vector<1x16x128xf32>
    %c0_5 = arith.constant 0 : index
    %c0_6 = arith.constant 0 : index
    %c0_7 = arith.constant 0 : index
    %3 = vector.load %arg4[%c0_5, %c0_6, %c0_7] : memref<1x16x128xf32, #tpu.memory_space<vmem>>, vector<1x16x128xf32>
    tpu.vector_store %arg4[%c0_5, %c0_6, %c0_7], %2 {strides = array<i32>} : memref<1x16x128xf32, #tpu.memory_space<vmem>>, vector<1x16x128xf32>,
    return
  }
  func.func @transform_0(%arg0: i32, %arg1: i32) -> (i32, i32, i32) {
    %c0_i32 = arith.constant 0 : i32
    %c0_i32_0 = arith.constant 0 : i32
    return %arg1, %arg0, %c0_i32 : i32, i32, i32
  }
  func.func @transform_1(%arg0: i32, %arg1: i32) -> (i32, i32, i32) {
    %c0_i32 = arith.constant 0 : i32
    %c0_i32_0 = arith.constant 0 : i32
    %c0_i32_1 = arith.constant 0 : i32
    return %c0_i32, %arg0, %c0_i32_0 : i32, i32, i32
  }
  func.func @transform_2(%arg0: i32, %arg1: i32) -> (i32, i32, i32) {
    %c0_i32 = arith.constant 0 : i32
    %c0_i32_0 = arith.constant 0 : i32
    return %arg1, %arg0, %c0_i32 : i32, i32, i32
  }
}

module attributes {stable_mosaic.version = 11 : i64} {
  func.func @kernel(%arg0: i32, %arg1: memref<1x64x32xbf16, #tpu.memory_space<vmem>>, %arg2: memref<1x64x32xbf16, #tpu.memory_space<vmem>>, %arg3: memref<1x64x32xbf16, #tpu.memory_space<vmem>>, %arg4: memref<1x64x32xf32, #tpu.memory_space<vmem>>) attributes {dimension_semantics = [#tpu.dimension_semantics<parallel>], iteration_bounds = array<i64: 4>, scalar_prefetch = 0 : i64, scratch_operands = 0 : i64, tpu.core_type = #tpu.core_type<tc>, window_params = [{transform_indices = @transform_0, window_bounds = array<i64: 1, 64, 32>}, {transform_indices = @transform_1, window_bounds = array<i64: 1, 64, 32>}, {transform_indices = @transform_2, window_bounds = array<i64: 1, 64, 32>}, {transform_indices = @transform_3, window_bounds = array<i64: 1, 64, 32>}]} {
    %c0 = arith.constant 0 : index
    %c0_0 = arith.constant 0 : index
    %c0_1 = arith.constant 0 : index
    %0 = vector.load %arg1[%c0, %c0_0, %c0_1] : memref<1x64x32xbf16, #tpu.memory_space<vmem>>, vector<1x64x32xbf16>
    %1 = vector.shape_cast %0 : vector<1x64x32xbf16> to vector<64x32xbf16>
    %c0_2 = arith.constant 0 : index
    %c0_3 = arith.constant 0 : index
    %c0_4 = arith.constant 0 : index
    %2 = vector.load %arg2[%c0_2, %c0_3, %c0_4] : memref<1x64x32xbf16, #tpu.memory_space<vmem>>, vector<1x64x32xbf16>
    %3 = vector.shape_cast %2 : vector<1x64x32xbf16> to vector<64x32xbf16>
    %c0_5 = arith.constant 0 : index
    %c0_6 = arith.constant 0 : index
    %c0_7 = arith.constant 0 : index
    %4 = vector.load %arg3[%c0_5, %c0_6, %c0_7] : memref<1x64x32xbf16, #tpu.memory_space<vmem>>, vector<1x64x32xbf16>
    %5 = vector.shape_cast %4 : vector<1x64x32xbf16> to vector<64x32xbf16>
    %6 = vector.extract_strided_slice %1 {offsets = [0, 0], sizes = [64, 8], strides = [1, 1]} : vector<64x32xbf16> to vector<64x8xbf16>
    %7 = vector.extract_strided_slice %3 {offsets = [0, 0], sizes = [64, 8], strides = [1, 1]} : vector<64x32xbf16> to vector<64x8xbf16>
    %8 = tpu.transpose %7, [1, 0] : vector<64x8xbf16> -> vector<8x64xbf16>
    %cst = arith.constant dense<0.000000e+00> : vector<64x64xf32>
    %9 = tpu.matmul %6, %8, %cst {dimension_numbers = #tpu.dot_dimension_numbers<[1], [0], [0], [1], [0, 0, 1, 1], [], []>} : vector<64x8xbf16>, vector<8x64xbf16>, vector<64x64xf32> -> vector<64x64xf32>
    %cst_8 = arith.constant 0.353553385 : f32
    %10 = vector.broadcast %cst_8 : f32 to vector<64x64xf32>
    %11 = arith.mulf %9, %10 : vector<64x64xf32>
    %cst_9 = arith.constant dense<0xFF800000> : vector<64xf32>
    %12 = vector.multi_reduction <maximumf>, %11, %cst_9 [1] : vector<64x64xf32> to vector<64xf32>
    %13 = vector.shape_cast %12 : vector<64xf32> to vector<64x1xf32>
    %14 = vector.broadcast %13 : vector<64x1xf32> to vector<64x64xf32>
    %15 = arith.subf %11, %14 : vector<64x64xf32>
    %16 = math.exp %15 : vector<64x64xf32>
    %cst_10 = arith.constant dense<0.000000e+00> : vector<64xf32>
    %17 = vector.multi_reduction <add>, %16, %cst_10 [1] : vector<64x64xf32> to vector<64xf32>
    %18 = vector.shape_cast %17 : vector<64xf32> to vector<64x1xf32>
    %19 = tpu.reciprocal %18 {approx = true} : vector<64x1xf32> -> vector<64x1xf32>
    %20 = vector.broadcast %19 : vector<64x1xf32> to vector<64x64xf32>
    %21 = arith.mulf %16, %20 : vector<64x64xf32>
    %22 = arith.truncf %21 : vector<64x64xf32> to vector<64x64xbf16>
    %23 = vector.extract_strided_slice %5 {offsets = [0, 0], sizes = [64, 8], strides = [1, 1]} : vector<64x32xbf16> to vector<64x8xbf16>
    %cst_11 = arith.constant dense<0.000000e+00> : vector<64x8xf32>
    %24 = tpu.matmul %22, %23, %cst_11 {dimension_numbers = #tpu.dot_dimension_numbers<[1], [0], [0], [1], [0, 0, 1, 1], [], []>} : vector<64x64xbf16>, vector<64x8xbf16>, vector<64x8xf32> -> vector<64x8xf32>
    %25 = vector.extract_strided_slice %1 {offsets = [0, 8], sizes = [64, 8], strides = [1, 1]} : vector<64x32xbf16> to vector<64x8xbf16>
    %26 = vector.extract_strided_slice %3 {offsets = [0, 8], sizes = [64, 8], strides = [1, 1]} : vector<64x32xbf16> to vector<64x8xbf16>
    %27 = tpu.transpose %26, [1, 0] : vector<64x8xbf16> -> vector<8x64xbf16>
    %cst_12 = arith.constant dense<0.000000e+00> : vector<64x64xf32>
    %28 = tpu.matmul %25, %27, %cst_12 {dimension_numbers = #tpu.dot_dimension_numbers<[1], [0], [0], [1], [0, 0, 1, 1], [], []>} : vector<64x8xbf16>, vector<8x64xbf16>, vector<64x64xf32> -> vector<64x64xf32>
    %cst_13 = arith.constant 0.353553385 : f32
    %29 = vector.broadcast %cst_13 : f32 to vector<64x64xf32>
    %30 = arith.mulf %28, %29 : vector<64x64xf32>
    %cst_14 = arith.constant dense<0xFF800000> : vector<64xf32>
    %31 = vector.multi_reduction <maximumf>, %30, %cst_14 [1] : vector<64x64xf32> to vector<64xf32>
    %32 = vector.shape_cast %31 : vector<64xf32> to vector<64x1xf32>
    %33 = vector.broadcast %32 : vector<64x1xf32> to vector<64x64xf32>
    %34 = arith.subf %30, %33 : vector<64x64xf32>
    %35 = math.exp %34 : vector<64x64xf32>
    %cst_15 = arith.constant dense<0.000000e+00> : vector<64xf32>
    %36 = vector.multi_reduction <add>, %35, %cst_15 [1] : vector<64x64xf32> to vector<64xf32>
    %37 = vector.shape_cast %36 : vector<64xf32> to vector<64x1xf32>
    %38 = tpu.reciprocal %37 {approx = true} : vector<64x1xf32> -> vector<64x1xf32>
    %39 = vector.broadcast %38 : vector<64x1xf32> to vector<64x64xf32>
    %40 = arith.mulf %35, %39 : vector<64x64xf32>
    %41 = arith.truncf %40 : vector<64x64xf32> to vector<64x64xbf16>
    %42 = vector.extract_strided_slice %5 {offsets = [0, 8], sizes = [64, 8], strides = [1, 1]} : vector<64x32xbf16> to vector<64x8xbf16>
    %cst_16 = arith.constant dense<0.000000e+00> : vector<64x8xf32>
    %43 = tpu.matmul %41, %42, %cst_16 {dimension_numbers = #tpu.dot_dimension_numbers<[1], [0], [0], [1], [0, 0, 1, 1], [], []>} : vector<64x64xbf16>, vector<64x8xbf16>, vector<64x8xf32> -> vector<64x8xf32>
    %44 = vector.extract_strided_slice %1 {offsets = [0, 16], sizes = [64, 8], strides = [1, 1]} : vector<64x32xbf16> to vector<64x8xbf16>
    %45 = vector.extract_strided_slice %3 {offsets = [0, 16], sizes = [64, 8], strides = [1, 1]} : vector<64x32xbf16> to vector<64x8xbf16>
    %46 = tpu.transpose %45, [1, 0] : vector<64x8xbf16> -> vector<8x64xbf16>
    %cst_17 = arith.constant dense<0.000000e+00> : vector<64x64xf32>
    %47 = tpu.matmul %44, %46, %cst_17 {dimension_numbers = #tpu.dot_dimension_numbers<[1], [0], [0], [1], [0, 0, 1, 1], [], []>} : vector<64x8xbf16>, vector<8x64xbf16>, vector<64x64xf32> -> vector<64x64xf32>
    %cst_18 = arith.constant 0.353553385 : f32
    %48 = vector.broadcast %cst_18 : f32 to vector<64x64xf32>
    %49 = arith.mulf %47, %48 : vector<64x64xf32>
    %cst_19 = arith.constant dense<0xFF800000> : vector<64xf32>
    %50 = vector.multi_reduction <maximumf>, %49, %cst_19 [1] : vector<64x64xf32> to vector<64xf32>
    %51 = vector.shape_cast %50 : vector<64xf32> to vector<64x1xf32>
    %52 = vector.broadcast %51 : vector<64x1xf32> to vector<64x64xf32>
    %53 = arith.subf %49, %52 : vector<64x64xf32>
    %54 = math.exp %53 : vector<64x64xf32>
    %cst_20 = arith.constant dense<0.000000e+00> : vector<64xf32>
    %55 = vector.multi_reduction <add>, %54, %cst_20 [1] : vector<64x64xf32> to vector<64xf32>
    %56 = vector.shape_cast %55 : vector<64xf32> to vector<64x1xf32>
    %57 = tpu.reciprocal %56 {approx = true} : vector<64x1xf32> -> vector<64x1xf32>
    %58 = vector.broadcast %57 : vector<64x1xf32> to vector<64x64xf32>
    %59 = arith.mulf %54, %58 : vector<64x64xf32>
    %60 = arith.truncf %59 : vector<64x64xf32> to vector<64x64xbf16>
    %61 = vector.extract_strided_slice %5 {offsets = [0, 16], sizes = [64, 8], strides = [1, 1]} : vector<64x32xbf16> to vector<64x8xbf16>
    %cst_21 = arith.constant dense<0.000000e+00> : vector<64x8xf32>
    %62 = tpu.matmul %60, %61, %cst_21 {dimension_numbers = #tpu.dot_dimension_numbers<[1], [0], [0], [1], [0, 0, 1, 1], [], []>} : vector<64x64xbf16>, vector<64x8xbf16>, vector<64x8xf32> -> vector<64x8xf32>
    %63 = vector.extract_strided_slice %1 {offsets = [0, 24], sizes = [64, 8], strides = [1, 1]} : vector<64x32xbf16> to vector<64x8xbf16>
    %64 = vector.extract_strided_slice %3 {offsets = [0, 24], sizes = [64, 8], strides = [1, 1]} : vector<64x32xbf16> to vector<64x8xbf16>
    %65 = tpu.transpose %64, [1, 0] : vector<64x8xbf16> -> vector<8x64xbf16>
    %cst_22 = arith.constant dense<0.000000e+00> : vector<64x64xf32>
    %66 = tpu.matmul %63, %65, %cst_22 {dimension_numbers = #tpu.dot_dimension_numbers<[1], [0], [0], [1], [0, 0, 1, 1], [], []>} : vector<64x8xbf16>, vector<8x64xbf16>, vector<64x64xf32> -> vector<64x64xf32>
    %cst_23 = arith.constant 0.353553385 : f32
    %67 = vector.broadcast %cst_23 : f32 to vector<64x64xf32>
    %68 = arith.mulf %66, %67 : vector<64x64xf32>
    %cst_24 = arith.constant dense<0xFF800000> : vector<64xf32>
    %69 = vector.multi_reduction <maximumf>, %68, %cst_24 [1] : vector<64x64xf32> to vector<64xf32>
    %70 = vector.shape_cast %69 : vector<64xf32> to vector<64x1xf32>
    %71 = vector.broadcast %70 : vector<64x1xf32> to vector<64x64xf32>
    %72 = arith.subf %68, %71 : vector<64x64xf32>
    %73 = math.exp %72 : vector<64x64xf32>
    %cst_25 = arith.constant dense<0.000000e+00> : vector<64xf32>
    %74 = vector.multi_reduction <add>, %73, %cst_25 [1] : vector<64x64xf32> to vector<64xf32>
    %75 = vector.shape_cast %74 : vector<64xf32> to vector<64x1xf32>
    %76 = tpu.reciprocal %75 {approx = true} : vector<64x1xf32> -> vector<64x1xf32>
    %77 = vector.broadcast %76 : vector<64x1xf32> to vector<64x64xf32>
    %78 = arith.mulf %73, %77 : vector<64x64xf32>
    %79 = arith.truncf %78 : vector<64x64xf32> to vector<64x64xbf16>
    %80 = vector.extract_strided_slice %5 {offsets = [0, 24], sizes = [64, 8], strides = [1, 1]} : vector<64x32xbf16> to vector<64x8xbf16>
    %cst_26 = arith.constant dense<0.000000e+00> : vector<64x8xf32>
    %81 = tpu.matmul %79, %80, %cst_26 {dimension_numbers = #tpu.dot_dimension_numbers<[1], [0], [0], [1], [0, 0, 1, 1], [], []>} : vector<64x64xbf16>, vector<64x8xbf16>, vector<64x8xf32> -> vector<64x8xf32>
    %82 = tpu.concatenate %24, %43, %62, %81 in 1 : vector<64x8xf32>, vector<64x8xf32>, vector<64x8xf32>, vector<64x8xf32> -> vector<64x32xf32>
    %c0_27 = arith.constant 0 : index
    %c0_28 = arith.constant 0 : index
    %c0_29 = arith.constant 0 : index
    %83 = vector.load %arg4[%c0_27, %c0_28, %c0_29] : memref<1x64x32xf32, #tpu.memory_space<vmem>>, vector<1x64x32xf32>
    %84 = vector.shape_cast %83 : vector<1x64x32xf32> to vector<64x32xf32>
    %85 = vector.shape_cast %82 : vector<64x32xf32> to vector<1x64x32xf32>
    tpu.vector_store %arg4[%c0_27, %c0_28, %c0_29], %85 {strides = array<i32>} : memref<1x64x32xf32, #tpu.memory_space<vmem>>, vector<1x64x32xf32>,
    return
  }
  func.func @transform_0(%arg0: i32) -> (i32, i32, i32) {
    %c0_i32 = arith.constant 0 : i32
    %c0_i32_0 = arith.constant 0 : i32
    %c0_i32_1 = arith.constant 0 : i32
    return %arg0, %c0_i32, %c0_i32_0 : i32, i32, i32
  }
  func.func @transform_1(%arg0: i32) -> (i32, i32, i32) {
    %c0_i32 = arith.constant 0 : i32
    %c0_i32_0 = arith.constant 0 : i32
    %c0_i32_1 = arith.constant 0 : i32
    return %arg0, %c0_i32, %c0_i32_0 : i32, i32, i32
  }
  func.func @transform_2(%arg0: i32) -> (i32, i32, i32) {
    %c0_i32 = arith.constant 0 : i32
    %c0_i32_0 = arith.constant 0 : i32
    %c0_i32_1 = arith.constant 0 : i32
    return %arg0, %c0_i32, %c0_i32_0 : i32, i32, i32
  }
  func.func @transform_3(%arg0: i32) -> (i32, i32, i32) {
    %c0_i32 = arith.constant 0 : i32
    %c0_i32_0 = arith.constant 0 : i32
    %c0_i32_1 = arith.constant 0 : i32
    return %arg0, %c0_i32, %c0_i32_0 : i32, i32, i32
  }
}

module attributes {stable_mosaic.version = 11 : i64} {
  func.func @kernel(%arg0: i32, %arg1: i32, %arg2: i32, %arg3: memref<256x128xbf16, #tpu.memory_space<vmem>>, %arg4: memref<128x128xbf16, #tpu.memory_space<vmem>>, %arg5: memref<1x128xf32, #tpu.memory_space<vmem>>, %arg6: memref<256x128xf32, #tpu.memory_space<vmem>>, %arg7: memref<256x128xf32, #tpu.memory_space<vmem>>) attributes {dimension_semantics = [#tpu.dimension_semantics<parallel>, #tpu.dimension_semantics<parallel>, #tpu.dimension_semantics<arbitrary>], iteration_bounds = array<i64: 1, 1, 1>, scalar_prefetch = 0 : i64, scratch_operands = 1 : i64, tpu.core_type = #tpu.core_type<tc>, window_params = [{transform_indices = @transform_0, window_bounds = array<i64: 256, 128>}, {transform_indices = @transform_1, window_bounds = array<i64: 128, 128>}, {transform_indices = @transform_2, window_bounds = array<i64: 1, 128>}, {transform_indices = @transform_3, window_bounds = array<i64: 256, 128>}]} {
    %c0_i32 = arith.constant 0 : i32
    %0 = arith.cmpi eq, %arg2, %c0_i32 : i32
    %1 = arith.extui %0 : i1 to i32
    %c0_i32_0 = arith.constant 0 : i32
    %2 = arith.cmpi ne, %1, %c0_i32_0 : i32
    scf.if %2 {
      %cst_10 = arith.constant 0.000000e+00 : f32
      %12 = vector.broadcast %cst_10 : f32 to vector<256x128xf32>
      %c0_11 = arith.constant 0 : index
      %c0_12 = arith.constant 0 : index
      %13 = vector.load %arg7[%c0_11, %c0_12] : memref<256x128xf32, #tpu.memory_space<vmem>>, vector<256x128xf32>
      tpu.vector_store %arg7[%c0_11, %c0_12], %12 {strides = array<i32>} : memref<256x128xf32, #tpu.memory_space<vmem>>, vector<256x128xf32>,
    } else {
    }
    %c0 = arith.constant 0 : index
    %c0_1 = arith.constant 0 : index
    %3 = vector.load %arg7[%c0, %c0_1] : memref<256x128xf32, #tpu.memory_space<vmem>>, vector<256x128xf32>
    %c0_2 = arith.constant 0 : index
    %c0_3 = arith.constant 0 : index
    %4 = vector.load %arg3[%c0_2, %c0_3] : memref<256x128xbf16, #tpu.memory_space<vmem>>, vector<256x128xbf16>
    %c0_4 = arith.constant 0 : index
    %c0_5 = arith.constant 0 : index
    %5 = vector.load %arg4[%c0_4, %c0_5] : memref<128x128xbf16, #tpu.memory_space<vmem>>, vector<128x128xbf16>
    %cst = arith.constant dense<0.000000e+00> : vector<256x128xf32>
    %6 = tpu.matmul %4, %5, %cst {dimension_numbers = #tpu.dot_dimension_numbers<[1], [0], [0], [1], [0, 0, 1, 1], [], []>} : vector<256x128xbf16>, vector<128x128xbf16>, vector<256x128xf32> -> vector<256x128xf32>
    %7 = arith.addf %3, %6 : vector<256x128xf32>
    %c0_6 = arith.constant 0 : index
    %c0_7 = arith.constant 0 : index
    %8 = vector.load %arg7[%c0_6, %c0_7] : memref<256x128xf32, #tpu.memory_space<vmem>>, vector<256x128xf32>
    tpu.vector_store %arg7[%c0_6, %c0_7], %7 {strides = array<i32>} : memref<256x128xf32, #tpu.memory_space<vmem>>, vector<256x128xf32>,
    %c0_i32_8 = arith.constant 0 : i32
    %9 = arith.cmpi eq, %arg2, %c0_i32_8 : i32
    %10 = arith.extui %9 : i1 to i32
    %c0_i32_9 = arith.constant 0 : i32
    %11 = arith.cmpi ne, %10, %c0_i32_9 : i32
    scf.if %11 {
      %c0_10 = arith.constant 0 : index
      %c0_11 = arith.constant 0 : index
      %12 = vector.load %arg7[%c0_10, %c0_11] : memref<256x128xf32, #tpu.memory_space<vmem>>, vector<256x128xf32>
      %c0_12 = arith.constant 0 : index
      %c0_13 = arith.constant 0 : index
      %13 = vector.load %arg5[%c0_12, %c0_13] : memref<1x128xf32, #tpu.memory_space<vmem>>, vector<1x128xf32>
      %14 = vector.broadcast %13 : vector<1x128xf32> to vector<256x128xf32>
      %15 = arith.addf %12, %14 : vector<256x128xf32>
      %cst_14 = arith.constant 0.000000e+00 : f32
      %16 = vector.broadcast %cst_14 : f32 to vector<256x128xf32>
      %17 = arith.maximumf %15, %16 : vector<256x128xf32>
      %c0_15 = arith.constant 0 : index
      %c0_16 = arith.constant 0 : index
      %18 = vector.load %arg6[%c0_15, %c0_16] : memref<256x128xf32, #tpu.memory_space<vmem>>, vector<256x128xf32>
      tpu.vector_store %arg6[%c0_15, %c0_16], %17 {strides = array<i32>} : memref<256x128xf32, #tpu.memory_space<vmem>>, vector<256x128xf32>,
    } else {
    }
    return
  }
  func.func @transform_0(%arg0: i32, %arg1: i32, %arg2: i32) -> (i32, i32) {
    %c0_i32 = arith.constant 0 : i32
    return %arg0, %arg2 : i32, i32
  }
  func.func @transform_1(%arg0: i32, %arg1: i32, %arg2: i32) -> (i32, i32) {
    %c0_i32 = arith.constant 0 : i32
    return %arg2, %arg1 : i32, i32
  }
  func.func @transform_2(%arg0: i32, %arg1: i32, %arg2: i32) -> (i32, i32) {
    %c0_i32 = arith.constant 0 : i32
    %c0_i32_0 = arith.constant 0 : i32
    return %c0_i32, %arg1 : i32, i32
  }
  func.func @transform_3(%arg0: i32, %arg1: i32, %arg2: i32) -> (i32, i32) {
    %c0_i32 = arith.constant 0 : i32
    return %arg0, %arg1 : i32, i32
  }
}

module attributes {stable_mosaic.version = 11 : i64} {
  func.func @kernel(%arg0: i32, %arg1: memref<256x32xf32, #tpu.memory_space<vmem>>, %arg2: memref<256x32xf32, #tpu.memory_space<vmem>>, %arg3: memref<1x32xf32, #tpu.memory_space<vmem>>, %arg4: memref<1x32xf32, #tpu.memory_space<vmem>>, %arg5: memref<256x32xf32, #tpu.memory_space<vmem>>) attributes {dimension_semantics = [#tpu.dimension_semantics<parallel>], iteration_bounds = array<i64: 1>, scalar_prefetch = 0 : i64, scratch_operands = 0 : i64, tpu.core_type = #tpu.core_type<tc>, window_params = [{transform_indices = @transform_0, window_bounds = array<i64: 256, 32>}, {transform_indices = @transform_1, window_bounds = array<i64: 256, 32>}, {pipeline_mode = #tpu.pipeline_mode<synchronous>, transform_indices = @transform_2, window_bounds = array<i64: 1, 32>}, {pipeline_mode = #tpu.pipeline_mode<synchronous>, transform_indices = @transform_3, window_bounds = array<i64: 1, 32>}, {transform_indices = @transform_4, window_bounds = array<i64: 256, 32>}]} {
    %c0 = arith.constant 0 : index
    %c0_0 = arith.constant 0 : index
    %0 = vector.load %arg1[%c0, %c0_0] : memref<256x32xf32, #tpu.memory_space<vmem>>, vector<256x32xf32>
    %c0_1 = arith.constant 0 : index
    %c0_2 = arith.constant 0 : index
    %1 = vector.load %arg2[%c0_1, %c0_2] : memref<256x32xf32, #tpu.memory_space<vmem>>, vector<256x32xf32>
    %2 = arith.addf %0, %1 : vector<256x32xf32>
    %cst = arith.constant dense<0.000000e+00> : vector<256xf32>
    %3 = vector.multi_reduction <add>, %2, %cst [1] : vector<256x32xf32> to vector<256xf32>
    %4 = vector.shape_cast %3 : vector<256xf32> to vector<256x1xf32>
    %cst_3 = arith.constant 3.200000e+01 : f32
    %5 = vector.broadcast %cst_3 : f32 to vector<256x1xf32>
    %6 = arith.divf %4, %5 : vector<256x1xf32>
    %7 = vector.broadcast %6 : vector<256x1xf32> to vector<256x32xf32>
    %8 = arith.subf %2, %7 : vector<256x32xf32>
    %9 = arith.mulf %8, %8 : vector<256x32xf32>
    %cst_4 = arith.constant dense<0.000000e+00> : vector<256xf32>
    %10 = vector.multi_reduction <add>, %9, %cst_4 [1] : vector<256x32xf32> to vector<256xf32>
    %11 = vector.shape_cast %10 : vector<256xf32> to vector<256x1xf32>
    %cst_5 = arith.constant 3.200000e+01 : f32
    %12 = vector.broadcast %cst_5 : f32 to vector<256x1xf32>
    %13 = arith.divf %11, %12 : vector<256x1xf32>
    %cst_6 = arith.constant 9.99999974E-6 : f32
    %14 = vector.broadcast %cst_6 : f32 to vector<256x1xf32>
    %15 = arith.addf %13, %14 : vector<256x1xf32>
    %16 = math.rsqrt %15 : vector<256x1xf32>
    %17 = vector.broadcast %16 : vector<256x1xf32> to vector<256x32xf32>
    %18 = arith.mulf %8, %17 : vector<256x32xf32>
    %c0_7 = arith.constant 0 : index
    %c0_8 = arith.constant 0 : index
    %19 = vector.load %arg3[%c0_7, %c0_8] : memref<1x32xf32, #tpu.memory_space<vmem>>, vector<1x32xf32>
    %20 = vector.broadcast %19 : vector<1x32xf32> to vector<256x32xf32>
    %21 = arith.mulf %18, %20 : vector<256x32xf32>
    %c0_9 = arith.constant 0 : index
    %c0_10 = arith.constant 0 : index
    %22 = vector.load %arg4[%c0_9, %c0_10] : memref<1x32xf32, #tpu.memory_space<vmem>>, vector<1x32xf32>
    %23 = vector.broadcast %22 : vector<1x32xf32> to vector<256x32xf32>
    %24 = arith.addf %21, %23 : vector<256x32xf32>
    %c0_11 = arith.constant 0 : index
    %c0_12 = arith.constant 0 : index
    %25 = vector.load %arg5[%c0_11, %c0_12] : memref<256x32xf32, #tpu.memory_space<vmem>>, vector<256x32xf32>
    tpu.vector_store %arg5[%c0_11, %c0_12], %24 {strides = array<i32>} : memref<256x32xf32, #tpu.memory_space<vmem>>, vector<256x32xf32>,
    return
  }
  func.func @transform_0(%arg0: i32) -> (i32, i32) {
    %c0_i32 = arith.constant 0 : i32
    %c0_i32_0 = arith.constant 0 : i32
    return %arg0, %c0_i32 : i32, i32
  }
  func.func @transform_1(%arg0: i32) -> (i32, i32) {
    %c0_i32 = arith.constant 0 : i32
    %c0_i32_0 = arith.constant 0 : i32
    return %arg0, %c0_i32 : i32, i32
  }
  func.func @transform_2(%arg0: i32) -> (i32, i32) {
    %c0_i32 = arith.constant 0 : i32
    %c0_i32_0 = arith.constant 0 : i32
    %c0_i32_1 = arith.constant 0 : i32
    return %c0_i32, %c0_i32_0 : i32, i32
  }
  func.func @transform_3(%arg0: i32) -> (i32, i32) {
    %c0_i32 = arith.constant 0 : i32
    %c0_i32_0 = arith.constant 0 : i32
    %c0_i32_1 = arith.constant 0 : i32
    return %c0_i32, %c0_i32_0 : i32, i32
  }
  func.func @transform_4(%arg0: i32) -> (i32, i32) {
    %c0_i32 = arith.constant 0 : i32
    %c0_i32_0 = arith.constant 0 : i32
    return %arg0, %c0_i32 : i32, i32
  }
}

module attributes {stable_mosaic.version = 11 : i64} {
  func.func @_add_kernel(%arg0: i32, %arg1: memref<64x128xf32, #tpu.memory_space<vmem>>, %arg2: memref<64x128xf32, #tpu.memory_space<vmem>>, %arg3: memref<64x128xf32, #tpu.memory_space<vmem>>) attributes {dimension_semantics = [#tpu.dimension_semantics<parallel>], iteration_bounds = array<i64: 1>, scalar_prefetch = 0 : i64, scratch_operands = 0 : i64, tpu.core_type = #tpu.core_type<tc>, window_params = [{transform_indices = @transform_0, window_bounds = array<i64: 64, 128>}, {transform_indices = @transform_1, window_bounds = array<i64: 64, 128>}, {transform_indices = @transform_2, window_bounds = array<i64: 64, 128>}]} {
    %c0 = arith.constant 0 : index
    %c0_0 = arith.constant 0 : index
    %0 = vector.load %arg1[%c0, %c0_0] : memref<64x128xf32, #tpu.memory_space<vmem>>, vector<64x128xf32>
    %c0_1 = arith.constant 0 : index
    %c0_2 = arith.constant 0 : index
    %1 = vector.load %arg2[%c0_1, %c0_2] : memref<64x128xf32, #tpu.memory_space<vmem>>, vector<64x128xf32>
    %2 = arith.addf %0, %1 : vector<64x128xf32>
    %c0_3 = arith.constant 0 : index
    %c0_4 = arith.constant 0 : index
    %3 = vector.load %arg3[%c0_3, %c0_4] : memref<64x128xf32, #tpu.memory_space<vmem>>, vector<64x128xf32>
    tpu.vector_store %arg3[%c0_3, %c0_4], %2 {strides = array<i32>} : memref<64x128xf32, #tpu.memory_space<vmem>>, vector<64x128xf32>,
    return
  }
  func.func @transform_0(%arg0: i32) -> (i32, i32) {
    %c0_i32 = arith.constant 0 : i32
    %c0_i32_0 = arith.constant 0 : i32
    return %arg0, %c0_i32 : i32, i32
  }
  func.func @transform_1(%arg0: i32) -> (i32, i32) {
    %c0_i32 = arith.constant 0 : i32
    %c0_i32_0 = arith.constant 0 : i32
    return %arg0, %c0_i32 : i32, i32
  }
  func.func @transform_2(%arg0: i32) -> (i32, i32) {
    %c0_i32 = arith.constant 0 : i32
    %c0_i32_0 = arith.constant 0 : i32
    return %arg0, %c0_i32 : i32, i32
  }
}

module attributes {stable_mosaic.version = 11 : i64} {
  func.func @kernel(%arg0: i32, %arg1: i32, %arg2: i32, %arg3: memref<128x128xbf16, #tpu.memory_space<vmem>>, %arg4: memref<128x128xbf16, #tpu.memory_space<vmem>>, %arg5: memref<1x128xf32, #tpu.memory_space<vmem>>, %arg6: memref<128x128xf32, #tpu.memory_space<vmem>>, %arg7: memref<128x128xf32, #tpu.memory_space<vmem>>) attributes {dimension_semantics = [#tpu.dimension_semantics<parallel>, #tpu.dimension_semantics<parallel>, #tpu.dimension_semantics<arbitrary>], iteration_bounds = array<i64: 1, 1, 1>, scalar_prefetch = 0 : i64, scratch_operands = 1 : i64, tpu.core_type = #tpu.core_type<tc>, window_params = [{transform_indices = @transform_0, window_bounds = array<i64: 128, 128>}, {transform_indices = @transform_1, window_bounds = array<i64: 128, 128>}, {transform_indices = @transform_2, window_bounds = array<i64: 1, 128>}, {transform_indices = @transform_3, window_bounds = array<i64: 128, 128>}]} {
    %c0_i32 = arith.constant 0 : i32
    %0 = arith.cmpi eq, %arg2, %c0_i32 : i32
    %1 = arith.extui %0 : i1 to i32
    %c0_i32_0 = arith.constant 0 : i32
    %2 = arith.cmpi ne, %1, %c0_i32_0 : i32
    scf.if %2 {
      %cst_10 = arith.constant 0.000000e+00 : f32
      %12 = vector.broadcast %cst_10 : f32 to vector<128x128xf32>
      %c0_11 = arith.constant 0 : index
      %c0_12 = arith.constant 0 : index
      %13 = vector.load %arg7[%c0_11, %c0_12] : memref<128x128xf32, #tpu.memory_space<vmem>>, vector<128x128xf32>
      tpu.vector_store %arg7[%c0_11, %c0_12], %12 {strides = array<i32>} : memref<128x128xf32, #tpu.memory_space<vmem>>, vector<128x128xf32>,
    } else {
    }
    %c0 = arith.constant 0 : index
    %c0_1 = arith.constant 0 : index
    %3 = vector.load %arg7[%c0, %c0_1] : memref<128x128xf32, #tpu.memory_space<vmem>>, vector<128x128xf32>
    %c0_2 = arith.constant 0 : index
    %c0_3 = arith.constant 0 : index
    %4 = vector.load %arg3[%c0_2, %c0_3] : memref<128x128xbf16, #tpu.memory_space<vmem>>, vector<128x128xbf16>
    %c0_4 = arith.constant 0 : index
    %c0_5 = arith.constant 0 : index
    %5 = vector.load %arg4[%c0_4, %c0_5] : memref<128x128xbf16, #tpu.memory_space<vmem>>, vector<128x128xbf16>
    %cst = arith.constant dense<0.000000e+00> : vector<128x128xf32>
    %6 = tpu.matmul %4, %5, %cst {dimension_numbers = #tpu.dot_dimension_numbers<[1], [0], [0], [1], [0, 0, 1, 1], [], []>} : vector<128x128xbf16>, vector<128x128xbf16>, vector<128x128xf32> -> vector<128x128xf32>
    %7 = arith.addf %3, %6 : vector<128x128xf32>
    %c0_6 = arith.constant 0 : index
    %c0_7 = arith.constant 0 : index
    %8 = vector.load %arg7[%c0_6, %c0_7] : memref<128x128xf32, #tpu.memory_space<vmem>>, vector<128x128xf32>
    tpu.vector_store %arg7[%c0_6, %c0_7], %7 {strides = array<i32>} : memref<128x128xf32, #tpu.memory_space<vmem>>, vector<128x128xf32>,
    %c0_i32_8 = arith.constant 0 : i32
    %9 = arith.cmpi eq, %arg2, %c0_i32_8 : i32
    %10 = arith.extui %9 : i1 to i32
    %c0_i32_9 = arith.constant 0 : i32
    %11 = arith.cmpi ne, %10, %c0_i32_9 : i32
    scf.if %11 {
      %c0_10 = arith.constant 0 : index
      %c0_11 = arith.constant 0 : index
      %12 = vector.load %arg7[%c0_10, %c0_11] : memref<128x128xf32, #tpu.memory_space<vmem>>, vector<128x128xf32>
      %c0_12 = arith.constant 0 : index
      %c0_13 = arith.constant 0 : index
      %13 = vector.load %arg5[%c0_12, %c0_13] : memref<1x128xf32, #tpu.memory_space<vmem>>, vector<1x128xf32>
      %14 = vector.broadcast %13 : vector<1x128xf32> to vector<128x128xf32>
      %15 = arith.addf %12, %14 : vector<128x128xf32>
      %c0_14 = arith.constant 0 : index
      %c0_15 = arith.constant 0 : index
      %16 = vector.load %arg6[%c0_14, %c0_15] : memref<128x128xf32, #tpu.memory_space<vmem>>, vector<128x128xf32>
      tpu.vector_store %arg6[%c0_14, %c0_15], %15 {strides = array<i32>} : memref<128x128xf32, #tpu.memory_space<vmem>>, vector<128x128xf32>,
    } else {
    }
    return
  }
  func.func @transform_0(%arg0: i32, %arg1: i32, %arg2: i32) -> (i32, i32) {
    %c0_i32 = arith.constant 0 : i32
    return %arg0, %arg2 : i32, i32
  }
  func.func @transform_1(%arg0: i32, %arg1: i32, %arg2: i32) -> (i32, i32) {
    %c0_i32 = arith.constant 0 : i32
    return %arg2, %arg1 : i32, i32
  }
  func.func @transform_2(%arg0: i32, %arg1: i32, %arg2: i32) -> (i32, i32) {
    %c0_i32 = arith.constant 0 : i32
    %c0_i32_0 = arith.constant 0 : i32
    return %c0_i32, %arg1 : i32, i32
  }
  func.func @transform_3(%arg0: i32, %arg1: i32, %arg2: i32) -> (i32, i32) {
    %c0_i32 = arith.constant 0 : i32
    return %arg0, %arg1 : i32, i32
  }
}

module attributes {stable_mosaic.version = 11 : i64} {
  func.func @kernel(%arg0: i32, %arg1: memref<1x64x32xbf16, #tpu.memory_space<vmem>>, %arg2: memref<1x64x32xbf16, #tpu.memory_space<vmem>>, %arg3: memref<1x64x32xbf16, #tpu.memory_space<vmem>>, %arg4: memref<1x64x32xf32, #tpu.memory_space<vmem>>) attributes {dimension_semantics = [#tpu.dimension_semantics<parallel>], iteration_bounds = array<i64: 2>, scalar_prefetch = 0 : i64, scratch_operands = 0 : i64, tpu.core_type = #tpu.core_type<tc>, window_params = [{transform_indices = @transform_0, window_bounds = array<i64: 1, 64, 32>}, {transform_indices = @transform_1, window_bounds = array<i64: 1, 64, 32>}, {transform_indices = @transform_2, window_bounds = array<i64: 1, 64, 32>}, {transform_indices = @transform_3, window_bounds = array<i64: 1, 64, 32>}]} {
    %c0 = arith.constant 0 : index
    %c0_0 = arith.constant 0 : index
    %c0_1 = arith.constant 0 : index
    %0 = vector.load %arg1[%c0, %c0_0, %c0_1] : memref<1x64x32xbf16, #tpu.memory_space<vmem>>, vector<1x64x32xbf16>
    %1 = vector.shape_cast %0 : vector<1x64x32xbf16> to vector<64x32xbf16>
    %c0_2 = arith.constant 0 : index
    %c0_3 = arith.constant 0 : index
    %c0_4 = arith.constant 0 : index
    %2 = vector.load %arg2[%c0_2, %c0_3, %c0_4] : memref<1x64x32xbf16, #tpu.memory_space<vmem>>, vector<1x64x32xbf16>
    %3 = vector.shape_cast %2 : vector<1x64x32xbf16> to vector<64x32xbf16>
    %c0_5 = arith.constant 0 : index
    %c0_6 = arith.constant 0 : index
    %c0_7 = arith.constant 0 : index
    %4 = vector.load %arg3[%c0_5, %c0_6, %c0_7] : memref<1x64x32xbf16, #tpu.memory_space<vmem>>, vector<1x64x32xbf16>
    %5 = vector.shape_cast %4 : vector<1x64x32xbf16> to vector<64x32xbf16>
    %6 = vector.extract_strided_slice %1 {offsets = [0, 0], sizes = [64, 8], strides = [1, 1]} : vector<64x32xbf16> to vector<64x8xbf16>
    %7 = vector.extract_strided_slice %3 {offsets = [0, 0], sizes = [64, 8], strides = [1, 1]} : vector<64x32xbf16> to vector<64x8xbf16>
    %8 = tpu.transpose %7, [1, 0] : vector<64x8xbf16> -> vector<8x64xbf16>
    %cst = arith.constant dense<0.000000e+00> : vector<64x64xf32>
    %9 = tpu.matmul %6, %8, %cst {dimension_numbers = #tpu.dot_dimension_numbers<[1], [0], [0], [1], [0, 0, 1, 1], [], []>} : vector<64x8xbf16>, vector<8x64xbf16>, vector<64x64xf32> -> vector<64x64xf32>
    %cst_8 = arith.constant 0.353553385 : f32
    %10 = vector.broadcast %cst_8 : f32 to vector<64x64xf32>
    %11 = arith.mulf %9, %10 : vector<64x64xf32>
    %cst_9 = arith.constant dense<0xFF800000> : vector<64xf32>
    %12 = vector.multi_reduction <maximumf>, %11, %cst_9 [1] : vector<64x64xf32> to vector<64xf32>
    %13 = vector.shape_cast %12 : vector<64xf32> to vector<64x1xf32>
    %14 = vector.broadcast %13 : vector<64x1xf32> to vector<64x64xf32>
    %15 = arith.subf %11, %14 : vector<64x64xf32>
    %16 = math.exp %15 : vector<64x64xf32>
    %cst_10 = arith.constant dense<0.000000e+00> : vector<64xf32>
    %17 = vector.multi_reduction <add>, %16, %cst_10 [1] : vector<64x64xf32> to vector<64xf32>
    %18 = vector.shape_cast %17 : vector<64xf32> to vector<64x1xf32>
    %19 = tpu.reciprocal %18 {approx = true} : vector<64x1xf32> -> vector<64x1xf32>
    %20 = vector.broadcast %19 : vector<64x1xf32> to vector<64x64xf32>
    %21 = arith.mulf %16, %20 : vector<64x64xf32>
    %22 = arith.truncf %21 : vector<64x64xf32> to vector<64x64xbf16>
    %23 = vector.extract_strided_slice %5 {offsets = [0, 0], sizes = [64, 8], strides = [1, 1]} : vector<64x32xbf16> to vector<64x8xbf16>
    %cst_11 = arith.constant dense<0.000000e+00> : vector<64x8xf32>
    %24 = tpu.matmul %22, %23, %cst_11 {dimension_numbers = #tpu.dot_dimension_numbers<[1], [0], [0], [1], [0, 0, 1, 1], [], []>} : vector<64x64xbf16>, vector<64x8xbf16>, vector<64x8xf32> -> vector<64x8xf32>
    %25 = vector.extract_strided_slice %1 {offsets = [0, 8], sizes = [64, 8], strides = [1, 1]} : vector<64x32xbf16> to vector<64x8xbf16>
    %26 = vector.extract_strided_slice %3 {offsets = [0, 8], sizes = [64, 8], strides = [1, 1]} : vector<64x32xbf16> to vector<64x8xbf16>
    %27 = tpu.transpose %26, [1, 0] : vector<64x8xbf16> -> vector<8x64xbf16>
    %cst_12 = arith.constant dense<0.000000e+00> : vector<64x64xf32>
    %28 = tpu.matmul %25, %27, %cst_12 {dimension_numbers = #tpu.dot_dimension_numbers<[1], [0], [0], [1], [0, 0, 1, 1], [], []>} : vector<64x8xbf16>, vector<8x64xbf16>, vector<64x64xf32> -> vector<64x64xf32>
    %cst_13 = arith.constant 0.353553385 : f32
    %29 = vector.broadcast %cst_13 : f32 to vector<64x64xf32>
    %30 = arith.mulf %28, %29 : vector<64x64xf32>
    %cst_14 = arith.constant dense<0xFF800000> : vector<64xf32>
    %31 = vector.multi_reduction <maximumf>, %30, %cst_14 [1] : vector<64x64xf32> to vector<64xf32>
    %32 = vector.shape_cast %31 : vector<64xf32> to vector<64x1xf32>
    %33 = vector.broadcast %32 : vector<64x1xf32> to vector<64x64xf32>
    %34 = arith.subf %30, %33 : vector<64x64xf32>
    %35 = math.exp %34 : vector<64x64xf32>
    %cst_15 = arith.constant dense<0.000000e+00> : vector<64xf32>
    %36 = vector.multi_reduction <add>, %35, %cst_15 [1] : vector<64x64xf32> to vector<64xf32>
    %37 = vector.shape_cast %36 : vector<64xf32> to vector<64x1xf32>
    %38 = tpu.reciprocal %37 {approx = true} : vector<64x1xf32> -> vector<64x1xf32>
    %39 = vector.broadcast %38 : vector<64x1xf32> to vector<64x64xf32>
    %40 = arith.mulf %35, %39 : vector<64x64xf32>
    %41 = arith.truncf %40 : vector<64x64xf32> to vector<64x64xbf16>
    %42 = vector.extract_strided_slice %5 {offsets = [0, 8], sizes = [64, 8], strides = [1, 1]} : vector<64x32xbf16> to vector<64x8xbf16>
    %cst_16 = arith.constant dense<0.000000e+00> : vector<64x8xf32>
    %43 = tpu.matmul %41, %42, %cst_16 {dimension_numbers = #tpu.dot_dimension_numbers<[1], [0], [0], [1], [0, 0, 1, 1], [], []>} : vector<64x64xbf16>, vector<64x8xbf16>, vector<64x8xf32> -> vector<64x8xf32>
    %44 = vector.extract_strided_slice %1 {offsets = [0, 16], sizes = [64, 8], strides = [1, 1]} : vector<64x32xbf16> to vector<64x8xbf16>
    %45 = vector.extract_strided_slice %3 {offsets = [0, 16], sizes = [64, 8], strides = [1, 1]} : vector<64x32xbf16> to vector<64x8xbf16>
    %46 = tpu.transpose %45, [1, 0] : vector<64x8xbf16> -> vector<8x64xbf16>
    %cst_17 = arith.constant dense<0.000000e+00> : vector<64x64xf32>
    %47 = tpu.matmul %44, %46, %cst_17 {dimension_numbers = #tpu.dot_dimension_numbers<[1], [0], [0], [1], [0, 0, 1, 1], [], []>} : vector<64x8xbf16>, vector<8x64xbf16>, vector<64x64xf32> -> vector<64x64xf32>
    %cst_18 = arith.constant 0.353553385 : f32
    %48 = vector.broadcast %cst_18 : f32 to vector<64x64xf32>
    %49 = arith.mulf %47, %48 : vector<64x64xf32>
    %cst_19 = arith.constant dense<0xFF800000> : vector<64xf32>
    %50 = vector.multi_reduction <maximumf>, %49, %cst_19 [1] : vector<64x64xf32> to vector<64xf32>
    %51 = vector.shape_cast %50 : vector<64xf32> to vector<64x1xf32>
    %52 = vector.broadcast %51 : vector<64x1xf32> to vector<64x64xf32>
    %53 = arith.subf %49, %52 : vector<64x64xf32>
    %54 = math.exp %53 : vector<64x64xf32>
    %cst_20 = arith.constant dense<0.000000e+00> : vector<64xf32>
    %55 = vector.multi_reduction <add>, %54, %cst_20 [1] : vector<64x64xf32> to vector<64xf32>
    %56 = vector.shape_cast %55 : vector<64xf32> to vector<64x1xf32>
    %57 = tpu.reciprocal %56 {approx = true} : vector<64x1xf32> -> vector<64x1xf32>
    %58 = vector.broadcast %57 : vector<64x1xf32> to vector<64x64xf32>
    %59 = arith.mulf %54, %58 : vector<64x64xf32>
    %60 = arith.truncf %59 : vector<64x64xf32> to vector<64x64xbf16>
    %61 = vector.extract_strided_slice %5 {offsets = [0, 16], sizes = [64, 8], strides = [1, 1]} : vector<64x32xbf16> to vector<64x8xbf16>
    %cst_21 = arith.constant dense<0.000000e+00> : vector<64x8xf32>
    %62 = tpu.matmul %60, %61, %cst_21 {dimension_numbers = #tpu.dot_dimension_numbers<[1], [0], [0], [1], [0, 0, 1, 1], [], []>} : vector<64x64xbf16>, vector<64x8xbf16>, vector<64x8xf32> -> vector<64x8xf32>
    %63 = vector.extract_strided_slice %1 {offsets = [0, 24], sizes = [64, 8], strides = [1, 1]} : vector<64x32xbf16> to vector<64x8xbf16>
    %64 = vector.extract_strided_slice %3 {offsets = [0, 24], sizes = [64, 8], strides = [1, 1]} : vector<64x32xbf16> to vector<64x8xbf16>
    %65 = tpu.transpose %64, [1, 0] : vector<64x8xbf16> -> vector<8x64xbf16>
    %cst_22 = arith.constant dense<0.000000e+00> : vector<64x64xf32>
    %66 = tpu.matmul %63, %65, %cst_22 {dimension_numbers = #tpu.dot_dimension_numbers<[1], [0], [0], [1], [0, 0, 1, 1], [], []>} : vector<64x8xbf16>, vector<8x64xbf16>, vector<64x64xf32> -> vector<64x64xf32>
    %cst_23 = arith.constant 0.353553385 : f32
    %67 = vector.broadcast %cst_23 : f32 to vector<64x64xf32>
    %68 = arith.mulf %66, %67 : vector<64x64xf32>
    %cst_24 = arith.constant dense<0xFF800000> : vector<64xf32>
    %69 = vector.multi_reduction <maximumf>, %68, %cst_24 [1] : vector<64x64xf32> to vector<64xf32>
    %70 = vector.shape_cast %69 : vector<64xf32> to vector<64x1xf32>
    %71 = vector.broadcast %70 : vector<64x1xf32> to vector<64x64xf32>
    %72 = arith.subf %68, %71 : vector<64x64xf32>
    %73 = math.exp %72 : vector<64x64xf32>
    %cst_25 = arith.constant dense<0.000000e+00> : vector<64xf32>
    %74 = vector.multi_reduction <add>, %73, %cst_25 [1] : vector<64x64xf32> to vector<64xf32>
    %75 = vector.shape_cast %74 : vector<64xf32> to vector<64x1xf32>
    %76 = tpu.reciprocal %75 {approx = true} : vector<64x1xf32> -> vector<64x1xf32>
    %77 = vector.broadcast %76 : vector<64x1xf32> to vector<64x64xf32>
    %78 = arith.mulf %73, %77 : vector<64x64xf32>
    %79 = arith.truncf %78 : vector<64x64xf32> to vector<64x64xbf16>
    %80 = vector.extract_strided_slice %5 {offsets = [0, 24], sizes = [64, 8], strides = [1, 1]} : vector<64x32xbf16> to vector<64x8xbf16>
    %cst_26 = arith.constant dense<0.000000e+00> : vector<64x8xf32>
    %81 = tpu.matmul %79, %80, %cst_26 {dimension_numbers = #tpu.dot_dimension_numbers<[1], [0], [0], [1], [0, 0, 1, 1], [], []>} : vector<64x64xbf16>, vector<64x8xbf16>, vector<64x8xf32> -> vector<64x8xf32>
    %82 = tpu.concatenate %24, %43, %62, %81 in 1 : vector<64x8xf32>, vector<64x8xf32>, vector<64x8xf32>, vector<64x8xf32> -> vector<64x32xf32>
    %c0_27 = arith.constant 0 : index
    %c0_28 = arith.constant 0 : index
    %c0_29 = arith.constant 0 : index
    %83 = vector.load %arg4[%c0_27, %c0_28, %c0_29] : memref<1x64x32xf32, #tpu.memory_space<vmem>>, vector<1x64x32xf32>
    %84 = vector.shape_cast %83 : vector<1x64x32xf32> to vector<64x32xf32>
    %85 = vector.shape_cast %82 : vector<64x32xf32> to vector<1x64x32xf32>
    tpu.vector_store %arg4[%c0_27, %c0_28, %c0_29], %85 {strides = array<i32>} : memref<1x64x32xf32, #tpu.memory_space<vmem>>, vector<1x64x32xf32>,
    return
  }
  func.func @transform_0(%arg0: i32) -> (i32, i32, i32) {
    %c0_i32 = arith.constant 0 : i32
    %c0_i32_0 = arith.constant 0 : i32
    %c0_i32_1 = arith.constant 0 : i32
    return %arg0, %c0_i32, %c0_i32_0 : i32, i32, i32
  }
  func.func @transform_1(%arg0: i32) -> (i32, i32, i32) {
    %c0_i32 = arith.constant 0 : i32
    %c0_i32_0 = arith.constant 0 : i32
    %c0_i32_1 = arith.constant 0 : i32
    return %arg0, %c0_i32, %c0_i32_0 : i32, i32, i32
  }
  func.func @transform_2(%arg0: i32) -> (i32, i32, i32) {
    %c0_i32 = arith.constant 0 : i32
    %c0_i32_0 = arith.constant 0 : i32
    %c0_i32_1 = arith.constant 0 : i32
    return %arg0, %c0_i32, %c0_i32_0 : i32, i32, i32
  }
  func.func @transform_3(%arg0: i32) -> (i32, i32, i32) {
    %c0_i32 = arith.constant 0 : i32
    %c0_i32_0 = arith.constant 0 : i32
    %c0_i32_1 = arith.constant 0 : i32
    return %arg0, %c0_i32, %c0_i32_0 : i32, i32, i32
  }
}

module attributes {stable_mosaic.version = 11 : i64} {
  func.func @kernel(%arg0: i32, %arg1: memref<128x64xf32, #tpu.memory_space<vmem>>, %arg2: memref<128x64xf32, #tpu.memory_space<vmem>>, %arg3: memref<1x64xf32, #tpu.memory_space<vmem>>, %arg4: memref<1x64xf32, #tpu.memory_space<vmem>>, %arg5: memref<128x64xf32, #tpu.memory_space<vmem>>) attributes {dimension_semantics = [#tpu.dimension_semantics<parallel>], iteration_bounds = array<i64: 1>, scalar_prefetch = 0 : i64, scratch_operands = 0 : i64, tpu.core_type = #tpu.core_type<tc>, window_params = [{transform_indices = @transform_0, window_bounds = array<i64: 128, 64>}, {transform_indices = @transform_1, window_bounds = array<i64: 128, 64>}, {pipeline_mode = #tpu.pipeline_mode<synchronous>, transform_indices = @transform_2, window_bounds = array<i64: 1, 64>}, {pipeline_mode = #tpu.pipeline_mode<synchronous>, transform_indices = @transform_3, window_bounds = array<i64: 1, 64>}, {transform_indices = @transform_4, window_bounds = array<i64: 128, 64>}]} {
    %c0 = arith.constant 0 : index
    %c0_0 = arith.constant 0 : index
    %0 = vector.load %arg1[%c0, %c0_0] : memref<128x64xf32, #tpu.memory_space<vmem>>, vector<128x64xf32>
    %c0_1 = arith.constant 0 : index
    %c0_2 = arith.constant 0 : index
    %1 = vector.load %arg2[%c0_1, %c0_2] : memref<128x64xf32, #tpu.memory_space<vmem>>, vector<128x64xf32>
    %2 = arith.addf %0, %1 : vector<128x64xf32>
    %cst = arith.constant dense<0.000000e+00> : vector<128xf32>
    %3 = vector.multi_reduction <add>, %2, %cst [1] : vector<128x64xf32> to vector<128xf32>
    %4 = vector.shape_cast %3 : vector<128xf32> to vector<128x1xf32>
    %cst_3 = arith.constant 6.400000e+01 : f32
    %5 = vector.broadcast %cst_3 : f32 to vector<128x1xf32>
    %6 = arith.divf %4, %5 : vector<128x1xf32>
    %7 = vector.broadcast %6 : vector<128x1xf32> to vector<128x64xf32>
    %8 = arith.subf %2, %7 : vector<128x64xf32>
    %9 = arith.mulf %8, %8 : vector<128x64xf32>
    %cst_4 = arith.constant dense<0.000000e+00> : vector<128xf32>
    %10 = vector.multi_reduction <add>, %9, %cst_4 [1] : vector<128x64xf32> to vector<128xf32>
    %11 = vector.shape_cast %10 : vector<128xf32> to vector<128x1xf32>
    %cst_5 = arith.constant 6.400000e+01 : f32
    %12 = vector.broadcast %cst_5 : f32 to vector<128x1xf32>
    %13 = arith.divf %11, %12 : vector<128x1xf32>
    %cst_6 = arith.constant 9.99999974E-6 : f32
    %14 = vector.broadcast %cst_6 : f32 to vector<128x1xf32>
    %15 = arith.addf %13, %14 : vector<128x1xf32>
    %16 = math.rsqrt %15 : vector<128x1xf32>
    %17 = vector.broadcast %16 : vector<128x1xf32> to vector<128x64xf32>
    %18 = arith.mulf %8, %17 : vector<128x64xf32>
    %c0_7 = arith.constant 0 : index
    %c0_8 = arith.constant 0 : index
    %19 = vector.load %arg3[%c0_7, %c0_8] : memref<1x64xf32, #tpu.memory_space<vmem>>, vector<1x64xf32>
    %20 = vector.broadcast %19 : vector<1x64xf32> to vector<128x64xf32>
    %21 = arith.mulf %18, %20 : vector<128x64xf32>
    %c0_9 = arith.constant 0 : index
    %c0_10 = arith.constant 0 : index
    %22 = vector.load %arg4[%c0_9, %c0_10] : memref<1x64xf32, #tpu.memory_space<vmem>>, vector<1x64xf32>
    %23 = vector.broadcast %22 : vector<1x64xf32> to vector<128x64xf32>
    %24 = arith.addf %21, %23 : vector<128x64xf32>
    %c0_11 = arith.constant 0 : index
    %c0_12 = arith.constant 0 : index
    %25 = vector.load %arg5[%c0_11, %c0_12] : memref<128x64xf32, #tpu.memory_space<vmem>>, vector<128x64xf32>
    tpu.vector_store %arg5[%c0_11, %c0_12], %24 {strides = array<i32>} : memref<128x64xf32, #tpu.memory_space<vmem>>, vector<128x64xf32>,
    return
  }
  func.func @transform_0(%arg0: i32) -> (i32, i32) {
    %c0_i32 = arith.constant 0 : i32
    %c0_i32_0 = arith.constant 0 : i32
    return %arg0, %c0_i32 : i32, i32
  }
  func.func @transform_1(%arg0: i32) -> (i32, i32) {
    %c0_i32 = arith.constant 0 : i32
    %c0_i32_0 = arith.constant 0 : i32
    return %arg0, %c0_i32 : i32, i32
  }
  func.func @transform_2(%arg0: i32) -> (i32, i32) {
    %c0_i32 = arith.constant 0 : i32
    %c0_i32_0 = arith.constant 0 : i32
    %c0_i32_1 = arith.constant 0 : i32
    return %c0_i32, %c0_i32_0 : i32, i32
  }
  func.func @transform_3(%arg0: i32) -> (i32, i32) {
    %c0_i32 = arith.constant 0 : i32
    %c0_i32_0 = arith.constant 0 : i32
    %c0_i32_1 = arith.constant 0 : i32
    return %c0_i32, %c0_i32_0 : i32, i32
  }
  func.func @transform_4(%arg0: i32) -> (i32, i32) {
    %c0_i32 = arith.constant 0 : i32
    %c0_i32_0 = arith.constant 0 : i32
    return %arg0, %c0_i32 : i32, i32
  }
}

module attributes {stable_mosaic.version = 11 : i64} {
  func.func @kernel(%arg0: i32, %arg1: i32, %arg2: i32, %arg3: memref<128x128xbf16, #tpu.memory_space<vmem>>, %arg4: memref<128x128xbf16, #tpu.memory_space<vmem>>, %arg5: memref<1x128xf32, #tpu.memory_space<vmem>>, %arg6: memref<128x128xf32, #tpu.memory_space<vmem>>, %arg7: memref<128x128xf32, #tpu.memory_space<vmem>>) attributes {dimension_semantics = [#tpu.dimension_semantics<parallel>, #tpu.dimension_semantics<parallel>, #tpu.dimension_semantics<arbitrary>], iteration_bounds = array<i64: 1, 1, 1>, scalar_prefetch = 0 : i64, scratch_operands = 1 : i64, tpu.core_type = #tpu.core_type<tc>, window_params = [{transform_indices = @transform_0, window_bounds = array<i64: 128, 128>}, {transform_indices = @transform_1, window_bounds = array<i64: 128, 128>}, {transform_indices = @transform_2, window_bounds = array<i64: 1, 128>}, {transform_indices = @transform_3, window_bounds = array<i64: 128, 128>}]} {
    %c0_i32 = arith.constant 0 : i32
    %0 = arith.cmpi eq, %arg2, %c0_i32 : i32
    %1 = arith.extui %0 : i1 to i32
    %c0_i32_0 = arith.constant 0 : i32
    %2 = arith.cmpi ne, %1, %c0_i32_0 : i32
    scf.if %2 {
      %cst_10 = arith.constant 0.000000e+00 : f32
      %12 = vector.broadcast %cst_10 : f32 to vector<128x128xf32>
      %c0_11 = arith.constant 0 : index
      %c0_12 = arith.constant 0 : index
      %13 = vector.load %arg7[%c0_11, %c0_12] : memref<128x128xf32, #tpu.memory_space<vmem>>, vector<128x128xf32>
      tpu.vector_store %arg7[%c0_11, %c0_12], %12 {strides = array<i32>} : memref<128x128xf32, #tpu.memory_space<vmem>>, vector<128x128xf32>,
    } else {
    }
    %c0 = arith.constant 0 : index
    %c0_1 = arith.constant 0 : index
    %3 = vector.load %arg7[%c0, %c0_1] : memref<128x128xf32, #tpu.memory_space<vmem>>, vector<128x128xf32>
    %c0_2 = arith.constant 0 : index
    %c0_3 = arith.constant 0 : index
    %4 = vector.load %arg3[%c0_2, %c0_3] : memref<128x128xbf16, #tpu.memory_space<vmem>>, vector<128x128xbf16>
    %c0_4 = arith.constant 0 : index
    %c0_5 = arith.constant 0 : index
    %5 = vector.load %arg4[%c0_4, %c0_5] : memref<128x128xbf16, #tpu.memory_space<vmem>>, vector<128x128xbf16>
    %cst = arith.constant dense<0.000000e+00> : vector<128x128xf32>
    %6 = tpu.matmul %4, %5, %cst {dimension_numbers = #tpu.dot_dimension_numbers<[1], [0], [0], [1], [0, 0, 1, 1], [], []>} : vector<128x128xbf16>, vector<128x128xbf16>, vector<128x128xf32> -> vector<128x128xf32>
    %7 = arith.addf %3, %6 : vector<128x128xf32>
    %c0_6 = arith.constant 0 : index
    %c0_7 = arith.constant 0 : index
    %8 = vector.load %arg7[%c0_6, %c0_7] : memref<128x128xf32, #tpu.memory_space<vmem>>, vector<128x128xf32>
    tpu.vector_store %arg7[%c0_6, %c0_7], %7 {strides = array<i32>} : memref<128x128xf32, #tpu.memory_space<vmem>>, vector<128x128xf32>,
    %c0_i32_8 = arith.constant 0 : i32
    %9 = arith.cmpi eq, %arg2, %c0_i32_8 : i32
    %10 = arith.extui %9 : i1 to i32
    %c0_i32_9 = arith.constant 0 : i32
    %11 = arith.cmpi ne, %10, %c0_i32_9 : i32
    scf.if %11 {
      %c0_10 = arith.constant 0 : index
      %c0_11 = arith.constant 0 : index
      %12 = vector.load %arg7[%c0_10, %c0_11] : memref<128x128xf32, #tpu.memory_space<vmem>>, vector<128x128xf32>
      %c0_12 = arith.constant 0 : index
      %c0_13 = arith.constant 0 : index
      %13 = vector.load %arg5[%c0_12, %c0_13] : memref<1x128xf32, #tpu.memory_space<vmem>>, vector<1x128xf32>
      %14 = vector.broadcast %13 : vector<1x128xf32> to vector<128x128xf32>
      %15 = arith.addf %12, %14 : vector<128x128xf32>
      %cst_14 = arith.constant 0.000000e+00 : f32
      %16 = vector.broadcast %cst_14 : f32 to vector<128x128xf32>
      %17 = arith.maximumf %15, %16 : vector<128x128xf32>
      %c0_15 = arith.constant 0 : index
      %c0_16 = arith.constant 0 : index
      %18 = vector.load %arg6[%c0_15, %c0_16] : memref<128x128xf32, #tpu.memory_space<vmem>>, vector<128x128xf32>
      tpu.vector_store %arg6[%c0_15, %c0_16], %17 {strides = array<i32>} : memref<128x128xf32, #tpu.memory_space<vmem>>, vector<128x128xf32>,
    } else {
    }
    return
  }
  func.func @transform_0(%arg0: i32, %arg1: i32, %arg2: i32) -> (i32, i32) {
    %c0_i32 = arith.constant 0 : i32
    return %arg0, %arg2 : i32, i32
  }
  func.func @transform_1(%arg0: i32, %arg1: i32, %arg2: i32) -> (i32, i32) {
    %c0_i32 = arith.constant 0 : i32
    return %arg2, %arg1 : i32, i32
  }
  func.func @transform_2(%arg0: i32, %arg1: i32, %arg2: i32) -> (i32, i32) {
    %c0_i32 = arith.constant 0 : i32
    %c0_i32_0 = arith.constant 0 : i32
    return %c0_i32, %arg1 : i32, i32
  }
  func.func @transform_3(%arg0: i32, %arg1: i32, %arg2: i32) -> (i32, i32) {
    %c0_i32 = arith.constant 0 : i32
    return %arg0, %arg1 : i32, i32
  }
}

module attributes {stable_mosaic.version = 11 : i64} {
  func.func @_cos_add_conv_kernel(%arg0: i32, %arg1: memref<1x32x64xf32, #tpu.memory_space<vmem>>, %arg2: memref<1x32x64xf32, #tpu.memory_space<vmem>>, %arg3: memref<32x64xbf16, #tpu.memory_space<vmem>>, %arg4: memref<32x1xf32, #tpu.memory_space<vmem>>, %arg5: memref<1x32x64xf32, #tpu.memory_space<vmem>>) attributes {dimension_semantics = [#tpu.dimension_semantics<parallel>], iteration_bounds = array<i64: 2>, scalar_prefetch = 0 : i64, scratch_operands = 0 : i64, tpu.core_type = #tpu.core_type<tc>, window_params = [{transform_indices = @transform_0, window_bounds = array<i64: 1, 32, 64>}, {transform_indices = @transform_1, window_bounds = array<i64: 1, 32, 64>}, {pipeline_mode = #tpu.pipeline_mode<synchronous>, transform_indices = @transform_2, window_bounds = array<i64: 32, 64>}, {pipeline_mode = #tpu.pipeline_mode<synchronous>, transform_indices = @transform_3, window_bounds = array<i64: 32, 1>}, {transform_indices = @transform_4, window_bounds = array<i64: 1, 32, 64>}]} {
    %c0 = arith.constant 0 : index
    %c0_0 = arith.constant 0 : index
    %c0_1 = arith.constant 0 : index
    %0 = vector.load %arg1[%c0, %c0_0, %c0_1] : memref<1x32x64xf32, #tpu.memory_space<vmem>>, vector<1x32x64xf32>
    %1 = vector.shape_cast %0 : vector<1x32x64xf32> to vector<32x64xf32>
    %c0_2 = arith.constant 0 : index
    %c0_3 = arith.constant 0 : index
    %c0_4 = arith.constant 0 : index
    %2 = vector.load %arg2[%c0_2, %c0_3, %c0_4] : memref<1x32x64xf32, #tpu.memory_space<vmem>>, vector<1x32x64xf32>
    %3 = vector.shape_cast %2 : vector<1x32x64xf32> to vector<32x64xf32>
    %4 = arith.mulf %1, %3 : vector<32x64xf32>
    %cst = arith.constant dense<0.000000e+00> : vector<64xf32>
    %5 = vector.multi_reduction <add>, %4, %cst [0] : vector<32x64xf32> to vector<64xf32>
    %6 = vector.shape_cast %5 : vector<64xf32> to vector<1x64xf32>
    %7 = arith.mulf %1, %1 : vector<32x64xf32>
    %cst_5 = arith.constant dense<0.000000e+00> : vector<64xf32>
    %8 = vector.multi_reduction <add>, %7, %cst_5 [0] : vector<32x64xf32> to vector<64xf32>
    %9 = vector.shape_cast %8 : vector<64xf32> to vector<1x64xf32>
    %10 = math.sqrt %9 : vector<1x64xf32>
    %11 = arith.mulf %3, %3 : vector<32x64xf32>
    %cst_6 = arith.constant dense<0.000000e+00> : vector<64xf32>
    %12 = vector.multi_reduction <add>, %11, %cst_6 [0] : vector<32x64xf32> to vector<64xf32>
    %13 = vector.shape_cast %12 : vector<64xf32> to vector<1x64xf32>
    %14 = math.sqrt %13 : vector<1x64xf32>
    %cst_7 = arith.constant 9.99999993E-9 : f32
    %15 = vector.broadcast %cst_7 : f32 to vector<1x64xf32>
    %16 = arith.maximumf %10, %15 : vector<1x64xf32>
    %cst_8 = arith.constant 9.99999993E-9 : f32
    %17 = vector.broadcast %cst_8 : f32 to vector<1x64xf32>
    %18 = arith.maximumf %14, %17 : vector<1x64xf32>
    %19 = arith.mulf %16, %18 : vector<1x64xf32>
    %20 = arith.divf %6, %19 : vector<1x64xf32>
    %21 = vector.broadcast %20 : vector<1x64xf32> to vector<32x64xf32>
    %22 = arith.addf %1, %21 : vector<32x64xf32>
    %23 = vector.broadcast %20 : vector<1x64xf32> to vector<32x64xf32>
    %24 = arith.addf %3, %23 : vector<32x64xf32>
    %25 = tpu.concatenate %22, %24 in 0 : vector<32x64xf32>, vector<32x64xf32> -> vector<64x64xf32>
    %c0_9 = arith.constant 0 : index
    %c0_10 = arith.constant 0 : index
    %26 = vector.load %arg3[%c0_9, %c0_10] : memref<32x64xbf16, #tpu.memory_space<vmem>>, vector<32x64xbf16>
    %27 = arith.truncf %25 : vector<64x64xf32> to vector<64x64xbf16>
    %cst_11 = arith.constant dense<0.000000e+00> : vector<32x64xf32>
    %28 = tpu.matmul %26, %27, %cst_11 {dimension_numbers = #tpu.dot_dimension_numbers<[1], [0], [0], [1], [0, 0, 1, 1], [], []>} : vector<32x64xbf16>, vector<64x64xbf16>, vector<32x64xf32> -> vector<32x64xf32>
    %c0_12 = arith.constant 0 : index
    %c0_13 = arith.constant 0 : index
    %29 = vector.load %arg4[%c0_12, %c0_13] : memref<32x1xf32, #tpu.memory_space<vmem>>, vector<32x1xf32>
    %30 = vector.broadcast %29 : vector<32x1xf32> to vector<32x64xf32>
    %31 = arith.addf %28, %30 : vector<32x64xf32>
    %c0_14 = arith.constant 0 : index
    %c0_15 = arith.constant 0 : index
    %c0_16 = arith.constant 0 : index
    %32 = vector.load %arg5[%c0_14, %c0_15, %c0_16] : memref<1x32x64xf32, #tpu.memory_space<vmem>>, vector<1x32x64xf32>
    %33 = vector.shape_cast %32 : vector<1x32x64xf32> to vector<32x64xf32>
    %34 = vector.shape_cast %31 : vector<32x64xf32> to vector<1x32x64xf32>
    tpu.vector_store %arg5[%c0_14, %c0_15, %c0_16], %34 {strides = array<i32>} : memref<1x32x64xf32, #tpu.memory_space<vmem>>, vector<1x32x64xf32>,
    return
  }
  func.func @transform_0(%arg0: i32) -> (i32, i32, i32) {
    %c0_i32 = arith.constant 0 : i32
    %c0_i32_0 = arith.constant 0 : i32
    %c0_i32_1 = arith.constant 0 : i32
    return %arg0, %c0_i32, %c0_i32_0 : i32, i32, i32
  }
  func.func @transform_1(%arg0: i32) -> (i32, i32, i32) {
    %c0_i32 = arith.constant 0 : i32
    %c0_i32_0 = arith.constant 0 : i32
    %c0_i32_1 = arith.constant 0 : i32
    return %arg0, %c0_i32, %c0_i32_0 : i32, i32, i32
  }
  func.func @transform_2(%arg0: i32) -> (i32, i32) {
    %c0_i32 = arith.constant 0 : i32
    %c0_i32_0 = arith.constant 0 : i32
    %c0_i32_1 = arith.constant 0 : i32
    return %c0_i32, %c0_i32_0 : i32, i32
  }
  func.func @transform_3(%arg0: i32) -> (i32, i32) {
    %c0_i32 = arith.constant 0 : i32
    %c0_i32_0 = arith.constant 0 : i32
    %c0_i32_1 = arith.constant 0 : i32
    return %c0_i32, %c0_i32_0 : i32, i32
  }
  func.func @transform_4(%arg0: i32) -> (i32, i32, i32) {
    %c0_i32 = arith.constant 0 : i32
    %c0_i32_0 = arith.constant 0 : i32
    %c0_i32_1 = arith.constant 0 : i32
    return %arg0, %c0_i32, %c0_i32_0 : i32, i32, i32
  }
}

module attributes {stable_mosaic.version = 11 : i64} {
  func.func @kernel(%arg0: i32, %arg1: memref<1x32x64xf32, #tpu.memory_space<vmem>>, %arg2: memref<16x32xbf16, #tpu.memory_space<vmem>>, %arg3: memref<16x1xf32, #tpu.memory_space<vmem>>, %arg4: memref<1x16x64xf32, #tpu.memory_space<vmem>>) attributes {dimension_semantics = [#tpu.dimension_semantics<parallel>], iteration_bounds = array<i64: 2>, scalar_prefetch = 0 : i64, scratch_operands = 0 : i64, tpu.core_type = #tpu.core_type<tc>, window_params = [{transform_indices = @transform_0, window_bounds = array<i64: 1, 32, 64>}, {pipeline_mode = #tpu.pipeline_mode<synchronous>, transform_indices = @transform_1, window_bounds = array<i64: 16, 32>}, {pipeline_mode = #tpu.pipeline_mode<synchronous>, transform_indices = @transform_2, window_bounds = array<i64: 16, 1>}, {transform_indices = @transform_3, window_bounds = array<i64: 1, 16, 64>}]} {
    %c0 = arith.constant 0 : index
    %c0_0 = arith.constant 0 : index
    %c0_1 = arith.constant 0 : index
    %0 = vector.load %arg1[%c0, %c0_0, %c0_1] : memref<1x32x64xf32, #tpu.memory_space<vmem>>, vector<1x32x64xf32>
    %1 = vector.shape_cast %0 : vector<1x32x64xf32> to vector<32x64xf32>
    %c0_2 = arith.constant 0 : index
    %c0_3 = arith.constant 0 : index
    %2 = vector.load %arg2[%c0_2, %c0_3] : memref<16x32xbf16, #tpu.memory_space<vmem>>, vector<16x32xbf16>
    %3 = arith.truncf %1 : vector<32x64xf32> to vector<32x64xbf16>
    %cst = arith.constant dense<0.000000e+00> : vector<16x64xf32>
    %4 = tpu.matmul %2, %3, %cst {dimension_numbers = #tpu.dot_dimension_numbers<[1], [0], [0], [1], [0, 0, 1, 1], [], []>} : vector<16x32xbf16>, vector<32x64xbf16>, vector<16x64xf32> -> vector<16x64xf32>
    %c0_4 = arith.constant 0 : index
    %c0_5 = arith.constant 0 : index
    %5 = vector.load %arg3[%c0_4, %c0_5] : memref<16x1xf32, #tpu.memory_space<vmem>>, vector<16x1xf32>
    %6 = vector.broadcast %5 : vector<16x1xf32> to vector<16x64xf32>
    %7 = arith.addf %4, %6 : vector<16x64xf32>
    %cst_6 = arith.constant 0.000000e+00 : f32
    %8 = vector.broadcast %cst_6 : f32 to vector<16x64xf32>
    %9 = arith.maximumf %7, %8 : vector<16x64xf32>
    %c0_7 = arith.constant 0 : index
    %c0_8 = arith.constant 0 : index
    %c0_9 = arith.constant 0 : index
    %10 = vector.load %arg4[%c0_7, %c0_8, %c0_9] : memref<1x16x64xf32, #tpu.memory_space<vmem>>, vector<1x16x64xf32>
    %11 = vector.shape_cast %10 : vector<1x16x64xf32> to vector<16x64xf32>
    %12 = vector.shape_cast %9 : vector<16x64xf32> to vector<1x16x64xf32>
    tpu.vector_store %arg4[%c0_7, %c0_8, %c0_9], %12 {strides = array<i32>} : memref<1x16x64xf32, #tpu.memory_space<vmem>>, vector<1x16x64xf32>,
    return
  }
  func.func @transform_0(%arg0: i32) -> (i32, i32, i32) {
    %c0_i32 = arith.constant 0 : i32
    %c0_i32_0 = arith.constant 0 : i32
    %c0_i32_1 = arith.constant 0 : i32
    return %arg0, %c0_i32, %c0_i32_0 : i32, i32, i32
  }
  func.func @transform_1(%arg0: i32) -> (i32, i32) {
    %c0_i32 = arith.constant 0 : i32
    %c0_i32_0 = arith.constant 0 : i32
    %c0_i32_1 = arith.constant 0 : i32
    return %c0_i32, %c0_i32_0 : i32, i32
  }
  func.func @transform_2(%arg0: i32) -> (i32, i32) {
    %c0_i32 = arith.constant 0 : i32
    %c0_i32_0 = arith.constant 0 : i32
    %c0_i32_1 = arith.constant 0 : i32
    return %c0_i32, %c0_i32_0 : i32, i32
  }
  func.func @transform_3(%arg0: i32) -> (i32, i32, i32) {
    %c0_i32 = arith.constant 0 : i32
    %c0_i32_0 = arith.constant 0 : i32
    %c0_i32_1 = arith.constant 0 : i32
    return %arg0, %c0_i32, %c0_i32_0 : i32, i32, i32
  }
}

module attributes {stable_mosaic.version = 11 : i64} {
  func.func @kernel(%arg0: i32, %arg1: memref<1x16x64xf32, #tpu.memory_space<vmem>>, %arg2: memref<32x16xbf16, #tpu.memory_space<vmem>>, %arg3: memref<32x1xf32, #tpu.memory_space<vmem>>, %arg4: memref<1x32x64xf32, #tpu.memory_space<vmem>>, %arg5: memref<1x32x64xf32, #tpu.memory_space<vmem>>) attributes {dimension_semantics = [#tpu.dimension_semantics<parallel>], iteration_bounds = array<i64: 2>, scalar_prefetch = 0 : i64, scratch_operands = 0 : i64, tpu.core_type = #tpu.core_type<tc>, window_params = [{transform_indices = @transform_0, window_bounds = array<i64: 1, 16, 64>}, {pipeline_mode = #tpu.pipeline_mode<synchronous>, transform_indices = @transform_1, window_bounds = array<i64: 32, 16>}, {pipeline_mode = #tpu.pipeline_mode<synchronous>, transform_indices = @transform_2, window_bounds = array<i64: 32, 1>}, {transform_indices = @transform_3, window_bounds = array<i64: 1, 32, 64>}, {transform_indices = @transform_4, window_bounds = array<i64: 1, 32, 64>}]} {
    %c0 = arith.constant 0 : index
    %c0_0 = arith.constant 0 : index
    %c0_1 = arith.constant 0 : index
    %0 = vector.load %arg1[%c0, %c0_0, %c0_1] : memref<1x16x64xf32, #tpu.memory_space<vmem>>, vector<1x16x64xf32>
    %1 = vector.shape_cast %0 : vector<1x16x64xf32> to vector<16x64xf32>
    %c0_2 = arith.constant 0 : index
    %c0_3 = arith.constant 0 : index
    %2 = vector.load %arg2[%c0_2, %c0_3] : memref<32x16xbf16, #tpu.memory_space<vmem>>, vector<32x16xbf16>
    %3 = arith.truncf %1 : vector<16x64xf32> to vector<16x64xbf16>
    %cst = arith.constant dense<0.000000e+00> : vector<32x64xf32>
    %4 = tpu.matmul %2, %3, %cst {dimension_numbers = #tpu.dot_dimension_numbers<[1], [0], [0], [1], [0, 0, 1, 1], [], []>} : vector<32x16xbf16>, vector<16x64xbf16>, vector<32x64xf32> -> vector<32x64xf32>
    %c0_4 = arith.constant 0 : index
    %c0_5 = arith.constant 0 : index
    %5 = vector.load %arg3[%c0_4, %c0_5] : memref<32x1xf32, #tpu.memory_space<vmem>>, vector<32x1xf32>
    %6 = vector.broadcast %5 : vector<32x1xf32> to vector<32x64xf32>
    %7 = arith.addf %4, %6 : vector<32x64xf32>
    %c0_6 = arith.constant 0 : index
    %c0_7 = arith.constant 0 : index
    %c0_8 = arith.constant 0 : index
    %8 = vector.load %arg4[%c0_6, %c0_7, %c0_8] : memref<1x32x64xf32, #tpu.memory_space<vmem>>, vector<1x32x64xf32>
    %9 = vector.shape_cast %8 : vector<1x32x64xf32> to vector<32x64xf32>
    %10 = arith.addf %7, %9 : vector<32x64xf32>
    %cst_9 = arith.constant 0.000000e+00 : f32
    %11 = vector.broadcast %cst_9 : f32 to vector<32x64xf32>
    %12 = arith.maximumf %10, %11 : vector<32x64xf32>
    %c0_10 = arith.constant 0 : index
    %c0_11 = arith.constant 0 : index
    %c0_12 = arith.constant 0 : index
    %13 = vector.load %arg5[%c0_10, %c0_11, %c0_12] : memref<1x32x64xf32, #tpu.memory_space<vmem>>, vector<1x32x64xf32>
    %14 = vector.shape_cast %13 : vector<1x32x64xf32> to vector<32x64xf32>
    %15 = vector.shape_cast %12 : vector<32x64xf32> to vector<1x32x64xf32>
    tpu.vector_store %arg5[%c0_10, %c0_11, %c0_12], %15 {strides = array<i32>} : memref<1x32x64xf32, #tpu.memory_space<vmem>>, vector<1x32x64xf32>,
    return
  }
  func.func @transform_0(%arg0: i32) -> (i32, i32, i32) {
    %c0_i32 = arith.constant 0 : i32
    %c0_i32_0 = arith.constant 0 : i32
    %c0_i32_1 = arith.constant 0 : i32
    return %arg0, %c0_i32, %c0_i32_0 : i32, i32, i32
  }
  func.func @transform_1(%arg0: i32) -> (i32, i32) {
    %c0_i32 = arith.constant 0 : i32
    %c0_i32_0 = arith.constant 0 : i32
    %c0_i32_1 = arith.constant 0 : i32
    return %c0_i32, %c0_i32_0 : i32, i32
  }
  func.func @transform_2(%arg0: i32) -> (i32, i32) {
    %c0_i32 = arith.constant 0 : i32
    %c0_i32_0 = arith.constant 0 : i32
    %c0_i32_1 = arith.constant 0 : i32
    return %c0_i32, %c0_i32_0 : i32, i32
  }
  func.func @transform_3(%arg0: i32) -> (i32, i32, i32) {
    %c0_i32 = arith.constant 0 : i32
    %c0_i32_0 = arith.constant 0 : i32
    %c0_i32_1 = arith.constant 0 : i32
    return %arg0, %c0_i32, %c0_i32_0 : i32, i32, i32
  }
  func.func @transform_4(%arg0: i32) -> (i32, i32, i32) {
    %c0_i32 = arith.constant 0 : i32
    %c0_i32_0 = arith.constant 0 : i32
    %c0_i32_1 = arith.constant 0 : i32
    return %arg0, %c0_i32, %c0_i32_0 : i32, i32, i32
  }
}

module attributes {stable_mosaic.version = 11 : i64} {
  func.func @kernel(%arg0: i32, %arg1: memref<1x144x64xf32, #tpu.memory_space<vmem>>, %arg2: memref<16x144xbf16, #tpu.memory_space<vmem>>, %arg3: memref<16x1xf32, #tpu.memory_space<vmem>>, %arg4: memref<1x16x64xf32, #tpu.memory_space<vmem>>) attributes {dimension_semantics = [#tpu.dimension_semantics<parallel>], iteration_bounds = array<i64: 2>, scalar_prefetch = 0 : i64, scratch_operands = 0 : i64, tpu.core_type = #tpu.core_type<tc>, window_params = [{transform_indices = @transform_0, window_bounds = array<i64: 1, 144, 64>}, {pipeline_mode = #tpu.pipeline_mode<synchronous>, transform_indices = @transform_1, window_bounds = array<i64: 16, 144>}, {pipeline_mode = #tpu.pipeline_mode<synchronous>, transform_indices = @transform_2, window_bounds = array<i64: 16, 1>}, {transform_indices = @transform_3, window_bounds = array<i64: 1, 16, 64>}]} {
    %c0 = arith.constant 0 : index
    %c0_0 = arith.constant 0 : index
    %c0_1 = arith.constant 0 : index
    %0 = vector.load %arg1[%c0, %c0_0, %c0_1] : memref<1x144x64xf32, #tpu.memory_space<vmem>>, vector<1x144x64xf32>
    %1 = vector.shape_cast %0 : vector<1x144x64xf32> to vector<144x64xf32>
    %c0_2 = arith.constant 0 : index
    %c0_3 = arith.constant 0 : index
    %2 = vector.load %arg2[%c0_2, %c0_3] : memref<16x144xbf16, #tpu.memory_space<vmem>>, vector<16x144xbf16>
    %3 = arith.truncf %1 : vector<144x64xf32> to vector<144x64xbf16>
    %cst = arith.constant dense<0.000000e+00> : vector<16x64xf32>
    %4 = tpu.matmul %2, %3, %cst {dimension_numbers = #tpu.dot_dimension_numbers<[1], [0], [0], [1], [0, 0, 1, 1], [], []>} : vector<16x144xbf16>, vector<144x64xbf16>, vector<16x64xf32> -> vector<16x64xf32>
    %c0_4 = arith.constant 0 : index
    %c0_5 = arith.constant 0 : index
    %5 = vector.load %arg3[%c0_4, %c0_5] : memref<16x1xf32, #tpu.memory_space<vmem>>, vector<16x1xf32>
    %6 = vector.broadcast %5 : vector<16x1xf32> to vector<16x64xf32>
    %7 = arith.addf %4, %6 : vector<16x64xf32>
    %cst_6 = arith.constant 0.000000e+00 : f32
    %8 = vector.broadcast %cst_6 : f32 to vector<16x64xf32>
    %9 = arith.maximumf %7, %8 : vector<16x64xf32>
    %c0_7 = arith.constant 0 : index
    %c0_8 = arith.constant 0 : index
    %c0_9 = arith.constant 0 : index
    %10 = vector.load %arg4[%c0_7, %c0_8, %c0_9] : memref<1x16x64xf32, #tpu.memory_space<vmem>>, vector<1x16x64xf32>
    %11 = vector.shape_cast %10 : vector<1x16x64xf32> to vector<16x64xf32>
    %12 = vector.shape_cast %9 : vector<16x64xf32> to vector<1x16x64xf32>
    tpu.vector_store %arg4[%c0_7, %c0_8, %c0_9], %12 {strides = array<i32>} : memref<1x16x64xf32, #tpu.memory_space<vmem>>, vector<1x16x64xf32>,
    return
  }
  func.func @transform_0(%arg0: i32) -> (i32, i32, i32) {
    %c0_i32 = arith.constant 0 : i32
    %c0_i32_0 = arith.constant 0 : i32
    %c0_i32_1 = arith.constant 0 : i32
    return %arg0, %c0_i32, %c0_i32_0 : i32, i32, i32
  }
  func.func @transform_1(%arg0: i32) -> (i32, i32) {
    %c0_i32 = arith.constant 0 : i32
    %c0_i32_0 = arith.constant 0 : i32
    %c0_i32_1 = arith.constant 0 : i32
    return %c0_i32, %c0_i32_0 : i32, i32
  }
  func.func @transform_2(%arg0: i32) -> (i32, i32) {
    %c0_i32 = arith.constant 0 : i32
    %c0_i32_0 = arith.constant 0 : i32
    %c0_i32_1 = arith.constant 0 : i32
    return %c0_i32, %c0_i32_0 : i32, i32
  }
  func.func @transform_3(%arg0: i32) -> (i32, i32, i32) {
    %c0_i32 = arith.constant 0 : i32
    %c0_i32_0 = arith.constant 0 : i32
    %c0_i32_1 = arith.constant 0 : i32
    return %arg0, %c0_i32, %c0_i32_0 : i32, i32, i32
  }
}

module attributes {stable_mosaic.version = 11 : i64} {
  func.func @kernel(%arg0: i32, %arg1: memref<1x1x32xbf16, #tpu.memory_space<vmem>>, %arg2: memref<1x64x32xbf16, #tpu.memory_space<vmem>>, %arg3: memref<1x64x32xbf16, #tpu.memory_space<vmem>>, %arg4: memref<1x1x32xf32, #tpu.memory_space<vmem>>) attributes {dimension_semantics = [#tpu.dimension_semantics<parallel>], iteration_bounds = array<i64: 2>, scalar_prefetch = 0 : i64, scratch_operands = 0 : i64, tpu.core_type = #tpu.core_type<tc>, window_params = [{transform_indices = @transform_0, window_bounds = array<i64: 1, 1, 32>}, {transform_indices = @transform_1, window_bounds = array<i64: 1, 64, 32>}, {transform_indices = @transform_2, window_bounds = array<i64: 1, 64, 32>}, {transform_indices = @transform_3, window_bounds = array<i64: 1, 1, 32>}]} {
    %c0 = arith.constant 0 : index
    %c0_0 = arith.constant 0 : index
    %c0_1 = arith.constant 0 : index
    %0 = vector.load %arg1[%c0, %c0_0, %c0_1] : memref<1x1x32xbf16, #tpu.memory_space<vmem>>, vector<1x1x32xbf16>
    %1 = vector.shape_cast %0 : vector<1x1x32xbf16> to vector<1x32xbf16>
    %c0_2 = arith.constant 0 : index
    %c0_3 = arith.constant 0 : index
    %c0_4 = arith.constant 0 : index
    %2 = vector.load %arg2[%c0_2, %c0_3, %c0_4] : memref<1x64x32xbf16, #tpu.memory_space<vmem>>, vector<1x64x32xbf16>
    %3 = vector.shape_cast %2 : vector<1x64x32xbf16> to vector<64x32xbf16>
    %c0_5 = arith.constant 0 : index
    %c0_6 = arith.constant 0 : index
    %c0_7 = arith.constant 0 : index
    %4 = vector.load %arg3[%c0_5, %c0_6, %c0_7] : memref<1x64x32xbf16, #tpu.memory_space<vmem>>, vector<1x64x32xbf16>
    %5 = vector.shape_cast %4 : vector<1x64x32xbf16> to vector<64x32xbf16>
    %6 = vector.extract_strided_slice %1 {offsets = [0, 0], sizes = [1, 8], strides = [1, 1]} : vector<1x32xbf16> to vector<1x8xbf16>
    %7 = vector.extract_strided_slice %3 {offsets = [0, 0], sizes = [64, 8], strides = [1, 1]} : vector<64x32xbf16> to vector<64x8xbf16>
    %8 = tpu.transpose %7, [1, 0] : vector<64x8xbf16> -> vector<8x64xbf16>
    %cst = arith.constant dense<0.000000e+00> : vector<1x64xf32>
    %9 = tpu.matmul %6, %8, %cst {dimension_numbers = #tpu.dot_dimension_numbers<[1], [0], [0], [1], [0, 0, 1, 1], [], []>} : vector<1x8xbf16>, vector<8x64xbf16>, vector<1x64xf32> -> vector<1x64xf32>
    %cst_8 = arith.constant 0.353553385 : f32
    %10 = vector.broadcast %cst_8 : f32 to vector<1x64xf32>
    %11 = arith.mulf %9, %10 : vector<1x64xf32>
    %cst_9 = arith.constant dense<0xFF800000> : vector<1xf32>
    %12 = vector.multi_reduction <maximumf>, %11, %cst_9 [1] : vector<1x64xf32> to vector<1xf32>
    %13 = vector.shape_cast %12 : vector<1xf32> to vector<1x1xf32>
    %14 = vector.broadcast %13 : vector<1x1xf32> to vector<1x64xf32>
    %15 = arith.subf %11, %14 : vector<1x64xf32>
    %16 = math.exp %15 : vector<1x64xf32>
    %cst_10 = arith.constant dense<0.000000e+00> : vector<1xf32>
    %17 = vector.multi_reduction <add>, %16, %cst_10 [1] : vector<1x64xf32> to vector<1xf32>
    %18 = vector.shape_cast %17 : vector<1xf32> to vector<1x1xf32>
    %19 = tpu.reciprocal %18 {approx = true} : vector<1x1xf32> -> vector<1x1xf32>
    %20 = vector.broadcast %19 : vector<1x1xf32> to vector<1x64xf32>
    %21 = arith.mulf %16, %20 : vector<1x64xf32>
    %22 = arith.truncf %21 : vector<1x64xf32> to vector<1x64xbf16>
    %23 = vector.extract_strided_slice %5 {offsets = [0, 0], sizes = [64, 8], strides = [1, 1]} : vector<64x32xbf16> to vector<64x8xbf16>
    %cst_11 = arith.constant dense<0.000000e+00> : vector<1x8xf32>
    %24 = tpu.matmul %22, %23, %cst_11 {dimension_numbers = #tpu.dot_dimension_numbers<[1], [0], [0], [1], [0, 0, 1, 1], [], []>} : vector<1x64xbf16>, vector<64x8xbf16>, vector<1x8xf32> -> vector<1x8xf32>
    %25 = vector.extract_strided_slice %1 {offsets = [0, 8], sizes = [1, 8], strides = [1, 1]} : vector<1x32xbf16> to vector<1x8xbf16>
    %26 = vector.extract_strided_slice %3 {offsets = [0, 8], sizes = [64, 8], strides = [1, 1]} : vector<64x32xbf16> to vector<64x8xbf16>
    %27 = tpu.transpose %26, [1, 0] : vector<64x8xbf16> -> vector<8x64xbf16>
    %cst_12 = arith.constant dense<0.000000e+00> : vector<1x64xf32>
    %28 = tpu.matmul %25, %27, %cst_12 {dimension_numbers = #tpu.dot_dimension_numbers<[1], [0], [0], [1], [0, 0, 1, 1], [], []>} : vector<1x8xbf16>, vector<8x64xbf16>, vector<1x64xf32> -> vector<1x64xf32>
    %cst_13 = arith.constant 0.353553385 : f32
    %29 = vector.broadcast %cst_13 : f32 to vector<1x64xf32>
    %30 = arith.mulf %28, %29 : vector<1x64xf32>
    %cst_14 = arith.constant dense<0xFF800000> : vector<1xf32>
    %31 = vector.multi_reduction <maximumf>, %30, %cst_14 [1] : vector<1x64xf32> to vector<1xf32>
    %32 = vector.shape_cast %31 : vector<1xf32> to vector<1x1xf32>
    %33 = vector.broadcast %32 : vector<1x1xf32> to vector<1x64xf32>
    %34 = arith.subf %30, %33 : vector<1x64xf32>
    %35 = math.exp %34 : vector<1x64xf32>
    %cst_15 = arith.constant dense<0.000000e+00> : vector<1xf32>
    %36 = vector.multi_reduction <add>, %35, %cst_15 [1] : vector<1x64xf32> to vector<1xf32>
    %37 = vector.shape_cast %36 : vector<1xf32> to vector<1x1xf32>
    %38 = tpu.reciprocal %37 {approx = true} : vector<1x1xf32> -> vector<1x1xf32>
    %39 = vector.broadcast %38 : vector<1x1xf32> to vector<1x64xf32>
    %40 = arith.mulf %35, %39 : vector<1x64xf32>
    %41 = arith.truncf %40 : vector<1x64xf32> to vector<1x64xbf16>
    %42 = vector.extract_strided_slice %5 {offsets = [0, 8], sizes = [64, 8], strides = [1, 1]} : vector<64x32xbf16> to vector<64x8xbf16>
    %cst_16 = arith.constant dense<0.000000e+00> : vector<1x8xf32>
    %43 = tpu.matmul %41, %42, %cst_16 {dimension_numbers = #tpu.dot_dimension_numbers<[1], [0], [0], [1], [0, 0, 1, 1], [], []>} : vector<1x64xbf16>, vector<64x8xbf16>, vector<1x8xf32> -> vector<1x8xf32>
    %44 = vector.extract_strided_slice %1 {offsets = [0, 16], sizes = [1, 8], strides = [1, 1]} : vector<1x32xbf16> to vector<1x8xbf16>
    %45 = vector.extract_strided_slice %3 {offsets = [0, 16], sizes = [64, 8], strides = [1, 1]} : vector<64x32xbf16> to vector<64x8xbf16>
    %46 = tpu.transpose %45, [1, 0] : vector<64x8xbf16> -> vector<8x64xbf16>
    %cst_17 = arith.constant dense<0.000000e+00> : vector<1x64xf32>
    %47 = tpu.matmul %44, %46, %cst_17 {dimension_numbers = #tpu.dot_dimension_numbers<[1], [0], [0], [1], [0, 0, 1, 1], [], []>} : vector<1x8xbf16>, vector<8x64xbf16>, vector<1x64xf32> -> vector<1x64xf32>
    %cst_18 = arith.constant 0.353553385 : f32
    %48 = vector.broadcast %cst_18 : f32 to vector<1x64xf32>
    %49 = arith.mulf %47, %48 : vector<1x64xf32>
    %cst_19 = arith.constant dense<0xFF800000> : vector<1xf32>
    %50 = vector.multi_reduction <maximumf>, %49, %cst_19 [1] : vector<1x64xf32> to vector<1xf32>
    %51 = vector.shape_cast %50 : vector<1xf32> to vector<1x1xf32>
    %52 = vector.broadcast %51 : vector<1x1xf32> to vector<1x64xf32>
    %53 = arith.subf %49, %52 : vector<1x64xf32>
    %54 = math.exp %53 : vector<1x64xf32>
    %cst_20 = arith.constant dense<0.000000e+00> : vector<1xf32>
    %55 = vector.multi_reduction <add>, %54, %cst_20 [1] : vector<1x64xf32> to vector<1xf32>
    %56 = vector.shape_cast %55 : vector<1xf32> to vector<1x1xf32>
    %57 = tpu.reciprocal %56 {approx = true} : vector<1x1xf32> -> vector<1x1xf32>
    %58 = vector.broadcast %57 : vector<1x1xf32> to vector<1x64xf32>
    %59 = arith.mulf %54, %58 : vector<1x64xf32>
    %60 = arith.truncf %59 : vector<1x64xf32> to vector<1x64xbf16>
    %61 = vector.extract_strided_slice %5 {offsets = [0, 16], sizes = [64, 8], strides = [1, 1]} : vector<64x32xbf16> to vector<64x8xbf16>
    %cst_21 = arith.constant dense<0.000000e+00> : vector<1x8xf32>
    %62 = tpu.matmul %60, %61, %cst_21 {dimension_numbers = #tpu.dot_dimension_numbers<[1], [0], [0], [1], [0, 0, 1, 1], [], []>} : vector<1x64xbf16>, vector<64x8xbf16>, vector<1x8xf32> -> vector<1x8xf32>
    %63 = vector.extract_strided_slice %1 {offsets = [0, 24], sizes = [1, 8], strides = [1, 1]} : vector<1x32xbf16> to vector<1x8xbf16>
    %64 = vector.extract_strided_slice %3 {offsets = [0, 24], sizes = [64, 8], strides = [1, 1]} : vector<64x32xbf16> to vector<64x8xbf16>
    %65 = tpu.transpose %64, [1, 0] : vector<64x8xbf16> -> vector<8x64xbf16>
    %cst_22 = arith.constant dense<0.000000e+00> : vector<1x64xf32>
    %66 = tpu.matmul %63, %65, %cst_22 {dimension_numbers = #tpu.dot_dimension_numbers<[1], [0], [0], [1], [0, 0, 1, 1], [], []>} : vector<1x8xbf16>, vector<8x64xbf16>, vector<1x64xf32> -> vector<1x64xf32>
    %cst_23 = arith.constant 0.353553385 : f32
    %67 = vector.broadcast %cst_23 : f32 to vector<1x64xf32>
    %68 = arith.mulf %66, %67 : vector<1x64xf32>
    %cst_24 = arith.constant dense<0xFF800000> : vector<1xf32>
    %69 = vector.multi_reduction <maximumf>, %68, %cst_24 [1] : vector<1x64xf32> to vector<1xf32>
    %70 = vector.shape_cast %69 : vector<1xf32> to vector<1x1xf32>
    %71 = vector.broadcast %70 : vector<1x1xf32> to vector<1x64xf32>
    %72 = arith.subf %68, %71 : vector<1x64xf32>
    %73 = math.exp %72 : vector<1x64xf32>
    %cst_25 = arith.constant dense<0.000000e+00> : vector<1xf32>
    %74 = vector.multi_reduction <add>, %73, %cst_25 [1] : vector<1x64xf32> to vector<1xf32>
    %75 = vector.shape_cast %74 : vector<1xf32> to vector<1x1xf32>
    %76 = tpu.reciprocal %75 {approx = true} : vector<1x1xf32> -> vector<1x1xf32>
    %77 = vector.broadcast %76 : vector<1x1xf32> to vector<1x64xf32>
    %78 = arith.mulf %73, %77 : vector<1x64xf32>
    %79 = arith.truncf %78 : vector<1x64xf32> to vector<1x64xbf16>
    %80 = vector.extract_strided_slice %5 {offsets = [0, 24], sizes = [64, 8], strides = [1, 1]} : vector<64x32xbf16> to vector<64x8xbf16>
    %cst_26 = arith.constant dense<0.000000e+00> : vector<1x8xf32>
    %81 = tpu.matmul %79, %80, %cst_26 {dimension_numbers = #tpu.dot_dimension_numbers<[1], [0], [0], [1], [0, 0, 1, 1], [], []>} : vector<1x64xbf16>, vector<64x8xbf16>, vector<1x8xf32> -> vector<1x8xf32>
    %82 = tpu.concatenate %24, %43, %62, %81 in 1 : vector<1x8xf32>, vector<1x8xf32>, vector<1x8xf32>, vector<1x8xf32> -> vector<1x32xf32>
    %c0_27 = arith.constant 0 : index
    %c0_28 = arith.constant 0 : index
    %c0_29 = arith.constant 0 : index
    %83 = vector.load %arg4[%c0_27, %c0_28, %c0_29] : memref<1x1x32xf32, #tpu.memory_space<vmem>>, vector<1x1x32xf32>
    %84 = vector.shape_cast %83 : vector<1x1x32xf32> to vector<1x32xf32>
    %85 = vector.shape_cast %82 : vector<1x32xf32> to vector<1x1x32xf32>
    tpu.vector_store %arg4[%c0_27, %c0_28, %c0_29], %85 {strides = array<i32>} : memref<1x1x32xf32, #tpu.memory_space<vmem>>, vector<1x1x32xf32>,
    return
  }
  func.func @transform_0(%arg0: i32) -> (i32, i32, i32) {
    %c0_i32 = arith.constant 0 : i32
    %c0_i32_0 = arith.constant 0 : i32
    %c0_i32_1 = arith.constant 0 : i32
    return %arg0, %c0_i32, %c0_i32_0 : i32, i32, i32
  }
  func.func @transform_1(%arg0: i32) -> (i32, i32, i32) {
    %c0_i32 = arith.constant 0 : i32
    %c0_i32_0 = arith.constant 0 : i32
    %c0_i32_1 = arith.constant 0 : i32
    return %arg0, %c0_i32, %c0_i32_0 : i32, i32, i32
  }
  func.func @transform_2(%arg0: i32) -> (i32, i32, i32) {
    %c0_i32 = arith.constant 0 : i32
    %c0_i32_0 = arith.constant 0 : i32
    %c0_i32_1 = arith.constant 0 : i32
    return %arg0, %c0_i32, %c0_i32_0 : i32, i32, i32
  }
  func.func @transform_3(%arg0: i32) -> (i32, i32, i32) {
    %c0_i32 = arith.constant 0 : i32
    %c0_i32_0 = arith.constant 0 : i32
    %c0_i32_1 = arith.constant 0 : i32
    return %arg0, %c0_i32, %c0_i32_0 : i32, i32, i32
  }
}

module attributes {stable_mosaic.version = 11 : i64} {
  func.func @kernel(%arg0: i32, %arg1: i32, %arg2: i32, %arg3: memref<8x128xbf16, #tpu.memory_space<vmem>>, %arg4: memref<128x128xbf16, #tpu.memory_space<vmem>>, %arg5: memref<1x128xf32, #tpu.memory_space<vmem>>, %arg6: memref<8x128xf32, #tpu.memory_space<vmem>>, %arg7: memref<8x128xf32, #tpu.memory_space<vmem>>) attributes {dimension_semantics = [#tpu.dimension_semantics<parallel>, #tpu.dimension_semantics<parallel>, #tpu.dimension_semantics<arbitrary>], iteration_bounds = array<i64: 1, 1, 1>, scalar_prefetch = 0 : i64, scratch_operands = 1 : i64, tpu.core_type = #tpu.core_type<tc>, window_params = [{transform_indices = @transform_0, window_bounds = array<i64: 8, 128>}, {transform_indices = @transform_1, window_bounds = array<i64: 128, 128>}, {transform_indices = @transform_2, window_bounds = array<i64: 1, 128>}, {transform_indices = @transform_3, window_bounds = array<i64: 8, 128>}]} {
    %c0_i32 = arith.constant 0 : i32
    %0 = arith.cmpi eq, %arg2, %c0_i32 : i32
    %1 = arith.extui %0 : i1 to i32
    %c0_i32_0 = arith.constant 0 : i32
    %2 = arith.cmpi ne, %1, %c0_i32_0 : i32
    scf.if %2 {
      %cst_10 = arith.constant 0.000000e+00 : f32
      %12 = vector.broadcast %cst_10 : f32 to vector<8x128xf32>
      %c0_11 = arith.constant 0 : index
      %c0_12 = arith.constant 0 : index
      %13 = vector.load %arg7[%c0_11, %c0_12] : memref<8x128xf32, #tpu.memory_space<vmem>>, vector<8x128xf32>
      tpu.vector_store %arg7[%c0_11, %c0_12], %12 {strides = array<i32>} : memref<8x128xf32, #tpu.memory_space<vmem>>, vector<8x128xf32>,
    } else {
    }
    %c0 = arith.constant 0 : index
    %c0_1 = arith.constant 0 : index
    %3 = vector.load %arg7[%c0, %c0_1] : memref<8x128xf32, #tpu.memory_space<vmem>>, vector<8x128xf32>
    %c0_2 = arith.constant 0 : index
    %c0_3 = arith.constant 0 : index
    %4 = vector.load %arg3[%c0_2, %c0_3] : memref<8x128xbf16, #tpu.memory_space<vmem>>, vector<8x128xbf16>
    %c0_4 = arith.constant 0 : index
    %c0_5 = arith.constant 0 : index
    %5 = vector.load %arg4[%c0_4, %c0_5] : memref<128x128xbf16, #tpu.memory_space<vmem>>, vector<128x128xbf16>
    %cst = arith.constant dense<0.000000e+00> : vector<8x128xf32>
    %6 = tpu.matmul %4, %5, %cst {dimension_numbers = #tpu.dot_dimension_numbers<[1], [0], [0], [1], [0, 0, 1, 1], [], []>} : vector<8x128xbf16>, vector<128x128xbf16>, vector<8x128xf32> -> vector<8x128xf32>
    %7 = arith.addf %3, %6 : vector<8x128xf32>
    %c0_6 = arith.constant 0 : index
    %c0_7 = arith.constant 0 : index
    %8 = vector.load %arg7[%c0_6, %c0_7] : memref<8x128xf32, #tpu.memory_space<vmem>>, vector<8x128xf32>
    tpu.vector_store %arg7[%c0_6, %c0_7], %7 {strides = array<i32>} : memref<8x128xf32, #tpu.memory_space<vmem>>, vector<8x128xf32>,
    %c0_i32_8 = arith.constant 0 : i32
    %9 = arith.cmpi eq, %arg2, %c0_i32_8 : i32
    %10 = arith.extui %9 : i1 to i32
    %c0_i32_9 = arith.constant 0 : i32
    %11 = arith.cmpi ne, %10, %c0_i32_9 : i32
    scf.if %11 {
      %c0_10 = arith.constant 0 : index
      %c0_11 = arith.constant 0 : index
      %12 = vector.load %arg7[%c0_10, %c0_11] : memref<8x128xf32, #tpu.memory_space<vmem>>, vector<8x128xf32>
      %c0_12 = arith.constant 0 : index
      %c0_13 = arith.constant 0 : index
      %13 = vector.load %arg5[%c0_12, %c0_13] : memref<1x128xf32, #tpu.memory_space<vmem>>, vector<1x128xf32>
      %14 = vector.broadcast %13 : vector<1x128xf32> to vector<8x128xf32>
      %15 = arith.addf %12, %14 : vector<8x128xf32>
      %c0_14 = arith.constant 0 : index
      %c0_15 = arith.constant 0 : index
      %16 = vector.load %arg6[%c0_14, %c0_15] : memref<8x128xf32, #tpu.memory_space<vmem>>, vector<8x128xf32>
      tpu.vector_store %arg6[%c0_14, %c0_15], %15 {strides = array<i32>} : memref<8x128xf32, #tpu.memory_space<vmem>>, vector<8x128xf32>,
    } else {
    }
    return
  }
  func.func @transform_0(%arg0: i32, %arg1: i32, %arg2: i32) -> (i32, i32) {
    %c0_i32 = arith.constant 0 : i32
    return %arg0, %arg2 : i32, i32
  }
  func.func @transform_1(%arg0: i32, %arg1: i32, %arg2: i32) -> (i32, i32) {
    %c0_i32 = arith.constant 0 : i32
    return %arg2, %arg1 : i32, i32
  }
  func.func @transform_2(%arg0: i32, %arg1: i32, %arg2: i32) -> (i32, i32) {
    %c0_i32 = arith.constant 0 : i32
    %c0_i32_0 = arith.constant 0 : i32
    return %c0_i32, %arg1 : i32, i32
  }
  func.func @transform_3(%arg0: i32, %arg1: i32, %arg2: i32) -> (i32, i32) {
    %c0_i32 = arith.constant 0 : i32
    return %arg0, %arg1 : i32, i32
  }
}

module attributes {stable_mosaic.version = 11 : i64} {
  func.func @kernel(%arg0: i32, %arg1: memref<8x32xf32, #tpu.memory_space<vmem>>, %arg2: memref<1x32xf32, #tpu.memory_space<vmem>>, %arg3: memref<1x32xf32, #tpu.memory_space<vmem>>, %arg4: memref<8x32xf32, #tpu.memory_space<vmem>>) attributes {dimension_semantics = [#tpu.dimension_semantics<parallel>], iteration_bounds = array<i64: 1>, scalar_prefetch = 0 : i64, scratch_operands = 0 : i64, tpu.core_type = #tpu.core_type<tc>, window_params = [{transform_indices = @transform_0, window_bounds = array<i64: 8, 32>}, {pipeline_mode = #tpu.pipeline_mode<synchronous>, transform_indices = @transform_1, window_bounds = array<i64: 1, 32>}, {pipeline_mode = #tpu.pipeline_mode<synchronous>, transform_indices = @transform_2, window_bounds = array<i64: 1, 32>}, {transform_indices = @transform_3, window_bounds = array<i64: 8, 32>}]} {
    %c0 = arith.constant 0 : index
    %c0_0 = arith.constant 0 : index
    %0 = vector.load %arg1[%c0, %c0_0] : memref<8x32xf32, #tpu.memory_space<vmem>>, vector<8x32xf32>
    %cst = arith.constant dense<0.000000e+00> : vector<8xf32>
    %1 = vector.multi_reduction <add>, %0, %cst [1] : vector<8x32xf32> to vector<8xf32>
    %2 = vector.shape_cast %1 : vector<8xf32> to vector<8x1xf32>
    %cst_1 = arith.constant 3.200000e+01 : f32
    %3 = vector.broadcast %cst_1 : f32 to vector<8x1xf32>
    %4 = arith.divf %2, %3 : vector<8x1xf32>
    %5 = vector.broadcast %4 : vector<8x1xf32> to vector<8x32xf32>
    %6 = arith.subf %0, %5 : vector<8x32xf32>
    %7 = arith.mulf %6, %6 : vector<8x32xf32>
    %cst_2 = arith.constant dense<0.000000e+00> : vector<8xf32>
    %8 = vector.multi_reduction <add>, %7, %cst_2 [1] : vector<8x32xf32> to vector<8xf32>
    %9 = vector.shape_cast %8 : vector<8xf32> to vector<8x1xf32>
    %cst_3 = arith.constant 3.200000e+01 : f32
    %10 = vector.broadcast %cst_3 : f32 to vector<8x1xf32>
    %11 = arith.divf %9, %10 : vector<8x1xf32>
    %cst_4 = arith.constant 9.99999974E-6 : f32
    %12 = vector.broadcast %cst_4 : f32 to vector<8x1xf32>
    %13 = arith.addf %11, %12 : vector<8x1xf32>
    %14 = math.rsqrt %13 : vector<8x1xf32>
    %15 = vector.broadcast %14 : vector<8x1xf32> to vector<8x32xf32>
    %16 = arith.mulf %6, %15 : vector<8x32xf32>
    %c0_5 = arith.constant 0 : index
    %c0_6 = arith.constant 0 : index
    %17 = vector.load %arg2[%c0_5, %c0_6] : memref<1x32xf32, #tpu.memory_space<vmem>>, vector<1x32xf32>
    %18 = vector.broadcast %17 : vector<1x32xf32> to vector<8x32xf32>
    %19 = arith.mulf %16, %18 : vector<8x32xf32>
    %c0_7 = arith.constant 0 : index
    %c0_8 = arith.constant 0 : index
    %20 = vector.load %arg3[%c0_7, %c0_8] : memref<1x32xf32, #tpu.memory_space<vmem>>, vector<1x32xf32>
    %21 = vector.broadcast %20 : vector<1x32xf32> to vector<8x32xf32>
    %22 = arith.addf %19, %21 : vector<8x32xf32>
    %c0_9 = arith.constant 0 : index
    %c0_10 = arith.constant 0 : index
    %23 = vector.load %arg4[%c0_9, %c0_10] : memref<8x32xf32, #tpu.memory_space<vmem>>, vector<8x32xf32>
    tpu.vector_store %arg4[%c0_9, %c0_10], %22 {strides = array<i32>} : memref<8x32xf32, #tpu.memory_space<vmem>>, vector<8x32xf32>,
    return
  }
  func.func @transform_0(%arg0: i32) -> (i32, i32) {
    %c0_i32 = arith.constant 0 : i32
    %c0_i32_0 = arith.constant 0 : i32
    return %arg0, %c0_i32 : i32, i32
  }
  func.func @transform_1(%arg0: i32) -> (i32, i32) {
    %c0_i32 = arith.constant 0 : i32
    %c0_i32_0 = arith.constant 0 : i32
    %c0_i32_1 = arith.constant 0 : i32
    return %c0_i32, %c0_i32_0 : i32, i32
  }
  func.func @transform_2(%arg0: i32) -> (i32, i32) {
    %c0_i32 = arith.constant 0 : i32
    %c0_i32_0 = arith.constant 0 : i32
    %c0_i32_1 = arith.constant 0 : i32
    return %c0_i32, %c0_i32_0 : i32, i32
  }
  func.func @transform_3(%arg0: i32) -> (i32, i32) {
    %c0_i32 = arith.constant 0 : i32
    %c0_i32_0 = arith.constant 0 : i32
    return %arg0, %c0_i32 : i32, i32
  }
}

</mosaic_0001>

<llo_original>
// kernel: _lambda_.49
$region0: #{_lambda_.49}
  #allocation0 [shape = 'u32[]', space=smem, size = 0x4, offset = 0x4, fixed_abs, tag = 'smem constant byte address 0x4 - core index']
  #allocation1 [shape = 'u32[72,128]{1,0:T(1,128)}', space=vmem, size = 0x9000, scoped, tag = 'internal scratch']
  #allocation2 [shape = 'f32[8,128]{1,0:T(8,128)}', space=vmem, size = 0x1000, scoped, tag = 'scratch operand']
  %s0 = inlined_call_operand.vmem [shape: bf16[8,128], index: 0, kind: input, shape index: {}]
  %s1 = inlined_call_operand.hbm [shape: bf16[128,128], index: 1, kind: input, shape index: {}]
  %s2 = inlined_call_operand.vmem [shape: f32[1,128], index: 2, kind: input, shape index: {}]
  %s3 = inlined_call_operand.vmem [shape: f32[8,128], index: 3, kind: output, shape index: {}]
  %s4 = sld [smem:[#allocation0]]
  $region34: #{_lambda_.49} parent=0
    _
  %s6 = ssub.s32 1, %s4
  %s7 = scalar_select 0, %s6, %s4
  $region1: #{_lambda_.49} parent=0
    #allocation3 [shape = 'u8[32768]{0}', space=vmem, size = 0x8000, scoped, tag = 'input window, operand 1, single buffered']
    #allocation4 [shape = 's32[1]{0}', space=sflag, size = 0x4, scoped, tag = 'scoped memory for _lambda_.49']
    %8 = vsyncpa [#allocation4], 0
    // Predicated region
    $region2: #{_lambda_.49} parent=1 // pred_check
      _
    $region3: #{_lambda_.49} parent=1 // pred_check_branch
      %10 = sbr.rel (0) target = $region5
    $region4: #{_lambda_.49} parent=1 // pred_region
      _
    $region5: #{_lambda_.49} parent=1 // pred_fallthru
      _
    // Predicated region
    $region6: #{_lambda_.49} parent=1 // pred_check
      _
    $region7: #{_lambda_.49} parent=1 // pred_check_branch
      %12 = sbr.rel (0) target = $region9
    $region8: #{_lambda_.49} parent=1 // pred_region
      %14 = vsyncadd [#allocation4], 0
      %s15 = sshll.u32 %s1, 4
      %s16 = int_to_ptr.hbm [resolvable:$true] %s15
      %s17 = sshll.u32 [#allocation3], 4
      %s18 = int_to_ptr.vmem [resolvable:$true] %s17
      %23 = dma.hbm_to_vmem [thread:$0]  %s16, 1024, %s18, [#allocation4], 64, 64, 4
    $region9: #{_lambda_.49} parent=1 // pred_fallthru
      _
    // Predicated region
    $region10: #{_lambda_.49} parent=1 // pred_check
      _
    $region11: #{_lambda_.49} parent=1 // pred_check_branch
      %25 = sbr.rel (0) target = $region13
    $region12: #{_lambda_.49} parent=1 // pred_region
      _
    $region13: #{_lambda_.49} parent=1 // pred_fallthru
      _
    // Predicated region
    $region14: #{_lambda_.49} parent=1 // pred_check
      _
    $region15: #{_lambda_.49} parent=1 // pred_check_branch
      %27 = sbr.rel (0) target = $region17
    $region16: #{_lambda_.49} parent=1 // pred_region
      %29 = dma.done [#allocation4], 1024
    $region17: #{_lambda_.49} parent=1 // pred_fallthru
      _
    %p30 = scmp.eq.s32.totalorder 0, 0
    // Predicated region
    $region18: #{_lambda_.49} parent=1 // pred_check
      %p31 = pneg %p30
    $region19: #{_lambda_.49} parent=1 // pred_check_branch
      %33 = sbr.rel (%p31) target = $region21
    $region20: #{_lambda_.49} parent=1 // pred_region
      %34 = vst [vmem:[#allocation2] sm:$0xff] 0.0
    $region21: #{_lambda_.49} parent=1 // pred_fallthru
      _
    %v35 = vld [vmem:[#allocation2] sm:$0xff]
    %v36 = vld [vmem:[%s0] sm:$0xf]
    %v37 = vld [vmem:[#allocation3] sm:$0xf]
    %v38 = vld [vmem:[#allocation3 + $0x4] sm:$0xf]
    %v39 = vld [vmem:[#allocation3 + $0x8] sm:$0xf]
    %v40 = vld [vmem:[#allocation3 + $0xc] sm:$0xf]
    %v41 = vld [vmem:[#allocation3 + $0x10] sm:$0xf]
    %v42 = vld [vmem:[#allocation3 + $0x14] sm:$0xf]
    %v43 = vld [vmem:[#allocation3 + $0x18] sm:$0xf]
    %v44 = vld [vmem:[#allocation3 + $0x1c] sm:$0xf]
    %v45 = vld [vmem:[#allocation3 + $0x20] sm:$0xf]
    %v46 = vld [vmem:[#allocation3 + $0x24] sm:$0xf]
    %v47 = vld [vmem:[#allocation3 + $0x28] sm:$0xf]
    %v48 = vld [vmem:[#allocation3 + $0x2c] sm:$0xf]
    %v49 = vld [vmem:[#allocation3 + $0x30] sm:$0xf]
    %v50 = vld [vmem:[#allocation3 + $0x34] sm:$0xf]
    %v51 = vld [vmem:[#allocation3 + $0x38] sm:$0xf]
    %v52 = vld [vmem:[#allocation3 + $0x3c] sm:$0xf]
    %v69 = vunpack.c.l.b16 %v37
    %v70 = vunpack.c.l.b16 %v38
    %v71 = vunpack.c.l.b16 %v39
    %v72 = vunpack.c.l.b16 %v40
    %v73 = vunpack.c.l.b16 %v41
    %v74 = vunpack.c.l.b16 %v42
    %v75 = vunpack.c.l.b16 %v43
    %v76 = vunpack.c.l.b16 %v44
    %v77 = vunpack.c.l.b16 %v45
    %v78 = vunpack.c.l.b16 %v46
    %v79 = vunpack.c.l.b16 %v47
    %v80 = vunpack.c.l.b16 %v48
    %v81 = vunpack.c.l.b16 %v49
    %v82 = vunpack.c.l.b16 %v50
    %v83 = vunpack.c.l.b16 %v51
    %v84 = vunpack.c.l.b16 %v52
    %v85 = vpack.c.b16 %v70, %v69
    %v86 = vpack.c.b16 %v72, %v71
    %v87 = vpack.c.b16 %v74, %v73
    %v88 = vpack.c.b16 %v76, %v75
    %v89 = vpack.c.b16 %v78, %v77
    %v90 = vpack.c.b16 %v80, %v79
    %v91 = vpack.c.b16 %v82, %v81
    %v92 = vpack.c.b16 %v84, %v83
    %101 = vmatpush.bf16.msra.mxu0 %v92
    %102 = vmatpush.bf16.msra.mxu0 %v91
    %103 = vmatpush.bf16.msra.mxu0 %v90
    %104 = vmatpush.bf16.msra.mxu0 %v89
    %105 = vmatpush.bf16.msra.mxu0 %v88
    %106 = vmatpush.bf16.msra.mxu0 %v87
    %107 = vmatpush.bf16.msra.mxu0 %v86
    %108 = vmatpush.bf16.msra.mxu0 %v85
    %109 = vmatmul.bf16.gmra.mxu0 %v36
    %v110 = vpop.f32.mrf.mxu0
    %v111 = vadd.f32 0.0, %v110
    %v112 = vpop.f32.mrf.mxu0
    %113 = vdwg.mxu0
    %v114 = vadd.f32 %v35, %v111
    %115 = vst [vmem:[#allocation2] sm:$0xff] %v114
    // Predicated region
    $region22: #{_lambda_.49} parent=1 // pred_check
      %p116 = pneg %p30
    $region23: #{_lambda_.49} parent=1 // pred_check_branch
      %118 = sbr.rel (%p116) target = $region25
    $region24: #{_lambda_.49} parent=1 // pred_region
      %v119 = vld [vmem:[#allocation2] sm:$0xff]
      %v120 = vld [vmem:[%s2] sm:$0x1]
      %v122 = vperm.slane %v120, 0
      %v124 = vadd.f32 %v119, %v122
      %125 = vst [vmem:[%s3] sm:$0xff] %v124
    $region25: #{_lambda_.49} parent=1 // pred_fallthru
      _
    // Predicated region
    $region26: #{_lambda_.49} parent=1 // pred_check
      _
    $region27: #{_lambda_.49} parent=1 // pred_check_branch
      %127 = sbr.rel (0) target = $region29
    $region28: #{_lambda_.49} parent=1 // pred_region
      _
    $region29: #{_lambda_.49} parent=1 // pred_fallthru
      _
    // Predicated region
    $region30: #{_lambda_.49} parent=1 // pred_check
      _
    $region31: #{_lambda_.49} parent=1 // pred_check_branch
      %129 = sbr.rel (0) target = $region33
    $region32: #{_lambda_.49} parent=1 // pred_region
      _
    $region33: #{_lambda_.49} parent=1 // pred_fallthru
      _
    %130 = vsyncpa [#allocation4], 1

// kernel: _lambda_.28
$region0: #{_lambda_.28}
  #allocation0 [shape = 'u32[]', space=smem, size = 0x4, offset = 0x4, fixed_abs, tag = 'smem constant byte address 0x4 - core index']
  #allocation1 [shape = 'u32[72,128]{1,0:T(1,128)}', space=vmem, size = 0x9000, scoped, tag = 'internal scratch']
  %s0 = inlined_call_operand.vmem [shape: f32[4,16,128], index: 0, kind: input, shape index: {}]
  %s1 = inlined_call_operand.vmem [shape: f32[1,16,128], index: 1, kind: input, shape index: {}]
  %s2 = inlined_call_operand.vmem [shape: f32[4,16,128], index: 2, kind: output, shape index: {}]
  %s3 = sld [smem:[#allocation0]]
  $region41: #{_lambda_.28} parent=0
    _
  %s5 = ssub.s32 1, %s3
  %s6 = scalar_select 0, %s5, %s3
  loop: start=0, step=1, limit=6
  $region2: #{_lambda_.28} parent=0 // loop_pre_header
    _
  $region3: #{_lambda_.28} parent=0 // loop_header
    %s8 = sphi 0, %s12
    %p9 = scmp.ge.s32.totalorder %s8, 6
    %s15 = sphi 0, %s27
    %s16 = sphi 0, %s23
    %s17 = sphi 0, %s15
    %s18 = sphi 0, %s16
    %s19 = sphi 0, %s17
    %s20 = sphi 0, %s18
    %s32 = sphi 0, %s34
    %s35 = sphi 0, %s32
    %s36 = sphi 0, %s35
    %s52 = sphi 0, %s36
    %s58 = sphi 0, %s60
    %s61 = sphi 0, %s58
    %s62 = sphi 0, %s61
    %s78 = sphi 0, %s62
    %s86 = sphi 0, %s88
    %s89 = sphi 0, %s86
    %s90 = sphi 0, %s89
    %s106 = sphi 0, %s90
  $region4: #{_lambda_.28} parent=0 // loop_header_branch
    %11 = sbr.rel (%p9) target = $region8
  $region5: #{_lambda_.28} parent=0 // loop_body
    %s13 = ssub.s32 %s8, 1
    %s14 = ssub.s32 %s8, 2
    %s21 = sadd.s32 1, %s16
    %p22 = scmp.ge.s32.totalorder %s21, 4
    %s23 = scalar_select %p22, 0, %s21
    %s24 = sadd.s32 1, %s15
    %s25 = scalar_select %p22, %s24, %s15
    %p26 = scmp.ge.s32.totalorder %s25, 1
    %s27 = scalar_select %p26, 0, %s25
    %s28 = ssub.s32 %s16, %s23
    %s29 = ssub.s32 %s15, %s27
    %s30 = sor.u32 %s28, %s29
    %p31 = scmp.eq.s32.totalorder %s30, 0
    %s33 = sadd.s32 %s32, 1
    %s34 = scalar_select %p31, %s32, %s33
    %p37 = pneg %p31
    %p38 = scmp.eq.s32.totalorder %s8, 3
    %p39 = por %p37, %p38
    %p40 = scmp.ne.s32.totalorder %s32, %s35
    %p41 = scmp.eq.s32.totalorder %s8, 0
    %p42 = por %p40, %p41
    %p43 = scmp.ne.s32.totalorder %s32, %s35
    %p44 = scmp.eq.s32.totalorder %s13, 3
    %p45 = por %p43, %p44
    %p46 = scmp.ne.s32.totalorder %s35, %s36
    %p47 = scmp.eq.s32.totalorder %s13, 0
    %p48 = por %p46, %p47
    %p49 = scmp.ne.s32.totalorder %s35, %s36
    %p50 = scmp.eq.s32.totalorder %s14, 3
    %p51 = por %p49, %p50
    %p53 = scmp.ne.s32.totalorder %s36, %s52
    %p54 = scmp.eq.s32.totalorder %s14, 0
    %p55 = por %p53, %p54
    %s56 = ssub.s32 %s15, %s27
    %p57 = scmp.eq.s32.totalorder %s56, 0
    %s59 = sadd.s32 %s58, 1
    %s60 = scalar_select %p57, %s58, %s59
    %p63 = pneg %p57
    %p64 = scmp.eq.s32.totalorder %s8, 3
    %p65 = por %p63, %p64
    %p66 = scmp.ne.s32.totalorder %s58, %s61
    %p67 = scmp.eq.s32.totalorder %s8, 0
    %p68 = por %p66, %p67
    %p69 = scmp.ne.s32.totalorder %s58, %s61
    %p70 = scmp.eq.s32.totalorder %s13, 3
    %p71 = por %p69, %p70
    %p72 = scmp.ne.s32.totalorder %s61, %s62
    %p73 = scmp.eq.s32.totalorder %s13, 0
    %p74 = por %p72, %p73
    %p75 = scmp.ne.s32.totalorder %s61, %s62
    %p76 = scmp.eq.s32.totalorder %s14, 3
    %p77 = por %p75, %p76
    %p79 = scmp.ne.s32.totalorder %s62, %s78
    %p80 = scmp.eq.s32.totalorder %s14, 0
    %p81 = por %p79, %p80
    %s82 = ssub.s32 %s16, %s23
    %s83 = ssub.s32 %s15, %s27
    %s84 = sor.u32 %s82, %s83
    %p85 = scmp.eq.s32.totalorder %s84, 0
    %s87 = sadd.s32 %s86, 1
    %s88 = scalar_select %p85, %s86, %s87
    %p91 = pneg %p85
    %p92 = scmp.eq.s32.totalorder %s8, 3
    %p93 = por %p91, %p92
    %p94 = scmp.ne.s32.totalorder %s86, %s89
    %p95 = scmp.eq.s32.totalorder %s8, 0
    %p96 = por %p94, %p95
    %p97 = scmp.ne.s32.totalorder %s86, %s89
    %p98 = scmp.eq.s32.totalorder %s13, 3
    %p99 = por %p97, %p98
    %p100 = scmp.ne.s32.totalorder %s89, %s90
    %p101 = scmp.eq.s32.totalorder %s13, 0
    %p102 = por %p100, %p101
    %p103 = scmp.ne.s32.totalorder %s89, %s90
    %p104 = scmp.eq.s32.totalorder %s14, 3
    %p105 = por %p103, %p104
    %p107 = scmp.ne.s32.totalorder %s90, %s106
    %p108 = scmp.eq.s32.totalorder %s14, 0
    %p109 = por %p107, %p108
    %p110 = scmp.le.s32.totalorder 1, %s8
    %p111 = scmp.lt.s32.totalorder %s8, 5
    %p112 = pnand %p110, %p111
    %p113 = pneg %p112
    // Predicated region
    $region9: #{_lambda_.28} parent=5 // pred_check
      _
    $region10: #{_lambda_.28} parent=5 // pred_check_branch
      %115 = sbr.rel (%p112) target = $region12
    $region11: #{_lambda_.28} parent=5 // pred_region
      %s116 = ssub.s32 %s8, 1
      // Predicated region
      $region13: #{_lambda_.28} parent=11 // pred_check
        %p117 = pneg %p74
      $region14: #{_lambda_.28} parent=11 // pred_check_branch
        %119 = sbr.rel (%p117) target = $region16
      $region15: #{_lambda_.28} parent=11 // pred_region
        %s120 = smul.u32 2, %s17
        %p121 = scmp.lt.s32.totalorder %s120, 1
        %s122 = scalar_select %p121, %s120, 1
        %s123 = smul.addr %s122, 8
        %s124 = scalar_lea.vmem %s1, %s123
        %s125 = smul.u32 2, %s17
      $region16: #{_lambda_.28} parent=11 // pred_fallthru
        _
    $region12: #{_lambda_.28} parent=5 // pred_fallthru
      _
    %p126 = scmp.lt.s32.totalorder %s8, 4
    // Predicated region
    $region17: #{_lambda_.28} parent=5 // pred_check
      %p127 = pneg %p126
    $region18: #{_lambda_.28} parent=5 // pred_check_branch
      %129 = sbr.rel (%p127) target = $region20
    $region19: #{_lambda_.28} parent=5 // pred_region
      // Predicated region
      $region21: #{_lambda_.28} parent=19 // pred_check
        %p130 = pneg %p42
      $region22: #{_lambda_.28} parent=19 // pred_check_branch
        %132 = sbr.rel (%p130) target = $region24
      $region23: #{_lambda_.28} parent=19 // pred_region
        %s133 = smul.u32 2, %s15
        %p134 = scmp.lt.s32.totalorder %s16, 3
        %s135 = scalar_select %p134, %s16, 3
        %p136 = scmp.lt.s32.totalorder %s133, 1
        %s137 = scalar_select %p136, %s133, 1
        %s138 = smul.addr %s135, 2
        %s139 = sadd.s32 %s137, %s138
        %s140 = smul.addr %s139, 8
        %s141 = scalar_lea.vmem %s0, %s140
        %s142 = smul.u32 2, %s15
      $region24: #{_lambda_.28} parent=19 // pred_fallthru
        _
    $region20: #{_lambda_.28} parent=5 // pred_fallthru
      _
    %p143 = scmp.le.s32.totalorder 1, %s8
    %p144 = scmp.lt.s32.totalorder %s8, 5
    %p145 = pnand %p143, %p144
    %p146 = pneg %p145
    // Predicated region
    $region25: #{_lambda_.28} parent=5 // pred_check
      _
    $region26: #{_lambda_.28} parent=5 // pred_check_branch
      %148 = sbr.rel (%p145) target = $region28
    $region27: #{_lambda_.28} parent=5 // pred_region
      %s149 = ssub.s32 %s8, 1
      %s150 = smul.u32 2, %s17
      %p151 = scmp.lt.s32.totalorder %s18, 3
      %s152 = scalar_select %p151, %s18, 3
      %p153 = scmp.lt.s32.totalorder %s150, 1
      %s154 = scalar_select %p153, %s150, 1
      %s155 = smul.addr %s152, 2
      %s156 = sadd.s32 %s154, %s155
      %s157 = smul.addr %s156, 8
      %s158 = scalar_lea.vmem %s0, %s157
      %p159 = pneg %p48
      %p160 = pneg %p45
      %s161 = smul.u32 2, %s17
      %p162 = scmp.lt.s32.totalorder %s161, 1
      %s163 = scalar_select %p162, %s161, 1
      %s164 = smul.addr %s163, 8
      %s165 = scalar_lea.vmem %s1, %s164
      %p166 = pneg %p74
      %p167 = pneg %p71
      %p168 = pneg %p102
      %p169 = pneg %p99
      %s170 = smul.u32 2, %s17
      %p171 = scmp.lt.s32.totalorder %s18, 3
      %s172 = scalar_select %p171, %s18, 3
      %p173 = scmp.lt.s32.totalorder %s170, 1
      %s174 = scalar_select %p173, %s170, 1
      %s175 = smul.addr %s172, 2
      %s176 = sadd.s32 %s174, %s175
      %s177 = smul.addr %s176, 8
      %s178 = scalar_lea.vmem %s2, %s177
      %s179 = smul.u32 2, %s17
      %p180 = scmp.lt.s32.totalorder %s18, 3
      %s181 = scalar_select %p180, %s18, 3
      %p182 = scmp.lt.s32.totalorder %s179, 1
      %s183 = scalar_select %p182, %s179, 1
      %s184 = smul.addr %s181, 2
      %s185 = sadd.s32 %s183, %s184
      %s186 = smul.addr %s185, 8
      %s187 = scalar_lea.vmem %s0, %s186
      %s188 = smul.u32 2, %s17
      %s189 = smul.u32 2, %s17
      %p190 = scmp.lt.s32.totalorder %s189, 1
      %s191 = scalar_select %p190, %s189, 1
      %s192 = smul.addr %s191, 8
      %s193 = scalar_lea.vmem %s1, %s192
      %s194 = smul.u32 2, %s17
      %s195 = smul.u32 2, %s17
      %p196 = scmp.lt.s32.totalorder %s18, 3
      %s197 = scalar_select %p196, %s18, 3
      %p198 = scmp.lt.s32.totalorder %s195, 1
      %s199 = scalar_select %p198, %s195, 1
      %s200 = smul.addr %s197, 2
      %s201 = sadd.s32 %s199, %s200
      %s202 = smul.addr %s201, 8
      %s203 = scalar_lea.vmem %s2, %s202
      %s204 = smul.u32 2, %s17
      %v205 = vld [vmem:[%s187] sm:$0xff]
      %v206 = vld [vmem:[%s187 + $0x8] sm:$0xff]
      %v207 = vld [vmem:[%s193] sm:$0xff]
      %v208 = vld [vmem:[%s193 + $0x8] sm:$0xff]
      %v209 = vadd.f32 %v205, %v207
      %v210 = vadd.f32 %v206, %v208
      %211 = vst [vmem:[%s203] sm:$0xff] %v209
      %212 = vst [vmem:[%s203 + $0x8] sm:$0xff] %v210
      %s213 = smul.u32 2, %s17
      %p214 = scmp.lt.s32.totalorder %s18, 3
      %s215 = scalar_select %p214, %s18, 3
      %p216 = scmp.lt.s32.totalorder %s213, 1
      %s217 = scalar_select %p216, %s213, 1
      %s218 = smul.addr %s215, 2
      %s219 = sadd.s32 %s217, %s218
      %s220 = smul.addr %s219, 8
      %s221 = scalar_lea.vmem %s2, %s220
      // Predicated region
      $region29: #{_lambda_.28} parent=27 // pred_check
        %p222 = pneg %p99
      $region30: #{_lambda_.28} parent=27 // pred_check_branch
        %224 = sbr.rel (%p222) target = $region32
      $region31: #{_lambda_.28} parent=27 // pred_region
        %s225 = smul.u32 2, %s17
      $region32: #{_lambda_.28} parent=27 // pred_fallthru
        _
    $region28: #{_lambda_.28} parent=5 // pred_fallthru
      _
    %p226 = scmp.le.s32.totalorder 2, %s8
    // Predicated region
    $region33: #{_lambda_.28} parent=5 // pred_check
      %p227 = pneg %p226
    $region34: #{_lambda_.28} parent=5 // pred_check_branch
      %229 = sbr.rel (%p227) target = $region36
    $region35: #{_lambda_.28} parent=5 // pred_region
      %s230 = ssub.s32 %s8, 2
      // Predicated region
      $region37: #{_lambda_.28} parent=35 // pred_check
        %p231 = pneg %p105
      $region38: #{_lambda_.28} parent=35 // pred_check_branch
        %233 = sbr.rel (%p231) target = $region40
      $region39: #{_lambda_.28} parent=35 // pred_region
        %s234 = smul.u32 2, %s19
        %p235 = scmp.lt.s32.totalorder %s20, 3
        %s236 = scalar_select %p235, %s20, 3
        %p237 = scmp.lt.s32.totalorder %s234, 1
        %s238 = scalar_select %p237, %s234, 1
        %s239 = smul.addr %s236, 2
        %s240 = sadd.s32 %s238, %s239
        %s241 = smul.addr %s240, 8
        %s242 = scalar_lea.vmem %s2, %s241
      $region40: #{_lambda_.28} parent=35 // pred_fallthru
        _
    $region36: #{_lambda_.28} parent=5 // pred_fallthru
      _
  $region6: #{_lambda_.28} parent=0 // loop_footer
    %s12 = sadd.s32 1, %s8
  $region7: #{_lambda_.28} parent=0 // loop_footer_branch
    %7 = sbr.rel target = $region3
  $region8: #{_lambda_.28} parent=0 // loop_exit
    _

// kernel: _lambda_.27
$region0: #{_lambda_.27}
  #allocation0 [shape = 'u32[]', space=smem, size = 0x4, offset = 0x4, fixed_abs, tag = 'smem constant byte address 0x4 - core index']
  #allocation1 [shape = 'u32[72,128]{1,0:T(1,128)}', space=vmem, size = 0x9000, scoped, tag = 'internal scratch']
  #allocation2 [shape = 'f32[256,128]{1,0:T(8,128)}', space=vmem, size = 0x20000, scoped, tag = 'scratch operand']
  %s0 = inlined_call_operand.vmem [shape: bf16[256,128], index: 0, kind: input, shape index: {}]
  %s1 = inlined_call_operand.vmem [shape: bf16[128,128], index: 1, kind: input, shape index: {}]
  %s2 = inlined_call_operand.vmem [shape: f32[1,128], index: 2, kind: input, shape index: {}]
  %s3 = inlined_call_operand.vmem [shape: f32[256,128], index: 3, kind: output, shape index: {}]
  %s4 = sld [smem:[#allocation0]]
  $region30: #{_lambda_.27} parent=0
    _
  %s6 = ssub.s32 1, %s4
  %s7 = scalar_select 0, %s6, %s4
  // Predicated region
  $region2: #{_lambda_.27} parent=0 // pred_check
    _
  $region3: #{_lambda_.27} parent=0 // pred_check_branch
    %9 = sbr.rel (0) target = $region5
  $region4: #{_lambda_.27} parent=0 // pred_region
    _
  $region5: #{_lambda_.27} parent=0 // pred_fallthru
    _
  // Predicated region
  $region6: #{_lambda_.27} parent=0 // pred_check
    _
  $region7: #{_lambda_.27} parent=0 // pred_check_branch
    %11 = sbr.rel (0) target = $region9
  $region8: #{_lambda_.27} parent=0 // pred_region
    _
  $region9: #{_lambda_.27} parent=0 // pred_fallthru
    _
  // Predicated region
  $region10: #{_lambda_.27} parent=0 // pred_check
    _
  $region11: #{_lambda_.27} parent=0 // pred_check_branch
    %13 = sbr.rel (0) target = $region13
  $region12: #{_lambda_.27} parent=0 // pred_region
    _
  $region13: #{_lambda_.27} parent=0 // pred_fallthru
    _
  %p14 = scmp.eq.s32.totalorder 0, 0
  // Predicated region
  $region14: #{_lambda_.27} parent=0 // pred_check
    %p15 = pneg %p14
  $region15: #{_lambda_.27} parent=0 // pred_check_branch
    %17 = sbr.rel (%p15) target = $region17
  $region16: #{_lambda_.27} parent=0 // pred_region
    %18 = vst [vmem:[#allocation2] sm:$0xff] 0.0
    %19 = vst [vmem:[#allocation2 + $0x8] sm:$0xff] 0.0
    %20 = vst [vmem:[#allocation2 + $0x10] sm:$0xff] 0.0
    %21 = vst [vmem:[#allocation2 + $0x18] sm:$0xff] 0.0
    %22 = vst [vmem:[#allocation2 + $0x20] sm:$0xff] 0.0
    %23 = vst [vmem:[#allocation2 + $0x28] sm:$0xff] 0.0
    %24 = vst [vmem:[#allocation2 + $0x30] sm:$0xff] 0.0
    %25 = vst [vmem:[#allocation2 + $0x38] sm:$0xff] 0.0
    %26 = vst [vmem:[#allocation2 + $0x40] sm:$0xff] 0.0
    %27 = vst [vmem:[#allocation2 + $0x48] sm:$0xff] 0.0
    %28 = vst [vmem:[#allocation2 + $0x50] sm:$0xff] 0.0
    %29 = vst [vmem:[#allocation2 + $0x58] sm:$0xff] 0.0
    %30 = vst [vmem:[#allocation2 + $0x60] sm:$0xff] 0.0
    %31 = vst [vmem:[#allocation2 + $0x68] sm:$0xff] 0.0
    %32 = vst [vmem:[#allocation2 + $0x70] sm:$0xff] 0.0
    %33 = vst [vmem:[#allocation2 + $0x78] sm:$0xff] 0.0
    %34 = vst [vmem:[#allocation2 + $0x80] sm:$0xff] 0.0
    %35 = vst [vmem:[#allocation2 + $0x88] sm:$0xff] 0.0
    %36 = vst [vmem:[#allocation2 + $0x90] sm:$0xff] 0.0
    %37 = vst [vmem:[#allocation2 + $0x98] sm:$0xff] 0.0
    %38 = vst [vmem:[#allocation2 + $0xa0] sm:$0xff] 0.0
    %39 = vst [vmem:[#allocation2 + $0xa8] sm:$0xff] 0.0
    %40 = vst [vmem:[#allocation2 + $0xb0] sm:$0xff] 0.0
    %41 = vst [vmem:[#allocation2 + $0xb8] sm:$0xff] 0.0
    %42 = vst [vmem:[#allocation2 + $0xc0] sm:$0xff] 0.0
    %43 = vst [vmem:[#allocation2 + $0xc8] sm:$0xff] 0.0
    %44 = vst [vmem:[#allocation2 + $0xd0] sm:$0xff] 0.0
    %45 = vst [vmem:[#allocation2 + $0xd8] sm:$0xff] 0.0
    %46 = vst [vmem:[#allocation2 + $0xe0] sm:$0xff] 0.0
    %47 = vst [vmem:[#allocation2 + $0xe8] sm:$0xff] 0.0
    %48 = vst [vmem:[#allocation2 + $0xf0] sm:$0xff] 0.0
    %49 = vst [vmem:[#allocation2 + $0xf8] sm:$0xff] 0.0
  $region17: #{_lambda_.27} parent=0 // pred_fallthru
    _
  %v50 = vld [vmem:[#allocation2] sm:$0xff]
  %v51 = vld [vmem:[#allocation2 + $0x8] sm:$0xff]
  %v52 = vld [vmem:[#allocation2 + $0x10] sm:$0xff]
  %v53 = vld [vmem:[#allocation2 + $0x18] sm:$0xff]
  %v54 = vld [vmem:[#allocation2 + $0x20] sm:$0xff]
  %v55 = vld [vmem:[#allocation2 + $0x28] sm:$0xff]
  %v56 = vld [vmem:[#allocation2 + $0x30] sm:$0xff]
  %v57 = vld [vmem:[#allocation2 + $0x38] sm:$0xff]
  %v58 = vld [vmem:[#allocation2 + $0x40] sm:$0xff]
  %v59 = vld [vmem:[#allocation2 + $0x48] sm:$0xff]
  %v60 = vld [vmem:[#allocation2 + $0x50] sm:$0xff]
  %v61 = vld [vmem:[#allocation2 + $0x58] sm:$0xff]
  %v62 = vld [vmem:[#allocation2 + $0x60] sm:$0xff]
  %v63 = vld [vmem:[#allocation2 + $0x68] sm:$0xff]
  %v64 = vld [vmem:[#allocation2 + $0x70] sm:$0xff]
  %v65 = vld [vmem:[#allocation2 + $0x78] sm:$0xff]
  %v66 = vld [vmem:[#allocation2 + $0x80] sm:$0xff]
  %v67 = vld [vmem:[#allocation2 + $0x88] sm:$0xff]
  %v68 = vld [vmem:[#allocation2 + $0x90] sm:$0xff]
  %v69 = vld [vmem:[#allocation2 + $0x98] sm:$0xff]
  %v70 = vld [vmem:[#allocation2 + $0xa0] sm:$0xff]
  %v71 = vld [vmem:[#allocation2 + $0xa8] sm:$0xff]
  %v72 = vld [vmem:[#allocation2 + $0xb0] sm:$0xff]
  %v73 = vld [vmem:[#allocation2 + $0xb8] sm:$0xff]
  %v74 = vld [vmem:[#allocation2 + $0xc0] sm:$0xff]
  %v75 = vld [vmem:[#allocation2 + $0xc8] sm:$0xff]
  %v76 = vld [vmem:[#allocation2 + $0xd0] sm:$0xff]
  %v77 = vld [vmem:[#allocation2 + $0xd8] sm:$0xff]
  %v78 = vld [vmem:[#allocation2 + $0xe0] sm:$0xff]
  %v79 = vld [vmem:[#allocation2 + $0xe8] sm:$0xff]
  %v80 = vld [vmem:[#allocation2 + $0xf0] sm:$0xff]
  %v81 = vld [vmem:[#allocation2 + $0xf8] sm:$0xff]
  %v82 = vld [vmem:[%s0] sm:$0xf]
  %v83 = vld [vmem:[%s0 + $0x4] sm:$0xf]
  %v84 = vld [vmem:[%s0 + $0x8] sm:$0xf]
  %v85 = vld [vmem:[%s0 + $0xc] sm:$0xf]
  %v86 = vld [vmem:[%s0 + $0x10] sm:$0xf]
  %v87 = vld [vmem:[%s0 + $0x14] sm:$0xf]
  %v88 = vld [vmem:[%s0 + $0x18] sm:$0xf]
  %v89 = vld [vmem:[%s0 + $0x1c] sm:$0xf]
  %v90 = vld [vmem:[%s0 + $0x20] sm:$0xf]
  %v91 = vld [vmem:[%s0 + $0x24] sm:$0xf]
  %v92 = vld [vmem:[%s0 + $0x28] sm:$0xf]
  %v93 = vld [vmem:[%s0 + $0x2c] sm:$0xf]
  %v94 = vld [vmem:[%s0 + $0x30] sm:$0xf]
  %v95 = vld [vmem:[%s0 + $0x34] sm:$0xf]
  %v96 = vld [vmem:[%s0 + $0x38] sm:$0xf]
  %v97 = vld [vmem:[%s0 + $0x3c] sm:$0xf]
  %v98 = vld [vmem:[%s0 + $0x40] sm:$0xf]
  %v99 = vld [vmem:[%s0 + $0x44] sm:$0xf]
  %v100 = vld [vmem:[%s0 + $0x48] sm:$0xf]
  %v101 = vld [vmem:[%s0 + $0x4c] sm:$0xf]
  %v102 = vld [vmem:[%s0 + $0x50] sm:$0xf]
  %v103 = vld [vmem:[%s0 + $0x54] sm:$0xf]
  %v104 = vld [vmem:[%s0 + $0x58] sm:$0xf]
  %v105 = vld [vmem:[%s0 + $0x5c] sm:$0xf]
  %v106 = vld [vmem:[%s0 + $0x60] sm:$0xf]
  %v107 = vld [vmem:[%s0 + $0x64] sm:$0xf]
  %v108 = vld [vmem:[%s0 + $0x68] sm:$0xf]
  %v109 = vld [vmem:[%s0 + $0x6c] sm:$0xf]
  %v110 = vld [vmem:[%s0 + $0x70] sm:$0xf]
  %v111 = vld [vmem:[%s0 + $0x74] sm:$0xf]
  %v112 = vld [vmem:[%s0 + $0x78] sm:$0xf]
  %v113 = vld [vmem:[%s0 + $0x7c] sm:$0xf]
  %v114 = vld [vmem:[%s1] sm:$0xf]
  %v115 = vld [vmem:[%s1 + $0x4] sm:$0xf]
  %v116 = vld [vmem:[%s1 + $0x8] sm:$0xf]
  %v117 = vld [vmem:[%s1 + $0xc] sm:$0xf]
  %v118 = vld [vmem:[%s1 + $0x10] sm:$0xf]
  %v119 = vld [vmem:[%s1 + $0x14] sm:$0xf]
  %v120 = vld [vmem:[%s1 + $0x18] sm:$0xf]
  %v121 = vld [vmem:[%s1 + $0x1c] sm:$0xf]
  %v122 = vld [vmem:[%s1 + $0x20] sm:$0xf]
  %v123 = vld [vmem:[%s1 + $0x24] sm:$0xf]
  %v124 = vld [vmem:[%s1 + $0x28] sm:$0xf]
  %v125 = vld [vmem:[%s1 + $0x2c] sm:$0xf]
  %v126 = vld [vmem:[%s1 + $0x30] sm:$0xf]
  %v127 = vld [vmem:[%s1 + $0x34] sm:$0xf]
  %v128 = vld [vmem:[%s1 + $0x38] sm:$0xf]
  %v129 = vld [vmem:[%s1 + $0x3c] sm:$0xf]
  %v162 = vunpack.c.l.b16 %v82
  %v163 = vunpack.c.l.b16 %v83
  %v164 = vunpack.c.l.b16 %v84
  %v165 = vunpack.c.l.b16 %v85
  %v166 = vunpack.c.l.b16 %v86
  %v167 = vunpack.c.l.b16 %v87
  %v168 = vunpack.c.l.b16 %v88
  %v169 = vunpack.c.l.b16 %v89
  %v170 = vunpack.c.l.b16 %v90
  %v171 = vunpack.c.l.b16 %v91
  %v172 = vunpack.c.l.b16 %v92
  %v173 = vunpack.c.l.b16 %v93
  %v174 = vunpack.c.l.b16 %v94
  %v175 = vunpack.c.l.b16 %v95
  %v176 = vunpack.c.l.b16 %v96
  %v177 = vunpack.c.l.b16 %v97
  %v178 = vunpack.c.l.b16 %v98
  %v179 = vunpack.c.l.b16 %v99
  %v180 = vunpack.c.l.b16 %v100
  %v181 = vunpack.c.l.b16 %v101
  %v182 = vunpack.c.l.b16 %v102
  %v183 = vunpack.c.l.b16 %v103
  %v184 = vunpack.c.l.b16 %v104
  %v185 = vunpack.c.l.b16 %v105
  %v186 = vunpack.c.l.b16 %v106
  %v187 = vunpack.c.l.b16 %v107
  %v188 = vunpack.c.l.b16 %v108
  %v189 = vunpack.c.l.b16 %v109
  %v190 = vunpack.c.l.b16 %v110
  %v191 = vunpack.c.l.b16 %v111
  %v192 = vunpack.c.l.b16 %v112
  %v193 = vunpack.c.l.b16 %v113
  %v194 = vpack.c.b16 %v163, %v162
  %v195 = vpack.c.b16 %v165, %v164
  %v196 = vpack.c.b16 %v167, %v166
  %v197 = vpack.c.b16 %v169, %v168
  %v198 = vpack.c.b16 %v171, %v170
  %v199 = vpack.c.b16 %v173, %v172
  %v200 = vpack.c.b16 %v175, %v174
  %v201 = vpack.c.b16 %v177, %v176
  %v202 = vpack.c.b16 %v179, %v178
  %v203 = vpack.c.b16 %v181, %v180
  %v204 = vpack.c.b16 %v183, %v182
  %v205 = vpack.c.b16 %v185, %v184
  %v206 = vpack.c.b16 %v187, %v186
  %v207 = vpack.c.b16 %v189, %v188
  %v208 = vpack.c.b16 %v191, %v190
  %v209 = vpack.c.b16 %v193, %v192
  %v242 = vunpack.c.l.b16 %v114
  %v243 = vunpack.c.l.b16 %v115
  %v244 = vunpack.c.l.b16 %v116
  %v245 = vunpack.c.l.b16 %v117
  %v246 = vunpack.c.l.b16 %v118
  %v247 = vunpack.c.l.b16 %v119
  %v248 = vunpack.c.l.b16 %v120
  %v249 = vunpack.c.l.b16 %v121
  %v250 = vunpack.c.l.b16 %v122
  %v251 = vunpack.c.l.b16 %v123
  %v252 = vunpack.c.l.b16 %v124
  %v253 = vunpack.c.l.b16 %v125
  %v254 = vunpack.c.l.b16 %v126
  %v255 = vunpack.c.l.b16 %v127
  %v256 = vunpack.c.l.b16 %v128
  %v257 = vunpack.c.l.b16 %v129
  %v258 = vpack.c.b16 %v243, %v242
  %v259 = vpack.c.b16 %v245, %v244
  %v260 = vpack.c.b16 %v247, %v246
  %v261 = vpack.c.b16 %v249, %v248
  %v262 = vpack.c.b16 %v251, %v250
  %v263 = vpack.c.b16 %v253, %v252
  %v264 = vpack.c.b16 %v255, %v254
  %v265 = vpack.c.b16 %v257, %v256
  %274 = vmatpush.bf16.msra.mxu0 %v265
  %275 = vmatpush.bf16.msra.mxu0 %v264
  %276 = vmatpush.bf16.msra.mxu0 %v263
  %277 = vmatpush.bf16.msra.mxu0 %v262
  %278 = vmatpush.bf16.msra.mxu0 %v261
  %279 = vmatpush.bf16.msra.mxu0 %v260
  %280 = vmatpush.bf16.msra.mxu0 %v259
  %281 = vmatpush.bf16.msra.mxu0 %v258
  %282 = vmatmul.bf16.gmra.mxu0 %v194
  %v283 = vpop.f32.mrf.mxu0
  %v284 = vadd.f32 0.0, %v283
  %v285 = vpop.f32.mrf.mxu0
  %v286 = vadd.f32 0.0, %v285
  %287 = vmatmul.bf16.gmra.mxu0 %v195
  %v288 = vpop.f32.mrf.mxu0
  %v289 = vadd.f32 0.0, %v288
  %v290 = vpop.f32.mrf.mxu0
  %v291 = vadd.f32 0.0, %v290
  %292 = vmatmul.bf16.gmra.mxu0 %v196
  %v293 = vpop.f32.mrf.mxu0
  %v294 = vadd.f32 0.0, %v293
  %v295 = vpop.f32.mrf.mxu0
  %v296 = vadd.f32 0.0, %v295
  %297 = vmatmul.bf16.gmra.mxu0 %v197
  %v298 = vpop.f32.mrf.mxu0
  %v299 = vadd.f32 0.0, %v298
  %v300 = vpop.f32.mrf.mxu0
  %v301 = vadd.f32 0.0, %v300
  %302 = vmatmul.bf16.gmra.mxu0 %v198
  %v303 = vpop.f32.mrf.mxu0
  %v304 = vadd.f32 0.0, %v303
  %v305 = vpop.f32.mrf.mxu0
  %v306 = vadd.f32 0.0, %v305
  %307 = vmatmul.bf16.gmra.mxu0 %v199
  %v308 = vpop.f32.mrf.mxu0
  %v309 = vadd.f32 0.0, %v308
  %v310 = vpop.f32.mrf.mxu0
  %v311 = vadd.f32 0.0, %v310
  %312 = vmatmul.bf16.gmra.mxu0 %v200
  %v313 = vpop.f32.mrf.mxu0
  %v314 = vadd.f32 0.0, %v313
  %v315 = vpop.f32.mrf.mxu0
  %v316 = vadd.f32 0.0, %v315
  %317 = vmatmul.bf16.gmra.mxu0 %v201
  %v318 = vpop.f32.mrf.mxu0
  %v319 = vadd.f32 0.0, %v318
  %v320 = vpop.f32.mrf.mxu0
  %v321 = vadd.f32 0.0, %v320
  %322 = vmatmul.bf16.gmra.mxu0 %v202
  %v323 = vpop.f32.mrf.mxu0
  %v324 = vadd.f32 0.0, %v323
  %v325 = vpop.f32.mrf.mxu0
  %v326 = vadd.f32 0.0, %v325
  %327 = vmatmul.bf16.gmra.mxu0 %v203
  %v328 = vpop.f32.mrf.mxu0
  %v329 = vadd.f32 0.0, %v328
  %v330 = vpop.f32.mrf.mxu0
  %v331 = vadd.f32 0.0, %v330
  %332 = vmatmul.bf16.gmra.mxu0 %v204
  %v333 = vpop.f32.mrf.mxu0
  %v334 = vadd.f32 0.0, %v333
  %v335 = vpop.f32.mrf.mxu0
  %v336 = vadd.f32 0.0, %v335
  %337 = vmatmul.bf16.gmra.mxu0 %v205
  %v338 = vpop.f32.mrf.mxu0
  %v339 = vadd.f32 0.0, %v338
  %v340 = vpop.f32.mrf.mxu0
  %v341 = vadd.f32 0.0, %v340
  %342 = vmatmul.bf16.gmra.mxu0 %v206
  %v343 = vpop.f32.mrf.mxu0
  %v344 = vadd.f32 0.0, %v343
  %v345 = vpop.f32.mrf.mxu0
  %v346 = vadd.f32 0.0, %v345
  %347 = vmatmul.bf16.gmra.mxu0 %v207
  %v348 = vpop.f32.mrf.mxu0
  %v349 = vadd.f32 0.0, %v348
  %v350 = vpop.f32.mrf.mxu0
  %v351 = vadd.f32 0.0, %v350
  %352 = vmatmul.bf16.gmra.mxu0 %v208
  %v353 = vpop.f32.mrf.mxu0
  %v354 = vadd.f32 0.0, %v353
  %v355 = vpop.f32.mrf.mxu0
  %v356 = vadd.f32 0.0, %v355
  %357 = vmatmul.bf16.gmra.mxu0 %v209
  %v358 = vpop.f32.mrf.mxu0
  %v359 = vadd.f32 0.0, %v358
  %v360 = vpop.f32.mrf.mxu0
  %v361 = vadd.f32 0.0, %v360
  %362 = vdwg.mxu0
  %v363 = vadd.f32 %v50, %v284
  %v364 = vadd.f32 %v51, %v286
  %v365 = vadd.f32 %v52, %v289
  %v366 = vadd.f32 %v53, %v291
  %v367 = vadd.f32 %v54, %v294
  %v368 = vadd.f32 %v55, %v296
  %v369 = vadd.f32 %v56, %v299
  %v370 = vadd.f32 %v57, %v301
  %v371 = vadd.f32 %v58, %v304
  %v372 = vadd.f32 %v59, %v306
  %v373 = vadd.f32 %v60, %v309
  %v374 = vadd.f32 %v61, %v311
  %v375 = vadd.f32 %v62, %v314
  %v376 = vadd.f32 %v63, %v316
  %v377 = vadd.f32 %v64, %v319
  %v378 = vadd.f32 %v65, %v321
  %v379 = vadd.f32 %v66, %v324
  %v380 = vadd.f32 %v67, %v326
  %v381 = vadd.f32 %v68, %v329
  %v382 = vadd.f32 %v69, %v331
  %v383 = vadd.f32 %v70, %v334
  %v384 = vadd.f32 %v71, %v336
  %v385 = vadd.f32 %v72, %v339
  %v386 = vadd.f32 %v73, %v341
  %v387 = vadd.f32 %v74, %v344
  %v388 = vadd.f32 %v75, %v346
  %v389 = vadd.f32 %v76, %v349
  %v390 = vadd.f32 %v77, %v351
  %v391 = vadd.f32 %v78, %v354
  %v392 = vadd.f32 %v79, %v356
  %v393 = vadd.f32 %v80, %v359
  %v394 = vadd.f32 %v81, %v361
  %395 = vst [vmem:[#allocation2] sm:$0xff] %v363
  %396 = vst [vmem:[#allocation2 + $0x8] sm:$0xff] %v364
  %397 = vst [vmem:[#allocation2 + $0x10] sm:$0xff] %v365
  %398 = vst [vmem:[#allocation2 + $0x18] sm:$0xff] %v366
  %399 = vst [vmem:[#allocation2 + $0x20] sm:$0xff] %v367
  %400 = vst [vmem:[#allocation2 + $0x28] sm:$0xff] %v368
  %401 = vst [vmem:[#allocation2 + $0x30] sm:$0xff] %v369
  %402 = vst [vmem:[#allocation2 + $0x38] sm:$0xff] %v370
  %403 = vst [vmem:[#allocation2 + $0x40] sm:$0xff] %v371
  %404 = vst [vmem:[#allocation2 + $0x48] sm:$0xff] %v372
  %405 = vst [vmem:[#allocation2 + $0x50] sm:$0xff] %v373
  %406 = vst [vmem:[#allocation2 + $0x58] sm:$0xff] %v374
  %407 = vst [vmem:[#allocation2 + $0x60] sm:$0xff] %v375
  %408 = vst [vmem:[#allocation2 + $0x68] sm:$0xff] %v376
  %409 = vst [vmem:[#allocation2 + $0x70] sm:$0xff] %v377
  %410 = vst [vmem:[#allocation2 + $0x78] sm:$0xff] %v378
  %411 = vst [vmem:[#allocation2 + $0x80] sm:$0xff] %v379
  %412 = vst [vmem:[#allocation2 + $0x88] sm:$0xff] %v380
  %413 = vst [vmem:[#allocation2 + $0x90] sm:$0xff] %v381
  %414 = vst [vmem:[#allocation2 + $0x98] sm:$0xff] %v382
  %415 = vst [vmem:[#allocation2 + $0xa0] sm:$0xff] %v383
  %416 = vst [vmem:[#allocation2 + $0xa8] sm:$0xff] %v384
  %417 = vst [vmem:[#allocation2 + $0xb0] sm:$0xff] %v385
  %418 = vst [vmem:[#allocation2 + $0xb8] sm:$0xff] %v386
  %419 = vst [vmem:[#allocation2 + $0xc0] sm:$0xff] %v387
  %420 = vst [vmem:[#allocation2 + $0xc8] sm:$0xff] %v388
  %421 = vst [vmem:[#allocation2 + $0xd0] sm:$0xff] %v389
  %422 = vst [vmem:[#allocation2 + $0xd8] sm:$0xff] %v390
  %423 = vst [vmem:[#allocation2 + $0xe0] sm:$0xff] %v391
  %424 = vst [vmem:[#allocation2 + $0xe8] sm:$0xff] %v392
  %425 = vst [vmem:[#allocation2 + $0xf0] sm:$0xff] %v393
  %426 = vst [vmem:[#allocation2 + $0xf8] sm:$0xff] %v394
  // Predicated region
  $region18: #{_lambda_.27} parent=0 // pred_check
    %p427 = pneg %p14
  $region19: #{_lambda_.27} parent=0 // pred_check_branch
    %429 = sbr.rel (%p427) target = $region21
  $region20: #{_lambda_.27} parent=0 // pred_region
    %v430 = vld [vmem:[#allocation2] sm:$0xff]
    %v431 = vld [vmem:[#allocation2 + $0x8] sm:$0xff]
    %v432 = vld [vmem:[#allocation2 + $0x10] sm:$0xff]
    %v433 = vld [vmem:[#allocation2 + $0x18] sm:$0xff]
    %v434 = vld [vmem:[#allocation2 + $0x20] sm:$0xff]
    %v435 = vld [vmem:[#allocation2 + $0x28] sm:$0xff]
    %v436 = vld [vmem:[#allocation2 + $0x30] sm:$0xff]
    %v437 = vld [vmem:[#allocation2 + $0x38] sm:$0xff]
    %v438 = vld [vmem:[#allocation2 + $0x40] sm:$0xff]
    %v439 = vld [vmem:[#allocation2 + $0x48] sm:$0xff]
    %v440 = vld [vmem:[#allocation2 + $0x50] sm:$0xff]
    %v441 = vld [vmem:[#allocation2 + $0x58] sm:$0xff]
    %v442 = vld [vmem:[#allocation2 + $0x60] sm:$0xff]
    %v443 = vld [vmem:[#allocation2 + $0x68] sm:$0xff]
    %v444 = vld [vmem:[#allocation2 + $0x70] sm:$0xff]
    %v445 = vld [vmem:[#allocation2 + $0x78] sm:$0xff]
    %v446 = vld [vmem:[#allocation2 + $0x80] sm:$0xff]
    %v447 = vld [vmem:[#allocation2 + $0x88] sm:$0xff]
    %v448 = vld [vmem:[#allocation2 + $0x90] sm:$0xff]
    %v449 = vld [vmem:[#allocation2 + $0x98] sm:$0xff]
    %v450 = vld [vmem:[#allocation2 + $0xa0] sm:$0xff]
    %v451 = vld [vmem:[#allocation2 + $0xa8] sm:$0xff]
    %v452 = vld [vmem:[#allocation2 + $0xb0] sm:$0xff]
    %v453 = vld [vmem:[#allocation2 + $0xb8] sm:$0xff]
    %v454 = vld [vmem:[#allocation2 + $0xc0] sm:$0xff]
    %v455 = vld [vmem:[#allocation2 + $0xc8] sm:$0xff]
    %v456 = vld [vmem:[#allocation2 + $0xd0] sm:$0xff]
    %v457 = vld [vmem:[#allocation2 + $0xd8] sm:$0xff]
    %v458 = vld [vmem:[#allocation2 + $0xe0] sm:$0xff]
    %v459 = vld [vmem:[#allocation2 + $0xe8] sm:$0xff]
    %v460 = vld [vmem:[#allocation2 + $0xf0] sm:$0xff]
    %v461 = vld [vmem:[#allocation2 + $0xf8] sm:$0xff]
    %v462 = vld [vmem:[%s2] sm:$0x1]
    %v464 = vperm.slane %v462, 0
    %v466 = vadd.f32 %v430, %v464
    %v467 = vadd.f32 %v431, %v464
    %v468 = vadd.f32 %v432, %v464
    %v469 = vadd.f32 %v433, %v464
    %v470 = vadd.f32 %v434, %v464
    %v471 = vadd.f32 %v435, %v464
    %v472 = vadd.f32 %v436, %v464
    %v473 = vadd.f32 %v437, %v464
    %v474 = vadd.f32 %v438, %v464
    %v475 = vadd.f32 %v439, %v464
    %v476 = vadd.f32 %v440, %v464
    %v477 = vadd.f32 %v441, %v464
    %v478 = vadd.f32 %v442, %v464
    %v479 = vadd.f32 %v443, %v464
    %v480 = vadd.f32 %v444, %v464
    %v481 = vadd.f32 %v445, %v464
    %v482 = vadd.f32 %v446, %v464
    %v483 = vadd.f32 %v447, %v464
    %v484 = vadd.f32 %v448, %v464
    %v485 = vadd.f32 %v449, %v464
    %v486 = vadd.f32 %v450, %v464
    %v487 = vadd.f32 %v451, %v464
    %v488 = vadd.f32 %v452, %v464
    %v489 = vadd.f32 %v453, %v464
    %v490 = vadd.f32 %v454, %v464
    %v491 = vadd.f32 %v455, %v464
    %v492 = vadd.f32 %v456, %v464
    %v493 = vadd.f32 %v457, %v464
    %v494 = vadd.f32 %v458, %v464
    %v495 = vadd.f32 %v459, %v464
    %v496 = vadd.f32 %v460, %v464
    %v497 = vadd.f32 %v461, %v464
    %498 = vst [vmem:[%s3] sm:$0xff] %v466
    %499 = vst [vmem:[%s3 + $0x8] sm:$0xff] %v467
    %500 = vst [vmem:[%s3 + $0x10] sm:$0xff] %v468
    %501 = vst [vmem:[%s3 + $0x18] sm:$0xff] %v469
    %502 = vst [vmem:[%s3 + $0x20] sm:$0xff] %v470
    %503 = vst [vmem:[%s3 + $0x28] sm:$0xff] %v471
    %504 = vst [vmem:[%s3 + $0x30] sm:$0xff] %v472
    %505 = vst [vmem:[%s3 + $0x38] sm:$0xff] %v473
    %506 = vst [vmem:[%s3 + $0x40] sm:$0xff] %v474
    %507 = vst [vmem:[%s3 + $0x48] sm:$0xff] %v475
    %508 = vst [vmem:[%s3 + $0x50] sm:$0xff] %v476
    %509 = vst [vmem:[%s3 + $0x58] sm:$0xff] %v477
    %510 = vst [vmem:[%s3 + $0x60] sm:$0xff] %v478
    %511 = vst [vmem:[%s3 + $0x68] sm:$0xff] %v479
    %512 = vst [vmem:[%s3 + $0x70] sm:$0xff] %v480
    %513 = vst [vmem:[%s3 + $0x78] sm:$0xff] %v481
    %514 = vst [vmem:[%s3 + $0x80] sm:$0xff] %v482
    %515 = vst [vmem:[%s3 + $0x88] sm:$0xff] %v483
    %516 = vst [vmem:[%s3 + $0x90] sm:$0xff] %v484
    %517 = vst [vmem:[%s3 + $0x98] sm:$0xff] %v485
    %518 = vst [vmem:[%s3 + $0xa0] sm:$0xff] %v486
    %519 = vst [vmem:[%s3 + $0xa8] sm:$0xff] %v487
    %520 = vst [vmem:[%s3 + $0xb0] sm:$0xff] %v488
    %521 = vst [vmem:[%s3 + $0xb8] sm:$0xff] %v489
    %522 = vst [vmem:[%s3 + $0xc0] sm:$0xff] %v490
    %523 = vst [vmem:[%s3 + $0xc8] sm:$0xff] %v491
    %524 = vst [vmem:[%s3 + $0xd0] sm:$0xff] %v492
    %525 = vst [vmem:[%s3 + $0xd8] sm:$0xff] %v493
    %526 = vst [vmem:[%s3 + $0xe0] sm:$0xff] %v494
    %527 = vst [vmem:[%s3 + $0xe8] sm:$0xff] %v495
    %528 = vst [vmem:[%s3 + $0xf0] sm:$0xff] %v496
    %529 = vst [vmem:[%s3 + $0xf8] sm:$0xff] %v497
  $region21: #{_lambda_.27} parent=0 // pred_fallthru
    _
  // Predicated region
  $region22: #{_lambda_.27} parent=0 // pred_check
    _
  $region23: #{_lambda_.27} parent=0 // pred_check_branch
    %531 = sbr.rel (0) target = $region25
  $region24: #{_lambda_.27} parent=0 // pred_region
    _
  $region25: #{_lambda_.27} parent=0 // pred_fallthru
    _
  // Predicated region
  $region26: #{_lambda_.27} parent=0 // pred_check
    _
  $region27: #{_lambda_.27} parent=0 // pred_check_branch
    %533 = sbr.rel (0) target = $region29
  $region28: #{_lambda_.27} parent=0 // pred_region
    _
  $region29: #{_lambda_.27} parent=0 // pred_fallthru
    _

// kernel: _lambda_.33
$region0: #{_lambda_.33}
  #allocation0 [shape = 'u32[]', space=smem, size = 0x4, offset = 0x4, fixed_abs, tag = 'smem constant byte address 0x4 - core index']
  #allocation1 [shape = 'u32[72,128]{1,0:T(1,128)}', space=vmem, size = 0x9000, scoped, tag = 'internal scratch']
  #allocation2 [shape = 'f32[256,128]{1,0:T(8,128)}', space=vmem, size = 0x20000, scoped, tag = 'scratch operand']
  %s0 = inlined_call_operand.vmem [shape: bf16[256,128], index: 0, kind: input, shape index: {}]
  %s1 = inlined_call_operand.vmem [shape: bf16[128,128], index: 1, kind: input, shape index: {}]
  %s2 = inlined_call_operand.vmem [shape: f32[1,128], index: 2, kind: input, shape index: {}]
  %s3 = inlined_call_operand.vmem [shape: f32[256,128], index: 3, kind: output, shape index: {}]
  %s4 = sld [smem:[#allocation0]]
  $region30: #{_lambda_.33} parent=0
    _
  %s6 = ssub.s32 1, %s4
  %s7 = scalar_select 0, %s6, %s4
  // Predicated region
  $region2: #{_lambda_.33} parent=0 // pred_check
    _
  $region3: #{_lambda_.33} parent=0 // pred_check_branch
    %9 = sbr.rel (0) target = $region5
  $region4: #{_lambda_.33} parent=0 // pred_region
    _
  $region5: #{_lambda_.33} parent=0 // pred_fallthru
    _
  // Predicated region
  $region6: #{_lambda_.33} parent=0 // pred_check
    _
  $region7: #{_lambda_.33} parent=0 // pred_check_branch
    %11 = sbr.rel (0) target = $region9
  $region8: #{_lambda_.33} parent=0 // pred_region
    _
  $region9: #{_lambda_.33} parent=0 // pred_fallthru
    _
  // Predicated region
  $region10: #{_lambda_.33} parent=0 // pred_check
    _
  $region11: #{_lambda_.33} parent=0 // pred_check_branch
    %13 = sbr.rel (0) target = $region13
  $region12: #{_lambda_.33} parent=0 // pred_region
    _
  $region13: #{_lambda_.33} parent=0 // pred_fallthru
    _
  %p14 = scmp.eq.s32.totalorder 0, 0
  // Predicated region
  $region14: #{_lambda_.33} parent=0 // pred_check
    %p15 = pneg %p14
  $region15: #{_lambda_.33} parent=0 // pred_check_branch
    %17 = sbr.rel (%p15) target = $region17
  $region16: #{_lambda_.33} parent=0 // pred_region
    %18 = vst [vmem:[#allocation2] sm:$0xff] 0.0
    %19 = vst [vmem:[#allocation2 + $0x8] sm:$0xff] 0.0
    %20 = vst [vmem:[#allocation2 + $0x10] sm:$0xff] 0.0
    %21 = vst [vmem:[#allocation2 + $0x18] sm:$0xff] 0.0
    %22 = vst [vmem:[#allocation2 + $0x20] sm:$0xff] 0.0
    %23 = vst [vmem:[#allocation2 + $0x28] sm:$0xff] 0.0
    %24 = vst [vmem:[#allocation2 + $0x30] sm:$0xff] 0.0
    %25 = vst [vmem:[#allocation2 + $0x38] sm:$0xff] 0.0
    %26 = vst [vmem:[#allocation2 + $0x40] sm:$0xff] 0.0
    %27 = vst [vmem:[#allocation2 + $0x48] sm:$0xff] 0.0
    %28 = vst [vmem:[#allocation2 + $0x50] sm:$0xff] 0.0
    %29 = vst [vmem:[#allocation2 + $0x58] sm:$0xff] 0.0
    %30 = vst [vmem:[#allocation2 + $0x60] sm:$0xff] 0.0
    %31 = vst [vmem:[#allocation2 + $0x68] sm:$0xff] 0.0
    %32 = vst [vmem:[#allocation2 + $0x70] sm:$0xff] 0.0
    %33 = vst [vmem:[#allocation2 + $0x78] sm:$0xff] 0.0
    %34 = vst [vmem:[#allocation2 + $0x80] sm:$0xff] 0.0
    %35 = vst [vmem:[#allocation2 + $0x88] sm:$0xff] 0.0
    %36 = vst [vmem:[#allocation2 + $0x90] sm:$0xff] 0.0
    %37 = vst [vmem:[#allocation2 + $0x98] sm:$0xff] 0.0
    %38 = vst [vmem:[#allocation2 + $0xa0] sm:$0xff] 0.0
    %39 = vst [vmem:[#allocation2 + $0xa8] sm:$0xff] 0.0
    %40 = vst [vmem:[#allocation2 + $0xb0] sm:$0xff] 0.0
    %41 = vst [vmem:[#allocation2 + $0xb8] sm:$0xff] 0.0
    %42 = vst [vmem:[#allocation2 + $0xc0] sm:$0xff] 0.0
    %43 = vst [vmem:[#allocation2 + $0xc8] sm:$0xff] 0.0
    %44 = vst [vmem:[#allocation2 + $0xd0] sm:$0xff] 0.0
    %45 = vst [vmem:[#allocation2 + $0xd8] sm:$0xff] 0.0
    %46 = vst [vmem:[#allocation2 + $0xe0] sm:$0xff] 0.0
    %47 = vst [vmem:[#allocation2 + $0xe8] sm:$0xff] 0.0
    %48 = vst [vmem:[#allocation2 + $0xf0] sm:$0xff] 0.0
    %49 = vst [vmem:[#allocation2 + $0xf8] sm:$0xff] 0.0
  $region17: #{_lambda_.33} parent=0 // pred_fallthru
    _
  %v50 = vld [vmem:[#allocation2] sm:$0xff]
  %v51 = vld [vmem:[#allocation2 + $0x8] sm:$0xff]
  %v52 = vld [vmem:[#allocation2 + $0x10] sm:$0xff]
  %v53 = vld [vmem:[#allocation2 + $0x18] sm:$0xff]
  %v54 = vld [vmem:[#allocation2 + $0x20] sm:$0xff]
  %v55 = vld [vmem:[#allocation2 + $0x28] sm:$0xff]
  %v56 = vld [vmem:[#allocation2 + $0x30] sm:$0xff]
  %v57 = vld [vmem:[#allocation2 + $0x38] sm:$0xff]
  %v58 = vld [vmem:[#allocation2 + $0x40] sm:$0xff]
  %v59 = vld [vmem:[#allocation2 + $0x48] sm:$0xff]
  %v60 = vld [vmem:[#allocation2 + $0x50] sm:$0xff]
  %v61 = vld [vmem:[#allocation2 + $0x58] sm:$0xff]
  %v62 = vld [vmem:[#allocation2 + $0x60] sm:$0xff]
  %v63 = vld [vmem:[#allocation2 + $0x68] sm:$0xff]
  %v64 = vld [vmem:[#allocation2 + $0x70] sm:$0xff]
  %v65 = vld [vmem:[#allocation2 + $0x78] sm:$0xff]
  %v66 = vld [vmem:[#allocation2 + $0x80] sm:$0xff]
  %v67 = vld [vmem:[#allocation2 + $0x88] sm:$0xff]
  %v68 = vld [vmem:[#allocation2 + $0x90] sm:$0xff]
  %v69 = vld [vmem:[#allocation2 + $0x98] sm:$0xff]
  %v70 = vld [vmem:[#allocation2 + $0xa0] sm:$0xff]
  %v71 = vld [vmem:[#allocation2 + $0xa8] sm:$0xff]
  %v72 = vld [vmem:[#allocation2 + $0xb0] sm:$0xff]
  %v73 = vld [vmem:[#allocation2 + $0xb8] sm:$0xff]
  %v74 = vld [vmem:[#allocation2 + $0xc0] sm:$0xff]
  %v75 = vld [vmem:[#allocation2 + $0xc8] sm:$0xff]
  %v76 = vld [vmem:[#allocation2 + $0xd0] sm:$0xff]
  %v77 = vld [vmem:[#allocation2 + $0xd8] sm:$0xff]
  %v78 = vld [vmem:[#allocation2 + $0xe0] sm:$0xff]
  %v79 = vld [vmem:[#allocation2 + $0xe8] sm:$0xff]
  %v80 = vld [vmem:[#allocation2 + $0xf0] sm:$0xff]
  %v81 = vld [vmem:[#allocation2 + $0xf8] sm:$0xff]
  %v82 = vld [vmem:[%s0] sm:$0xf]
  %v83 = vld [vmem:[%s0 + $0x4] sm:$0xf]
  %v84 = vld [vmem:[%s0 + $0x8] sm:$0xf]
  %v85 = vld [vmem:[%s0 + $0xc] sm:$0xf]
  %v86 = vld [vmem:[%s0 + $0x10] sm:$0xf]
  %v87 = vld [vmem:[%s0 + $0x14] sm:$0xf]
  %v88 = vld [vmem:[%s0 + $0x18] sm:$0xf]
  %v89 = vld [vmem:[%s0 + $0x1c] sm:$0xf]
  %v90 = vld [vmem:[%s0 + $0x20] sm:$0xf]
  %v91 = vld [vmem:[%s0 + $0x24] sm:$0xf]
  %v92 = vld [vmem:[%s0 + $0x28] sm:$0xf]
  %v93 = vld [vmem:[%s0 + $0x2c] sm:$0xf]
  %v94 = vld [vmem:[%s0 + $0x30] sm:$0xf]
  %v95 = vld [vmem:[%s0 + $0x34] sm:$0xf]
  %v96 = vld [vmem:[%s0 + $0x38] sm:$0xf]
  %v97 = vld [vmem:[%s0 + $0x3c] sm:$0xf]
  %v98 = vld [vmem:[%s0 + $0x40] sm:$0xf]
  %v99 = vld [vmem:[%s0 + $0x44] sm:$0xf]
  %v100 = vld [vmem:[%s0 + $0x48] sm:$0xf]
  %v101 = vld [vmem:[%s0 + $0x4c] sm:$0xf]
  %v102 = vld [vmem:[%s0 + $0x50] sm:$0xf]
  %v103 = vld [vmem:[%s0 + $0x54] sm:$0xf]
  %v104 = vld [vmem:[%s0 + $0x58] sm:$0xf]
  %v105 = vld [vmem:[%s0 + $0x5c] sm:$0xf]
  %v106 = vld [vmem:[%s0 + $0x60] sm:$0xf]
  %v107 = vld [vmem:[%s0 + $0x64] sm:$0xf]
  %v108 = vld [vmem:[%s0 + $0x68] sm:$0xf]
  %v109 = vld [vmem:[%s0 + $0x6c] sm:$0xf]
  %v110 = vld [vmem:[%s0 + $0x70] sm:$0xf]
  %v111 = vld [vmem:[%s0 + $0x74] sm:$0xf]
  %v112 = vld [vmem:[%s0 + $0x78] sm:$0xf]
  %v113 = vld [vmem:[%s0 + $0x7c] sm:$0xf]
  %v114 = vld [vmem:[%s1] sm:$0xf]
  %v115 = vld [vmem:[%s1 + $0x4] sm:$0xf]
  %v116 = vld [vmem:[%s1 + $0x8] sm:$0xf]
  %v117 = vld [vmem:[%s1 + $0xc] sm:$0xf]
  %v118 = vld [vmem:[%s1 + $0x10] sm:$0xf]
  %v119 = vld [vmem:[%s1 + $0x14] sm:$0xf]
  %v120 = vld [vmem:[%s1 + $0x18] sm:$0xf]
  %v121 = vld [vmem:[%s1 + $0x1c] sm:$0xf]
  %v122 = vld [vmem:[%s1 + $0x20] sm:$0xf]
  %v123 = vld [vmem:[%s1 + $0x24] sm:$0xf]
  %v124 = vld [vmem:[%s1 + $0x28] sm:$0xf]
  %v125 = vld [vmem:[%s1 + $0x2c] sm:$0xf]
  %v126 = vld [vmem:[%s1 + $0x30] sm:$0xf]
  %v127 = vld [vmem:[%s1 + $0x34] sm:$0xf]
  %v128 = vld [vmem:[%s1 + $0x38] sm:$0xf]
  %v129 = vld [vmem:[%s1 + $0x3c] sm:$0xf]
  %v162 = vunpack.c.l.b16 %v82
  %v163 = vunpack.c.l.b16 %v83
  %v164 = vunpack.c.l.b16 %v84
  %v165 = vunpack.c.l.b16 %v85
  %v166 = vunpack.c.l.b16 %v86
  %v167 = vunpack.c.l.b16 %v87
  %v168 = vunpack.c.l.b16 %v88
  %v169 = vunpack.c.l.b16 %v89
  %v170 = vunpack.c.l.b16 %v90
  %v171 = vunpack.c.l.b16 %v91
  %v172 = vunpack.c.l.b16 %v92
  %v173 = vunpack.c.l.b16 %v93
  %v174 = vunpack.c.l.b16 %v94
  %v175 = vunpack.c.l.b16 %v95
  %v176 = vunpack.c.l.b16 %v96
  %v177 = vunpack.c.l.b16 %v97
  %v178 = vunpack.c.l.b16 %v98
  %v179 = vunpack.c.l.b16 %v99
  %v180 = vunpack.c.l.b16 %v100
  %v181 = vunpack.c.l.b16 %v101
  %v182 = vunpack.c.l.b16 %v102
  %v183 = vunpack.c.l.b16 %v103
  %v184 = vunpack.c.l.b16 %v104
  %v185 = vunpack.c.l.b16 %v105
  %v186 = vunpack.c.l.b16 %v106
  %v187 = vunpack.c.l.b16 %v107
  %v188 = vunpack.c.l.b16 %v108
  %v189 = vunpack.c.l.b16 %v109
  %v190 = vunpack.c.l.b16 %v110
  %v191 = vunpack.c.l.b16 %v111
  %v192 = vunpack.c.l.b16 %v112
  %v193 = vunpack.c.l.b16 %v113
  %v194 = vpack.c.b16 %v163, %v162
  %v195 = vpack.c.b16 %v165, %v164
  %v196 = vpack.c.b16 %v167, %v166
  %v197 = vpack.c.b16 %v169, %v168
  %v198 = vpack.c.b16 %v171, %v170
  %v199 = vpack.c.b16 %v173, %v172
  %v200 = vpack.c.b16 %v175, %v174
  %v201 = vpack.c.b16 %v177, %v176
  %v202 = vpack.c.b16 %v179, %v178
  %v203 = vpack.c.b16 %v181, %v180
  %v204 = vpack.c.b16 %v183, %v182
  %v205 = vpack.c.b16 %v185, %v184
  %v206 = vpack.c.b16 %v187, %v186
  %v207 = vpack.c.b16 %v189, %v188
  %v208 = vpack.c.b16 %v191, %v190
  %v209 = vpack.c.b16 %v193, %v192
  %v242 = vunpack.c.l.b16 %v114
  %v243 = vunpack.c.l.b16 %v115
  %v244 = vunpack.c.l.b16 %v116
  %v245 = vunpack.c.l.b16 %v117
  %v246 = vunpack.c.l.b16 %v118
  %v247 = vunpack.c.l.b16 %v119
  %v248 = vunpack.c.l.b16 %v120
  %v249 = vunpack.c.l.b16 %v121
  %v250 = vunpack.c.l.b16 %v122
  %v251 = vunpack.c.l.b16 %v123
  %v252 = vunpack.c.l.b16 %v124
  %v253 = vunpack.c.l.b16 %v125
  %v254 = vunpack.c.l.b16 %v126
  %v255 = vunpack.c.l.b16 %v127
  %v256 = vunpack.c.l.b16 %v128
  %v257 = vunpack.c.l.b16 %v129
  %v258 = vpack.c.b16 %v243, %v242
  %v259 = vpack.c.b16 %v245, %v244
  %v260 = vpack.c.b16 %v247, %v246
  %v261 = vpack.c.b16 %v249, %v248
  %v262 = vpack.c.b16 %v251, %v250
  %v263 = vpack.c.b16 %v253, %v252
  %v264 = vpack.c.b16 %v255, %v254
  %v265 = vpack.c.b16 %v257, %v256
  %274 = vmatpush.bf16.msra.mxu0 %v265
  %275 = vmatpush.bf16.msra.mxu0 %v264
  %276 = vmatpush.bf16.msra.mxu0 %v263
  %277 = vmatpush.bf16.msra.mxu0 %v262
  %278 = vmatpush.bf16.msra.mxu0 %v261
  %279 = vmatpush.bf16.msra.mxu0 %v260
  %280 = vmatpush.bf16.msra.mxu0 %v259
  %281 = vmatpush.bf16.msra.mxu0 %v258
  %282 = vmatmul.bf16.gmra.mxu0 %v194
  %v283 = vpop.f32.mrf.mxu0
  %v284 = vadd.f32 0.0, %v283
  %v285 = vpop.f32.mrf.mxu0
  %v286 = vadd.f32 0.0, %v285
  %287 = vmatmul.bf16.gmra.mxu0 %v195
  %v288 = vpop.f32.mrf.mxu0
  %v289 = vadd.f32 0.0, %v288
  %v290 = vpop.f32.mrf.mxu0
  %v291 = vadd.f32 0.0, %v290
  %292 = vmatmul.bf16.gmra.mxu0 %v196
  %v293 = vpop.f32.mrf.mxu0
  %v294 = vadd.f32 0.0, %v293
  %v295 = vpop.f32.mrf.mxu0
  %v296 = vadd.f32 0.0, %v295
  %297 = vmatmul.bf16.gmra.mxu0 %v197
  %v298 = vpop.f32.mrf.mxu0
  %v299 = vadd.f32 0.0, %v298
  %v300 = vpop.f32.mrf.mxu0
  %v301 = vadd.f32 0.0, %v300
  %302 = vmatmul.bf16.gmra.mxu0 %v198
  %v303 = vpop.f32.mrf.mxu0
  %v304 = vadd.f32 0.0, %v303
  %v305 = vpop.f32.mrf.mxu0
  %v306 = vadd.f32 0.0, %v305
  %307 = vmatmul.bf16.gmra.mxu0 %v199
  %v308 = vpop.f32.mrf.mxu0
  %v309 = vadd.f32 0.0, %v308
  %v310 = vpop.f32.mrf.mxu0
  %v311 = vadd.f32 0.0, %v310
  %312 = vmatmul.bf16.gmra.mxu0 %v200
  %v313 = vpop.f32.mrf.mxu0
  %v314 = vadd.f32 0.0, %v313
  %v315 = vpop.f32.mrf.mxu0
  %v316 = vadd.f32 0.0, %v315
  %317 = vmatmul.bf16.gmra.mxu0 %v201
  %v318 = vpop.f32.mrf.mxu0
  %v319 = vadd.f32 0.0, %v318
  %v320 = vpop.f32.mrf.mxu0
  %v321 = vadd.f32 0.0, %v320
  %322 = vmatmul.bf16.gmra.mxu0 %v202
  %v323 = vpop.f32.mrf.mxu0
  %v324 = vadd.f32 0.0, %v323
  %v325 = vpop.f32.mrf.mxu0
  %v326 = vadd.f32 0.0, %v325
  %327 = vmatmul.bf16.gmra.mxu0 %v203
  %v328 = vpop.f32.mrf.mxu0
  %v329 = vadd.f32 0.0, %v328
  %v330 = vpop.f32.mrf.mxu0
  %v331 = vadd.f32 0.0, %v330
  %332 = vmatmul.bf16.gmra.mxu0 %v204
  %v333 = vpop.f32.mrf.mxu0
  %v334 = vadd.f32 0.0, %v333
  %v335 = vpop.f32.mrf.mxu0
  %v336 = vadd.f32 0.0, %v335
  %337 = vmatmul.bf16.gmra.mxu0 %v205
  %v338 = vpop.f32.mrf.mxu0
  %v339 = vadd.f32 0.0, %v338
  %v340 = vpop.f32.mrf.mxu0
  %v341 = vadd.f32 0.0, %v340
  %342 = vmatmul.bf16.gmra.mxu0 %v206
  %v343 = vpop.f32.mrf.mxu0
  %v344 = vadd.f32 0.0, %v343
  %v345 = vpop.f32.mrf.mxu0
  %v346 = vadd.f32 0.0, %v345
  %347 = vmatmul.bf16.gmra.mxu0 %v207
  %v348 = vpop.f32.mrf.mxu0
  %v349 = vadd.f32 0.0, %v348
  %v350 = vpop.f32.mrf.mxu0
  %v351 = vadd.f32 0.0, %v350
  %352 = vmatmul.bf16.gmra.mxu0 %v208
  %v353 = vpop.f32.mrf.mxu0
  %v354 = vadd.f32 0.0, %v353
  %v355 = vpop.f32.mrf.mxu0
  %v356 = vadd.f32 0.0, %v355
  %357 = vmatmul.bf16.gmra.mxu0 %v209
  %v358 = vpop.f32.mrf.mxu0
  %v359 = vadd.f32 0.0, %v358
  %v360 = vpop.f32.mrf.mxu0
  %v361 = vadd.f32 0.0, %v360
  %362 = vdwg.mxu0
  %v363 = vadd.f32 %v50, %v284
  %v364 = vadd.f32 %v51, %v286
  %v365 = vadd.f32 %v52, %v289
  %v366 = vadd.f32 %v53, %v291
  %v367 = vadd.f32 %v54, %v294
  %v368 = vadd.f32 %v55, %v296
  %v369 = vadd.f32 %v56, %v299
  %v370 = vadd.f32 %v57, %v301
  %v371 = vadd.f32 %v58, %v304
  %v372 = vadd.f32 %v59, %v306
  %v373 = vadd.f32 %v60, %v309
  %v374 = vadd.f32 %v61, %v311
  %v375 = vadd.f32 %v62, %v314
  %v376 = vadd.f32 %v63, %v316
  %v377 = vadd.f32 %v64, %v319
  %v378 = vadd.f32 %v65, %v321
  %v379 = vadd.f32 %v66, %v324
  %v380 = vadd.f32 %v67, %v326
  %v381 = vadd.f32 %v68, %v329
  %v382 = vadd.f32 %v69, %v331
  %v383 = vadd.f32 %v70, %v334
  %v384 = vadd.f32 %v71, %v336
  %v385 = vadd.f32 %v72, %v339
  %v386 = vadd.f32 %v73, %v341
  %v387 = vadd.f32 %v74, %v344
  %v388 = vadd.f32 %v75, %v346
  %v389 = vadd.f32 %v76, %v349
  %v390 = vadd.f32 %v77, %v351
  %v391 = vadd.f32 %v78, %v354
  %v392 = vadd.f32 %v79, %v356
  %v393 = vadd.f32 %v80, %v359
  %v394 = vadd.f32 %v81, %v361
  %395 = vst [vmem:[#allocation2] sm:$0xff] %v363
  %396 = vst [vmem:[#allocation2 + $0x8] sm:$0xff] %v364
  %397 = vst [vmem:[#allocation2 + $0x10] sm:$0xff] %v365
  %398 = vst [vmem:[#allocation2 + $0x18] sm:$0xff] %v366
  %399 = vst [vmem:[#allocation2 + $0x20] sm:$0xff] %v367
  %400 = vst [vmem:[#allocation2 + $0x28] sm:$0xff] %v368
  %401 = vst [vmem:[#allocation2 + $0x30] sm:$0xff] %v369
  %402 = vst [vmem:[#allocation2 + $0x38] sm:$0xff] %v370
  %403 = vst [vmem:[#allocation2 + $0x40] sm:$0xff] %v371
  %404 = vst [vmem:[#allocation2 + $0x48] sm:$0xff] %v372
  %405 = vst [vmem:[#allocation2 + $0x50] sm:$0xff] %v373
  %406 = vst [vmem:[#allocation2 + $0x58] sm:$0xff] %v374
  %407 = vst [vmem:[#allocation2 + $0x60] sm:$0xff] %v375
  %408 = vst [vmem:[#allocation2 + $0x68] sm:$0xff] %v376
  %409 = vst [vmem:[#allocation2 + $0x70] sm:$0xff] %v377
  %410 = vst [vmem:[#allocation2 + $0x78] sm:$0xff] %v378
  %411 = vst [vmem:[#allocation2 + $0x80] sm:$0xff] %v379
  %412 = vst [vmem:[#allocation2 + $0x88] sm:$0xff] %v380
  %413 = vst [vmem:[#allocation2 + $0x90] sm:$0xff] %v381
  %414 = vst [vmem:[#allocation2 + $0x98] sm:$0xff] %v382
  %415 = vst [vmem:[#allocation2 + $0xa0] sm:$0xff] %v383
  %416 = vst [vmem:[#allocation2 + $0xa8] sm:$0xff] %v384
  %417 = vst [vmem:[#allocation2 + $0xb0] sm:$0xff] %v385
  %418 = vst [vmem:[#allocation2 + $0xb8] sm:$0xff] %v386
  %419 = vst [vmem:[#allocation2 + $0xc0] sm:$0xff] %v387
  %420 = vst [vmem:[#allocation2 + $0xc8] sm:$0xff] %v388
  %421 = vst [vmem:[#allocation2 + $0xd0] sm:$0xff] %v389
  %422 = vst [vmem:[#allocation2 + $0xd8] sm:$0xff] %v390
  %423 = vst [vmem:[#allocation2 + $0xe0] sm:$0xff] %v391
  %424 = vst [vmem:[#allocation2 + $0xe8] sm:$0xff] %v392
  %425 = vst [vmem:[#allocation2 + $0xf0] sm:$0xff] %v393
  %426 = vst [vmem:[#allocation2 + $0xf8] sm:$0xff] %v394
  // Predicated region
  $region18: #{_lambda_.33} parent=0 // pred_check
    %p427 = pneg %p14
  $region19: #{_lambda_.33} parent=0 // pred_check_branch
    %429 = sbr.rel (%p427) target = $region21
  $region20: #{_lambda_.33} parent=0 // pred_region
    %v430 = vld [vmem:[#allocation2] sm:$0xff]
    %v431 = vld [vmem:[#allocation2 + $0x8] sm:$0xff]
    %v432 = vld [vmem:[#allocation2 + $0x10] sm:$0xff]
    %v433 = vld [vmem:[#allocation2 + $0x18] sm:$0xff]
    %v434 = vld [vmem:[#allocation2 + $0x20] sm:$0xff]
    %v435 = vld [vmem:[#allocation2 + $0x28] sm:$0xff]
    %v436 = vld [vmem:[#allocation2 + $0x30] sm:$0xff]
    %v437 = vld [vmem:[#allocation2 + $0x38] sm:$0xff]
    %v438 = vld [vmem:[#allocation2 + $0x40] sm:$0xff]
    %v439 = vld [vmem:[#allocation2 + $0x48] sm:$0xff]
    %v440 = vld [vmem:[#allocation2 + $0x50] sm:$0xff]
    %v441 = vld [vmem:[#allocation2 + $0x58] sm:$0xff]
    %v442 = vld [vmem:[#allocation2 + $0x60] sm:$0xff]
    %v443 = vld [vmem:[#allocation2 + $0x68] sm:$0xff]
    %v444 = vld [vmem:[#allocation2 + $0x70] sm:$0xff]
    %v445 = vld [vmem:[#allocation2 + $0x78] sm:$0xff]
    %v446 = vld [vmem:[#allocation2 + $0x80] sm:$0xff]
    %v447 = vld [vmem:[#allocation2 + $0x88] sm:$0xff]
    %v448 = vld [vmem:[#allocation2 + $0x90] sm:$0xff]
    %v449 = vld [vmem:[#allocation2 + $0x98] sm:$0xff]
    %v450 = vld [vmem:[#allocation2 + $0xa0] sm:$0xff]
    %v451 = vld [vmem:[#allocation2 + $0xa8] sm:$0xff]
    %v452 = vld [vmem:[#allocation2 + $0xb0] sm:$0xff]
    %v453 = vld [vmem:[#allocation2 + $0xb8] sm:$0xff]
    %v454 = vld [vmem:[#allocation2 + $0xc0] sm:$0xff]
    %v455 = vld [vmem:[#allocation2 + $0xc8] sm:$0xff]
    %v456 = vld [vmem:[#allocation2 + $0xd0] sm:$0xff]
    %v457 = vld [vmem:[#allocation2 + $0xd8] sm:$0xff]
    %v458 = vld [vmem:[#allocation2 + $0xe0] sm:$0xff]
    %v459 = vld [vmem:[#allocation2 + $0xe8] sm:$0xff]
    %v460 = vld [vmem:[#allocation2 + $0xf0] sm:$0xff]
    %v461 = vld [vmem:[#allocation2 + $0xf8] sm:$0xff]
    %v462 = vld [vmem:[%s2] sm:$0x1]
    %v464 = vperm.slane %v462, 0
    %v466 = vadd.f32 %v430, %v464
    %v467 = vadd.f32 %v431, %v464
    %v468 = vadd.f32 %v432, %v464
    %v469 = vadd.f32 %v433, %v464
    %v470 = vadd.f32 %v434, %v464
    %v471 = vadd.f32 %v435, %v464
    %v472 = vadd.f32 %v436, %v464
    %v473 = vadd.f32 %v437, %v464
    %v474 = vadd.f32 %v438, %v464
    %v475 = vadd.f32 %v439, %v464
    %v476 = vadd.f32 %v440, %v464
    %v477 = vadd.f32 %v441, %v464
    %v478 = vadd.f32 %v442, %v464
    %v479 = vadd.f32 %v443, %v464
    %v480 = vadd.f32 %v444, %v464
    %v481 = vadd.f32 %v445, %v464
    %v482 = vadd.f32 %v446, %v464
    %v483 = vadd.f32 %v447, %v464
    %v484 = vadd.f32 %v448, %v464
    %v485 = vadd.f32 %v449, %v464
    %v486 = vadd.f32 %v450, %v464
    %v487 = vadd.f32 %v451, %v464
    %v488 = vadd.f32 %v452, %v464
    %v489 = vadd.f32 %v453, %v464
    %v490 = vadd.f32 %v454, %v464
    %v491 = vadd.f32 %v455, %v464
    %v492 = vadd.f32 %v456, %v464
    %v493 = vadd.f32 %v457, %v464
    %v494 = vadd.f32 %v458, %v464
    %v495 = vadd.f32 %v459, %v464
    %v496 = vadd.f32 %v460, %v464
    %v497 = vadd.f32 %v461, %v464
    %v498 = vmax.f32 %v466, 0.0
    %v499 = vmax.f32 %v467, 0.0
    %v500 = vmax.f32 %v468, 0.0
    %v501 = vmax.f32 %v469, 0.0
    %v502 = vmax.f32 %v470, 0.0
    %v503 = vmax.f32 %v471, 0.0
    %v504 = vmax.f32 %v472, 0.0
    %v505 = vmax.f32 %v473, 0.0
    %v506 = vmax.f32 %v474, 0.0
    %v507 = vmax.f32 %v475, 0.0
    %v508 = vmax.f32 %v476, 0.0
    %v509 = vmax.f32 %v477, 0.0
    %v510 = vmax.f32 %v478, 0.0
    %v511 = vmax.f32 %v479, 0.0
    %v512 = vmax.f32 %v480, 0.0
    %v513 = vmax.f32 %v481, 0.0
    %v514 = vmax.f32 %v482, 0.0
    %v515 = vmax.f32 %v483, 0.0
    %v516 = vmax.f32 %v484, 0.0
    %v517 = vmax.f32 %v485, 0.0
    %v518 = vmax.f32 %v486, 0.0
    %v519 = vmax.f32 %v487, 0.0
    %v520 = vmax.f32 %v488, 0.0
    %v521 = vmax.f32 %v489, 0.0
    %v522 = vmax.f32 %v490, 0.0
    %v523 = vmax.f32 %v491, 0.0
    %v524 = vmax.f32 %v492, 0.0
    %v525 = vmax.f32 %v493, 0.0
    %v526 = vmax.f32 %v494, 0.0
    %v527 = vmax.f32 %v495, 0.0
    %v528 = vmax.f32 %v496, 0.0
    %v529 = vmax.f32 %v497, 0.0
    %530 = vst [vmem:[%s3] sm:$0xff] %v498
    %531 = vst [vmem:[%s3 + $0x8] sm:$0xff] %v499
    %532 = vst [vmem:[%s3 + $0x10] sm:$0xff] %v500
    %533 = vst [vmem:[%s3 + $0x18] sm:$0xff] %v501
    %534 = vst [vmem:[%s3 + $0x20] sm:$0xff] %v502
    %535 = vst [vmem:[%s3 + $0x28] sm:$0xff] %v503
    %536 = vst [vmem:[%s3 + $0x30] sm:$0xff] %v504
    %537 = vst [vmem:[%s3 + $0x38] sm:$0xff] %v505
    %538 = vst [vmem:[%s3 + $0x40] sm:$0xff] %v506
    %539 = vst [vmem:[%s3 + $0x48] sm:$0xff] %v507
    %540 = vst [vmem:[%s3 + $0x50] sm:$0xff] %v508
    %541 = vst [vmem:[%s3 + $0x58] sm:$0xff] %v509
    %542 = vst [vmem:[%s3 + $0x60] sm:$0xff] %v510
    %543 = vst [vmem:[%s3 + $0x68] sm:$0xff] %v511
    %544 = vst [vmem:[%s3 + $0x70] sm:$0xff] %v512
    %545 = vst [vmem:[%s3 + $0x78] sm:$0xff] %v513
    %546 = vst [vmem:[%s3 + $0x80] sm:$0xff] %v514
    %547 = vst [vmem:[%s3 + $0x88] sm:$0xff] %v515
    %548 = vst [vmem:[%s3 + $0x90] sm:$0xff] %v516
    %549 = vst [vmem:[%s3 + $0x98] sm:$0xff] %v517
    %550 = vst [vmem:[%s3 + $0xa0] sm:$0xff] %v518
    %551 = vst [vmem:[%s3 + $0xa8] sm:$0xff] %v519
    %552 = vst [vmem:[%s3 + $0xb0] sm:$0xff] %v520
    %553 = vst [vmem:[%s3 + $0xb8] sm:$0xff] %v521
    %554 = vst [vmem:[%s3 + $0xc0] sm:$0xff] %v522
    %555 = vst [vmem:[%s3 + $0xc8] sm:$0xff] %v523
    %556 = vst [vmem:[%s3 + $0xd0] sm:$0xff] %v524
    %557 = vst [vmem:[%s3 + $0xd8] sm:$0xff] %v525
    %558 = vst [vmem:[%s3 + $0xe0] sm:$0xff] %v526
    %559 = vst [vmem:[%s3 + $0xe8] sm:$0xff] %v527
    %560 = vst [vmem:[%s3 + $0xf0] sm:$0xff] %v528
    %561 = vst [vmem:[%s3 + $0xf8] sm:$0xff] %v529
  $region21: #{_lambda_.33} parent=0 // pred_fallthru
    _
  // Predicated region
  $region22: #{_lambda_.33} parent=0 // pred_check
    _
  $region23: #{_lambda_.33} parent=0 // pred_check_branch
    %563 = sbr.rel (0) target = $region25
  $region24: #{_lambda_.33} parent=0 // pred_region
    _
  $region25: #{_lambda_.33} parent=0 // pred_fallthru
    _
  // Predicated region
  $region26: #{_lambda_.33} parent=0 // pred_check
    _
  $region27: #{_lambda_.33} parent=0 // pred_check_branch
    %565 = sbr.rel (0) target = $region29
  $region28: #{_lambda_.33} parent=0 // pred_region
    _
  $region29: #{_lambda_.33} parent=0 // pred_fallthru
    _

// kernel: _lambda_.30
$region0: #{_lambda_.30}
  #allocation0 [shape = 'u32[]', space=smem, size = 0x4, offset = 0x4, fixed_abs, tag = 'smem constant byte address 0x4 - core index']
  #allocation1 [shape = 'u32[72,128]{1,0:T(1,128)}', space=vmem, size = 0x9000, scoped, tag = 'internal scratch']
  %s0 = inlined_call_operand.vmem [shape: bf16[4,64,32], index: 0, kind: input, shape index: {}]
  %s1 = inlined_call_operand.vmem [shape: bf16[4,64,32], index: 1, kind: input, shape index: {}]
  %s2 = inlined_call_operand.vmem [shape: bf16[4,64,32], index: 2, kind: input, shape index: {}]
  %s3 = inlined_call_operand.vmem [shape: f32[4,64,32], index: 3, kind: output, shape index: {}]
  %s4 = sld [smem:[#allocation0]]
  $region45: #{_lambda_.30} parent=0
    _
  %s6 = ssub.s32 1, %s4
  %s7 = scalar_select 0, %s6, %s4
  loop: start=0, step=1, limit=6
  $region2: #{_lambda_.30} parent=0 // loop_pre_header
    _
  $region3: #{_lambda_.30} parent=0 // loop_header
    %s9 = sphi 0, %s13
    %p10 = scmp.ge.s32.totalorder %s9, 6
    %s19 = sphi 0, %s21
    %s22 = sphi 0, %s19
    %s23 = sphi 0, %s22
    %s39 = sphi 0, %s23
    %s45 = sphi 0, %s47
    %s48 = sphi 0, %s45
    %s49 = sphi 0, %s48
    %s65 = sphi 0, %s49
    %s71 = sphi 0, %s73
    %s74 = sphi 0, %s71
    %s75 = sphi 0, %s74
    %s91 = sphi 0, %s75
    %s97 = sphi 0, %s99
    %s100 = sphi 0, %s97
    %s101 = sphi 0, %s100
    %s117 = sphi 0, %s101
  $region4: #{_lambda_.30} parent=0 // loop_header_branch
    %12 = sbr.rel (%p10) target = $region8
  $region5: #{_lambda_.30} parent=0 // loop_body
    %s14 = ssub.s32 %s9, 1
    %s15 = ssub.s32 %s9, 2
    %s16 = sadd.s32 %s9, 1
    %s17 = ssub.s32 %s9, %s16
    %p18 = scmp.eq.s32.totalorder %s17, 0
    %s20 = sadd.s32 %s19, 1
    %s21 = scalar_select %p18, %s19, %s20
    %p24 = pneg %p18
    %p25 = scmp.eq.s32.totalorder %s9, 3
    %p26 = por %p24, %p25
    %p27 = scmp.ne.s32.totalorder %s19, %s22
    %p28 = scmp.eq.s32.totalorder %s9, 0
    %p29 = por %p27, %p28
    %p30 = scmp.ne.s32.totalorder %s19, %s22
    %p31 = scmp.eq.s32.totalorder %s14, 3
    %p32 = por %p30, %p31
    %p33 = scmp.ne.s32.totalorder %s22, %s23
    %p34 = scmp.eq.s32.totalorder %s14, 0
    %p35 = por %p33, %p34
    %p36 = scmp.ne.s32.totalorder %s22, %s23
    %p37 = scmp.eq.s32.totalorder %s15, 3
    %p38 = por %p36, %p37
    %p40 = scmp.ne.s32.totalorder %s23, %s39
    %p41 = scmp.eq.s32.totalorder %s15, 0
    %p42 = por %p40, %p41
    %s43 = ssub.s32 %s9, %s16
    %p44 = scmp.eq.s32.totalorder %s43, 0
    %s46 = sadd.s32 %s45, 1
    %s47 = scalar_select %p44, %s45, %s46
    %p50 = pneg %p44
    %p51 = scmp.eq.s32.totalorder %s9, 3
    %p52 = por %p50, %p51
    %p53 = scmp.ne.s32.totalorder %s45, %s48
    %p54 = scmp.eq.s32.totalorder %s9, 0
    %p55 = por %p53, %p54
    %p56 = scmp.ne.s32.totalorder %s45, %s48
    %p57 = scmp.eq.s32.totalorder %s14, 3
    %p58 = por %p56, %p57
    %p59 = scmp.ne.s32.totalorder %s48, %s49
    %p60 = scmp.eq.s32.totalorder %s14, 0
    %p61 = por %p59, %p60
    %p62 = scmp.ne.s32.totalorder %s48, %s49
    %p63 = scmp.eq.s32.totalorder %s15, 3
    %p64 = por %p62, %p63
    %p66 = scmp.ne.s32.totalorder %s49, %s65
    %p67 = scmp.eq.s32.totalorder %s15, 0
    %p68 = por %p66, %p67
    %s69 = ssub.s32 %s9, %s16
    %p70 = scmp.eq.s32.totalorder %s69, 0
    %s72 = sadd.s32 %s71, 1
    %s73 = scalar_select %p70, %s71, %s72
    %p76 = pneg %p70
    %p77 = scmp.eq.s32.totalorder %s9, 3
    %p78 = por %p76, %p77
    %p79 = scmp.ne.s32.totalorder %s71, %s74
    %p80 = scmp.eq.s32.totalorder %s9, 0
    %p81 = por %p79, %p80
    %p82 = scmp.ne.s32.totalorder %s71, %s74
    %p83 = scmp.eq.s32.totalorder %s14, 3
    %p84 = por %p82, %p83
    %p85 = scmp.ne.s32.totalorder %s74, %s75
    %p86 = scmp.eq.s32.totalorder %s14, 0
    %p87 = por %p85, %p86
    %p88 = scmp.ne.s32.totalorder %s74, %s75
    %p89 = scmp.eq.s32.totalorder %s15, 3
    %p90 = por %p88, %p89
    %p92 = scmp.ne.s32.totalorder %s75, %s91
    %p93 = scmp.eq.s32.totalorder %s15, 0
    %p94 = por %p92, %p93
    %s95 = ssub.s32 %s9, %s16
    %p96 = scmp.eq.s32.totalorder %s95, 0
    %s98 = sadd.s32 %s97, 1
    %s99 = scalar_select %p96, %s97, %s98
    %p102 = pneg %p96
    %p103 = scmp.eq.s32.totalorder %s9, 3
    %p104 = por %p102, %p103
    %p105 = scmp.ne.s32.totalorder %s97, %s100
    %p106 = scmp.eq.s32.totalorder %s9, 0
    %p107 = por %p105, %p106
    %p108 = scmp.ne.s32.totalorder %s97, %s100
    %p109 = scmp.eq.s32.totalorder %s14, 3
    %p110 = por %p108, %p109
    %p111 = scmp.ne.s32.totalorder %s100, %s101
    %p112 = scmp.eq.s32.totalorder %s14, 0
    %p113 = por %p111, %p112
    %p114 = scmp.ne.s32.totalorder %s100, %s101
    %p115 = scmp.eq.s32.totalorder %s15, 3
    %p116 = por %p114, %p115
    %p118 = scmp.ne.s32.totalorder %s101, %s117
    %p119 = scmp.eq.s32.totalorder %s15, 0
    %p120 = por %p118, %p119
    %p121 = scmp.le.s32.totalorder 1, %s9
    %p122 = scmp.lt.s32.totalorder %s9, 5
    %p123 = pnand %p121, %p122
    %p124 = pneg %p123
    // Predicated region
    $region9: #{_lambda_.30} parent=5 // pred_check
      _
    $region10: #{_lambda_.30} parent=5 // pred_check_branch
      %126 = sbr.rel (%p123) target = $region12
    $region11: #{_lambda_.30} parent=5 // pred_region
      %s127 = ssub.s32 %s9, 1
    $region12: #{_lambda_.30} parent=5 // pred_fallthru
      _
    %p128 = scmp.lt.s32.totalorder %s9, 4
    // Predicated region
    $region13: #{_lambda_.30} parent=5 // pred_check
      %p129 = pneg %p128
    $region14: #{_lambda_.30} parent=5 // pred_check_branch
      %131 = sbr.rel (%p129) target = $region16
    $region15: #{_lambda_.30} parent=5 // pred_region
      // Predicated region
      $region17: #{_lambda_.30} parent=15 // pred_check
        %p132 = pneg %p29
      $region18: #{_lambda_.30} parent=15 // pred_check_branch
        %134 = sbr.rel (%p132) target = $region20
      $region19: #{_lambda_.30} parent=15 // pred_region
        %p135 = scmp.lt.s32.totalorder %s9, 3
        %s136 = scalar_select %p135, %s9, 3
        %s137 = smul.addr %s136, 8
        %s138 = smul.addr %s137, 4
        %s139 = scalar_lea.vmem %s0, %s138
      $region20: #{_lambda_.30} parent=15 // pred_fallthru
        _
      // Predicated region
      $region21: #{_lambda_.30} parent=15 // pred_check
        %p140 = pneg %p55
      $region22: #{_lambda_.30} parent=15 // pred_check_branch
        %142 = sbr.rel (%p140) target = $region24
      $region23: #{_lambda_.30} parent=15 // pred_region
        %p143 = scmp.lt.s32.totalorder %s9, 3
        %s144 = scalar_select %p143, %s9, 3
        %s145 = smul.addr %s144, 8
        %s146 = smul.addr %s145, 4
        %s147 = scalar_lea.vmem %s1, %s146
      $region24: #{_lambda_.30} parent=15 // pred_fallthru
        _
      // Predicated region
      $region25: #{_lambda_.30} parent=15 // pred_check
        %p148 = pneg %p81
      $region26: #{_lambda_.30} parent=15 // pred_check_branch
        %150 = sbr.rel (%p148) target = $region28
      $region27: #{_lambda_.30} parent=15 // pred_region
        %p151 = scmp.lt.s32.totalorder %s9, 3
        %s152 = scalar_select %p151, %s9, 3
        %s153 = smul.addr %s152, 8
        %s154 = smul.addr %s153, 4
        %s155 = scalar_lea.vmem %s2, %s154
      $region28: #{_lambda_.30} parent=15 // pred_fallthru
        _
    $region16: #{_lambda_.30} parent=5 // pred_fallthru
      _
    %p156 = scmp.le.s32.totalorder 1, %s9
    %p157 = scmp.lt.s32.totalorder %s9, 5
    %p158 = pnand %p156, %p157
    %p159 = pneg %p158
    // Predicated region
    $region29: #{_lambda_.30} parent=5 // pred_check
      _
    $region30: #{_lambda_.30} parent=5 // pred_check_branch
      %161 = sbr.rel (%p158) target = $region32
    $region31: #{_lambda_.30} parent=5 // pred_region
      %s162 = ssub.s32 %s9, 1
      %p163 = scmp.lt.s32.totalorder %s14, 3
      %s164 = scalar_select %p163, %s14, 3
      %s165 = smul.addr %s164, 8
      %s166 = smul.addr %s165, 4
      %s167 = scalar_lea.vmem %s0, %s166
      %p168 = pneg %p35
      %p169 = pneg %p32
      %p170 = scmp.lt.s32.totalorder %s14, 3
      %s171 = scalar_select %p170, %s14, 3
      %s172 = smul.addr %s171, 8
      %s173 = smul.addr %s172, 4
      %s174 = scalar_lea.vmem %s1, %s173
      %p175 = pneg %p61
      %p176 = pneg %p58
      %p177 = scmp.lt.s32.totalorder %s14, 3
      %s178 = scalar_select %p177, %s14, 3
      %s179 = smul.addr %s178, 8
      %s180 = smul.addr %s179, 4
      %s181 = scalar_lea.vmem %s2, %s180
      %p182 = pneg %p87
      %p183 = pneg %p84
      %p184 = pneg %p113
      %p185 = pneg %p110
      %p186 = scmp.lt.s32.totalorder %s14, 3
      %s187 = scalar_select %p186, %s14, 3
      %s188 = smul.addr %s187, 8
      %s189 = smul.addr %s188, 8
      %s190 = scalar_lea.vmem %s3, %s189
      %p191 = scmp.lt.s32.totalorder %s14, 3
      %s192 = scalar_select %p191, %s14, 3
      %s193 = smul.addr %s192, 8
      %s194 = smul.addr %s193, 4
      %s195 = scalar_lea.vmem %s0, %s194
      %p196 = scmp.lt.s32.totalorder %s14, 3
      %s197 = scalar_select %p196, %s14, 3
      %s198 = smul.addr %s197, 8
      %s199 = smul.addr %s198, 4
      %s200 = scalar_lea.vmem %s1, %s199
      %p201 = scmp.lt.s32.totalorder %s14, 3
      %s202 = scalar_select %p201, %s14, 3
      %s203 = smul.addr %s202, 8
      %s204 = smul.addr %s203, 4
      %s205 = scalar_lea.vmem %s2, %s204
      %p206 = scmp.lt.s32.totalorder %s14, 3
      %s207 = scalar_select %p206, %s14, 3
      %s208 = smul.addr %s207, 8
      %s209 = smul.addr %s208, 8
      %s210 = scalar_lea.vmem %s3, %s209
      %v212 = vld [vmem:[%s195] sm:$0xf]
      %v213 = vld [vmem:[%s195 + $0x4] sm:$0xf]
      %v214 = vld [vmem:[%s195 + $0x8] sm:$0xf]
      %v215 = vld [vmem:[%s195 + $0xc] sm:$0xf]
      %v216 = vld [vmem:[%s195 + $0x10] sm:$0xf]
      %v217 = vld [vmem:[%s195 + $0x14] sm:$0xf]
      %v218 = vld [vmem:[%s195 + $0x18] sm:$0xf]
      %v219 = vld [vmem:[%s195 + $0x1c] sm:$0xf]
      %v220 = vld [vmem:[%s200] sm:$0xf]
      %v221 = vld [vmem:[%s200 + $0x4] sm:$0xf]
      %v222 = vld [vmem:[%s200 + $0x8] sm:$0xf]
      %v223 = vld [vmem:[%s200 + $0xc] sm:$0xf]
      %v224 = vld [vmem:[%s200 + $0x10] sm:$0xf]
      %v225 = vld [vmem:[%s200 + $0x14] sm:$0xf]
      %v226 = vld [vmem:[%s200 + $0x18] sm:$0xf]
      %v227 = vld [vmem:[%s200 + $0x1c] sm:$0xf]
      %v228 = vld [vmem:[%s205] sm:$0xf]
      %v229 = vld [vmem:[%s205 + $0x4] sm:$0xf]
      %v230 = vld [vmem:[%s205 + $0x8] sm:$0xf]
      %v231 = vld [vmem:[%s205 + $0xc] sm:$0xf]
      %v232 = vld [vmem:[%s205 + $0x10] sm:$0xf]
      %v233 = vld [vmem:[%s205 + $0x14] sm:$0xf]
      %v234 = vld [vmem:[%s205 + $0x18] sm:$0xf]
      %v235 = vld [vmem:[%s205 + $0x1c] sm:$0xf]
      %v244 = vunpack.c.l.b16 %v212
      %v245 = vunpack.c.l.b16 %v213
      %v246 = vunpack.c.l.b16 %v214
      %v247 = vunpack.c.l.b16 %v215
      %v248 = vunpack.c.l.b16 %v216
      %v249 = vunpack.c.l.b16 %v217
      %v250 = vunpack.c.l.b16 %v218
      %v251 = vunpack.c.l.b16 %v219
      %v252 = vpack.c.b16 %v245, %v244
      %v253 = vpack.c.b16 %v247, %v246
      %v254 = vpack.c.b16 %v249, %v248
      %v255 = vpack.c.b16 %v251, %v250
      %v264 = vunpack.c.l.b16 %v220
      %v265 = vunpack.c.l.b16 %v221
      %v266 = vunpack.c.l.b16 %v222
      %v267 = vunpack.c.l.b16 %v223
      %v268 = vunpack.c.l.b16 %v224
      %v269 = vunpack.c.l.b16 %v225
      %v270 = vunpack.c.l.b16 %v226
      %v271 = vunpack.c.l.b16 %v227
      %v272 = vpack.c.b16 %v265, %v264
      %v273 = vpack.c.b16 %v267, %v266
      %v274 = vpack.c.b16 %v269, %v268
      %v275 = vpack.c.b16 %v271, %v270
      %vm276 = vcmask 64512
      %v278 = vsel %vm276, %v252, 0
      %v281 = vsel %vm276, %v253, 0
      %v284 = vsel %vm276, %v254, 0
      %v287 = vsel %vm276, %v255, 0
      %v290 = vsel %vm276, %v272, 0
      %v293 = vsel %vm276, %v273, 0
      %v296 = vsel %vm276, %v274, 0
      %v299 = vsel %vm276, %v275, 0
      %301 = vmatpush.bf16.xpose.msra.mxu0 0
      %302 = vmatpush.bf16.xpose.msra.mxu0 0
      %303 = vmatpush.bf16.xpose.msra.mxu0 0
      %304 = vmatpush.bf16.xpose.msra.mxu0 0
      %305 = vmatpush.bf16.xpose.msra.mxu0 %v299
      %306 = vmatpush.bf16.xpose.msra.mxu0 %v296
      %307 = vmatpush.bf16.xpose.msra.mxu0 %v293
      %308 = vmatpush.bf16.xpose.msra.mxu0 %v290
      %309 = vmatmul.bf16.gmra.mxu0 %v278
      %v310 = vpop.f32.mrf.mxu0
      %v311 = vadd.f32 0.0, %v310
      %v312 = vpop.f32.mrf.mxu0
      %v313 = vadd.f32 0.0, %v312
      %314 = vmatmul.bf16.gmra.mxu0 %v281
      %v315 = vpop.f32.mrf.mxu0
      %v316 = vadd.f32 0.0, %v315
      %v317 = vpop.f32.mrf.mxu0
      %v318 = vadd.f32 0.0, %v317
      %319 = vmatmul.bf16.gmra.mxu0 %v284
      %v320 = vpop.f32.mrf.mxu0
      %v321 = vadd.f32 0.0, %v320
      %v322 = vpop.f32.mrf.mxu0
      %v323 = vadd.f32 0.0, %v322
      %324 = vmatmul.bf16.gmra.mxu0 %v287
      %v325 = vpop.f32.mrf.mxu0
      %v326 = vadd.f32 0.0, %v325
      %v327 = vpop.f32.mrf.mxu0
      %v328 = vadd.f32 0.0, %v327
      %329 = vdwg.mxu0
      %v330 = vmul.f32 %v311, 0.35355338
      %v331 = vmul.f32 %v313, 0.35355338
      %v332 = vmul.f32 %v316, 0.35355338
      %v333 = vmul.f32 %v318, 0.35355338
      %v334 = vmul.f32 %v321, 0.35355338
      %v335 = vmul.f32 %v323, 0.35355338
      %v336 = vmul.f32 %v326, 0.35355338
      %v337 = vmul.f32 %v328, 0.35355338
      %vm338 = vcmask 523264
      %v339 = vsel %vm338, %v330, -inf
      %340 = vmax.xlane.f32.xlu0 %v339
      %v341 = vpop.xlane.xlu0 %340
      %v342 = vsel %vm338, %v331, -inf
      %343 = vmax.xlane.f32.xlu0 %v342
      %v344 = vpop.xlane.xlu0 %343
      %v345 = vsel %vm338, %v332, -inf
      %346 = vmax.xlane.f32.xlu0 %v345
      %v347 = vpop.xlane.xlu0 %346
      %v348 = vsel %vm338, %v333, -inf
      %349 = vmax.xlane.f32.xlu0 %v348
      %v350 = vpop.xlane.xlu0 %349
      %v351 = vsel %vm338, %v334, -inf
      %352 = vmax.xlane.f32.xlu0 %v351
      %v353 = vpop.xlane.xlu0 %352
      %v354 = vsel %vm338, %v335, -inf
      %355 = vmax.xlane.f32.xlu0 %v354
      %v356 = vpop.xlane.xlu0 %355
      %v357 = vsel %vm338, %v336, -inf
      %358 = vmax.xlane.f32.xlu0 %v357
      %v359 = vpop.xlane.xlu0 %358
      %v360 = vsel %vm338, %v337, -inf
      %361 = vmax.xlane.f32.xlu0 %v360
      %v362 = vpop.xlane.xlu0 %361
      %v363 = vsub.f32 %v330, %v341
      %v364 = vsub.f32 %v331, %v344
      %v365 = vsub.f32 %v332, %v347
      %v366 = vsub.f32 %v333, %v350
      %v367 = vsub.f32 %v334, %v353
      %v368 = vsub.f32 %v335, %v356
      %v369 = vsub.f32 %v336, %v359
      %v370 = vsub.f32 %v337, %v362
      %v371 = vmul.f32 %v363, 1.442695
      %v372 = vpow.pop %v371
      %v373 = vmul.f32 %v364, 1.442695
      %v374 = vpow.pop %v373
      %v375 = vmul.f32 %v365, 1.442695
      %v376 = vpow.pop %v375
      %v377 = vmul.f32 %v366, 1.442695
      %v378 = vpow.pop %v377
      %v379 = vmul.f32 %v367, 1.442695
      %v380 = vpow.pop %v379
      %v381 = vmul.f32 %v368, 1.442695
      %v382 = vpow.pop %v381
      %v383 = vmul.f32 %v369, 1.442695
      %v384 = vpow.pop %v383
      %v385 = vmul.f32 %v370, 1.442695
      %v386 = vpow.pop %v385
      %v387 = vsel %vm338, %v372, 0.0
      %388 = vadd.xlane.f32.xlu0 %v387
      %v389 = vpop.xlane.xlu0 %388
      %v390 = vsel %vm338, %v374, 0.0
      %391 = vadd.xlane.f32.xlu0 %v390
      %v392 = vpop.xlane.xlu0 %391
      %v393 = vsel %vm338, %v376, 0.0
      %394 = vadd.xlane.f32.xlu0 %v393
      %v395 = vpop.xlane.xlu0 %394
      %v396 = vsel %vm338, %v378, 0.0
      %397 = vadd.xlane.f32.xlu0 %v396
      %v398 = vpop.xlane.xlu0 %397
      %v399 = vsel %vm338, %v380, 0.0
      %400 = vadd.xlane.f32.xlu0 %v399
      %v401 = vpop.xlane.xlu0 %400
      %v402 = vsel %vm338, %v382, 0.0
      %403 = vadd.xlane.f32.xlu0 %v402
      %v404 = vpop.xlane.xlu0 %403
      %v405 = vsel %vm338, %v384, 0.0
      %406 = vadd.xlane.f32.xlu0 %v405
      %v407 = vpop.xlane.xlu0 %406
      %v408 = vsel %vm338, %v386, 0.0
      %409 = vadd.xlane.f32.xlu0 %v408
      %v410 = vpop.xlane.xlu0 %409
      %v411 = vrcp.pop %v389
      %v412 = vrcp.pop %v392
      %v413 = vrcp.pop %v395
      %v414 = vrcp.pop %v398
      %v415 = vrcp.pop %v401
      %v416 = vrcp.pop %v404
      %v417 = vrcp.pop %v407
      %v418 = vrcp.pop %v410
      %v419 = vmul.f32 %v372, %v411
      %v420 = vmul.f32 %v374, %v412
      %v421 = vmul.f32 %v376, %v413
      %v422 = vmul.f32 %v378, %v414
      %v423 = vmul.f32 %v380, %v415
      %v424 = vmul.f32 %v382, %v416
      %v425 = vmul.f32 %v384, %v417
      %v426 = vmul.f32 %v386, %v418
      %v427 = vpack.c.bf16 %v420, %v419
      %v428 = vpack.c.bf16 %v422, %v421
      %v429 = vpack.c.bf16 %v424, %v423
      %v430 = vpack.c.bf16 %v426, %v425
      %v439 = vunpack.c.l.b16 %v228
      %v440 = vunpack.c.l.b16 %v229
      %v441 = vunpack.c.l.b16 %v230
      %v442 = vunpack.c.l.b16 %v231
      %v443 = vunpack.c.l.b16 %v232
      %v444 = vunpack.c.l.b16 %v233
      %v445 = vunpack.c.l.b16 %v234
      %v446 = vunpack.c.l.b16 %v235
      %v447 = vpack.c.b16 %v440, %v439
      %v448 = vpack.c.b16 %v442, %v441
      %v449 = vpack.c.b16 %v444, %v443
      %v450 = vpack.c.b16 %v446, %v445
      %v456 = vsel %vm338, %v427, 0
      %v459 = vsel %vm338, %v428, 0
      %v462 = vsel %vm338, %v429, 0
      %v465 = vsel %vm338, %v430, 0
      %467 = vmatpush.bf16.msra.mxu0 0
      %468 = vmatpush.bf16.msra.mxu0 0
      %469 = vmatpush.bf16.msra.mxu0 0
      %470 = vmatpush.bf16.msra.mxu0 0
      %471 = vmatpush.bf16.msra.mxu0 %v450
      %472 = vmatpush.bf16.msra.mxu0 %v449
      %473 = vmatpush.bf16.msra.mxu0 %v448
      %474 = vmatpush.bf16.msra.mxu0 %v447
      %475 = vmatmul.bf16.gmra.mxu0 %v456
      %v476 = vpop.f32.mrf.mxu0
      %v477 = vadd.f32 0.0, %v476
      %v478 = vpop.f32.mrf.mxu0
      %v479 = vadd.f32 0.0, %v478
      %480 = vmatmul.bf16.gmra.mxu0 %v459
      %v481 = vpop.f32.mrf.mxu0
      %v482 = vadd.f32 0.0, %v481
      %v483 = vpop.f32.mrf.mxu0
      %v484 = vadd.f32 0.0, %v483
      %485 = vmatmul.bf16.gmra.mxu0 %v462
      %v486 = vpop.f32.mrf.mxu0
      %v487 = vadd.f32 0.0, %v486
      %v488 = vpop.f32.mrf.mxu0
      %v489 = vadd.f32 0.0, %v488
      %490 = vmatmul.bf16.gmra.mxu0 %v465
      %v491 = vpop.f32.mrf.mxu0
      %v492 = vadd.f32 0.0, %v491
      %v493 = vpop.f32.mrf.mxu0
      %v494 = vadd.f32 0.0, %v493
      %495 = vdwg.mxu0
      %496 = vrot.lane.b32.xlu0 %v252, 120
      %v497 = vpop.permute.xlu0 %496
      %498 = vrot.lane.b32.xlu0 %v253, 120
      %v499 = vpop.permute.xlu0 %498
      %500 = vrot.lane.b32.xlu0 %v254, 120
      %v501 = vpop.permute.xlu0 %500
      %502 = vrot.lane.b32.xlu0 %v255, 120
      %v503 = vpop.permute.xlu0 %502
      %504 = vrot.lane.b32.xlu0 %v272, 120
      %v505 = vpop.permute.xlu0 %504
      %506 = vrot.lane.b32.xlu0 %v273, 120
      %v507 = vpop.permute.xlu0 %506
      %508 = vrot.lane.b32.xlu0 %v274, 120
      %v509 = vpop.permute.xlu0 %508
      %510 = vrot.lane.b32.xlu0 %v275, 120
      %v511 = vpop.permute.xlu0 %510
      %v513 = vsel %vm276, %v497, 0
      %v516 = vsel %vm276, %v499, 0
      %v519 = vsel %vm276, %v501, 0
      %v522 = vsel %vm276, %v503, 0
      %v525 = vsel %vm276, %v505, 0
      %v528 = vsel %vm276, %v507, 0
      %v531 = vsel %vm276, %v509, 0
      %v534 = vsel %vm276, %v511, 0
      %536 = vmatpush.bf16.xpose.msra.mxu0 0
      %537 = vmatpush.bf16.xpose.msra.mxu0 0
      %538 = vmatpush.bf16.xpose.msra.mxu0 0
      %539 = vmatpush.bf16.xpose.msra.mxu0 0
      %540 = vmatpush.bf16.xpose.msra.mxu0 %v534
      %541 = vmatpush.bf16.xpose.msra.mxu0 %v531
      %542 = vmatpush.bf16.xpose.msra.mxu0 %v528
      %543 = vmatpush.bf16.xpose.msra.mxu0 %v525
      %544 = vmatmul.bf16.gmra.mxu0 %v513
      %v545 = vpop.f32.mrf.mxu0
      %v546 = vadd.f32 0.0, %v545
      %v547 = vpop.f32.mrf.mxu0
      %v548 = vadd.f32 0.0, %v547
      %549 = vmatmul.bf16.gmra.mxu0 %v516
      %v550 = vpop.f32.mrf.mxu0
      %v551 = vadd.f32 0.0, %v550
      %v552 = vpop.f32.mrf.mxu0
      %v553 = vadd.f32 0.0, %v552
      %554 = vmatmul.bf16.gmra.mxu0 %v519
      %v555 = vpop.f32.mrf.mxu0
      %v556 = vadd.f32 0.0, %v555
      %v557 = vpop.f32.mrf.mxu0
      %v558 = vadd.f32 0.0, %v557
      %559 = vmatmul.bf16.gmra.mxu0 %v522
      %v560 = vpop.f32.mrf.mxu0
      %v561 = vadd.f32 0.0, %v560
      %v562 = vpop.f32.mrf.mxu0
      %v563 = vadd.f32 0.0, %v562
      %564 = vdwg.mxu0
      %v565 = vmul.f32 %v546, 0.35355338
      %v566 = vmul.f32 %v548, 0.35355338
      %v567 = vmul.f32 %v551, 0.35355338
      %v568 = vmul.f32 %v553, 0.35355338
      %v569 = vmul.f32 %v556, 0.35355338
      %v570 = vmul.f32 %v558, 0.35355338
      %v571 = vmul.f32 %v561, 0.35355338
      %v572 = vmul.f32 %v563, 0.35355338
      %v573 = vsel %vm338, %v565, -inf
      %574 = vmax.xlane.f32.xlu0 %v573
      %v575 = vpop.xlane.xlu0 %574
      %v576 = vsel %vm338, %v566, -inf
      %577 = vmax.xlane.f32.xlu0 %v576
      %v578 = vpop.xlane.xlu0 %577
      %v579 = vsel %vm338, %v567, -inf
      %580 = vmax.xlane.f32.xlu0 %v579
      %v581 = vpop.xlane.xlu0 %580
      %v582 = vsel %vm338, %v568, -inf
      %583 = vmax.xlane.f32.xlu0 %v582
      %v584 = vpop.xlane.xlu0 %583
      %v585 = vsel %vm338, %v569, -inf
      %586 = vmax.xlane.f32.xlu0 %v585
      %v587 = vpop.xlane.xlu0 %586
      %v588 = vsel %vm338, %v570, -inf
      %589 = vmax.xlane.f32.xlu0 %v588
      %v590 = vpop.xlane.xlu0 %589
      %v591 = vsel %vm338, %v571, -inf
      %592 = vmax.xlane.f32.xlu0 %v591
      %v593 = vpop.xlane.xlu0 %592
      %v594 = vsel %vm338, %v572, -inf
      %595 = vmax.xlane.f32.xlu0 %v594
      %v596 = vpop.xlane.xlu0 %595
      %v597 = vsub.f32 %v565, %v575
      %v598 = vsub.f32 %v566, %v578
      %v599 = vsub.f32 %v567, %v581
      %v600 = vsub.f32 %v568, %v584
      %v601 = vsub.f32 %v569, %v587
      %v602 = vsub.f32 %v570, %v590
      %v603 = vsub.f32 %v571, %v593
      %v604 = vsub.f32 %v572, %v596
      %v605 = vmul.f32 %v597, 1.442695
      %v606 = vpow.pop %v605
      %v607 = vmul.f32 %v598, 1.442695
      %v608 = vpow.pop %v607
      %v609 = vmul.f32 %v599, 1.442695
      %v610 = vpow.pop %v609
      %v611 = vmul.f32 %v600, 1.442695
      %v612 = vpow.pop %v611
      %v613 = vmul.f32 %v601, 1.442695
      %v614 = vpow.pop %v613
      %v615 = vmul.f32 %v602, 1.442695
      %v616 = vpow.pop %v615
      %v617 = vmul.f32 %v603, 1.442695
      %v618 = vpow.pop %v617
      %v619 = vmul.f32 %v604, 1.442695
      %v620 = vpow.pop %v619
      %v621 = vsel %vm338, %v606, 0.0
      %622 = vadd.xlane.f32.xlu0 %v621
      %v623 = vpop.xlane.xlu0 %622
      %v624 = vsel %vm338, %v608, 0.0
      %625 = vadd.xlane.f32.xlu0 %v624
      %v626 = vpop.xlane.xlu0 %625
      %v627 = vsel %vm338, %v610, 0.0
      %628 = vadd.xlane.f32.xlu0 %v627
      %v629 = vpop.xlane.xlu0 %628
      %v630 = vsel %vm338, %v612, 0.0
      %631 = vadd.xlane.f32.xlu0 %v630
      %v632 = vpop.xlane.xlu0 %631
      %v633 = vsel %vm338, %v614, 0.0
      %634 = vadd.xlane.f32.xlu0 %v633
      %v635 = vpop.xlane.xlu0 %634
      %v636 = vsel %vm338, %v616, 0.0
      %637 = vadd.xlane.f32.xlu0 %v636
      %v638 = vpop.xlane.xlu0 %637
      %v639 = vsel %vm338, %v618, 0.0
      %640 = vadd.xlane.f32.xlu0 %v639
      %v641 = vpop.xlane.xlu0 %640
      %v642 = vsel %vm338, %v620, 0.0
      %643 = vadd.xlane.f32.xlu0 %v642
      %v644 = vpop.xlane.xlu0 %643
      %v645 = vrcp.pop %v623
      %v646 = vrcp.pop %v626
      %v647 = vrcp.pop %v629
      %v648 = vrcp.pop %v632
      %v649 = vrcp.pop %v635
      %v650 = vrcp.pop %v638
      %v651 = vrcp.pop %v641
      %v652 = vrcp.pop %v644
      %v653 = vmul.f32 %v606, %v645
      %v654 = vmul.f32 %v608, %v646
      %v655 = vmul.f32 %v610, %v647
      %v656 = vmul.f32 %v612, %v648
      %v657 = vmul.f32 %v614, %v649
      %v658 = vmul.f32 %v616, %v650
      %v659 = vmul.f32 %v618, %v651
      %v660 = vmul.f32 %v620, %v652
      %v661 = vpack.c.bf16 %v654, %v653
      %v662 = vpack.c.bf16 %v656, %v655
      %v663 = vpack.c.bf16 %v658, %v657
      %v664 = vpack.c.bf16 %v660, %v659
      %665 = vrot.lane.b32.xlu0 %v447, 120
      %v666 = vpop.permute.xlu0 %665
      %667 = vrot.lane.b32.xlu0 %v448, 120
      %v668 = vpop.permute.xlu0 %667
      %669 = vrot.lane.b32.xlu0 %v449, 120
      %v670 = vpop.permute.xlu0 %669
      %671 = vrot.lane.b32.xlu0 %v450, 120
      %v672 = vpop.permute.xlu0 %671
      %v678 = vsel %vm338, %v661, 0
      %v681 = vsel %vm338, %v662, 0
      %v684 = vsel %vm338, %v663, 0
      %v687 = vsel %vm338, %v664, 0
      %689 = vmatpush.bf16.msra.mxu0 0
      %690 = vmatpush.bf16.msra.mxu0 0
      %691 = vmatpush.bf16.msra.mxu0 0
      %692 = vmatpush.bf16.msra.mxu0 0
      %693 = vmatpush.bf16.msra.mxu0 %v672
      %694 = vmatpush.bf16.msra.mxu0 %v670
      %695 = vmatpush.bf16.msra.mxu0 %v668
      %696 = vmatpush.bf16.msra.mxu0 %v666
      %697 = vmatmul.bf16.gmra.mxu0 %v678
      %v698 = vpop.f32.mrf.mxu0
      %v699 = vadd.f32 0.0, %v698
      %v700 = vpop.f32.mrf.mxu0
      %v701 = vadd.f32 0.0, %v700
      %702 = vmatmul.bf16.gmra.mxu0 %v681
      %v703 = vpop.f32.mrf.mxu0
      %v704 = vadd.f32 0.0, %v703
      %v705 = vpop.f32.mrf.mxu0
      %v706 = vadd.f32 0.0, %v705
      %707 = vmatmul.bf16.gmra.mxu0 %v684
      %v708 = vpop.f32.mrf.mxu0
      %v709 = vadd.f32 0.0, %v708
      %v710 = vpop.f32.mrf.mxu0
      %v711 = vadd.f32 0.0, %v710
      %712 = vmatmul.bf16.gmra.mxu0 %v687
      %v713 = vpop.f32.mrf.mxu0
      %v714 = vadd.f32 0.0, %v713
      %v715 = vpop.f32.mrf.mxu0
      %v716 = vadd.f32 0.0, %v715
      %717 = vdwg.mxu0
      %718 = vrot.lane.b32.xlu0 %v252, 112
      %v719 = vpop.permute.xlu0 %718
      %720 = vrot.lane.b32.xlu0 %v253, 112
      %v721 = vpop.permute.xlu0 %720
      %722 = vrot.lane.b32.xlu0 %v254, 112
      %v723 = vpop.permute.xlu0 %722
      %724 = vrot.lane.b32.xlu0 %v255, 112
      %v725 = vpop.permute.xlu0 %724
      %726 = vrot.lane.b32.xlu0 %v272, 112
      %v727 = vpop.permute.xlu0 %726
      %728 = vrot.lane.b32.xlu0 %v273, 112
      %v729 = vpop.permute.xlu0 %728
      %730 = vrot.lane.b32.xlu0 %v274, 112
      %v731 = vpop.permute.xlu0 %730
      %732 = vrot.lane.b32.xlu0 %v275, 112
      %v733 = vpop.permute.xlu0 %732
      %v735 = vsel %vm276, %v719, 0
      %v738 = vsel %vm276, %v721, 0
      %v741 = vsel %vm276, %v723, 0
      %v744 = vsel %vm276, %v725, 0
      %v747 = vsel %vm276, %v727, 0
      %v750 = vsel %vm276, %v729, 0
      %v753 = vsel %vm276, %v731, 0
      %v756 = vsel %vm276, %v733, 0
      %758 = vmatpush.bf16.xpose.msra.mxu0 0
      %759 = vmatpush.bf16.xpose.msra.mxu0 0
      %760 = vmatpush.bf16.xpose.msra.mxu0 0
      %761 = vmatpush.bf16.xpose.msra.mxu0 0
      %762 = vmatpush.bf16.xpose.msra.mxu0 %v756
      %763 = vmatpush.bf16.xpose.msra.mxu0 %v753
      %764 = vmatpush.bf16.xpose.msra.mxu0 %v750
      %765 = vmatpush.bf16.xpose.msra.mxu0 %v747
      %766 = vmatmul.bf16.gmra.mxu0 %v735
      %v767 = vpop.f32.mrf.mxu0
      %v768 = vadd.f32 0.0, %v767
      %v769 = vpop.f32.mrf.mxu0
      %v770 = vadd.f32 0.0, %v769
      %771 = vmatmul.bf16.gmra.mxu0 %v738
      %v772 = vpop.f32.mrf.mxu0
      %v773 = vadd.f32 0.0, %v772
      %v774 = vpop.f32.mrf.mxu0
      %v775 = vadd.f32 0.0, %v774
      %776 = vmatmul.bf16.gmra.mxu0 %v741
      %v777 = vpop.f32.mrf.mxu0
      %v778 = vadd.f32 0.0, %v777
      %v779 = vpop.f32.mrf.mxu0
      %v780 = vadd.f32 0.0, %v779
      %781 = vmatmul.bf16.gmra.mxu0 %v744
      %v782 = vpop.f32.mrf.mxu0
      %v783 = vadd.f32 0.0, %v782
      %v784 = vpop.f32.mrf.mxu0
      %v785 = vadd.f32 0.0, %v784
      %786 = vdwg.mxu0
      %v787 = vmul.f32 %v768, 0.35355338
      %v788 = vmul.f32 %v770, 0.35355338
      %v789 = vmul.f32 %v773, 0.35355338
      %v790 = vmul.f32 %v775, 0.35355338
      %v791 = vmul.f32 %v778, 0.35355338
      %v792 = vmul.f32 %v780, 0.35355338
      %v793 = vmul.f32 %v783, 0.35355338
      %v794 = vmul.f32 %v785, 0.35355338
      %v795 = vsel %vm338, %v787, -inf
      %796 = vmax.xlane.f32.xlu0 %v795
      %v797 = vpop.xlane.xlu0 %796
      %v798 = vsel %vm338, %v788, -inf
      %799 = vmax.xlane.f32.xlu0 %v798
      %v800 = vpop.xlane.xlu0 %799
      %v801 = vsel %vm338, %v789, -inf
      %802 = vmax.xlane.f32.xlu0 %v801
      %v803 = vpop.xlane.xlu0 %802
      %v804 = vsel %vm338, %v790, -inf
      %805 = vmax.xlane.f32.xlu0 %v804
      %v806 = vpop.xlane.xlu0 %805
      %v807 = vsel %vm338, %v791, -inf
      %808 = vmax.xlane.f32.xlu0 %v807
      %v809 = vpop.xlane.xlu0 %808
      %v810 = vsel %vm338, %v792, -inf
      %811 = vmax.xlane.f32.xlu0 %v810
      %v812 = vpop.xlane.xlu0 %811
      %v813 = vsel %vm338, %v793, -inf
      %814 = vmax.xlane.f32.xlu0 %v813
      %v815 = vpop.xlane.xlu0 %814
      %v816 = vsel %vm338, %v794, -inf
      %817 = vmax.xlane.f32.xlu0 %v816
      %v818 = vpop.xlane.xlu0 %817
      %v819 = vsub.f32 %v787, %v797
      %v820 = vsub.f32 %v788, %v800
      %v821 = vsub.f32 %v789, %v803
      %v822 = vsub.f32 %v790, %v806
      %v823 = vsub.f32 %v791, %v809
      %v824 = vsub.f32 %v792, %v812
      %v825 = vsub.f32 %v793, %v815
      %v826 = vsub.f32 %v794, %v818
      %v827 = vmul.f32 %v819, 1.442695
      %v828 = vpow.pop %v827
      %v829 = vmul.f32 %v820, 1.442695
      %v830 = vpow.pop %v829
      %v831 = vmul.f32 %v821, 1.442695
      %v832 = vpow.pop %v831
      %v833 = vmul.f32 %v822, 1.442695
      %v834 = vpow.pop %v833
      %v835 = vmul.f32 %v823, 1.442695
      %v836 = vpow.pop %v835
      %v837 = vmul.f32 %v824, 1.442695
      %v838 = vpow.pop %v837
      %v839 = vmul.f32 %v825, 1.442695
      %v840 = vpow.pop %v839
      %v841 = vmul.f32 %v826, 1.442695
      %v842 = vpow.pop %v841
      %v843 = vsel %vm338, %v828, 0.0
      %844 = vadd.xlane.f32.xlu0 %v843
      %v845 = vpop.xlane.xlu0 %844
      %v846 = vsel %vm338, %v830, 0.0
      %847 = vadd.xlane.f32.xlu0 %v846
      %v848 = vpop.xlane.xlu0 %847
      %v849 = vsel %vm338, %v832, 0.0
      %850 = vadd.xlane.f32.xlu0 %v849
      %v851 = vpop.xlane.xlu0 %850
      %v852 = vsel %vm338, %v834, 0.0
      %853 = vadd.xlane.f32.xlu0 %v852
      %v854 = vpop.xlane.xlu0 %853
      %v855 = vsel %vm338, %v836, 0.0
      %856 = vadd.xlane.f32.xlu0 %v855
      %v857 = vpop.xlane.xlu0 %856
      %v858 = vsel %vm338, %v838, 0.0
      %859 = vadd.xlane.f32.xlu0 %v858
      %v860 = vpop.xlane.xlu0 %859
      %v861 = vsel %vm338, %v840, 0.0
      %862 = vadd.xlane.f32.xlu0 %v861
      %v863 = vpop.xlane.xlu0 %862
      %v864 = vsel %vm338, %v842, 0.0
      %865 = vadd.xlane.f32.xlu0 %v864
      %v866 = vpop.xlane.xlu0 %865
      %v867 = vrcp.pop %v845
      %v868 = vrcp.pop %v848
      %v869 = vrcp.pop %v851
      %v870 = vrcp.pop %v854
      %v871 = vrcp.pop %v857
      %v872 = vrcp.pop %v860
      %v873 = vrcp.pop %v863
      %v874 = vrcp.pop %v866
      %v875 = vmul.f32 %v828, %v867
      %v876 = vmul.f32 %v830, %v868
      %v877 = vmul.f32 %v832, %v869
      %v878 = vmul.f32 %v834, %v870
      %v879 = vmul.f32 %v836, %v871
      %v880 = vmul.f32 %v838, %v872
      %v881 = vmul.f32 %v840, %v873
      %v882 = vmul.f32 %v842, %v874
      %v883 = vpack.c.bf16 %v876, %v875
      %v884 = vpack.c.bf16 %v878, %v877
      %v885 = vpack.c.bf16 %v880, %v879
      %v886 = vpack.c.bf16 %v882, %v881
      %887 = vrot.lane.b32.xlu0 %v447, 112
      %v888 = vpop.permute.xlu0 %887
      %889 = vrot.lane.b32.xlu0 %v448, 112
      %v890 = vpop.permute.xlu0 %889
      %891 = vrot.lane.b32.xlu0 %v449, 112
      %v892 = vpop.permute.xlu0 %891
      %893 = vrot.lane.b32.xlu0 %v450, 112
      %v894 = vpop.permute.xlu0 %893
      %v900 = vsel %vm338, %v883, 0
      %v903 = vsel %vm338, %v884, 0
      %v906 = vsel %vm338, %v885, 0
      %v909 = vsel %vm338, %v886, 0
      %911 = vmatpush.bf16.msra.mxu0 0
      %912 = vmatpush.bf16.msra.mxu0 0
      %913 = vmatpush.bf16.msra.mxu0 0
      %914 = vmatpush.bf16.msra.mxu0 0
      %915 = vmatpush.bf16.msra.mxu0 %v894
      %916 = vmatpush.bf16.msra.mxu0 %v892
      %917 = vmatpush.bf16.msra.mxu0 %v890
      %918 = vmatpush.bf16.msra.mxu0 %v888
      %919 = vmatmul.bf16.gmra.mxu0 %v900
      %v920 = vpop.f32.mrf.mxu0
      %v921 = vadd.f32 0.0, %v920
      %v922 = vpop.f32.mrf.mxu0
      %v923 = vadd.f32 0.0, %v922
      %924 = vmatmul.bf16.gmra.mxu0 %v903
      %v925 = vpop.f32.mrf.mxu0
      %v926 = vadd.f32 0.0, %v925
      %v927 = vpop.f32.mrf.mxu0
      %v928 = vadd.f32 0.0, %v927
      %929 = vmatmul.bf16.gmra.mxu0 %v906
      %v930 = vpop.f32.mrf.mxu0
      %v931 = vadd.f32 0.0, %v930
      %v932 = vpop.f32.mrf.mxu0
      %v933 = vadd.f32 0.0, %v932
      %934 = vmatmul.bf16.gmra.mxu0 %v909
      %v935 = vpop.f32.mrf.mxu0
      %v936 = vadd.f32 0.0, %v935
      %v937 = vpop.f32.mrf.mxu0
      %v938 = vadd.f32 0.0, %v937
      %939 = vdwg.mxu0
      %940 = vrot.lane.b32.xlu0 %v252, 104
      %v941 = vpop.permute.xlu0 %940
      %942 = vrot.lane.b32.xlu0 %v253, 104
      %v943 = vpop.permute.xlu0 %942
      %944 = vrot.lane.b32.xlu0 %v254, 104
      %v945 = vpop.permute.xlu0 %944
      %946 = vrot.lane.b32.xlu0 %v255, 104
      %v947 = vpop.permute.xlu0 %946
      %948 = vrot.lane.b32.xlu0 %v272, 104
      %v949 = vpop.permute.xlu0 %948
      %950 = vrot.lane.b32.xlu0 %v273, 104
      %v951 = vpop.permute.xlu0 %950
      %952 = vrot.lane.b32.xlu0 %v274, 104
      %v953 = vpop.permute.xlu0 %952
      %954 = vrot.lane.b32.xlu0 %v275, 104
      %v955 = vpop.permute.xlu0 %954
      %v957 = vsel %vm276, %v941, 0
      %v960 = vsel %vm276, %v943, 0
      %v963 = vsel %vm276, %v945, 0
      %v966 = vsel %vm276, %v947, 0
      %v969 = vsel %vm276, %v949, 0
      %v972 = vsel %vm276, %v951, 0
      %v975 = vsel %vm276, %v953, 0
      %v978 = vsel %vm276, %v955, 0
      %980 = vmatpush.bf16.xpose.msra.mxu0 0
      %981 = vmatpush.bf16.xpose.msra.mxu0 0
      %982 = vmatpush.bf16.xpose.msra.mxu0 0
      %983 = vmatpush.bf16.xpose.msra.mxu0 0
      %984 = vmatpush.bf16.xpose.msra.mxu0 %v978
      %985 = vmatpush.bf16.xpose.msra.mxu0 %v975
      %986 = vmatpush.bf16.xpose.msra.mxu0 %v972
      %987 = vmatpush.bf16.xpose.msra.mxu0 %v969
      %988 = vmatmul.bf16.gmra.mxu0 %v957
      %v989 = vpop.f32.mrf.mxu0
      %v990 = vadd.f32 0.0, %v989
      %v991 = vpop.f32.mrf.mxu0
      %v992 = vadd.f32 0.0, %v991
      %993 = vmatmul.bf16.gmra.mxu0 %v960
      %v994 = vpop.f32.mrf.mxu0
      %v995 = vadd.f32 0.0, %v994
      %v996 = vpop.f32.mrf.mxu0
      %v997 = vadd.f32 0.0, %v996
      %998 = vmatmul.bf16.gmra.mxu0 %v963
      %v999 = vpop.f32.mrf.mxu0
      %v1000 = vadd.f32 0.0, %v999
      %v1001 = vpop.f32.mrf.mxu0
      %v1002 = vadd.f32 0.0, %v1001
      %1003 = vmatmul.bf16.gmra.mxu0 %v966
      %v1004 = vpop.f32.mrf.mxu0
      %v1005 = vadd.f32 0.0, %v1004
      %v1006 = vpop.f32.mrf.mxu0
      %v1007 = vadd.f32 0.0, %v1006
      %1008 = vdwg.mxu0
      %v1009 = vmul.f32 %v990, 0.35355338
      %v1010 = vmul.f32 %v992, 0.35355338
      %v1011 = vmul.f32 %v995, 0.35355338
      %v1012 = vmul.f32 %v997, 0.35355338
      %v1013 = vmul.f32 %v1000, 0.35355338
      %v1014 = vmul.f32 %v1002, 0.35355338
      %v1015 = vmul.f32 %v1005, 0.35355338
      %v1016 = vmul.f32 %v1007, 0.35355338
      %v1017 = vsel %vm338, %v1009, -inf
      %1018 = vmax.xlane.f32.xlu0 %v1017
      %v1019 = vpop.xlane.xlu0 %1018
      %v1020 = vsel %vm338, %v1010, -inf
      %1021 = vmax.xlane.f32.xlu0 %v1020
      %v1022 = vpop.xlane.xlu0 %1021
      %v1023 = vsel %vm338, %v1011, -inf
      %1024 = vmax.xlane.f32.xlu0 %v1023
      %v1025 = vpop.xlane.xlu0 %1024
      %v1026 = vsel %vm338, %v1012, -inf
      %1027 = vmax.xlane.f32.xlu0 %v1026
      %v1028 = vpop.xlane.xlu0 %1027
      %v1029 = vsel %vm338, %v1013, -inf
      %1030 = vmax.xlane.f32.xlu0 %v1029
      %v1031 = vpop.xlane.xlu0 %1030
      %v1032 = vsel %vm338, %v1014, -inf
      %1033 = vmax.xlane.f32.xlu0 %v1032
      %v1034 = vpop.xlane.xlu0 %1033
      %v1035 = vsel %vm338, %v1015, -inf
      %1036 = vmax.xlane.f32.xlu0 %v1035
      %v1037 = vpop.xlane.xlu0 %1036
      %v1038 = vsel %vm338, %v1016, -inf
      %1039 = vmax.xlane.f32.xlu0 %v1038
      %v1040 = vpop.xlane.xlu0 %1039
      %v1041 = vsub.f32 %v1009, %v1019
      %v1042 = vsub.f32 %v1010, %v1022
      %v1043 = vsub.f32 %v1011, %v1025
      %v1044 = vsub.f32 %v1012, %v1028
      %v1045 = vsub.f32 %v1013, %v1031
      %v1046 = vsub.f32 %v1014, %v1034
      %v1047 = vsub.f32 %v1015, %v1037
      %v1048 = vsub.f32 %v1016, %v1040
      %v1049 = vmul.f32 %v1041, 1.442695
      %v1050 = vpow.pop %v1049
      %v1051 = vmul.f32 %v1042, 1.442695
      %v1052 = vpow.pop %v1051
      %v1053 = vmul.f32 %v1043, 1.442695
      %v1054 = vpow.pop %v1053
      %v1055 = vmul.f32 %v1044, 1.442695
      %v1056 = vpow.pop %v1055
      %v1057 = vmul.f32 %v1045, 1.442695
      %v1058 = vpow.pop %v1057
      %v1059 = vmul.f32 %v1046, 1.442695
      %v1060 = vpow.pop %v1059
      %v1061 = vmul.f32 %v1047, 1.442695
      %v1062 = vpow.pop %v1061
      %v1063 = vmul.f32 %v1048, 1.442695
      %v1064 = vpow.pop %v1063
      %v1065 = vsel %vm338, %v1050, 0.0
      %1066 = vadd.xlane.f32.xlu0 %v1065
      %v1067 = vpop.xlane.xlu0 %1066
      %v1068 = vsel %vm338, %v1052, 0.0
      %1069 = vadd.xlane.f32.xlu0 %v1068
      %v1070 = vpop.xlane.xlu0 %1069
      %v1071 = vsel %vm338, %v1054, 0.0
      %1072 = vadd.xlane.f32.xlu0 %v1071
      %v1073 = vpop.xlane.xlu0 %1072
      %v1074 = vsel %vm338, %v1056, 0.0
      %1075 = vadd.xlane.f32.xlu0 %v1074
      %v1076 = vpop.xlane.xlu0 %1075
      %v1077 = vsel %vm338, %v1058, 0.0
      %1078 = vadd.xlane.f32.xlu0 %v1077
      %v1079 = vpop.xlane.xlu0 %1078
      %v1080 = vsel %vm338, %v1060, 0.0
      %1081 = vadd.xlane.f32.xlu0 %v1080
      %v1082 = vpop.xlane.xlu0 %1081
      %v1083 = vsel %vm338, %v1062, 0.0
      %1084 = vadd.xlane.f32.xlu0 %v1083
      %v1085 = vpop.xlane.xlu0 %1084
      %v1086 = vsel %vm338, %v1064, 0.0
      %1087 = vadd.xlane.f32.xlu0 %v1086
      %v1088 = vpop.xlane.xlu0 %1087
      %v1089 = vrcp.pop %v1067
      %v1090 = vrcp.pop %v1070
      %v1091 = vrcp.pop %v1073
      %v1092 = vrcp.pop %v1076
      %v1093 = vrcp.pop %v1079
      %v1094 = vrcp.pop %v1082
      %v1095 = vrcp.pop %v1085
      %v1096 = vrcp.pop %v1088
      %v1097 = vmul.f32 %v1050, %v1089
      %v1098 = vmul.f32 %v1052, %v1090
      %v1099 = vmul.f32 %v1054, %v1091
      %v1100 = vmul.f32 %v1056, %v1092
      %v1101 = vmul.f32 %v1058, %v1093
      %v1102 = vmul.f32 %v1060, %v1094
      %v1103 = vmul.f32 %v1062, %v1095
      %v1104 = vmul.f32 %v1064, %v1096
      %v1105 = vpack.c.bf16 %v1098, %v1097
      %v1106 = vpack.c.bf16 %v1100, %v1099
      %v1107 = vpack.c.bf16 %v1102, %v1101
      %v1108 = vpack.c.bf16 %v1104, %v1103
      %1109 = vrot.lane.b32.xlu0 %v447, 104
      %v1110 = vpop.permute.xlu0 %1109
      %1111 = vrot.lane.b32.xlu0 %v448, 104
      %v1112 = vpop.permute.xlu0 %1111
      %1113 = vrot.lane.b32.xlu0 %v449, 104
      %v1114 = vpop.permute.xlu0 %1113
      %1115 = vrot.lane.b32.xlu0 %v450, 104
      %v1116 = vpop.permute.xlu0 %1115
      %v1122 = vsel %vm338, %v1105, 0
      %v1125 = vsel %vm338, %v1106, 0
      %v1128 = vsel %vm338, %v1107, 0
      %v1131 = vsel %vm338, %v1108, 0
      %1133 = vmatpush.bf16.msra.mxu0 0
      %1134 = vmatpush.bf16.msra.mxu0 0
      %1135 = vmatpush.bf16.msra.mxu0 0
      %1136 = vmatpush.bf16.msra.mxu0 0
      %1137 = vmatpush.bf16.msra.mxu0 %v1116
      %1138 = vmatpush.bf16.msra.mxu0 %v1114
      %1139 = vmatpush.bf16.msra.mxu0 %v1112
      %1140 = vmatpush.bf16.msra.mxu0 %v1110
      %1141 = vmatmul.bf16.gmra.mxu0 %v1122
      %v1142 = vpop.f32.mrf.mxu0
      %v1143 = vadd.f32 0.0, %v1142
      %v1144 = vpop.f32.mrf.mxu0
      %v1145 = vadd.f32 0.0, %v1144
      %1146 = vmatmul.bf16.gmra.mxu0 %v1125
      %v1147 = vpop.f32.mrf.mxu0
      %v1148 = vadd.f32 0.0, %v1147
      %v1149 = vpop.f32.mrf.mxu0
      %v1150 = vadd.f32 0.0, %v1149
      %1151 = vmatmul.bf16.gmra.mxu0 %v1128
      %v1152 = vpop.f32.mrf.mxu0
      %v1153 = vadd.f32 0.0, %v1152
      %v1154 = vpop.f32.mrf.mxu0
      %v1155 = vadd.f32 0.0, %v1154
      %1156 = vmatmul.bf16.gmra.mxu0 %v1131
      %v1157 = vpop.f32.mrf.mxu0
      %v1158 = vadd.f32 0.0, %v1157
      %v1159 = vpop.f32.mrf.mxu0
      %v1160 = vadd.f32 0.0, %v1159
      %1161 = vdwg.mxu0
      %1170 = vrot.lane.b32.xlu0 %v699, 8
      %v1171 = vpop.permute.xlu0 %1170
      %1172 = vrot.lane.b32.xlu0 %v701, 8
      %v1173 = vpop.permute.xlu0 %1172
      %1174 = vrot.lane.b32.xlu0 %v704, 8
      %v1175 = vpop.permute.xlu0 %1174
      %1176 = vrot.lane.b32.xlu0 %v706, 8
      %v1177 = vpop.permute.xlu0 %1176
      %1178 = vrot.lane.b32.xlu0 %v709, 8
      %v1179 = vpop.permute.xlu0 %1178
      %1180 = vrot.lane.b32.xlu0 %v711, 8
      %v1181 = vpop.permute.xlu0 %1180
      %1182 = vrot.lane.b32.xlu0 %v714, 8
      %v1183 = vpop.permute.xlu0 %1182
      %1184 = vrot.lane.b32.xlu0 %v716, 8
      %v1185 = vpop.permute.xlu0 %1184
      %1202 = vrot.lane.b32.xlu0 %v921, 16
      %v1203 = vpop.permute.xlu0 %1202
      %1204 = vrot.lane.b32.xlu0 %v923, 16
      %v1205 = vpop.permute.xlu0 %1204
      %1206 = vrot.lane.b32.xlu0 %v926, 16
      %v1207 = vpop.permute.xlu0 %1206
      %1208 = vrot.lane.b32.xlu0 %v928, 16
      %v1209 = vpop.permute.xlu0 %1208
      %1210 = vrot.lane.b32.xlu0 %v931, 16
      %v1211 = vpop.permute.xlu0 %1210
      %1212 = vrot.lane.b32.xlu0 %v933, 16
      %v1213 = vpop.permute.xlu0 %1212
      %1214 = vrot.lane.b32.xlu0 %v936, 16
      %v1215 = vpop.permute.xlu0 %1214
      %1216 = vrot.lane.b32.xlu0 %v938, 16
      %v1217 = vpop.permute.xlu0 %1216
      %1234 = vrot.lane.b32.xlu0 %v1143, 24
      %v1235 = vpop.permute.xlu0 %1234
      %1236 = vrot.lane.b32.xlu0 %v1145, 24
      %v1237 = vpop.permute.xlu0 %1236
      %1238 = vrot.lane.b32.xlu0 %v1148, 24
      %v1239 = vpop.permute.xlu0 %1238
      %1240 = vrot.lane.b32.xlu0 %v1150, 24
      %v1241 = vpop.permute.xlu0 %1240
      %1242 = vrot.lane.b32.xlu0 %v1153, 24
      %v1243 = vpop.permute.xlu0 %1242
      %1244 = vrot.lane.b32.xlu0 %v1155, 24
      %v1245 = vpop.permute.xlu0 %1244
      %1246 = vrot.lane.b32.xlu0 %v1158, 24
      %v1247 = vpop.permute.xlu0 %1246
      %1248 = vrot.lane.b32.xlu0 %v1160, 24
      %v1249 = vpop.permute.xlu0 %1248
      %v1258 = vsel %vm276, %v477, %v1171
      %v1259 = vsel %vm276, %v479, %v1173
      %v1260 = vsel %vm276, %v482, %v1175
      %v1261 = vsel %vm276, %v484, %v1177
      %v1262 = vsel %vm276, %v487, %v1179
      %v1263 = vsel %vm276, %v489, %v1181
      %v1264 = vsel %vm276, %v492, %v1183
      %v1265 = vsel %vm276, %v494, %v1185
      %vm1266 = vcmask 130048
      %v1267 = vsel %vm1266, %v1258, %v1203
      %v1268 = vsel %vm1266, %v1259, %v1205
      %v1269 = vsel %vm1266, %v1260, %v1207
      %v1270 = vsel %vm1266, %v1261, %v1209
      %v1271 = vsel %vm1266, %v1262, %v1211
      %v1272 = vsel %vm1266, %v1263, %v1213
      %v1273 = vsel %vm1266, %v1264, %v1215
      %v1274 = vsel %vm1266, %v1265, %v1217
      %vm1275 = vcmask 195584
      %v1276 = vsel %vm1275, %v1267, %v1235
      %v1277 = vsel %vm1275, %v1268, %v1237
      %v1278 = vsel %vm1275, %v1269, %v1239
      %v1279 = vsel %vm1275, %v1270, %v1241
      %v1280 = vsel %vm1275, %v1271, %v1243
      %v1281 = vsel %vm1275, %v1272, %v1245
      %v1282 = vsel %vm1275, %v1273, %v1247
      %v1283 = vsel %vm1275, %v1274, %v1249
      %vm1284 = vcmask 261120
      %1285 = vst.msk [vmem:[%s210] sm:$0xff] %vm1284, %v1276
      %1286 = vst.msk [vmem:[%s210 + $0x8] sm:$0xff] %vm1284, %v1277
      %1287 = vst.msk [vmem:[%s210 + $0x10] sm:$0xff] %vm1284, %v1278
      %1288 = vst.msk [vmem:[%s210 + $0x18] sm:$0xff] %vm1284, %v1279
      %1289 = vst.msk [vmem:[%s210 + $0x20] sm:$0xff] %vm1284, %v1280
      %1290 = vst.msk [vmem:[%s210 + $0x28] sm:$0xff] %vm1284, %v1281
      %1291 = vst.msk [vmem:[%s210 + $0x30] sm:$0xff] %vm1284, %v1282
      %1292 = vst.msk [vmem:[%s210 + $0x38] sm:$0xff] %vm1284, %v1283
      %p1293 = scmp.lt.s32.totalorder %s14, 3
      %s1294 = scalar_select %p1293, %s14, 3
      %s1295 = smul.addr %s1294, 8
      %s1296 = smul.addr %s1295, 8
      %s1297 = scalar_lea.vmem %s3, %s1296
      // Predicated region
      $region33: #{_lambda_.30} parent=31 // pred_check
        %p1298 = pneg %p110
      $region34: #{_lambda_.30} parent=31 // pred_check_branch
        %1300 = sbr.rel (%p1298) target = $region36
      $region35: #{_lambda_.30} parent=31 // pred_region
        _
      $region36: #{_lambda_.30} parent=31 // pred_fallthru
        _
    $region32: #{_lambda_.30} parent=5 // pred_fallthru
      _
    %p1301 = scmp.le.s32.totalorder 2, %s9
    // Predicated region
    $region37: #{_lambda_.30} parent=5 // pred_check
      %p1302 = pneg %p1301
    $region38: #{_lambda_.30} parent=5 // pred_check_branch
      %1304 = sbr.rel (%p1302) target = $region40
    $region39: #{_lambda_.30} parent=5 // pred_region
      %s1305 = ssub.s32 %s9, 2
      // Predicated region
      $region41: #{_lambda_.30} parent=39 // pred_check
        %p1306 = pneg %p116
      $region42: #{_lambda_.30} parent=39 // pred_check_branch
        %1308 = sbr.rel (%p1306) target = $region44
      $region43: #{_lambda_.30} parent=39 // pred_region
        %p1309 = scmp.lt.s32.totalorder %s15, 3
        %s1310 = scalar_select %p1309, %s15, 3
        %s1311 = smul.addr %s1310, 8
        %s1312 = smul.addr %s1311, 8
        %s1313 = scalar_lea.vmem %s3, %s1312
      $region44: #{_lambda_.30} parent=39 // pred_fallthru
        _
    $region40: #{_lambda_.30} parent=5 // pred_fallthru
      _
  $region6: #{_lambda_.30} parent=0 // loop_footer
    %s13 = sadd.s32 1, %s9
  $region7: #{_lambda_.30} parent=0 // loop_footer_branch
    %8 = sbr.rel target = $region3
  $region8: #{_lambda_.30} parent=0 // loop_exit
    _

// kernel: _lambda_.36
$region0: #{_lambda_.36}
  #allocation0 [shape = 'u32[]', space=smem, size = 0x4, offset = 0x4, fixed_abs, tag = 'smem constant byte address 0x4 - core index']
  #allocation1 [shape = 'u32[72,128]{1,0:T(1,128)}', space=vmem, size = 0x9000, scoped, tag = 'internal scratch']
  %s0 = inlined_call_operand.vmem [shape: f32[64,128], index: 0, kind: input, shape index: {}]
  %s1 = inlined_call_operand.vmem [shape: f32[64,128], index: 1, kind: input, shape index: {}]
  %s2 = inlined_call_operand.vmem [shape: f32[64,128], index: 2, kind: output, shape index: {}]
  %s3 = sld [smem:[#allocation0]]
  $region18: #{_lambda_.36} parent=0
    _
  %s5 = ssub.s32 1, %s3
  %s6 = scalar_select 0, %s5, %s3
  // Predicated region
  $region2: #{_lambda_.36} parent=0 // pred_check
    _
  $region3: #{_lambda_.36} parent=0 // pred_check_branch
    %8 = sbr.rel (0) target = $region5
  $region4: #{_lambda_.36} parent=0 // pred_region
    _
  $region5: #{_lambda_.36} parent=0 // pred_fallthru
    _
  // Predicated region
  $region6: #{_lambda_.36} parent=0 // pred_check
    _
  $region7: #{_lambda_.36} parent=0 // pred_check_branch
    %10 = sbr.rel (0) target = $region9
  $region8: #{_lambda_.36} parent=0 // pred_region
    _
  $region9: #{_lambda_.36} parent=0 // pred_fallthru
    _
  %v11 = vld [vmem:[%s0] sm:$0xff]
  %v12 = vld [vmem:[%s0 + $0x8] sm:$0xff]
  %v13 = vld [vmem:[%s0 + $0x10] sm:$0xff]
  %v14 = vld [vmem:[%s0 + $0x18] sm:$0xff]
  %v15 = vld [vmem:[%s0 + $0x20] sm:$0xff]
  %v16 = vld [vmem:[%s0 + $0x28] sm:$0xff]
  %v17 = vld [vmem:[%s0 + $0x30] sm:$0xff]
  %v18 = vld [vmem:[%s0 + $0x38] sm:$0xff]
  %v19 = vld [vmem:[%s1] sm:$0xff]
  %v20 = vld [vmem:[%s1 + $0x8] sm:$0xff]
  %v21 = vld [vmem:[%s1 + $0x10] sm:$0xff]
  %v22 = vld [vmem:[%s1 + $0x18] sm:$0xff]
  %v23 = vld [vmem:[%s1 + $0x20] sm:$0xff]
  %v24 = vld [vmem:[%s1 + $0x28] sm:$0xff]
  %v25 = vld [vmem:[%s1 + $0x30] sm:$0xff]
  %v26 = vld [vmem:[%s1 + $0x38] sm:$0xff]
  %v27 = vadd.f32 %v11, %v19
  %v28 = vadd.f32 %v12, %v20
  %v29 = vadd.f32 %v13, %v21
  %v30 = vadd.f32 %v14, %v22
  %v31 = vadd.f32 %v15, %v23
  %v32 = vadd.f32 %v16, %v24
  %v33 = vadd.f32 %v17, %v25
  %v34 = vadd.f32 %v18, %v26
  %35 = vst [vmem:[%s2] sm:$0xff] %v27
  %36 = vst [vmem:[%s2 + $0x8] sm:$0xff] %v28
  %37 = vst [vmem:[%s2 + $0x10] sm:$0xff] %v29
  %38 = vst [vmem:[%s2 + $0x18] sm:$0xff] %v30
  %39 = vst [vmem:[%s2 + $0x20] sm:$0xff] %v31
  %40 = vst [vmem:[%s2 + $0x28] sm:$0xff] %v32
  %41 = vst [vmem:[%s2 + $0x30] sm:$0xff] %v33
  %42 = vst [vmem:[%s2 + $0x38] sm:$0xff] %v34
  // Predicated region
  $region10: #{_lambda_.36} parent=0 // pred_check
    _
  $region11: #{_lambda_.36} parent=0 // pred_check_branch
    %44 = sbr.rel (0) target = $region13
  $region12: #{_lambda_.36} parent=0 // pred_region
    _
  $region13: #{_lambda_.36} parent=0 // pred_fallthru
    _
  // Predicated region
  $region14: #{_lambda_.36} parent=0 // pred_check
    _
  $region15: #{_lambda_.36} parent=0 // pred_check_branch
    %46 = sbr.rel (0) target = $region17
  $region16: #{_lambda_.36} parent=0 // pred_region
    _
  $region17: #{_lambda_.36} parent=0 // pred_fallthru
    _

// kernel: _lambda_.32
$region0: #{_lambda_.32}
  #allocation0 [shape = 'u32[]', space=smem, size = 0x4, offset = 0x4, fixed_abs, tag = 'smem constant byte address 0x4 - core index']
  #allocation1 [shape = 'u32[72,128]{1,0:T(1,128)}', space=vmem, size = 0x9000, scoped, tag = 'internal scratch']
  %s0 = inlined_call_operand.vmem [shape: f32[256,32], index: 0, kind: input, shape index: {}]
  %s1 = inlined_call_operand.vmem [shape: f32[256,32], index: 1, kind: input, shape index: {}]
  %s2 = inlined_call_operand.vmem [shape: f32[1,32], index: 2, kind: input, shape index: {}]
  %s3 = inlined_call_operand.vmem [shape: f32[1,32], index: 3, kind: input, shape index: {}]
  %s4 = inlined_call_operand.vmem [shape: f32[256,32], index: 4, kind: output, shape index: {}]
  %s5 = sld [smem:[#allocation0]]
  $region26: #{_lambda_.32} parent=0
    _
  %s7 = ssub.s32 1, %s5
  %s8 = scalar_select 0, %s7, %s5
  // Predicated region
  $region2: #{_lambda_.32} parent=0 // pred_check
    _
  $region3: #{_lambda_.32} parent=0 // pred_check_branch
    %10 = sbr.rel (0) target = $region5
  $region4: #{_lambda_.32} parent=0 // pred_region
    _
  $region5: #{_lambda_.32} parent=0 // pred_fallthru
    _
  // Predicated region
  $region6: #{_lambda_.32} parent=0 // pred_check
    _
  $region7: #{_lambda_.32} parent=0 // pred_check_branch
    %12 = sbr.rel (0) target = $region9
  $region8: #{_lambda_.32} parent=0 // pred_region
    _
  $region9: #{_lambda_.32} parent=0 // pred_fallthru
    _
  // Predicated region
  $region10: #{_lambda_.32} parent=0 // pred_check
    _
  $region11: #{_lambda_.32} parent=0 // pred_check_branch
    %14 = sbr.rel (0) target = $region13
  $region12: #{_lambda_.32} parent=0 // pred_region
    _
  $region13: #{_lambda_.32} parent=0 // pred_fallthru
    _
  // Predicated region
  $region14: #{_lambda_.32} parent=0 // pred_check
    _
  $region15: #{_lambda_.32} parent=0 // pred_check_branch
    %16 = sbr.rel (0) target = $region17
  $region16: #{_lambda_.32} parent=0 // pred_region
    _
  $region17: #{_lambda_.32} parent=0 // pred_fallthru
    _
  %v17 = vld [vmem:[%s0] sm:$0xff]
  %v18 = vld [vmem:[%s0 + $0x8] sm:$0xff]
  %v19 = vld [vmem:[%s0 + $0x10] sm:$0xff]
  %v20 = vld [vmem:[%s0 + $0x18] sm:$0xff]
  %v21 = vld [vmem:[%s0 + $0x20] sm:$0xff]
  %v22 = vld [vmem:[%s0 + $0x28] sm:$0xff]
  %v23 = vld [vmem:[%s0 + $0x30] sm:$0xff]
  %v24 = vld [vmem:[%s0 + $0x38] sm:$0xff]
  %v25 = vld [vmem:[%s0 + $0x40] sm:$0xff]
  %v26 = vld [vmem:[%s0 + $0x48] sm:$0xff]
  %v27 = vld [vmem:[%s0 + $0x50] sm:$0xff]
  %v28 = vld [vmem:[%s0 + $0x58] sm:$0xff]
  %v29 = vld [vmem:[%s0 + $0x60] sm:$0xff]
  %v30 = vld [vmem:[%s0 + $0x68] sm:$0xff]
  %v31 = vld [vmem:[%s0 + $0x70] sm:$0xff]
  %v32 = vld [vmem:[%s0 + $0x78] sm:$0xff]
  %v33 = vld [vmem:[%s0 + $0x80] sm:$0xff]
  %v34 = vld [vmem:[%s0 + $0x88] sm:$0xff]
  %v35 = vld [vmem:[%s0 + $0x90] sm:$0xff]
  %v36 = vld [vmem:[%s0 + $0x98] sm:$0xff]
  %v37 = vld [vmem:[%s0 + $0xa0] sm:$0xff]
  %v38 = vld [vmem:[%s0 + $0xa8] sm:$0xff]
  %v39 = vld [vmem:[%s0 + $0xb0] sm:$0xff]
  %v40 = vld [vmem:[%s0 + $0xb8] sm:$0xff]
  %v41 = vld [vmem:[%s0 + $0xc0] sm:$0xff]
  %v42 = vld [vmem:[%s0 + $0xc8] sm:$0xff]
  %v43 = vld [vmem:[%s0 + $0xd0] sm:$0xff]
  %v44 = vld [vmem:[%s0 + $0xd8] sm:$0xff]
  %v45 = vld [vmem:[%s0 + $0xe0] sm:$0xff]
  %v46 = vld [vmem:[%s0 + $0xe8] sm:$0xff]
  %v47 = vld [vmem:[%s0 + $0xf0] sm:$0xff]
  %v48 = vld [vmem:[%s0 + $0xf8] sm:$0xff]
  %v49 = vld [vmem:[%s1] sm:$0xff]
  %v50 = vld [vmem:[%s1 + $0x8] sm:$0xff]
  %v51 = vld [vmem:[%s1 + $0x10] sm:$0xff]
  %v52 = vld [vmem:[%s1 + $0x18] sm:$0xff]
  %v53 = vld [vmem:[%s1 + $0x20] sm:$0xff]
  %v54 = vld [vmem:[%s1 + $0x28] sm:$0xff]
  %v55 = vld [vmem:[%s1 + $0x30] sm:$0xff]
  %v56 = vld [vmem:[%s1 + $0x38] sm:$0xff]
  %v57 = vld [vmem:[%s1 + $0x40] sm:$0xff]
  %v58 = vld [vmem:[%s1 + $0x48] sm:$0xff]
  %v59 = vld [vmem:[%s1 + $0x50] sm:$0xff]
  %v60 = vld [vmem:[%s1 + $0x58] sm:$0xff]
  %v61 = vld [vmem:[%s1 + $0x60] sm:$0xff]
  %v62 = vld [vmem:[%s1 + $0x68] sm:$0xff]
  %v63 = vld [vmem:[%s1 + $0x70] sm:$0xff]
  %v64 = vld [vmem:[%s1 + $0x78] sm:$0xff]
  %v65 = vld [vmem:[%s1 + $0x80] sm:$0xff]
  %v66 = vld [vmem:[%s1 + $0x88] sm:$0xff]
  %v67 = vld [vmem:[%s1 + $0x90] sm:$0xff]
  %v68 = vld [vmem:[%s1 + $0x98] sm:$0xff]
  %v69 = vld [vmem:[%s1 + $0xa0] sm:$0xff]
  %v70 = vld [vmem:[%s1 + $0xa8] sm:$0xff]
  %v71 = vld [vmem:[%s1 + $0xb0] sm:$0xff]
  %v72 = vld [vmem:[%s1 + $0xb8] sm:$0xff]
  %v73 = vld [vmem:[%s1 + $0xc0] sm:$0xff]
  %v74 = vld [vmem:[%s1 + $0xc8] sm:$0xff]
  %v75 = vld [vmem:[%s1 + $0xd0] sm:$0xff]
  %v76 = vld [vmem:[%s1 + $0xd8] sm:$0xff]
  %v77 = vld [vmem:[%s1 + $0xe0] sm:$0xff]
  %v78 = vld [vmem:[%s1 + $0xe8] sm:$0xff]
  %v79 = vld [vmem:[%s1 + $0xf0] sm:$0xff]
  %v80 = vld [vmem:[%s1 + $0xf8] sm:$0xff]
  %v81 = vadd.f32 %v17, %v49
  %v82 = vadd.f32 %v18, %v50
  %v83 = vadd.f32 %v19, %v51
  %v84 = vadd.f32 %v20, %v52
  %v85 = vadd.f32 %v21, %v53
  %v86 = vadd.f32 %v22, %v54
  %v87 = vadd.f32 %v23, %v55
  %v88 = vadd.f32 %v24, %v56
  %v89 = vadd.f32 %v25, %v57
  %v90 = vadd.f32 %v26, %v58
  %v91 = vadd.f32 %v27, %v59
  %v92 = vadd.f32 %v28, %v60
  %v93 = vadd.f32 %v29, %v61
  %v94 = vadd.f32 %v30, %v62
  %v95 = vadd.f32 %v31, %v63
  %v96 = vadd.f32 %v32, %v64
  %v97 = vadd.f32 %v33, %v65
  %v98 = vadd.f32 %v34, %v66
  %v99 = vadd.f32 %v35, %v67
  %v100 = vadd.f32 %v36, %v68
  %v101 = vadd.f32 %v37, %v69
  %v102 = vadd.f32 %v38, %v70
  %v103 = vadd.f32 %v39, %v71
  %v104 = vadd.f32 %v40, %v72
  %v105 = vadd.f32 %v41, %v73
  %v106 = vadd.f32 %v42, %v74
  %v107 = vadd.f32 %v43, %v75
  %v108 = vadd.f32 %v44, %v76
  %v109 = vadd.f32 %v45, %v77
  %v110 = vadd.f32 %v46, %v78
  %v111 = vadd.f32 %v47, %v79
  %v112 = vadd.f32 %v48, %v80
  %vm113 = vcmask 261120
  %v114 = vsel %vm113, %v81, 0.0
  %115 = vadd.xlane.f32.xlu0 %v114
  %v116 = vpop.xlane.xlu0 %115
  %v117 = vsel %vm113, %v82, 0.0
  %118 = vadd.xlane.f32.xlu0 %v117
  %v119 = vpop.xlane.xlu0 %118
  %v120 = vsel %vm113, %v83, 0.0
  %121 = vadd.xlane.f32.xlu0 %v120
  %v122 = vpop.xlane.xlu0 %121
  %v123 = vsel %vm113, %v84, 0.0
  %124 = vadd.xlane.f32.xlu0 %v123
  %v125 = vpop.xlane.xlu0 %124
  %v126 = vsel %vm113, %v85, 0.0
  %127 = vadd.xlane.f32.xlu0 %v126
  %v128 = vpop.xlane.xlu0 %127
  %v129 = vsel %vm113, %v86, 0.0
  %130 = vadd.xlane.f32.xlu0 %v129
  %v131 = vpop.xlane.xlu0 %130
  %v132 = vsel %vm113, %v87, 0.0
  %133 = vadd.xlane.f32.xlu0 %v132
  %v134 = vpop.xlane.xlu0 %133
  %v135 = vsel %vm113, %v88, 0.0
  %136 = vadd.xlane.f32.xlu0 %v135
  %v137 = vpop.xlane.xlu0 %136
  %v138 = vsel %vm113, %v89, 0.0
  %139 = vadd.xlane.f32.xlu0 %v138
  %v140 = vpop.xlane.xlu0 %139
  %v141 = vsel %vm113, %v90, 0.0
  %142 = vadd.xlane.f32.xlu0 %v141
  %v143 = vpop.xlane.xlu0 %142
  %v144 = vsel %vm113, %v91, 0.0
  %145 = vadd.xlane.f32.xlu0 %v144
  %v146 = vpop.xlane.xlu0 %145
  %v147 = vsel %vm113, %v92, 0.0
  %148 = vadd.xlane.f32.xlu0 %v147
  %v149 = vpop.xlane.xlu0 %148
  %v150 = vsel %vm113, %v93, 0.0
  %151 = vadd.xlane.f32.xlu0 %v150
  %v152 = vpop.xlane.xlu0 %151
  %v153 = vsel %vm113, %v94, 0.0
  %154 = vadd.xlane.f32.xlu0 %v153
  %v155 = vpop.xlane.xlu0 %154
  %v156 = vsel %vm113, %v95, 0.0
  %157 = vadd.xlane.f32.xlu0 %v156
  %v158 = vpop.xlane.xlu0 %157
  %v159 = vsel %vm113, %v96, 0.0
  %160 = vadd.xlane.f32.xlu0 %v159
  %v161 = vpop.xlane.xlu0 %160
  %v162 = vsel %vm113, %v97, 0.0
  %163 = vadd.xlane.f32.xlu0 %v162
  %v164 = vpop.xlane.xlu0 %163
  %v165 = vsel %vm113, %v98, 0.0
  %166 = vadd.xlane.f32.xlu0 %v165
  %v167 = vpop.xlane.xlu0 %166
  %v168 = vsel %vm113, %v99, 0.0
  %169 = vadd.xlane.f32.xlu0 %v168
  %v170 = vpop.xlane.xlu0 %169
  %v171 = vsel %vm113, %v100, 0.0
  %172 = vadd.xlane.f32.xlu0 %v171
  %v173 = vpop.xlane.xlu0 %172
  %v174 = vsel %vm113, %v101, 0.0
  %175 = vadd.xlane.f32.xlu0 %v174
  %v176 = vpop.xlane.xlu0 %175
  %v177 = vsel %vm113, %v102, 0.0
  %178 = vadd.xlane.f32.xlu0 %v177
  %v179 = vpop.xlane.xlu0 %178
  %v180 = vsel %vm113, %v103, 0.0
  %181 = vadd.xlane.f32.xlu0 %v180
  %v182 = vpop.xlane.xlu0 %181
  %v183 = vsel %vm113, %v104, 0.0
  %184 = vadd.xlane.f32.xlu0 %v183
  %v185 = vpop.xlane.xlu0 %184
  %v186 = vsel %vm113, %v105, 0.0
  %187 = vadd.xlane.f32.xlu0 %v186
  %v188 = vpop.xlane.xlu0 %187
  %v189 = vsel %vm113, %v106, 0.0
  %190 = vadd.xlane.f32.xlu0 %v189
  %v191 = vpop.xlane.xlu0 %190
  %v192 = vsel %vm113, %v107, 0.0
  %193 = vadd.xlane.f32.xlu0 %v192
  %v194 = vpop.xlane.xlu0 %193
  %v195 = vsel %vm113, %v108, 0.0
  %196 = vadd.xlane.f32.xlu0 %v195
  %v197 = vpop.xlane.xlu0 %196
  %v198 = vsel %vm113, %v109, 0.0
  %199 = vadd.xlane.f32.xlu0 %v198
  %v200 = vpop.xlane.xlu0 %199
  %v201 = vsel %vm113, %v110, 0.0
  %202 = vadd.xlane.f32.xlu0 %v201
  %v203 = vpop.xlane.xlu0 %202
  %v204 = vsel %vm113, %v111, 0.0
  %205 = vadd.xlane.f32.xlu0 %v204
  %v206 = vpop.xlane.xlu0 %205
  %v207 = vsel %vm113, %v112, 0.0
  %208 = vadd.xlane.f32.xlu0 %v207
  %v209 = vpop.xlane.xlu0 %208
  %v210 = vrcp.pop 32.0
  %v211 = vmul.f32 32.0, %v210
  %v212 = vsub.f32 1.0, %v211
  %v213 = vmul.f32 %v210, %v212
  %v214 = vadd.f32 %v210, %v213
  %vm215 = vweird.f32 %v210
  %v216 = vsel %vm215, %v210, %v214
  %v217 = vmul.f32 %v116, %v216
  %v218 = vmul.f32 %v119, %v216
  %v219 = vmul.f32 %v122, %v216
  %v220 = vmul.f32 %v125, %v216
  %v221 = vmul.f32 %v128, %v216
  %v222 = vmul.f32 %v131, %v216
  %v223 = vmul.f32 %v134, %v216
  %v224 = vmul.f32 %v137, %v216
  %v225 = vmul.f32 %v140, %v216
  %v226 = vmul.f32 %v143, %v216
  %v227 = vmul.f32 %v146, %v216
  %v228 = vmul.f32 %v149, %v216
  %v229 = vmul.f32 %v152, %v216
  %v230 = vmul.f32 %v155, %v216
  %v231 = vmul.f32 %v158, %v216
  %v232 = vmul.f32 %v161, %v216
  %v233 = vmul.f32 %v164, %v216
  %v234 = vmul.f32 %v167, %v216
  %v235 = vmul.f32 %v170, %v216
  %v236 = vmul.f32 %v173, %v216
  %v237 = vmul.f32 %v176, %v216
  %v238 = vmul.f32 %v179, %v216
  %v239 = vmul.f32 %v182, %v216
  %v240 = vmul.f32 %v185, %v216
  %v241 = vmul.f32 %v188, %v216
  %v242 = vmul.f32 %v191, %v216
  %v243 = vmul.f32 %v194, %v216
  %v244 = vmul.f32 %v197, %v216
  %v245 = vmul.f32 %v200, %v216
  %v246 = vmul.f32 %v203, %v216
  %v247 = vmul.f32 %v206, %v216
  %v248 = vmul.f32 %v209, %v216
  %v249 = vsub.f32 %v81, %v217
  %v250 = vsub.f32 %v82, %v218
  %v251 = vsub.f32 %v83, %v219
  %v252 = vsub.f32 %v84, %v220
  %v253 = vsub.f32 %v85, %v221
  %v254 = vsub.f32 %v86, %v222
  %v255 = vsub.f32 %v87, %v223
  %v256 = vsub.f32 %v88, %v224
  %v257 = vsub.f32 %v89, %v225
  %v258 = vsub.f32 %v90, %v226
  %v259 = vsub.f32 %v91, %v227
  %v260 = vsub.f32 %v92, %v228
  %v261 = vsub.f32 %v93, %v229
  %v262 = vsub.f32 %v94, %v230
  %v263 = vsub.f32 %v95, %v231
  %v264 = vsub.f32 %v96, %v232
  %v265 = vsub.f32 %v97, %v233
  %v266 = vsub.f32 %v98, %v234
  %v267 = vsub.f32 %v99, %v235
  %v268 = vsub.f32 %v100, %v236
  %v269 = vsub.f32 %v101, %v237
  %v270 = vsub.f32 %v102, %v238
  %v271 = vsub.f32 %v103, %v239
  %v272 = vsub.f32 %v104, %v240
  %v273 = vsub.f32 %v105, %v241
  %v274 = vsub.f32 %v106, %v242
  %v275 = vsub.f32 %v107, %v243
  %v276 = vsub.f32 %v108, %v244
  %v277 = vsub.f32 %v109, %v245
  %v278 = vsub.f32 %v110, %v246
  %v279 = vsub.f32 %v111, %v247
  %v280 = vsub.f32 %v112, %v248
  %v281 = vmul.f32 %v249, %v249
  %v282 = vmul.f32 %v250, %v250
  %v283 = vmul.f32 %v251, %v251
  %v284 = vmul.f32 %v252, %v252
  %v285 = vmul.f32 %v253, %v253
  %v286 = vmul.f32 %v254, %v254
  %v287 = vmul.f32 %v255, %v255
  %v288 = vmul.f32 %v256, %v256
  %v289 = vmul.f32 %v257, %v257
  %v290 = vmul.f32 %v258, %v258
  %v291 = vmul.f32 %v259, %v259
  %v292 = vmul.f32 %v260, %v260
  %v293 = vmul.f32 %v261, %v261
  %v294 = vmul.f32 %v262, %v262
  %v295 = vmul.f32 %v263, %v263
  %v296 = vmul.f32 %v264, %v264
  %v297 = vmul.f32 %v265, %v265
  %v298 = vmul.f32 %v266, %v266
  %v299 = vmul.f32 %v267, %v267
  %v300 = vmul.f32 %v268, %v268
  %v301 = vmul.f32 %v269, %v269
  %v302 = vmul.f32 %v270, %v270
  %v303 = vmul.f32 %v271, %v271
  %v304 = vmul.f32 %v272, %v272
  %v305 = vmul.f32 %v273, %v273
  %v306 = vmul.f32 %v274, %v274
  %v307 = vmul.f32 %v275, %v275
  %v308 = vmul.f32 %v276, %v276
  %v309 = vmul.f32 %v277, %v277
  %v310 = vmul.f32 %v278, %v278
  %v311 = vmul.f32 %v279, %v279
  %v312 = vmul.f32 %v280, %v280
  %v313 = vsel %vm113, %v281, 0.0
  %314 = vadd.xlane.f32.xlu0 %v313
  %v315 = vpop.xlane.xlu0 %314
  %v316 = vsel %vm113, %v282, 0.0
  %317 = vadd.xlane.f32.xlu0 %v316
  %v318 = vpop.xlane.xlu0 %317
  %v319 = vsel %vm113, %v283, 0.0
  %320 = vadd.xlane.f32.xlu0 %v319
  %v321 = vpop.xlane.xlu0 %320
  %v322 = vsel %vm113, %v284, 0.0
  %323 = vadd.xlane.f32.xlu0 %v322
  %v324 = vpop.xlane.xlu0 %323
  %v325 = vsel %vm113, %v285, 0.0
  %326 = vadd.xlane.f32.xlu0 %v325
  %v327 = vpop.xlane.xlu0 %326
  %v328 = vsel %vm113, %v286, 0.0
  %329 = vadd.xlane.f32.xlu0 %v328
  %v330 = vpop.xlane.xlu0 %329
  %v331 = vsel %vm113, %v287, 0.0
  %332 = vadd.xlane.f32.xlu0 %v331
  %v333 = vpop.xlane.xlu0 %332
  %v334 = vsel %vm113, %v288, 0.0
  %335 = vadd.xlane.f32.xlu0 %v334
  %v336 = vpop.xlane.xlu0 %335
  %v337 = vsel %vm113, %v289, 0.0
  %338 = vadd.xlane.f32.xlu0 %v337
  %v339 = vpop.xlane.xlu0 %338
  %v340 = vsel %vm113, %v290, 0.0
  %341 = vadd.xlane.f32.xlu0 %v340
  %v342 = vpop.xlane.xlu0 %341
  %v343 = vsel %vm113, %v291, 0.0
  %344 = vadd.xlane.f32.xlu0 %v343
  %v345 = vpop.xlane.xlu0 %344
  %v346 = vsel %vm113, %v292, 0.0
  %347 = vadd.xlane.f32.xlu0 %v346
  %v348 = vpop.xlane.xlu0 %347
  %v349 = vsel %vm113, %v293, 0.0
  %350 = vadd.xlane.f32.xlu0 %v349
  %v351 = vpop.xlane.xlu0 %350
  %v352 = vsel %vm113, %v294, 0.0
  %353 = vadd.xlane.f32.xlu0 %v352
  %v354 = vpop.xlane.xlu0 %353
  %v355 = vsel %vm113, %v295, 0.0
  %356 = vadd.xlane.f32.xlu0 %v355
  %v357 = vpop.xlane.xlu0 %356
  %v358 = vsel %vm113, %v296, 0.0
  %359 = vadd.xlane.f32.xlu0 %v358
  %v360 = vpop.xlane.xlu0 %359
  %v361 = vsel %vm113, %v297, 0.0
  %362 = vadd.xlane.f32.xlu0 %v361
  %v363 = vpop.xlane.xlu0 %362
  %v364 = vsel %vm113, %v298, 0.0
  %365 = vadd.xlane.f32.xlu0 %v364
  %v366 = vpop.xlane.xlu0 %365
  %v367 = vsel %vm113, %v299, 0.0
  %368 = vadd.xlane.f32.xlu0 %v367
  %v369 = vpop.xlane.xlu0 %368
  %v370 = vsel %vm113, %v300, 0.0
  %371 = vadd.xlane.f32.xlu0 %v370
  %v372 = vpop.xlane.xlu0 %371
  %v373 = vsel %vm113, %v301, 0.0
  %374 = vadd.xlane.f32.xlu0 %v373
  %v375 = vpop.xlane.xlu0 %374
  %v376 = vsel %vm113, %v302, 0.0
  %377 = vadd.xlane.f32.xlu0 %v376
  %v378 = vpop.xlane.xlu0 %377
  %v379 = vsel %vm113, %v303, 0.0
  %380 = vadd.xlane.f32.xlu0 %v379
  %v381 = vpop.xlane.xlu0 %380
  %v382 = vsel %vm113, %v304, 0.0
  %383 = vadd.xlane.f32.xlu0 %v382
  %v384 = vpop.xlane.xlu0 %383
  %v385 = vsel %vm113, %v305, 0.0
  %386 = vadd.xlane.f32.xlu0 %v385
  %v387 = vpop.xlane.xlu0 %386
  %v388 = vsel %vm113, %v306, 0.0
  %389 = vadd.xlane.f32.xlu0 %v388
  %v390 = vpop.xlane.xlu0 %389
  %v391 = vsel %vm113, %v307, 0.0
  %392 = vadd.xlane.f32.xlu0 %v391
  %v393 = vpop.xlane.xlu0 %392
  %v394 = vsel %vm113, %v308, 0.0
  %395 = vadd.xlane.f32.xlu0 %v394
  %v396 = vpop.xlane.xlu0 %395
  %v397 = vsel %vm113, %v309, 0.0
  %398 = vadd.xlane.f32.xlu0 %v397
  %v399 = vpop.xlane.xlu0 %398
  %v400 = vsel %vm113, %v310, 0.0
  %401 = vadd.xlane.f32.xlu0 %v400
  %v402 = vpop.xlane.xlu0 %401
  %v403 = vsel %vm113, %v311, 0.0
  %404 = vadd.xlane.f32.xlu0 %v403
  %v405 = vpop.xlane.xlu0 %404
  %v406 = vsel %vm113, %v312, 0.0
  %407 = vadd.xlane.f32.xlu0 %v406
  %v408 = vpop.xlane.xlu0 %407
  %v409 = vmul.f32 %v315, %v216
  %v410 = vmul.f32 %v318, %v216
  %v411 = vmul.f32 %v321, %v216
  %v412 = vmul.f32 %v324, %v216
  %v413 = vmul.f32 %v327, %v216
  %v414 = vmul.f32 %v330, %v216
  %v415 = vmul.f32 %v333, %v216
  %v416 = vmul.f32 %v336, %v216
  %v417 = vmul.f32 %v339, %v216
  %v418 = vmul.f32 %v342, %v216
  %v419 = vmul.f32 %v345, %v216
  %v420 = vmul.f32 %v348, %v216
  %v421 = vmul.f32 %v351, %v216
  %v422 = vmul.f32 %v354, %v216
  %v423 = vmul.f32 %v357, %v216
  %v424 = vmul.f32 %v360, %v216
  %v425 = vmul.f32 %v363, %v216
  %v426 = vmul.f32 %v366, %v216
  %v427 = vmul.f32 %v369, %v216
  %v428 = vmul.f32 %v372, %v216
  %v429 = vmul.f32 %v375, %v216
  %v430 = vmul.f32 %v378, %v216
  %v431 = vmul.f32 %v381, %v216
  %v432 = vmul.f32 %v384, %v216
  %v433 = vmul.f32 %v387, %v216
  %v434 = vmul.f32 %v390, %v216
  %v435 = vmul.f32 %v393, %v216
  %v436 = vmul.f32 %v396, %v216
  %v437 = vmul.f32 %v399, %v216
  %v438 = vmul.f32 %v402, %v216
  %v439 = vmul.f32 %v405, %v216
  %v440 = vmul.f32 %v408, %v216
  %v441 = vadd.f32 %v409, 1e-05
  %v442 = vadd.f32 %v410, 1e-05
  %v443 = vadd.f32 %v411, 1e-05
  %v444 = vadd.f32 %v412, 1e-05
  %v445 = vadd.f32 %v413, 1e-05
  %v446 = vadd.f32 %v414, 1e-05
  %v447 = vadd.f32 %v415, 1e-05
  %v448 = vadd.f32 %v416, 1e-05
  %v449 = vadd.f32 %v417, 1e-05
  %v450 = vadd.f32 %v418, 1e-05
  %v451 = vadd.f32 %v419, 1e-05
  %v452 = vadd.f32 %v420, 1e-05
  %v453 = vadd.f32 %v421, 1e-05
  %v454 = vadd.f32 %v422, 1e-05
  %v455 = vadd.f32 %v423, 1e-05
  %v456 = vadd.f32 %v424, 1e-05
  %v457 = vadd.f32 %v425, 1e-05
  %v458 = vadd.f32 %v426, 1e-05
  %v459 = vadd.f32 %v427, 1e-05
  %v460 = vadd.f32 %v428, 1e-05
  %v461 = vadd.f32 %v429, 1e-05
  %v462 = vadd.f32 %v430, 1e-05
  %v463 = vadd.f32 %v431, 1e-05
  %v464 = vadd.f32 %v432, 1e-05
  %v465 = vadd.f32 %v433, 1e-05
  %v466 = vadd.f32 %v434, 1e-05
  %v467 = vadd.f32 %v435, 1e-05
  %v468 = vadd.f32 %v436, 1e-05
  %v469 = vadd.f32 %v437, 1e-05
  %v470 = vadd.f32 %v438, 1e-05
  %v471 = vadd.f32 %v439, 1e-05
  %v472 = vadd.f32 %v440, 1e-05
  %v473 = vrsqrt.pop %v441
  %v474 = vmul.f32 %v473, %v441
  %v475 = vmul.f32 %v474, %v473
  %v476 = vmul.f32 0.5, %v475
  %v477 = vsub.f32 1.5, %v476
  %v478 = vmul.f32 %v473, %v477
  %vm479 = vweird.f32 %v441
  %vm480 = vweird.f32 %v473
  %vm481 = vmor %vm479, %vm480
  %v482 = vsel %vm481, %v473, %v478
  %v483 = vrsqrt.pop %v442
  %v484 = vmul.f32 %v483, %v442
  %v485 = vmul.f32 %v484, %v483
  %v486 = vmul.f32 0.5, %v485
  %v487 = vsub.f32 1.5, %v486
  %v488 = vmul.f32 %v483, %v487
  %vm489 = vweird.f32 %v442
  %vm490 = vweird.f32 %v483
  %vm491 = vmor %vm489, %vm490
  %v492 = vsel %vm491, %v483, %v488
  %v493 = vrsqrt.pop %v443
  %v494 = vmul.f32 %v493, %v443
  %v495 = vmul.f32 %v494, %v493
  %v496 = vmul.f32 0.5, %v495
  %v497 = vsub.f32 1.5, %v496
  %v498 = vmul.f32 %v493, %v497
  %vm499 = vweird.f32 %v443
  %vm500 = vweird.f32 %v493
  %vm501 = vmor %vm499, %vm500
  %v502 = vsel %vm501, %v493, %v498
  %v503 = vrsqrt.pop %v444
  %v504 = vmul.f32 %v503, %v444
  %v505 = vmul.f32 %v504, %v503
  %v506 = vmul.f32 0.5, %v505
  %v507 = vsub.f32 1.5, %v506
  %v508 = vmul.f32 %v503, %v507
  %vm509 = vweird.f32 %v444
  %vm510 = vweird.f32 %v503
  %vm511 = vmor %vm509, %vm510
  %v512 = vsel %vm511, %v503, %v508
  %v513 = vrsqrt.pop %v445
  %v514 = vmul.f32 %v513, %v445
  %v515 = vmul.f32 %v514, %v513
  %v516 = vmul.f32 0.5, %v515
  %v517 = vsub.f32 1.5, %v516
  %v518 = vmul.f32 %v513, %v517
  %vm519 = vweird.f32 %v445
  %vm520 = vweird.f32 %v513
  %vm521 = vmor %vm519, %vm520
  %v522 = vsel %vm521, %v513, %v518
  %v523 = vrsqrt.pop %v446
  %v524 = vmul.f32 %v523, %v446
  %v525 = vmul.f32 %v524, %v523
  %v526 = vmul.f32 0.5, %v525
  %v527 = vsub.f32 1.5, %v526
  %v528 = vmul.f32 %v523, %v527
  %vm529 = vweird.f32 %v446
  %vm530 = vweird.f32 %v523
  %vm531 = vmor %vm529, %vm530
  %v532 = vsel %vm531, %v523, %v528
  %v533 = vrsqrt.pop %v447
  %v534 = vmul.f32 %v533, %v447
  %v535 = vmul.f32 %v534, %v533
  %v536 = vmul.f32 0.5, %v535
  %v537 = vsub.f32 1.5, %v536
  %v538 = vmul.f32 %v533, %v537
  %vm539 = vweird.f32 %v447
  %vm540 = vweird.f32 %v533
  %vm541 = vmor %vm539, %vm540
  %v542 = vsel %vm541, %v533, %v538
  %v543 = vrsqrt.pop %v448
  %v544 = vmul.f32 %v543, %v448
  %v545 = vmul.f32 %v544, %v543
  %v546 = vmul.f32 0.5, %v545
  %v547 = vsub.f32 1.5, %v546
  %v548 = vmul.f32 %v543, %v547
  %vm549 = vweird.f32 %v448
  %vm550 = vweird.f32 %v543
  %vm551 = vmor %vm549, %vm550
  %v552 = vsel %vm551, %v543, %v548
  %v553 = vrsqrt.pop %v449
  %v554 = vmul.f32 %v553, %v449
  %v555 = vmul.f32 %v554, %v553
  %v556 = vmul.f32 0.5, %v555
  %v557 = vsub.f32 1.5, %v556
  %v558 = vmul.f32 %v553, %v557
  %vm559 = vweird.f32 %v449
  %vm560 = vweird.f32 %v553
  %vm561 = vmor %vm559, %vm560
  %v562 = vsel %vm561, %v553, %v558
  %v563 = vrsqrt.pop %v450
  %v564 = vmul.f32 %v563, %v450
  %v565 = vmul.f32 %v564, %v563
  %v566 = vmul.f32 0.5, %v565
  %v567 = vsub.f32 1.5, %v566
  %v568 = vmul.f32 %v563, %v567
  %vm569 = vweird.f32 %v450
  %vm570 = vweird.f32 %v563
  %vm571 = vmor %vm569, %vm570
  %v572 = vsel %vm571, %v563, %v568
  %v573 = vrsqrt.pop %v451
  %v574 = vmul.f32 %v573, %v451
  %v575 = vmul.f32 %v574, %v573
  %v576 = vmul.f32 0.5, %v575
  %v577 = vsub.f32 1.5, %v576
  %v578 = vmul.f32 %v573, %v577
  %vm579 = vweird.f32 %v451
  %vm580 = vweird.f32 %v573
  %vm581 = vmor %vm579, %vm580
  %v582 = vsel %vm581, %v573, %v578
  %v583 = vrsqrt.pop %v452
  %v584 = vmul.f32 %v583, %v452
  %v585 = vmul.f32 %v584, %v583
  %v586 = vmul.f32 0.5, %v585
  %v587 = vsub.f32 1.5, %v586
  %v588 = vmul.f32 %v583, %v587
  %vm589 = vweird.f32 %v452
  %vm590 = vweird.f32 %v583
  %vm591 = vmor %vm589, %vm590
  %v592 = vsel %vm591, %v583, %v588
  %v593 = vrsqrt.pop %v453
  %v594 = vmul.f32 %v593, %v453
  %v595 = vmul.f32 %v594, %v593
  %v596 = vmul.f32 0.5, %v595
  %v597 = vsub.f32 1.5, %v596
  %v598 = vmul.f32 %v593, %v597
  %vm599 = vweird.f32 %v453
  %vm600 = vweird.f32 %v593
  %vm601 = vmor %vm599, %vm600
  %v602 = vsel %vm601, %v593, %v598
  %v603 = vrsqrt.pop %v454
  %v604 = vmul.f32 %v603, %v454
  %v605 = vmul.f32 %v604, %v603
  %v606 = vmul.f32 0.5, %v605
  %v607 = vsub.f32 1.5, %v606
  %v608 = vmul.f32 %v603, %v607
  %vm609 = vweird.f32 %v454
  %vm610 = vweird.f32 %v603
  %vm611 = vmor %vm609, %vm610
  %v612 = vsel %vm611, %v603, %v608
  %v613 = vrsqrt.pop %v455
  %v614 = vmul.f32 %v613, %v455
  %v615 = vmul.f32 %v614, %v613
  %v616 = vmul.f32 0.5, %v615
  %v617 = vsub.f32 1.5, %v616
  %v618 = vmul.f32 %v613, %v617
  %vm619 = vweird.f32 %v455
  %vm620 = vweird.f32 %v613
  %vm621 = vmor %vm619, %vm620
  %v622 = vsel %vm621, %v613, %v618
  %v623 = vrsqrt.pop %v456
  %v624 = vmul.f32 %v623, %v456
  %v625 = vmul.f32 %v624, %v623
  %v626 = vmul.f32 0.5, %v625
  %v627 = vsub.f32 1.5, %v626
  %v628 = vmul.f32 %v623, %v627
  %vm629 = vweird.f32 %v456
  %vm630 = vweird.f32 %v623
  %vm631 = vmor %vm629, %vm630
  %v632 = vsel %vm631, %v623, %v628
  %v633 = vrsqrt.pop %v457
  %v634 = vmul.f32 %v633, %v457
  %v635 = vmul.f32 %v634, %v633
  %v636 = vmul.f32 0.5, %v635
  %v637 = vsub.f32 1.5, %v636
  %v638 = vmul.f32 %v633, %v637
  %vm639 = vweird.f32 %v457
  %vm640 = vweird.f32 %v633
  %vm641 = vmor %vm639, %vm640
  %v642 = vsel %vm641, %v633, %v638
  %v643 = vrsqrt.pop %v458
  %v644 = vmul.f32 %v643, %v458
  %v645 = vmul.f32 %v644, %v643
  %v646 = vmul.f32 0.5, %v645
  %v647 = vsub.f32 1.5, %v646
  %v648 = vmul.f32 %v643, %v647
  %vm649 = vweird.f32 %v458
  %vm650 = vweird.f32 %v643
  %vm651 = vmor %vm649, %vm650
  %v652 = vsel %vm651, %v643, %v648
  %v653 = vrsqrt.pop %v459
  %v654 = vmul.f32 %v653, %v459
  %v655 = vmul.f32 %v654, %v653
  %v656 = vmul.f32 0.5, %v655
  %v657 = vsub.f32 1.5, %v656
  %v658 = vmul.f32 %v653, %v657
  %vm659 = vweird.f32 %v459
  %vm660 = vweird.f32 %v653
  %vm661 = vmor %vm659, %vm660
  %v662 = vsel %vm661, %v653, %v658
  %v663 = vrsqrt.pop %v460
  %v664 = vmul.f32 %v663, %v460
  %v665 = vmul.f32 %v664, %v663
  %v666 = vmul.f32 0.5, %v665
  %v667 = vsub.f32 1.5, %v666
  %v668 = vmul.f32 %v663, %v667
  %vm669 = vweird.f32 %v460
  %vm670 = vweird.f32 %v663
  %vm671 = vmor %vm669, %vm670
  %v672 = vsel %vm671, %v663, %v668
  %v673 = vrsqrt.pop %v461
  %v674 = vmul.f32 %v673, %v461
  %v675 = vmul.f32 %v674, %v673
  %v676 = vmul.f32 0.5, %v675
  %v677 = vsub.f32 1.5, %v676
  %v678 = vmul.f32 %v673, %v677
  %vm679 = vweird.f32 %v461
  %vm680 = vweird.f32 %v673
  %vm681 = vmor %vm679, %vm680
  %v682 = vsel %vm681, %v673, %v678
  %v683 = vrsqrt.pop %v462
  %v684 = vmul.f32 %v683, %v462
  %v685 = vmul.f32 %v684, %v683
  %v686 = vmul.f32 0.5, %v685
  %v687 = vsub.f32 1.5, %v686
  %v688 = vmul.f32 %v683, %v687
  %vm689 = vweird.f32 %v462
  %vm690 = vweird.f32 %v683
  %vm691 = vmor %vm689, %vm690
  %v692 = vsel %vm691, %v683, %v688
  %v693 = vrsqrt.pop %v463
  %v694 = vmul.f32 %v693, %v463
  %v695 = vmul.f32 %v694, %v693
  %v696 = vmul.f32 0.5, %v695
  %v697 = vsub.f32 1.5, %v696
  %v698 = vmul.f32 %v693, %v697
  %vm699 = vweird.f32 %v463
  %vm700 = vweird.f32 %v693
  %vm701 = vmor %vm699, %vm700
  %v702 = vsel %vm701, %v693, %v698
  %v703 = vrsqrt.pop %v464
  %v704 = vmul.f32 %v703, %v464
  %v705 = vmul.f32 %v704, %v703
  %v706 = vmul.f32 0.5, %v705
  %v707 = vsub.f32 1.5, %v706
  %v708 = vmul.f32 %v703, %v707
  %vm709 = vweird.f32 %v464
  %vm710 = vweird.f32 %v703
  %vm711 = vmor %vm709, %vm710
  %v712 = vsel %vm711, %v703, %v708
  %v713 = vrsqrt.pop %v465
  %v714 = vmul.f32 %v713, %v465
  %v715 = vmul.f32 %v714, %v713
  %v716 = vmul.f32 0.5, %v715
  %v717 = vsub.f32 1.5, %v716
  %v718 = vmul.f32 %v713, %v717
  %vm719 = vweird.f32 %v465
  %vm720 = vweird.f32 %v713
  %vm721 = vmor %vm719, %vm720
  %v722 = vsel %vm721, %v713, %v718
  %v723 = vrsqrt.pop %v466
  %v724 = vmul.f32 %v723, %v466
  %v725 = vmul.f32 %v724, %v723
  %v726 = vmul.f32 0.5, %v725
  %v727 = vsub.f32 1.5, %v726
  %v728 = vmul.f32 %v723, %v727
  %vm729 = vweird.f32 %v466
  %vm730 = vweird.f32 %v723
  %vm731 = vmor %vm729, %vm730
  %v732 = vsel %vm731, %v723, %v728
  %v733 = vrsqrt.pop %v467
  %v734 = vmul.f32 %v733, %v467
  %v735 = vmul.f32 %v734, %v733
  %v736 = vmul.f32 0.5, %v735
  %v737 = vsub.f32 1.5, %v736
  %v738 = vmul.f32 %v733, %v737
  %vm739 = vweird.f32 %v467
  %vm740 = vweird.f32 %v733
  %vm741 = vmor %vm739, %vm740
  %v742 = vsel %vm741, %v733, %v738
  %v743 = vrsqrt.pop %v468
  %v744 = vmul.f32 %v743, %v468
  %v745 = vmul.f32 %v744, %v743
  %v746 = vmul.f32 0.5, %v745
  %v747 = vsub.f32 1.5, %v746
  %v748 = vmul.f32 %v743, %v747
  %vm749 = vweird.f32 %v468
  %vm750 = vweird.f32 %v743
  %vm751 = vmor %vm749, %vm750
  %v752 = vsel %vm751, %v743, %v748
  %v753 = vrsqrt.pop %v469
  %v754 = vmul.f32 %v753, %v469
  %v755 = vmul.f32 %v754, %v753
  %v756 = vmul.f32 0.5, %v755
  %v757 = vsub.f32 1.5, %v756
  %v758 = vmul.f32 %v753, %v757
  %vm759 = vweird.f32 %v469
  %vm760 = vweird.f32 %v753
  %vm761 = vmor %vm759, %vm760
  %v762 = vsel %vm761, %v753, %v758
  %v763 = vrsqrt.pop %v470
  %v764 = vmul.f32 %v763, %v470
  %v765 = vmul.f32 %v764, %v763
  %v766 = vmul.f32 0.5, %v765
  %v767 = vsub.f32 1.5, %v766
  %v768 = vmul.f32 %v763, %v767
  %vm769 = vweird.f32 %v470
  %vm770 = vweird.f32 %v763
  %vm771 = vmor %vm769, %vm770
  %v772 = vsel %vm771, %v763, %v768
  %v773 = vrsqrt.pop %v471
  %v774 = vmul.f32 %v773, %v471
  %v775 = vmul.f32 %v774, %v773
  %v776 = vmul.f32 0.5, %v775
  %v777 = vsub.f32 1.5, %v776
  %v778 = vmul.f32 %v773, %v777
  %vm779 = vweird.f32 %v471
  %vm780 = vweird.f32 %v773
  %vm781 = vmor %vm779, %vm780
  %v782 = vsel %vm781, %v773, %v778
  %v783 = vrsqrt.pop %v472
  %v784 = vmul.f32 %v783, %v472
  %v785 = vmul.f32 %v784, %v783
  %v786 = vmul.f32 0.5, %v785
  %v787 = vsub.f32 1.5, %v786
  %v788 = vmul.f32 %v783, %v787
  %vm789 = vweird.f32 %v472
  %vm790 = vweird.f32 %v783
  %vm791 = vmor %vm789, %vm790
  %v792 = vsel %vm791, %v783, %v788
  %v793 = vmul.f32 %v249, %v482
  %v794 = vmul.f32 %v250, %v492
  %v795 = vmul.f32 %v251, %v502
  %v796 = vmul.f32 %v252, %v512
  %v797 = vmul.f32 %v253, %v522
  %v798 = vmul.f32 %v254, %v532
  %v799 = vmul.f32 %v255, %v542
  %v800 = vmul.f32 %v256, %v552
  %v801 = vmul.f32 %v257, %v562
  %v802 = vmul.f32 %v258, %v572
  %v803 = vmul.f32 %v259, %v582
  %v804 = vmul.f32 %v260, %v592
  %v805 = vmul.f32 %v261, %v602
  %v806 = vmul.f32 %v262, %v612
  %v807 = vmul.f32 %v263, %v622
  %v808 = vmul.f32 %v264, %v632
  %v809 = vmul.f32 %v265, %v642
  %v810 = vmul.f32 %v266, %v652
  %v811 = vmul.f32 %v267, %v662
  %v812 = vmul.f32 %v268, %v672
  %v813 = vmul.f32 %v269, %v682
  %v814 = vmul.f32 %v270, %v692
  %v815 = vmul.f32 %v271, %v702
  %v816 = vmul.f32 %v272, %v712
  %v817 = vmul.f32 %v273, %v722
  %v818 = vmul.f32 %v274, %v732
  %v819 = vmul.f32 %v275, %v742
  %v820 = vmul.f32 %v276, %v752
  %v821 = vmul.f32 %v277, %v762
  %v822 = vmul.f32 %v278, %v772
  %v823 = vmul.f32 %v279, %v782
  %v824 = vmul.f32 %v280, %v792
  %v825 = vld [vmem:[%s2] sm:$0x1]
  %v827 = vperm.slane %v825, 0
  %v829 = vmul.f32 %v793, %v827
  %v830 = vmul.f32 %v794, %v827
  %v831 = vmul.f32 %v795, %v827
  %v832 = vmul.f32 %v796, %v827
  %v833 = vmul.f32 %v797, %v827
  %v834 = vmul.f32 %v798, %v827
  %v835 = vmul.f32 %v799, %v827
  %v836 = vmul.f32 %v800, %v827
  %v837 = vmul.f32 %v801, %v827
  %v838 = vmul.f32 %v802, %v827
  %v839 = vmul.f32 %v803, %v827
  %v840 = vmul.f32 %v804, %v827
  %v841 = vmul.f32 %v805, %v827
  %v842 = vmul.f32 %v806, %v827
  %v843 = vmul.f32 %v807, %v827
  %v844 = vmul.f32 %v808, %v827
  %v845 = vmul.f32 %v809, %v827
  %v846 = vmul.f32 %v810, %v827
  %v847 = vmul.f32 %v811, %v827
  %v848 = vmul.f32 %v812, %v827
  %v849 = vmul.f32 %v813, %v827
  %v850 = vmul.f32 %v814, %v827
  %v851 = vmul.f32 %v815, %v827
  %v852 = vmul.f32 %v816, %v827
  %v853 = vmul.f32 %v817, %v827
  %v854 = vmul.f32 %v818, %v827
  %v855 = vmul.f32 %v819, %v827
  %v856 = vmul.f32 %v820, %v827
  %v857 = vmul.f32 %v821, %v827
  %v858 = vmul.f32 %v822, %v827
  %v859 = vmul.f32 %v823, %v827
  %v860 = vmul.f32 %v824, %v827
  %v861 = vld [vmem:[%s3] sm:$0x1]
  %v863 = vperm.slane %v861, 0
  %v865 = vadd.f32 %v829, %v863
  %v866 = vadd.f32 %v830, %v863
  %v867 = vadd.f32 %v831, %v863
  %v868 = vadd.f32 %v832, %v863
  %v869 = vadd.f32 %v833, %v863
  %v870 = vadd.f32 %v834, %v863
  %v871 = vadd.f32 %v835, %v863
  %v872 = vadd.f32 %v836, %v863
  %v873 = vadd.f32 %v837, %v863
  %v874 = vadd.f32 %v838, %v863
  %v875 = vadd.f32 %v839, %v863
  %v876 = vadd.f32 %v840, %v863
  %v877 = vadd.f32 %v841, %v863
  %v878 = vadd.f32 %v842, %v863
  %v879 = vadd.f32 %v843, %v863
  %v880 = vadd.f32 %v844, %v863
  %v881 = vadd.f32 %v845, %v863
  %v882 = vadd.f32 %v846, %v863
  %v883 = vadd.f32 %v847, %v863
  %v884 = vadd.f32 %v848, %v863
  %v885 = vadd.f32 %v849, %v863
  %v886 = vadd.f32 %v850, %v863
  %v887 = vadd.f32 %v851, %v863
  %v888 = vadd.f32 %v852, %v863
  %v889 = vadd.f32 %v853, %v863
  %v890 = vadd.f32 %v854, %v863
  %v891 = vadd.f32 %v855, %v863
  %v892 = vadd.f32 %v856, %v863
  %v893 = vadd.f32 %v857, %v863
  %v894 = vadd.f32 %v858, %v863
  %v895 = vadd.f32 %v859, %v863
  %v896 = vadd.f32 %v860, %v863
  %897 = vst.msk [vmem:[%s4] sm:$0xff] %vm113, %v865
  %898 = vst.msk [vmem:[%s4 + $0x8] sm:$0xff] %vm113, %v866
  %899 = vst.msk [vmem:[%s4 + $0x10] sm:$0xff] %vm113, %v867
  %900 = vst.msk [vmem:[%s4 + $0x18] sm:$0xff] %vm113, %v868
  %901 = vst.msk [vmem:[%s4 + $0x20] sm:$0xff] %vm113, %v869
  %902 = vst.msk [vmem:[%s4 + $0x28] sm:$0xff] %vm113, %v870
  %903 = vst.msk [vmem:[%s4 + $0x30] sm:$0xff] %vm113, %v871
  %904 = vst.msk [vmem:[%s4 + $0x38] sm:$0xff] %vm113, %v872
  %905 = vst.msk [vmem:[%s4 + $0x40] sm:$0xff] %vm113, %v873
  %906 = vst.msk [vmem:[%s4 + $0x48] sm:$0xff] %vm113, %v874
  %907 = vst.msk [vmem:[%s4 + $0x50] sm:$0xff] %vm113, %v875
  %908 = vst.msk [vmem:[%s4 + $0x58] sm:$0xff] %vm113, %v876
  %909 = vst.msk [vmem:[%s4 + $0x60] sm:$0xff] %vm113, %v877
  %910 = vst.msk [vmem:[%s4 + $0x68] sm:$0xff] %vm113, %v878
  %911 = vst.msk [vmem:[%s4 + $0x70] sm:$0xff] %vm113, %v879
  %912 = vst.msk [vmem:[%s4 + $0x78] sm:$0xff] %vm113, %v880
  %913 = vst.msk [vmem:[%s4 + $0x80] sm:$0xff] %vm113, %v881
  %914 = vst.msk [vmem:[%s4 + $0x88] sm:$0xff] %vm113, %v882
  %915 = vst.msk [vmem:[%s4 + $0x90] sm:$0xff] %vm113, %v883
  %916 = vst.msk [vmem:[%s4 + $0x98] sm:$0xff] %vm113, %v884
  %917 = vst.msk [vmem:[%s4 + $0xa0] sm:$0xff] %vm113, %v885
  %918 = vst.msk [vmem:[%s4 + $0xa8] sm:$0xff] %vm113, %v886
  %919 = vst.msk [vmem:[%s4 + $0xb0] sm:$0xff] %vm113, %v887
  %920 = vst.msk [vmem:[%s4 + $0xb8] sm:$0xff] %vm113, %v888
  %921 = vst.msk [vmem:[%s4 + $0xc0] sm:$0xff] %vm113, %v889
  %922 = vst.msk [vmem:[%s4 + $0xc8] sm:$0xff] %vm113, %v890
  %923 = vst.msk [vmem:[%s4 + $0xd0] sm:$0xff] %vm113, %v891
  %924 = vst.msk [vmem:[%s4 + $0xd8] sm:$0xff] %vm113, %v892
  %925 = vst.msk [vmem:[%s4 + $0xe0] sm:$0xff] %vm113, %v893
  %926 = vst.msk [vmem:[%s4 + $0xe8] sm:$0xff] %vm113, %v894
  %927 = vst.msk [vmem:[%s4 + $0xf0] sm:$0xff] %vm113, %v895
  %928 = vst.msk [vmem:[%s4 + $0xf8] sm:$0xff] %vm113, %v896
  // Predicated region
  $region18: #{_lambda_.32} parent=0 // pred_check
    _
  $region19: #{_lambda_.32} parent=0 // pred_check_branch
    %930 = sbr.rel (0) target = $region21
  $region20: #{_lambda_.32} parent=0 // pred_region
    _
  $region21: #{_lambda_.32} parent=0 // pred_fallthru
    _
  // Predicated region
  $region22: #{_lambda_.32} parent=0 // pred_check
    _
  $region23: #{_lambda_.32} parent=0 // pred_check_branch
    %932 = sbr.rel (0) target = $region25
  $region24: #{_lambda_.32} parent=0 // pred_region
    _
  $region25: #{_lambda_.32} parent=0 // pred_fallthru
    _

// kernel: _lambda_.37
$region0: #{_lambda_.37}
  #allocation0 [shape = 'u32[]', space=smem, size = 0x4, offset = 0x4, fixed_abs, tag = 'smem constant byte address 0x4 - core index']
  #allocation1 [shape = 'u32[72,128]{1,0:T(1,128)}', space=vmem, size = 0x9000, scoped, tag = 'internal scratch']
  #allocation2 [shape = 'f32[128,128]{1,0:T(8,128)}', space=vmem, size = 0x10000, scoped, tag = 'scratch operand']
  %s0 = inlined_call_operand.vmem [shape: bf16[128,128], index: 0, kind: input, shape index: {}]
  %s1 = inlined_call_operand.vmem [shape: bf16[128,128], index: 1, kind: input, shape index: {}]
  %s2 = inlined_call_operand.vmem [shape: f32[1,128], index: 2, kind: input, shape index: {}]
  %s3 = inlined_call_operand.vmem [shape: f32[128,128], index: 3, kind: output, shape index: {}]
  %s4 = sld [smem:[#allocation0]]
  $region30: #{_lambda_.37} parent=0
    _
  %s6 = ssub.s32 1, %s4
  %s7 = scalar_select 0, %s6, %s4
  // Predicated region
  $region2: #{_lambda_.37} parent=0 // pred_check
    _
  $region3: #{_lambda_.37} parent=0 // pred_check_branch
    %9 = sbr.rel (0) target = $region5
  $region4: #{_lambda_.37} parent=0 // pred_region
    _
  $region5: #{_lambda_.37} parent=0 // pred_fallthru
    _
  // Predicated region
  $region6: #{_lambda_.37} parent=0 // pred_check
    _
  $region7: #{_lambda_.37} parent=0 // pred_check_branch
    %11 = sbr.rel (0) target = $region9
  $region8: #{_lambda_.37} parent=0 // pred_region
    _
  $region9: #{_lambda_.37} parent=0 // pred_fallthru
    _
  // Predicated region
  $region10: #{_lambda_.37} parent=0 // pred_check
    _
  $region11: #{_lambda_.37} parent=0 // pred_check_branch
    %13 = sbr.rel (0) target = $region13
  $region12: #{_lambda_.37} parent=0 // pred_region
    _
  $region13: #{_lambda_.37} parent=0 // pred_fallthru
    _
  %p14 = scmp.eq.s32.totalorder 0, 0
  // Predicated region
  $region14: #{_lambda_.37} parent=0 // pred_check
    %p15 = pneg %p14
  $region15: #{_lambda_.37} parent=0 // pred_check_branch
    %17 = sbr.rel (%p15) target = $region17
  $region16: #{_lambda_.37} parent=0 // pred_region
    %18 = vst [vmem:[#allocation2] sm:$0xff] 0.0
    %19 = vst [vmem:[#allocation2 + $0x8] sm:$0xff] 0.0
    %20 = vst [vmem:[#allocation2 + $0x10] sm:$0xff] 0.0
    %21 = vst [vmem:[#allocation2 + $0x18] sm:$0xff] 0.0
    %22 = vst [vmem:[#allocation2 + $0x20] sm:$0xff] 0.0
    %23 = vst [vmem:[#allocation2 + $0x28] sm:$0xff] 0.0
    %24 = vst [vmem:[#allocation2 + $0x30] sm:$0xff] 0.0
    %25 = vst [vmem:[#allocation2 + $0x38] sm:$0xff] 0.0
    %26 = vst [vmem:[#allocation2 + $0x40] sm:$0xff] 0.0
    %27 = vst [vmem:[#allocation2 + $0x48] sm:$0xff] 0.0
    %28 = vst [vmem:[#allocation2 + $0x50] sm:$0xff] 0.0
    %29 = vst [vmem:[#allocation2 + $0x58] sm:$0xff] 0.0
    %30 = vst [vmem:[#allocation2 + $0x60] sm:$0xff] 0.0
    %31 = vst [vmem:[#allocation2 + $0x68] sm:$0xff] 0.0
    %32 = vst [vmem:[#allocation2 + $0x70] sm:$0xff] 0.0
    %33 = vst [vmem:[#allocation2 + $0x78] sm:$0xff] 0.0
  $region17: #{_lambda_.37} parent=0 // pred_fallthru
    _
  %v34 = vld [vmem:[#allocation2] sm:$0xff]
  %v35 = vld [vmem:[#allocation2 + $0x8] sm:$0xff]
  %v36 = vld [vmem:[#allocation2 + $0x10] sm:$0xff]
  %v37 = vld [vmem:[#allocation2 + $0x18] sm:$0xff]
  %v38 = vld [vmem:[#allocation2 + $0x20] sm:$0xff]
  %v39 = vld [vmem:[#allocation2 + $0x28] sm:$0xff]
  %v40 = vld [vmem:[#allocation2 + $0x30] sm:$0xff]
  %v41 = vld [vmem:[#allocation2 + $0x38] sm:$0xff]
  %v42 = vld [vmem:[#allocation2 + $0x40] sm:$0xff]
  %v43 = vld [vmem:[#allocation2 + $0x48] sm:$0xff]
  %v44 = vld [vmem:[#allocation2 + $0x50] sm:$0xff]
  %v45 = vld [vmem:[#allocation2 + $0x58] sm:$0xff]
  %v46 = vld [vmem:[#allocation2 + $0x60] sm:$0xff]
  %v47 = vld [vmem:[#allocation2 + $0x68] sm:$0xff]
  %v48 = vld [vmem:[#allocation2 + $0x70] sm:$0xff]
  %v49 = vld [vmem:[#allocation2 + $0x78] sm:$0xff]
  %v50 = vld [vmem:[%s0] sm:$0xf]
  %v51 = vld [vmem:[%s0 + $0x4] sm:$0xf]
  %v52 = vld [vmem:[%s0 + $0x8] sm:$0xf]
  %v53 = vld [vmem:[%s0 + $0xc] sm:$0xf]
  %v54 = vld [vmem:[%s0 + $0x10] sm:$0xf]
  %v55 = vld [vmem:[%s0 + $0x14] sm:$0xf]
  %v56 = vld [vmem:[%s0 + $0x18] sm:$0xf]
  %v57 = vld [vmem:[%s0 + $0x1c] sm:$0xf]
  %v58 = vld [vmem:[%s0 + $0x20] sm:$0xf]
  %v59 = vld [vmem:[%s0 + $0x24] sm:$0xf]
  %v60 = vld [vmem:[%s0 + $0x28] sm:$0xf]
  %v61 = vld [vmem:[%s0 + $0x2c] sm:$0xf]
  %v62 = vld [vmem:[%s0 + $0x30] sm:$0xf]
  %v63 = vld [vmem:[%s0 + $0x34] sm:$0xf]
  %v64 = vld [vmem:[%s0 + $0x38] sm:$0xf]
  %v65 = vld [vmem:[%s0 + $0x3c] sm:$0xf]
  %v66 = vld [vmem:[%s1] sm:$0xf]
  %v67 = vld [vmem:[%s1 + $0x4] sm:$0xf]
  %v68 = vld [vmem:[%s1 + $0x8] sm:$0xf]
  %v69 = vld [vmem:[%s1 + $0xc] sm:$0xf]
  %v70 = vld [vmem:[%s1 + $0x10] sm:$0xf]
  %v71 = vld [vmem:[%s1 + $0x14] sm:$0xf]
  %v72 = vld [vmem:[%s1 + $0x18] sm:$0xf]
  %v73 = vld [vmem:[%s1 + $0x1c] sm:$0xf]
  %v74 = vld [vmem:[%s1 + $0x20] sm:$0xf]
  %v75 = vld [vmem:[%s1 + $0x24] sm:$0xf]
  %v76 = vld [vmem:[%s1 + $0x28] sm:$0xf]
  %v77 = vld [vmem:[%s1 + $0x2c] sm:$0xf]
  %v78 = vld [vmem:[%s1 + $0x30] sm:$0xf]
  %v79 = vld [vmem:[%s1 + $0x34] sm:$0xf]
  %v80 = vld [vmem:[%s1 + $0x38] sm:$0xf]
  %v81 = vld [vmem:[%s1 + $0x3c] sm:$0xf]
  %v98 = vunpack.c.l.b16 %v50
  %v99 = vunpack.c.l.b16 %v51
  %v100 = vunpack.c.l.b16 %v52
  %v101 = vunpack.c.l.b16 %v53
  %v102 = vunpack.c.l.b16 %v54
  %v103 = vunpack.c.l.b16 %v55
  %v104 = vunpack.c.l.b16 %v56
  %v105 = vunpack.c.l.b16 %v57
  %v106 = vunpack.c.l.b16 %v58
  %v107 = vunpack.c.l.b16 %v59
  %v108 = vunpack.c.l.b16 %v60
  %v109 = vunpack.c.l.b16 %v61
  %v110 = vunpack.c.l.b16 %v62
  %v111 = vunpack.c.l.b16 %v63
  %v112 = vunpack.c.l.b16 %v64
  %v113 = vunpack.c.l.b16 %v65
  %v114 = vpack.c.b16 %v99, %v98
  %v115 = vpack.c.b16 %v101, %v100
  %v116 = vpack.c.b16 %v103, %v102
  %v117 = vpack.c.b16 %v105, %v104
  %v118 = vpack.c.b16 %v107, %v106
  %v119 = vpack.c.b16 %v109, %v108
  %v120 = vpack.c.b16 %v111, %v110
  %v121 = vpack.c.b16 %v113, %v112
  %v146 = vunpack.c.l.b16 %v66
  %v147 = vunpack.c.l.b16 %v67
  %v148 = vunpack.c.l.b16 %v68
  %v149 = vunpack.c.l.b16 %v69
  %v150 = vunpack.c.l.b16 %v70
  %v151 = vunpack.c.l.b16 %v71
  %v152 = vunpack.c.l.b16 %v72
  %v153 = vunpack.c.l.b16 %v73
  %v154 = vunpack.c.l.b16 %v74
  %v155 = vunpack.c.l.b16 %v75
  %v156 = vunpack.c.l.b16 %v76
  %v157 = vunpack.c.l.b16 %v77
  %v158 = vunpack.c.l.b16 %v78
  %v159 = vunpack.c.l.b16 %v79
  %v160 = vunpack.c.l.b16 %v80
  %v161 = vunpack.c.l.b16 %v81
  %v162 = vpack.c.b16 %v147, %v146
  %v163 = vpack.c.b16 %v149, %v148
  %v164 = vpack.c.b16 %v151, %v150
  %v165 = vpack.c.b16 %v153, %v152
  %v166 = vpack.c.b16 %v155, %v154
  %v167 = vpack.c.b16 %v157, %v156
  %v168 = vpack.c.b16 %v159, %v158
  %v169 = vpack.c.b16 %v161, %v160
  %178 = vmatpush.bf16.msra.mxu0 %v169
  %179 = vmatpush.bf16.msra.mxu0 %v168
  %180 = vmatpush.bf16.msra.mxu0 %v167
  %181 = vmatpush.bf16.msra.mxu0 %v166
  %182 = vmatpush.bf16.msra.mxu0 %v165
  %183 = vmatpush.bf16.msra.mxu0 %v164
  %184 = vmatpush.bf16.msra.mxu0 %v163
  %185 = vmatpush.bf16.msra.mxu0 %v162
  %186 = vmatmul.bf16.gmra.mxu0 %v114
  %v187 = vpop.f32.mrf.mxu0
  %v188 = vadd.f32 0.0, %v187
  %v189 = vpop.f32.mrf.mxu0
  %v190 = vadd.f32 0.0, %v189
  %191 = vmatmul.bf16.gmra.mxu0 %v115
  %v192 = vpop.f32.mrf.mxu0
  %v193 = vadd.f32 0.0, %v192
  %v194 = vpop.f32.mrf.mxu0
  %v195 = vadd.f32 0.0, %v194
  %196 = vmatmul.bf16.gmra.mxu0 %v116
  %v197 = vpop.f32.mrf.mxu0
  %v198 = vadd.f32 0.0, %v197
  %v199 = vpop.f32.mrf.mxu0
  %v200 = vadd.f32 0.0, %v199
  %201 = vmatmul.bf16.gmra.mxu0 %v117
  %v202 = vpop.f32.mrf.mxu0
  %v203 = vadd.f32 0.0, %v202
  %v204 = vpop.f32.mrf.mxu0
  %v205 = vadd.f32 0.0, %v204
  %206 = vmatmul.bf16.gmra.mxu0 %v118
  %v207 = vpop.f32.mrf.mxu0
  %v208 = vadd.f32 0.0, %v207
  %v209 = vpop.f32.mrf.mxu0
  %v210 = vadd.f32 0.0, %v209
  %211 = vmatmul.bf16.gmra.mxu0 %v119
  %v212 = vpop.f32.mrf.mxu0
  %v213 = vadd.f32 0.0, %v212
  %v214 = vpop.f32.mrf.mxu0
  %v215 = vadd.f32 0.0, %v214
  %216 = vmatmul.bf16.gmra.mxu0 %v120
  %v217 = vpop.f32.mrf.mxu0
  %v218 = vadd.f32 0.0, %v217
  %v219 = vpop.f32.mrf.mxu0
  %v220 = vadd.f32 0.0, %v219
  %221 = vmatmul.bf16.gmra.mxu0 %v121
  %v222 = vpop.f32.mrf.mxu0
  %v223 = vadd.f32 0.0, %v222
  %v224 = vpop.f32.mrf.mxu0
  %v225 = vadd.f32 0.0, %v224
  %226 = vdwg.mxu0
  %v227 = vadd.f32 %v34, %v188
  %v228 = vadd.f32 %v35, %v190
  %v229 = vadd.f32 %v36, %v193
  %v230 = vadd.f32 %v37, %v195
  %v231 = vadd.f32 %v38, %v198
  %v232 = vadd.f32 %v39, %v200
  %v233 = vadd.f32 %v40, %v203
  %v234 = vadd.f32 %v41, %v205
  %v235 = vadd.f32 %v42, %v208
  %v236 = vadd.f32 %v43, %v210
  %v237 = vadd.f32 %v44, %v213
  %v238 = vadd.f32 %v45, %v215
  %v239 = vadd.f32 %v46, %v218
  %v240 = vadd.f32 %v47, %v220
  %v241 = vadd.f32 %v48, %v223
  %v242 = vadd.f32 %v49, %v225
  %243 = vst [vmem:[#allocation2] sm:$0xff] %v227
  %244 = vst [vmem:[#allocation2 + $0x8] sm:$0xff] %v228
  %245 = vst [vmem:[#allocation2 + $0x10] sm:$0xff] %v229
  %246 = vst [vmem:[#allocation2 + $0x18] sm:$0xff] %v230
  %247 = vst [vmem:[#allocation2 + $0x20] sm:$0xff] %v231
  %248 = vst [vmem:[#allocation2 + $0x28] sm:$0xff] %v232
  %249 = vst [vmem:[#allocation2 + $0x30] sm:$0xff] %v233
  %250 = vst [vmem:[#allocation2 + $0x38] sm:$0xff] %v234
  %251 = vst [vmem:[#allocation2 + $0x40] sm:$0xff] %v235
  %252 = vst [vmem:[#allocation2 + $0x48] sm:$0xff] %v236
  %253 = vst [vmem:[#allocation2 + $0x50] sm:$0xff] %v237
  %254 = vst [vmem:[#allocation2 + $0x58] sm:$0xff] %v238
  %255 = vst [vmem:[#allocation2 + $0x60] sm:$0xff] %v239
  %256 = vst [vmem:[#allocation2 + $0x68] sm:$0xff] %v240
  %257 = vst [vmem:[#allocation2 + $0x70] sm:$0xff] %v241
  %258 = vst [vmem:[#allocation2 + $0x78] sm:$0xff] %v242
  // Predicated region
  $region18: #{_lambda_.37} parent=0 // pred_check
    %p259 = pneg %p14
  $region19: #{_lambda_.37} parent=0 // pred_check_branch
    %261 = sbr.rel (%p259) target = $region21
  $region20: #{_lambda_.37} parent=0 // pred_region
    %v262 = vld [vmem:[#allocation2] sm:$0xff]
    %v263 = vld [vmem:[#allocation2 + $0x8] sm:$0xff]
    %v264 = vld [vmem:[#allocation2 + $0x10] sm:$0xff]
    %v265 = vld [vmem:[#allocation2 + $0x18] sm:$0xff]
    %v266 = vld [vmem:[#allocation2 + $0x20] sm:$0xff]
    %v267 = vld [vmem:[#allocation2 + $0x28] sm:$0xff]
    %v268 = vld [vmem:[#allocation2 + $0x30] sm:$0xff]
    %v269 = vld [vmem:[#allocation2 + $0x38] sm:$0xff]
    %v270 = vld [vmem:[#allocation2 + $0x40] sm:$0xff]
    %v271 = vld [vmem:[#allocation2 + $0x48] sm:$0xff]
    %v272 = vld [vmem:[#allocation2 + $0x50] sm:$0xff]
    %v273 = vld [vmem:[#allocation2 + $0x58] sm:$0xff]
    %v274 = vld [vmem:[#allocation2 + $0x60] sm:$0xff]
    %v275 = vld [vmem:[#allocation2 + $0x68] sm:$0xff]
    %v276 = vld [vmem:[#allocation2 + $0x70] sm:$0xff]
    %v277 = vld [vmem:[#allocation2 + $0x78] sm:$0xff]
    %v278 = vld [vmem:[%s2] sm:$0x1]
    %v280 = vperm.slane %v278, 0
    %v282 = vadd.f32 %v262, %v280
    %v283 = vadd.f32 %v263, %v280
    %v284 = vadd.f32 %v264, %v280
    %v285 = vadd.f32 %v265, %v280
    %v286 = vadd.f32 %v266, %v280
    %v287 = vadd.f32 %v267, %v280
    %v288 = vadd.f32 %v268, %v280
    %v289 = vadd.f32 %v269, %v280
    %v290 = vadd.f32 %v270, %v280
    %v291 = vadd.f32 %v271, %v280
    %v292 = vadd.f32 %v272, %v280
    %v293 = vadd.f32 %v273, %v280
    %v294 = vadd.f32 %v274, %v280
    %v295 = vadd.f32 %v275, %v280
    %v296 = vadd.f32 %v276, %v280
    %v297 = vadd.f32 %v277, %v280
    %298 = vst [vmem:[%s3] sm:$0xff] %v282
    %299 = vst [vmem:[%s3 + $0x8] sm:$0xff] %v283
    %300 = vst [vmem:[%s3 + $0x10] sm:$0xff] %v284
    %301 = vst [vmem:[%s3 + $0x18] sm:$0xff] %v285
    %302 = vst [vmem:[%s3 + $0x20] sm:$0xff] %v286
    %303 = vst [vmem:[%s3 + $0x28] sm:$0xff] %v287
    %304 = vst [vmem:[%s3 + $0x30] sm:$0xff] %v288
    %305 = vst [vmem:[%s3 + $0x38] sm:$0xff] %v289
    %306 = vst [vmem:[%s3 + $0x40] sm:$0xff] %v290
    %307 = vst [vmem:[%s3 + $0x48] sm:$0xff] %v291
    %308 = vst [vmem:[%s3 + $0x50] sm:$0xff] %v292
    %309 = vst [vmem:[%s3 + $0x58] sm:$0xff] %v293
    %310 = vst [vmem:[%s3 + $0x60] sm:$0xff] %v294
    %311 = vst [vmem:[%s3 + $0x68] sm:$0xff] %v295
    %312 = vst [vmem:[%s3 + $0x70] sm:$0xff] %v296
    %313 = vst [vmem:[%s3 + $0x78] sm:$0xff] %v297
  $region21: #{_lambda_.37} parent=0 // pred_fallthru
    _
  // Predicated region
  $region22: #{_lambda_.37} parent=0 // pred_check
    _
  $region23: #{_lambda_.37} parent=0 // pred_check_branch
    %315 = sbr.rel (0) target = $region25
  $region24: #{_lambda_.37} parent=0 // pred_region
    _
  $region25: #{_lambda_.37} parent=0 // pred_fallthru
    _
  // Predicated region
  $region26: #{_lambda_.37} parent=0 // pred_check
    _
  $region27: #{_lambda_.37} parent=0 // pred_check_branch
    %317 = sbr.rel (0) target = $region29
  $region28: #{_lambda_.37} parent=0 // pred_region
    _
  $region29: #{_lambda_.37} parent=0 // pred_fallthru
    _

// kernel: _lambda_.40
$region0: #{_lambda_.40}
  #allocation0 [shape = 'u32[]', space=smem, size = 0x4, offset = 0x4, fixed_abs, tag = 'smem constant byte address 0x4 - core index']
  #allocation1 [shape = 'u32[72,128]{1,0:T(1,128)}', space=vmem, size = 0x9000, scoped, tag = 'internal scratch']
  %s0 = inlined_call_operand.vmem [shape: f32[128,64], index: 0, kind: input, shape index: {}]
  %s1 = inlined_call_operand.vmem [shape: f32[128,64], index: 1, kind: input, shape index: {}]
  %s2 = inlined_call_operand.vmem [shape: f32[1,64], index: 2, kind: input, shape index: {}]
  %s3 = inlined_call_operand.vmem [shape: f32[1,64], index: 3, kind: input, shape index: {}]
  %s4 = inlined_call_operand.vmem [shape: f32[128,64], index: 4, kind: output, shape index: {}]
  %s5 = sld [smem:[#allocation0]]
  $region26: #{_lambda_.40} parent=0
    _
  %s7 = ssub.s32 1, %s5
  %s8 = scalar_select 0, %s7, %s5
  // Predicated region
  $region2: #{_lambda_.40} parent=0 // pred_check
    _
  $region3: #{_lambda_.40} parent=0 // pred_check_branch
    %10 = sbr.rel (0) target = $region5
  $region4: #{_lambda_.40} parent=0 // pred_region
    _
  $region5: #{_lambda_.40} parent=0 // pred_fallthru
    _
  // Predicated region
  $region6: #{_lambda_.40} parent=0 // pred_check
    _
  $region7: #{_lambda_.40} parent=0 // pred_check_branch
    %12 = sbr.rel (0) target = $region9
  $region8: #{_lambda_.40} parent=0 // pred_region
    _
  $region9: #{_lambda_.40} parent=0 // pred_fallthru
    _
  // Predicated region
  $region10: #{_lambda_.40} parent=0 // pred_check
    _
  $region11: #{_lambda_.40} parent=0 // pred_check_branch
    %14 = sbr.rel (0) target = $region13
  $region12: #{_lambda_.40} parent=0 // pred_region
    _
  $region13: #{_lambda_.40} parent=0 // pred_fallthru
    _
  // Predicated region
  $region14: #{_lambda_.40} parent=0 // pred_check
    _
  $region15: #{_lambda_.40} parent=0 // pred_check_branch
    %16 = sbr.rel (0) target = $region17
  $region16: #{_lambda_.40} parent=0 // pred_region
    _
  $region17: #{_lambda_.40} parent=0 // pred_fallthru
    _
  %v17 = vld [vmem:[%s0] sm:$0xff]
  %v18 = vld [vmem:[%s0 + $0x8] sm:$0xff]
  %v19 = vld [vmem:[%s0 + $0x10] sm:$0xff]
  %v20 = vld [vmem:[%s0 + $0x18] sm:$0xff]
  %v21 = vld [vmem:[%s0 + $0x20] sm:$0xff]
  %v22 = vld [vmem:[%s0 + $0x28] sm:$0xff]
  %v23 = vld [vmem:[%s0 + $0x30] sm:$0xff]
  %v24 = vld [vmem:[%s0 + $0x38] sm:$0xff]
  %v25 = vld [vmem:[%s0 + $0x40] sm:$0xff]
  %v26 = vld [vmem:[%s0 + $0x48] sm:$0xff]
  %v27 = vld [vmem:[%s0 + $0x50] sm:$0xff]
  %v28 = vld [vmem:[%s0 + $0x58] sm:$0xff]
  %v29 = vld [vmem:[%s0 + $0x60] sm:$0xff]
  %v30 = vld [vmem:[%s0 + $0x68] sm:$0xff]
  %v31 = vld [vmem:[%s0 + $0x70] sm:$0xff]
  %v32 = vld [vmem:[%s0 + $0x78] sm:$0xff]
  %v33 = vld [vmem:[%s1] sm:$0xff]
  %v34 = vld [vmem:[%s1 + $0x8] sm:$0xff]
  %v35 = vld [vmem:[%s1 + $0x10] sm:$0xff]
  %v36 = vld [vmem:[%s1 + $0x18] sm:$0xff]
  %v37 = vld [vmem:[%s1 + $0x20] sm:$0xff]
  %v38 = vld [vmem:[%s1 + $0x28] sm:$0xff]
  %v39 = vld [vmem:[%s1 + $0x30] sm:$0xff]
  %v40 = vld [vmem:[%s1 + $0x38] sm:$0xff]
  %v41 = vld [vmem:[%s1 + $0x40] sm:$0xff]
  %v42 = vld [vmem:[%s1 + $0x48] sm:$0xff]
  %v43 = vld [vmem:[%s1 + $0x50] sm:$0xff]
  %v44 = vld [vmem:[%s1 + $0x58] sm:$0xff]
  %v45 = vld [vmem:[%s1 + $0x60] sm:$0xff]
  %v46 = vld [vmem:[%s1 + $0x68] sm:$0xff]
  %v47 = vld [vmem:[%s1 + $0x70] sm:$0xff]
  %v48 = vld [vmem:[%s1 + $0x78] sm:$0xff]
  %v49 = vadd.f32 %v17, %v33
  %v50 = vadd.f32 %v18, %v34
  %v51 = vadd.f32 %v19, %v35
  %v52 = vadd.f32 %v20, %v36
  %v53 = vadd.f32 %v21, %v37
  %v54 = vadd.f32 %v22, %v38
  %v55 = vadd.f32 %v23, %v39
  %v56 = vadd.f32 %v24, %v40
  %v57 = vadd.f32 %v25, %v41
  %v58 = vadd.f32 %v26, %v42
  %v59 = vadd.f32 %v27, %v43
  %v60 = vadd.f32 %v28, %v44
  %v61 = vadd.f32 %v29, %v45
  %v62 = vadd.f32 %v30, %v46
  %v63 = vadd.f32 %v31, %v47
  %v64 = vadd.f32 %v32, %v48
  %vm65 = vcmask 523264
  %v66 = vsel %vm65, %v49, 0.0
  %67 = vadd.xlane.f32.xlu0 %v66
  %v68 = vpop.xlane.xlu0 %67
  %v69 = vsel %vm65, %v50, 0.0
  %70 = vadd.xlane.f32.xlu0 %v69
  %v71 = vpop.xlane.xlu0 %70
  %v72 = vsel %vm65, %v51, 0.0
  %73 = vadd.xlane.f32.xlu0 %v72
  %v74 = vpop.xlane.xlu0 %73
  %v75 = vsel %vm65, %v52, 0.0
  %76 = vadd.xlane.f32.xlu0 %v75
  %v77 = vpop.xlane.xlu0 %76
  %v78 = vsel %vm65, %v53, 0.0
  %79 = vadd.xlane.f32.xlu0 %v78
  %v80 = vpop.xlane.xlu0 %79
  %v81 = vsel %vm65, %v54, 0.0
  %82 = vadd.xlane.f32.xlu0 %v81
  %v83 = vpop.xlane.xlu0 %82
  %v84 = vsel %vm65, %v55, 0.0
  %85 = vadd.xlane.f32.xlu0 %v84
  %v86 = vpop.xlane.xlu0 %85
  %v87 = vsel %vm65, %v56, 0.0
  %88 = vadd.xlane.f32.xlu0 %v87
  %v89 = vpop.xlane.xlu0 %88
  %v90 = vsel %vm65, %v57, 0.0
  %91 = vadd.xlane.f32.xlu0 %v90
  %v92 = vpop.xlane.xlu0 %91
  %v93 = vsel %vm65, %v58, 0.0
  %94 = vadd.xlane.f32.xlu0 %v93
  %v95 = vpop.xlane.xlu0 %94
  %v96 = vsel %vm65, %v59, 0.0
  %97 = vadd.xlane.f32.xlu0 %v96
  %v98 = vpop.xlane.xlu0 %97
  %v99 = vsel %vm65, %v60, 0.0
  %100 = vadd.xlane.f32.xlu0 %v99
  %v101 = vpop.xlane.xlu0 %100
  %v102 = vsel %vm65, %v61, 0.0
  %103 = vadd.xlane.f32.xlu0 %v102
  %v104 = vpop.xlane.xlu0 %103
  %v105 = vsel %vm65, %v62, 0.0
  %106 = vadd.xlane.f32.xlu0 %v105
  %v107 = vpop.xlane.xlu0 %106
  %v108 = vsel %vm65, %v63, 0.0
  %109 = vadd.xlane.f32.xlu0 %v108
  %v110 = vpop.xlane.xlu0 %109
  %v111 = vsel %vm65, %v64, 0.0
  %112 = vadd.xlane.f32.xlu0 %v111
  %v113 = vpop.xlane.xlu0 %112
  %v114 = vrcp.pop 64.0
  %v115 = vmul.f32 64.0, %v114
  %v116 = vsub.f32 1.0, %v115
  %v117 = vmul.f32 %v114, %v116
  %v118 = vadd.f32 %v114, %v117
  %vm119 = vweird.f32 %v114
  %v120 = vsel %vm119, %v114, %v118
  %v121 = vmul.f32 %v68, %v120
  %v122 = vmul.f32 %v71, %v120
  %v123 = vmul.f32 %v74, %v120
  %v124 = vmul.f32 %v77, %v120
  %v125 = vmul.f32 %v80, %v120
  %v126 = vmul.f32 %v83, %v120
  %v127 = vmul.f32 %v86, %v120
  %v128 = vmul.f32 %v89, %v120
  %v129 = vmul.f32 %v92, %v120
  %v130 = vmul.f32 %v95, %v120
  %v131 = vmul.f32 %v98, %v120
  %v132 = vmul.f32 %v101, %v120
  %v133 = vmul.f32 %v104, %v120
  %v134 = vmul.f32 %v107, %v120
  %v135 = vmul.f32 %v110, %v120
  %v136 = vmul.f32 %v113, %v120
  %v137 = vsub.f32 %v49, %v121
  %v138 = vsub.f32 %v50, %v122
  %v139 = vsub.f32 %v51, %v123
  %v140 = vsub.f32 %v52, %v124
  %v141 = vsub.f32 %v53, %v125
  %v142 = vsub.f32 %v54, %v126
  %v143 = vsub.f32 %v55, %v127
  %v144 = vsub.f32 %v56, %v128
  %v145 = vsub.f32 %v57, %v129
  %v146 = vsub.f32 %v58, %v130
  %v147 = vsub.f32 %v59, %v131
  %v148 = vsub.f32 %v60, %v132
  %v149 = vsub.f32 %v61, %v133
  %v150 = vsub.f32 %v62, %v134
  %v151 = vsub.f32 %v63, %v135
  %v152 = vsub.f32 %v64, %v136
  %v153 = vmul.f32 %v137, %v137
  %v154 = vmul.f32 %v138, %v138
  %v155 = vmul.f32 %v139, %v139
  %v156 = vmul.f32 %v140, %v140
  %v157 = vmul.f32 %v141, %v141
  %v158 = vmul.f32 %v142, %v142
  %v159 = vmul.f32 %v143, %v143
  %v160 = vmul.f32 %v144, %v144
  %v161 = vmul.f32 %v145, %v145
  %v162 = vmul.f32 %v146, %v146
  %v163 = vmul.f32 %v147, %v147
  %v164 = vmul.f32 %v148, %v148
  %v165 = vmul.f32 %v149, %v149
  %v166 = vmul.f32 %v150, %v150
  %v167 = vmul.f32 %v151, %v151
  %v168 = vmul.f32 %v152, %v152
  %v169 = vsel %vm65, %v153, 0.0
  %170 = vadd.xlane.f32.xlu0 %v169
  %v171 = vpop.xlane.xlu0 %170
  %v172 = vsel %vm65, %v154, 0.0
  %173 = vadd.xlane.f32.xlu0 %v172
  %v174 = vpop.xlane.xlu0 %173
  %v175 = vsel %vm65, %v155, 0.0
  %176 = vadd.xlane.f32.xlu0 %v175
  %v177 = vpop.xlane.xlu0 %176
  %v178 = vsel %vm65, %v156, 0.0
  %179 = vadd.xlane.f32.xlu0 %v178
  %v180 = vpop.xlane.xlu0 %179
  %v181 = vsel %vm65, %v157, 0.0
  %182 = vadd.xlane.f32.xlu0 %v181
  %v183 = vpop.xlane.xlu0 %182
  %v184 = vsel %vm65, %v158, 0.0
  %185 = vadd.xlane.f32.xlu0 %v184
  %v186 = vpop.xlane.xlu0 %185
  %v187 = vsel %vm65, %v159, 0.0
  %188 = vadd.xlane.f32.xlu0 %v187
  %v189 = vpop.xlane.xlu0 %188
  %v190 = vsel %vm65, %v160, 0.0
  %191 = vadd.xlane.f32.xlu0 %v190
  %v192 = vpop.xlane.xlu0 %191
  %v193 = vsel %vm65, %v161, 0.0
  %194 = vadd.xlane.f32.xlu0 %v193
  %v195 = vpop.xlane.xlu0 %194
  %v196 = vsel %vm65, %v162, 0.0
  %197 = vadd.xlane.f32.xlu0 %v196
  %v198 = vpop.xlane.xlu0 %197
  %v199 = vsel %vm65, %v163, 0.0
  %200 = vadd.xlane.f32.xlu0 %v199
  %v201 = vpop.xlane.xlu0 %200
  %v202 = vsel %vm65, %v164, 0.0
  %203 = vadd.xlane.f32.xlu0 %v202
  %v204 = vpop.xlane.xlu0 %203
  %v205 = vsel %vm65, %v165, 0.0
  %206 = vadd.xlane.f32.xlu0 %v205
  %v207 = vpop.xlane.xlu0 %206
  %v208 = vsel %vm65, %v166, 0.0
  %209 = vadd.xlane.f32.xlu0 %v208
  %v210 = vpop.xlane.xlu0 %209
  %v211 = vsel %vm65, %v167, 0.0
  %212 = vadd.xlane.f32.xlu0 %v211
  %v213 = vpop.xlane.xlu0 %212
  %v214 = vsel %vm65, %v168, 0.0
  %215 = vadd.xlane.f32.xlu0 %v214
  %v216 = vpop.xlane.xlu0 %215
  %v217 = vmul.f32 %v171, %v120
  %v218 = vmul.f32 %v174, %v120
  %v219 = vmul.f32 %v177, %v120
  %v220 = vmul.f32 %v180, %v120
  %v221 = vmul.f32 %v183, %v120
  %v222 = vmul.f32 %v186, %v120
  %v223 = vmul.f32 %v189, %v120
  %v224 = vmul.f32 %v192, %v120
  %v225 = vmul.f32 %v195, %v120
  %v226 = vmul.f32 %v198, %v120
  %v227 = vmul.f32 %v201, %v120
  %v228 = vmul.f32 %v204, %v120
  %v229 = vmul.f32 %v207, %v120
  %v230 = vmul.f32 %v210, %v120
  %v231 = vmul.f32 %v213, %v120
  %v232 = vmul.f32 %v216, %v120
  %v233 = vadd.f32 %v217, 1e-05
  %v234 = vadd.f32 %v218, 1e-05
  %v235 = vadd.f32 %v219, 1e-05
  %v236 = vadd.f32 %v220, 1e-05
  %v237 = vadd.f32 %v221, 1e-05
  %v238 = vadd.f32 %v222, 1e-05
  %v239 = vadd.f32 %v223, 1e-05
  %v240 = vadd.f32 %v224, 1e-05
  %v241 = vadd.f32 %v225, 1e-05
  %v242 = vadd.f32 %v226, 1e-05
  %v243 = vadd.f32 %v227, 1e-05
  %v244 = vadd.f32 %v228, 1e-05
  %v245 = vadd.f32 %v229, 1e-05
  %v246 = vadd.f32 %v230, 1e-05
  %v247 = vadd.f32 %v231, 1e-05
  %v248 = vadd.f32 %v232, 1e-05
  %v249 = vrsqrt.pop %v233
  %v250 = vmul.f32 %v249, %v233
  %v251 = vmul.f32 %v250, %v249
  %v252 = vmul.f32 0.5, %v251
  %v253 = vsub.f32 1.5, %v252
  %v254 = vmul.f32 %v249, %v253
  %vm255 = vweird.f32 %v233
  %vm256 = vweird.f32 %v249
  %vm257 = vmor %vm255, %vm256
  %v258 = vsel %vm257, %v249, %v254
  %v259 = vrsqrt.pop %v234
  %v260 = vmul.f32 %v259, %v234
  %v261 = vmul.f32 %v260, %v259
  %v262 = vmul.f32 0.5, %v261
  %v263 = vsub.f32 1.5, %v262
  %v264 = vmul.f32 %v259, %v263
  %vm265 = vweird.f32 %v234
  %vm266 = vweird.f32 %v259
  %vm267 = vmor %vm265, %vm266
  %v268 = vsel %vm267, %v259, %v264
  %v269 = vrsqrt.pop %v235
  %v270 = vmul.f32 %v269, %v235
  %v271 = vmul.f32 %v270, %v269
  %v272 = vmul.f32 0.5, %v271
  %v273 = vsub.f32 1.5, %v272
  %v274 = vmul.f32 %v269, %v273
  %vm275 = vweird.f32 %v235
  %vm276 = vweird.f32 %v269
  %vm277 = vmor %vm275, %vm276
  %v278 = vsel %vm277, %v269, %v274
  %v279 = vrsqrt.pop %v236
  %v280 = vmul.f32 %v279, %v236
  %v281 = vmul.f32 %v280, %v279
  %v282 = vmul.f32 0.5, %v281
  %v283 = vsub.f32 1.5, %v282
  %v284 = vmul.f32 %v279, %v283
  %vm285 = vweird.f32 %v236
  %vm286 = vweird.f32 %v279
  %vm287 = vmor %vm285, %vm286
  %v288 = vsel %vm287, %v279, %v284
  %v289 = vrsqrt.pop %v237
  %v290 = vmul.f32 %v289, %v237
  %v291 = vmul.f32 %v290, %v289
  %v292 = vmul.f32 0.5, %v291
  %v293 = vsub.f32 1.5, %v292
  %v294 = vmul.f32 %v289, %v293
  %vm295 = vweird.f32 %v237
  %vm296 = vweird.f32 %v289
  %vm297 = vmor %vm295, %vm296
  %v298 = vsel %vm297, %v289, %v294
  %v299 = vrsqrt.pop %v238
  %v300 = vmul.f32 %v299, %v238
  %v301 = vmul.f32 %v300, %v299
  %v302 = vmul.f32 0.5, %v301
  %v303 = vsub.f32 1.5, %v302
  %v304 = vmul.f32 %v299, %v303
  %vm305 = vweird.f32 %v238
  %vm306 = vweird.f32 %v299
  %vm307 = vmor %vm305, %vm306
  %v308 = vsel %vm307, %v299, %v304
  %v309 = vrsqrt.pop %v239
  %v310 = vmul.f32 %v309, %v239
  %v311 = vmul.f32 %v310, %v309
  %v312 = vmul.f32 0.5, %v311
  %v313 = vsub.f32 1.5, %v312
  %v314 = vmul.f32 %v309, %v313
  %vm315 = vweird.f32 %v239
  %vm316 = vweird.f32 %v309
  %vm317 = vmor %vm315, %vm316
  %v318 = vsel %vm317, %v309, %v314
  %v319 = vrsqrt.pop %v240
  %v320 = vmul.f32 %v319, %v240
  %v321 = vmul.f32 %v320, %v319
  %v322 = vmul.f32 0.5, %v321
  %v323 = vsub.f32 1.5, %v322
  %v324 = vmul.f32 %v319, %v323
  %vm325 = vweird.f32 %v240
  %vm326 = vweird.f32 %v319
  %vm327 = vmor %vm325, %vm326
  %v328 = vsel %vm327, %v319, %v324
  %v329 = vrsqrt.pop %v241
  %v330 = vmul.f32 %v329, %v241
  %v331 = vmul.f32 %v330, %v329
  %v332 = vmul.f32 0.5, %v331
  %v333 = vsub.f32 1.5, %v332
  %v334 = vmul.f32 %v329, %v333
  %vm335 = vweird.f32 %v241
  %vm336 = vweird.f32 %v329
  %vm337 = vmor %vm335, %vm336
  %v338 = vsel %vm337, %v329, %v334
  %v339 = vrsqrt.pop %v242
  %v340 = vmul.f32 %v339, %v242
  %v341 = vmul.f32 %v340, %v339
  %v342 = vmul.f32 0.5, %v341
  %v343 = vsub.f32 1.5, %v342
  %v344 = vmul.f32 %v339, %v343
  %vm345 = vweird.f32 %v242
  %vm346 = vweird.f32 %v339
  %vm347 = vmor %vm345, %vm346
  %v348 = vsel %vm347, %v339, %v344
  %v349 = vrsqrt.pop %v243
  %v350 = vmul.f32 %v349, %v243
  %v351 = vmul.f32 %v350, %v349
  %v352 = vmul.f32 0.5, %v351
  %v353 = vsub.f32 1.5, %v352
  %v354 = vmul.f32 %v349, %v353
  %vm355 = vweird.f32 %v243
  %vm356 = vweird.f32 %v349
  %vm357 = vmor %vm355, %vm356
  %v358 = vsel %vm357, %v349, %v354
  %v359 = vrsqrt.pop %v244
  %v360 = vmul.f32 %v359, %v244
  %v361 = vmul.f32 %v360, %v359
  %v362 = vmul.f32 0.5, %v361
  %v363 = vsub.f32 1.5, %v362
  %v364 = vmul.f32 %v359, %v363
  %vm365 = vweird.f32 %v244
  %vm366 = vweird.f32 %v359
  %vm367 = vmor %vm365, %vm366
  %v368 = vsel %vm367, %v359, %v364
  %v369 = vrsqrt.pop %v245
  %v370 = vmul.f32 %v369, %v245
  %v371 = vmul.f32 %v370, %v369
  %v372 = vmul.f32 0.5, %v371
  %v373 = vsub.f32 1.5, %v372
  %v374 = vmul.f32 %v369, %v373
  %vm375 = vweird.f32 %v245
  %vm376 = vweird.f32 %v369
  %vm377 = vmor %vm375, %vm376
  %v378 = vsel %vm377, %v369, %v374
  %v379 = vrsqrt.pop %v246
  %v380 = vmul.f32 %v379, %v246
  %v381 = vmul.f32 %v380, %v379
  %v382 = vmul.f32 0.5, %v381
  %v383 = vsub.f32 1.5, %v382
  %v384 = vmul.f32 %v379, %v383
  %vm385 = vweird.f32 %v246
  %vm386 = vweird.f32 %v379
  %vm387 = vmor %vm385, %vm386
  %v388 = vsel %vm387, %v379, %v384
  %v389 = vrsqrt.pop %v247
  %v390 = vmul.f32 %v389, %v247
  %v391 = vmul.f32 %v390, %v389
  %v392 = vmul.f32 0.5, %v391
  %v393 = vsub.f32 1.5, %v392
  %v394 = vmul.f32 %v389, %v393
  %vm395 = vweird.f32 %v247
  %vm396 = vweird.f32 %v389
  %vm397 = vmor %vm395, %vm396
  %v398 = vsel %vm397, %v389, %v394
  %v399 = vrsqrt.pop %v248
  %v400 = vmul.f32 %v399, %v248
  %v401 = vmul.f32 %v400, %v399
  %v402 = vmul.f32 0.5, %v401
  %v403 = vsub.f32 1.5, %v402
  %v404 = vmul.f32 %v399, %v403
  %vm405 = vweird.f32 %v248
  %vm406 = vweird.f32 %v399
  %vm407 = vmor %vm405, %vm406
  %v408 = vsel %vm407, %v399, %v404
  %v409 = vmul.f32 %v137, %v258
  %v410 = vmul.f32 %v138, %v268
  %v411 = vmul.f32 %v139, %v278
  %v412 = vmul.f32 %v140, %v288
  %v413 = vmul.f32 %v141, %v298
  %v414 = vmul.f32 %v142, %v308
  %v415 = vmul.f32 %v143, %v318
  %v416 = vmul.f32 %v144, %v328
  %v417 = vmul.f32 %v145, %v338
  %v418 = vmul.f32 %v146, %v348
  %v419 = vmul.f32 %v147, %v358
  %v420 = vmul.f32 %v148, %v368
  %v421 = vmul.f32 %v149, %v378
  %v422 = vmul.f32 %v150, %v388
  %v423 = vmul.f32 %v151, %v398
  %v424 = vmul.f32 %v152, %v408
  %v425 = vld [vmem:[%s2] sm:$0x1]
  %v427 = vperm.slane %v425, 0
  %v429 = vmul.f32 %v409, %v427
  %v430 = vmul.f32 %v410, %v427
  %v431 = vmul.f32 %v411, %v427
  %v432 = vmul.f32 %v412, %v427
  %v433 = vmul.f32 %v413, %v427
  %v434 = vmul.f32 %v414, %v427
  %v435 = vmul.f32 %v415, %v427
  %v436 = vmul.f32 %v416, %v427
  %v437 = vmul.f32 %v417, %v427
  %v438 = vmul.f32 %v418, %v427
  %v439 = vmul.f32 %v419, %v427
  %v440 = vmul.f32 %v420, %v427
  %v441 = vmul.f32 %v421, %v427
  %v442 = vmul.f32 %v422, %v427
  %v443 = vmul.f32 %v423, %v427
  %v444 = vmul.f32 %v424, %v427
  %v445 = vld [vmem:[%s3] sm:$0x1]
  %v447 = vperm.slane %v445, 0
  %v449 = vadd.f32 %v429, %v447
  %v450 = vadd.f32 %v430, %v447
  %v451 = vadd.f32 %v431, %v447
  %v452 = vadd.f32 %v432, %v447
  %v453 = vadd.f32 %v433, %v447
  %v454 = vadd.f32 %v434, %v447
  %v455 = vadd.f32 %v435, %v447
  %v456 = vadd.f32 %v436, %v447
  %v457 = vadd.f32 %v437, %v447
  %v458 = vadd.f32 %v438, %v447
  %v459 = vadd.f32 %v439, %v447
  %v460 = vadd.f32 %v440, %v447
  %v461 = vadd.f32 %v441, %v447
  %v462 = vadd.f32 %v442, %v447
  %v463 = vadd.f32 %v443, %v447
  %v464 = vadd.f32 %v444, %v447
  %465 = vst.msk [vmem:[%s4] sm:$0xff] %vm65, %v449
  %466 = vst.msk [vmem:[%s4 + $0x8] sm:$0xff] %vm65, %v450
  %467 = vst.msk [vmem:[%s4 + $0x10] sm:$0xff] %vm65, %v451
  %468 = vst.msk [vmem:[%s4 + $0x18] sm:$0xff] %vm65, %v452
  %469 = vst.msk [vmem:[%s4 + $0x20] sm:$0xff] %vm65, %v453
  %470 = vst.msk [vmem:[%s4 + $0x28] sm:$0xff] %vm65, %v454
  %471 = vst.msk [vmem:[%s4 + $0x30] sm:$0xff] %vm65, %v455
  %472 = vst.msk [vmem:[%s4 + $0x38] sm:$0xff] %vm65, %v456
  %473 = vst.msk [vmem:[%s4 + $0x40] sm:$0xff] %vm65, %v457
  %474 = vst.msk [vmem:[%s4 + $0x48] sm:$0xff] %vm65, %v458
  %475 = vst.msk [vmem:[%s4 + $0x50] sm:$0xff] %vm65, %v459
  %476 = vst.msk [vmem:[%s4 + $0x58] sm:$0xff] %vm65, %v460
  %477 = vst.msk [vmem:[%s4 + $0x60] sm:$0xff] %vm65, %v461
  %478 = vst.msk [vmem:[%s4 + $0x68] sm:$0xff] %vm65, %v462
  %479 = vst.msk [vmem:[%s4 + $0x70] sm:$0xff] %vm65, %v463
  %480 = vst.msk [vmem:[%s4 + $0x78] sm:$0xff] %vm65, %v464
  // Predicated region
  $region18: #{_lambda_.40} parent=0 // pred_check
    _
  $region19: #{_lambda_.40} parent=0 // pred_check_branch
    %482 = sbr.rel (0) target = $region21
  $region20: #{_lambda_.40} parent=0 // pred_region
    _
  $region21: #{_lambda_.40} parent=0 // pred_fallthru
    _
  // Predicated region
  $region22: #{_lambda_.40} parent=0 // pred_check
    _
  $region23: #{_lambda_.40} parent=0 // pred_check_branch
    %484 = sbr.rel (0) target = $region25
  $region24: #{_lambda_.40} parent=0 // pred_region
    _
  $region25: #{_lambda_.40} parent=0 // pred_fallthru
    _

// kernel: _lambda_.38
$region0: #{_lambda_.38}
  #allocation0 [shape = 'u32[]', space=smem, size = 0x4, offset = 0x4, fixed_abs, tag = 'smem constant byte address 0x4 - core index']
  #allocation1 [shape = 'u32[72,128]{1,0:T(1,128)}', space=vmem, size = 0x9000, scoped, tag = 'internal scratch']
  %s0 = inlined_call_operand.vmem [shape: bf16[2,64,32], index: 0, kind: input, shape index: {}]
  %s1 = inlined_call_operand.vmem [shape: bf16[2,64,32], index: 1, kind: input, shape index: {}]
  %s2 = inlined_call_operand.vmem [shape: bf16[2,64,32], index: 2, kind: input, shape index: {}]
  %s3 = inlined_call_operand.vmem [shape: f32[2,64,32], index: 3, kind: output, shape index: {}]
  %s4 = sld [smem:[#allocation0]]
  $region45: #{_lambda_.38} parent=0
    _
  %s6 = ssub.s32 1, %s4
  %s7 = scalar_select 0, %s6, %s4
  loop: start=0, step=1, limit=4
  $region2: #{_lambda_.38} parent=0 // loop_pre_header
    _
  $region3: #{_lambda_.38} parent=0 // loop_header
    %s9 = sphi 0, %s13
    %p10 = scmp.ge.s32.totalorder %s9, 4
    %s19 = sphi 0, %s21
    %s22 = sphi 0, %s19
    %s23 = sphi 0, %s22
    %s39 = sphi 0, %s23
    %s45 = sphi 0, %s47
    %s48 = sphi 0, %s45
    %s49 = sphi 0, %s48
    %s65 = sphi 0, %s49
    %s71 = sphi 0, %s73
    %s74 = sphi 0, %s71
    %s75 = sphi 0, %s74
    %s91 = sphi 0, %s75
    %s97 = sphi 0, %s99
    %s100 = sphi 0, %s97
    %s101 = sphi 0, %s100
    %s117 = sphi 0, %s101
  $region4: #{_lambda_.38} parent=0 // loop_header_branch
    %12 = sbr.rel (%p10) target = $region8
  $region5: #{_lambda_.38} parent=0 // loop_body
    %s14 = ssub.s32 %s9, 1
    %s15 = ssub.s32 %s9, 2
    %s16 = sadd.s32 %s9, 1
    %s17 = ssub.s32 %s9, %s16
    %p18 = scmp.eq.s32.totalorder %s17, 0
    %s20 = sadd.s32 %s19, 1
    %s21 = scalar_select %p18, %s19, %s20
    %p24 = pneg %p18
    %p25 = scmp.eq.s32.totalorder %s9, 1
    %p26 = por %p24, %p25
    %p27 = scmp.ne.s32.totalorder %s19, %s22
    %p28 = scmp.eq.s32.totalorder %s9, 0
    %p29 = por %p27, %p28
    %p30 = scmp.ne.s32.totalorder %s19, %s22
    %p31 = scmp.eq.s32.totalorder %s14, 1
    %p32 = por %p30, %p31
    %p33 = scmp.ne.s32.totalorder %s22, %s23
    %p34 = scmp.eq.s32.totalorder %s14, 0
    %p35 = por %p33, %p34
    %p36 = scmp.ne.s32.totalorder %s22, %s23
    %p37 = scmp.eq.s32.totalorder %s15, 1
    %p38 = por %p36, %p37
    %p40 = scmp.ne.s32.totalorder %s23, %s39
    %p41 = scmp.eq.s32.totalorder %s15, 0
    %p42 = por %p40, %p41
    %s43 = ssub.s32 %s9, %s16
    %p44 = scmp.eq.s32.totalorder %s43, 0
    %s46 = sadd.s32 %s45, 1
    %s47 = scalar_select %p44, %s45, %s46
    %p50 = pneg %p44
    %p51 = scmp.eq.s32.totalorder %s9, 1
    %p52 = por %p50, %p51
    %p53 = scmp.ne.s32.totalorder %s45, %s48
    %p54 = scmp.eq.s32.totalorder %s9, 0
    %p55 = por %p53, %p54
    %p56 = scmp.ne.s32.totalorder %s45, %s48
    %p57 = scmp.eq.s32.totalorder %s14, 1
    %p58 = por %p56, %p57
    %p59 = scmp.ne.s32.totalorder %s48, %s49
    %p60 = scmp.eq.s32.totalorder %s14, 0
    %p61 = por %p59, %p60
    %p62 = scmp.ne.s32.totalorder %s48, %s49
    %p63 = scmp.eq.s32.totalorder %s15, 1
    %p64 = por %p62, %p63
    %p66 = scmp.ne.s32.totalorder %s49, %s65
    %p67 = scmp.eq.s32.totalorder %s15, 0
    %p68 = por %p66, %p67
    %s69 = ssub.s32 %s9, %s16
    %p70 = scmp.eq.s32.totalorder %s69, 0
    %s72 = sadd.s32 %s71, 1
    %s73 = scalar_select %p70, %s71, %s72
    %p76 = pneg %p70
    %p77 = scmp.eq.s32.totalorder %s9, 1
    %p78 = por %p76, %p77
    %p79 = scmp.ne.s32.totalorder %s71, %s74
    %p80 = scmp.eq.s32.totalorder %s9, 0
    %p81 = por %p79, %p80
    %p82 = scmp.ne.s32.totalorder %s71, %s74
    %p83 = scmp.eq.s32.totalorder %s14, 1
    %p84 = por %p82, %p83
    %p85 = scmp.ne.s32.totalorder %s74, %s75
    %p86 = scmp.eq.s32.totalorder %s14, 0
    %p87 = por %p85, %p86
    %p88 = scmp.ne.s32.totalorder %s74, %s75
    %p89 = scmp.eq.s32.totalorder %s15, 1
    %p90 = por %p88, %p89
    %p92 = scmp.ne.s32.totalorder %s75, %s91
    %p93 = scmp.eq.s32.totalorder %s15, 0
    %p94 = por %p92, %p93
    %s95 = ssub.s32 %s9, %s16
    %p96 = scmp.eq.s32.totalorder %s95, 0
    %s98 = sadd.s32 %s97, 1
    %s99 = scalar_select %p96, %s97, %s98
    %p102 = pneg %p96
    %p103 = scmp.eq.s32.totalorder %s9, 1
    %p104 = por %p102, %p103
    %p105 = scmp.ne.s32.totalorder %s97, %s100
    %p106 = scmp.eq.s32.totalorder %s9, 0
    %p107 = por %p105, %p106
    %p108 = scmp.ne.s32.totalorder %s97, %s100
    %p109 = scmp.eq.s32.totalorder %s14, 1
    %p110 = por %p108, %p109
    %p111 = scmp.ne.s32.totalorder %s100, %s101
    %p112 = scmp.eq.s32.totalorder %s14, 0
    %p113 = por %p111, %p112
    %p114 = scmp.ne.s32.totalorder %s100, %s101
    %p115 = scmp.eq.s32.totalorder %s15, 1
    %p116 = por %p114, %p115
    %p118 = scmp.ne.s32.totalorder %s101, %s117
    %p119 = scmp.eq.s32.totalorder %s15, 0
    %p120 = por %p118, %p119
    %p121 = scmp.le.s32.totalorder 1, %s9
    %p122 = scmp.lt.s32.totalorder %s9, 3
    %p123 = pnand %p121, %p122
    %p124 = pneg %p123
    // Predicated region
    $region9: #{_lambda_.38} parent=5 // pred_check
      _
    $region10: #{_lambda_.38} parent=5 // pred_check_branch
      %126 = sbr.rel (%p123) target = $region12
    $region11: #{_lambda_.38} parent=5 // pred_region
      %s127 = ssub.s32 %s9, 1
    $region12: #{_lambda_.38} parent=5 // pred_fallthru
      _
    %p128 = scmp.lt.s32.totalorder %s9, 2
    // Predicated region
    $region13: #{_lambda_.38} parent=5 // pred_check
      %p129 = pneg %p128
    $region14: #{_lambda_.38} parent=5 // pred_check_branch
      %131 = sbr.rel (%p129) target = $region16
    $region15: #{_lambda_.38} parent=5 // pred_region
      // Predicated region
      $region17: #{_lambda_.38} parent=15 // pred_check
        %p132 = pneg %p29
      $region18: #{_lambda_.38} parent=15 // pred_check_branch
        %134 = sbr.rel (%p132) target = $region20
      $region19: #{_lambda_.38} parent=15 // pred_region
        %p135 = scmp.lt.s32.totalorder %s9, 1
        %s136 = scalar_select %p135, %s9, 1
        %s137 = smul.addr %s136, 8
        %s138 = smul.addr %s137, 4
        %s139 = scalar_lea.vmem %s0, %s138
      $region20: #{_lambda_.38} parent=15 // pred_fallthru
        _
      // Predicated region
      $region21: #{_lambda_.38} parent=15 // pred_check
        %p140 = pneg %p55
      $region22: #{_lambda_.38} parent=15 // pred_check_branch
        %142 = sbr.rel (%p140) target = $region24
      $region23: #{_lambda_.38} parent=15 // pred_region
        %p143 = scmp.lt.s32.totalorder %s9, 1
        %s144 = scalar_select %p143, %s9, 1
        %s145 = smul.addr %s144, 8
        %s146 = smul.addr %s145, 4
        %s147 = scalar_lea.vmem %s1, %s146
      $region24: #{_lambda_.38} parent=15 // pred_fallthru
        _
      // Predicated region
      $region25: #{_lambda_.38} parent=15 // pred_check
        %p148 = pneg %p81
      $region26: #{_lambda_.38} parent=15 // pred_check_branch
        %150 = sbr.rel (%p148) target = $region28
      $region27: #{_lambda_.38} parent=15 // pred_region
        %p151 = scmp.lt.s32.totalorder %s9, 1
        %s152 = scalar_select %p151, %s9, 1
        %s153 = smul.addr %s152, 8
        %s154 = smul.addr %s153, 4
        %s155 = scalar_lea.vmem %s2, %s154
      $region28: #{_lambda_.38} parent=15 // pred_fallthru
        _
    $region16: #{_lambda_.38} parent=5 // pred_fallthru
      _
    %p156 = scmp.le.s32.totalorder 1, %s9
    %p157 = scmp.lt.s32.totalorder %s9, 3
    %p158 = pnand %p156, %p157
    %p159 = pneg %p158
    // Predicated region
    $region29: #{_lambda_.38} parent=5 // pred_check
      _
    $region30: #{_lambda_.38} parent=5 // pred_check_branch
      %161 = sbr.rel (%p158) target = $region32
    $region31: #{_lambda_.38} parent=5 // pred_region
      %s162 = ssub.s32 %s9, 1
      %p163 = scmp.lt.s32.totalorder %s14, 1
      %s164 = scalar_select %p163, %s14, 1
      %s165 = smul.addr %s164, 8
      %s166 = smul.addr %s165, 4
      %s167 = scalar_lea.vmem %s0, %s166
      %p168 = pneg %p35
      %p169 = pneg %p32
      %p170 = scmp.lt.s32.totalorder %s14, 1
      %s171 = scalar_select %p170, %s14, 1
      %s172 = smul.addr %s171, 8
      %s173 = smul.addr %s172, 4
      %s174 = scalar_lea.vmem %s1, %s173
      %p175 = pneg %p61
      %p176 = pneg %p58
      %p177 = scmp.lt.s32.totalorder %s14, 1
      %s178 = scalar_select %p177, %s14, 1
      %s179 = smul.addr %s178, 8
      %s180 = smul.addr %s179, 4
      %s181 = scalar_lea.vmem %s2, %s180
      %p182 = pneg %p87
      %p183 = pneg %p84
      %p184 = pneg %p113
      %p185 = pneg %p110
      %p186 = scmp.lt.s32.totalorder %s14, 1
      %s187 = scalar_select %p186, %s14, 1
      %s188 = smul.addr %s187, 8
      %s189 = smul.addr %s188, 8
      %s190 = scalar_lea.vmem %s3, %s189
      %p191 = scmp.lt.s32.totalorder %s14, 1
      %s192 = scalar_select %p191, %s14, 1
      %s193 = smul.addr %s192, 8
      %s194 = smul.addr %s193, 4
      %s195 = scalar_lea.vmem %s0, %s194
      %p196 = scmp.lt.s32.totalorder %s14, 1
      %s197 = scalar_select %p196, %s14, 1
      %s198 = smul.addr %s197, 8
      %s199 = smul.addr %s198, 4
      %s200 = scalar_lea.vmem %s1, %s199
      %p201 = scmp.lt.s32.totalorder %s14, 1
      %s202 = scalar_select %p201, %s14, 1
      %s203 = smul.addr %s202, 8
      %s204 = smul.addr %s203, 4
      %s205 = scalar_lea.vmem %s2, %s204
      %p206 = scmp.lt.s32.totalorder %s14, 1
      %s207 = scalar_select %p206, %s14, 1
      %s208 = smul.addr %s207, 8
      %s209 = smul.addr %s208, 8
      %s210 = scalar_lea.vmem %s3, %s209
      %v212 = vld [vmem:[%s195] sm:$0xf]
      %v213 = vld [vmem:[%s195 + $0x4] sm:$0xf]
      %v214 = vld [vmem:[%s195 + $0x8] sm:$0xf]
      %v215 = vld [vmem:[%s195 + $0xc] sm:$0xf]
      %v216 = vld [vmem:[%s195 + $0x10] sm:$0xf]
      %v217 = vld [vmem:[%s195 + $0x14] sm:$0xf]
      %v218 = vld [vmem:[%s195 + $0x18] sm:$0xf]
      %v219 = vld [vmem:[%s195 + $0x1c] sm:$0xf]
      %v220 = vld [vmem:[%s200] sm:$0xf]
      %v221 = vld [vmem:[%s200 + $0x4] sm:$0xf]
      %v222 = vld [vmem:[%s200 + $0x8] sm:$0xf]
      %v223 = vld [vmem:[%s200 + $0xc] sm:$0xf]
      %v224 = vld [vmem:[%s200 + $0x10] sm:$0xf]
      %v225 = vld [vmem:[%s200 + $0x14] sm:$0xf]
      %v226 = vld [vmem:[%s200 + $0x18] sm:$0xf]
      %v227 = vld [vmem:[%s200 + $0x1c] sm:$0xf]
      %v228 = vld [vmem:[%s205] sm:$0xf]
      %v229 = vld [vmem:[%s205 + $0x4] sm:$0xf]
      %v230 = vld [vmem:[%s205 + $0x8] sm:$0xf]
      %v231 = vld [vmem:[%s205 + $0xc] sm:$0xf]
      %v232 = vld [vmem:[%s205 + $0x10] sm:$0xf]
      %v233 = vld [vmem:[%s205 + $0x14] sm:$0xf]
      %v234 = vld [vmem:[%s205 + $0x18] sm:$0xf]
      %v235 = vld [vmem:[%s205 + $0x1c] sm:$0xf]
      %v244 = vunpack.c.l.b16 %v212
      %v245 = vunpack.c.l.b16 %v213
      %v246 = vunpack.c.l.b16 %v214
      %v247 = vunpack.c.l.b16 %v215
      %v248 = vunpack.c.l.b16 %v216
      %v249 = vunpack.c.l.b16 %v217
      %v250 = vunpack.c.l.b16 %v218
      %v251 = vunpack.c.l.b16 %v219
      %v252 = vpack.c.b16 %v245, %v244
      %v253 = vpack.c.b16 %v247, %v246
      %v254 = vpack.c.b16 %v249, %v248
      %v255 = vpack.c.b16 %v251, %v250
      %v264 = vunpack.c.l.b16 %v220
      %v265 = vunpack.c.l.b16 %v221
      %v266 = vunpack.c.l.b16 %v222
      %v267 = vunpack.c.l.b16 %v223
      %v268 = vunpack.c.l.b16 %v224
      %v269 = vunpack.c.l.b16 %v225
      %v270 = vunpack.c.l.b16 %v226
      %v271 = vunpack.c.l.b16 %v227
      %v272 = vpack.c.b16 %v265, %v264
      %v273 = vpack.c.b16 %v267, %v266
      %v274 = vpack.c.b16 %v269, %v268
      %v275 = vpack.c.b16 %v271, %v270
      %vm276 = vcmask 64512
      %v278 = vsel %vm276, %v252, 0
      %v281 = vsel %vm276, %v253, 0
      %v284 = vsel %vm276, %v254, 0
      %v287 = vsel %vm276, %v255, 0
      %v290 = vsel %vm276, %v272, 0
      %v293 = vsel %vm276, %v273, 0
      %v296 = vsel %vm276, %v274, 0
      %v299 = vsel %vm276, %v275, 0
      %301 = vmatpush.bf16.xpose.msra.mxu0 0
      %302 = vmatpush.bf16.xpose.msra.mxu0 0
      %303 = vmatpush.bf16.xpose.msra.mxu0 0
      %304 = vmatpush.bf16.xpose.msra.mxu0 0
      %305 = vmatpush.bf16.xpose.msra.mxu0 %v299
      %306 = vmatpush.bf16.xpose.msra.mxu0 %v296
      %307 = vmatpush.bf16.xpose.msra.mxu0 %v293
      %308 = vmatpush.bf16.xpose.msra.mxu0 %v290
      %309 = vmatmul.bf16.gmra.mxu0 %v278
      %v310 = vpop.f32.mrf.mxu0
      %v311 = vadd.f32 0.0, %v310
      %v312 = vpop.f32.mrf.mxu0
      %v313 = vadd.f32 0.0, %v312
      %314 = vmatmul.bf16.gmra.mxu0 %v281
      %v315 = vpop.f32.mrf.mxu0
      %v316 = vadd.f32 0.0, %v315
      %v317 = vpop.f32.mrf.mxu0
      %v318 = vadd.f32 0.0, %v317
      %319 = vmatmul.bf16.gmra.mxu0 %v284
      %v320 = vpop.f32.mrf.mxu0
      %v321 = vadd.f32 0.0, %v320
      %v322 = vpop.f32.mrf.mxu0
      %v323 = vadd.f32 0.0, %v322
      %324 = vmatmul.bf16.gmra.mxu0 %v287
      %v325 = vpop.f32.mrf.mxu0
      %v326 = vadd.f32 0.0, %v325
      %v327 = vpop.f32.mrf.mxu0
      %v328 = vadd.f32 0.0, %v327
      %329 = vdwg.mxu0
      %v330 = vmul.f32 %v311, 0.35355338
      %v331 = vmul.f32 %v313, 0.35355338
      %v332 = vmul.f32 %v316, 0.35355338
      %v333 = vmul.f32 %v318, 0.35355338
      %v334 = vmul.f32 %v321, 0.35355338
      %v335 = vmul.f32 %v323, 0.35355338
      %v336 = vmul.f32 %v326, 0.35355338
      %v337 = vmul.f32 %v328, 0.35355338
      %vm338 = vcmask 523264
      %v339 = vsel %vm338, %v330, -inf
      %340 = vmax.xlane.f32.xlu0 %v339
      %v341 = vpop.xlane.xlu0 %340
      %v342 = vsel %vm338, %v331, -inf
      %343 = vmax.xlane.f32.xlu0 %v342
      %v344 = vpop.xlane.xlu0 %343
      %v345 = vsel %vm338, %v332, -inf
      %346 = vmax.xlane.f32.xlu0 %v345
      %v347 = vpop.xlane.xlu0 %346
      %v348 = vsel %vm338, %v333, -inf
      %349 = vmax.xlane.f32.xlu0 %v348
      %v350 = vpop.xlane.xlu0 %349
      %v351 = vsel %vm338, %v334, -inf
      %352 = vmax.xlane.f32.xlu0 %v351
      %v353 = vpop.xlane.xlu0 %352
      %v354 = vsel %vm338, %v335, -inf
      %355 = vmax.xlane.f32.xlu0 %v354
      %v356 = vpop.xlane.xlu0 %355
      %v357 = vsel %vm338, %v336, -inf
      %358 = vmax.xlane.f32.xlu0 %v357
      %v359 = vpop.xlane.xlu0 %358
      %v360 = vsel %vm338, %v337, -inf
      %361 = vmax.xlane.f32.xlu0 %v360
      %v362 = vpop.xlane.xlu0 %361
      %v363 = vsub.f32 %v330, %v341
      %v364 = vsub.f32 %v331, %v344
      %v365 = vsub.f32 %v332, %v347
      %v366 = vsub.f32 %v333, %v350
      %v367 = vsub.f32 %v334, %v353
      %v368 = vsub.f32 %v335, %v356
      %v369 = vsub.f32 %v336, %v359
      %v370 = vsub.f32 %v337, %v362
      %v371 = vmul.f32 %v363, 1.442695
      %v372 = vpow.pop %v371
      %v373 = vmul.f32 %v364, 1.442695
      %v374 = vpow.pop %v373
      %v375 = vmul.f32 %v365, 1.442695
      %v376 = vpow.pop %v375
      %v377 = vmul.f32 %v366, 1.442695
      %v378 = vpow.pop %v377
      %v379 = vmul.f32 %v367, 1.442695
      %v380 = vpow.pop %v379
      %v381 = vmul.f32 %v368, 1.442695
      %v382 = vpow.pop %v381
      %v383 = vmul.f32 %v369, 1.442695
      %v384 = vpow.pop %v383
      %v385 = vmul.f32 %v370, 1.442695
      %v386 = vpow.pop %v385
      %v387 = vsel %vm338, %v372, 0.0
      %388 = vadd.xlane.f32.xlu0 %v387
      %v389 = vpop.xlane.xlu0 %388
      %v390 = vsel %vm338, %v374, 0.0
      %391 = vadd.xlane.f32.xlu0 %v390
      %v392 = vpop.xlane.xlu0 %391
      %v393 = vsel %vm338, %v376, 0.0
      %394 = vadd.xlane.f32.xlu0 %v393
      %v395 = vpop.xlane.xlu0 %394
      %v396 = vsel %vm338, %v378, 0.0
      %397 = vadd.xlane.f32.xlu0 %v396
      %v398 = vpop.xlane.xlu0 %397
      %v399 = vsel %vm338, %v380, 0.0
      %400 = vadd.xlane.f32.xlu0 %v399
      %v401 = vpop.xlane.xlu0 %400
      %v402 = vsel %vm338, %v382, 0.0
      %403 = vadd.xlane.f32.xlu0 %v402
      %v404 = vpop.xlane.xlu0 %403
      %v405 = vsel %vm338, %v384, 0.0
      %406 = vadd.xlane.f32.xlu0 %v405
      %v407 = vpop.xlane.xlu0 %406
      %v408 = vsel %vm338, %v386, 0.0
      %409 = vadd.xlane.f32.xlu0 %v408
      %v410 = vpop.xlane.xlu0 %409
      %v411 = vrcp.pop %v389
      %v412 = vrcp.pop %v392
      %v413 = vrcp.pop %v395
      %v414 = vrcp.pop %v398
      %v415 = vrcp.pop %v401
      %v416 = vrcp.pop %v404
      %v417 = vrcp.pop %v407
      %v418 = vrcp.pop %v410
      %v419 = vmul.f32 %v372, %v411
      %v420 = vmul.f32 %v374, %v412
      %v421 = vmul.f32 %v376, %v413
      %v422 = vmul.f32 %v378, %v414
      %v423 = vmul.f32 %v380, %v415
      %v424 = vmul.f32 %v382, %v416
      %v425 = vmul.f32 %v384, %v417
      %v426 = vmul.f32 %v386, %v418
      %v427 = vpack.c.bf16 %v420, %v419
      %v428 = vpack.c.bf16 %v422, %v421
      %v429 = vpack.c.bf16 %v424, %v423
      %v430 = vpack.c.bf16 %v426, %v425
      %v439 = vunpack.c.l.b16 %v228
      %v440 = vunpack.c.l.b16 %v229
      %v441 = vunpack.c.l.b16 %v230
      %v442 = vunpack.c.l.b16 %v231
      %v443 = vunpack.c.l.b16 %v232
      %v444 = vunpack.c.l.b16 %v233
      %v445 = vunpack.c.l.b16 %v234
      %v446 = vunpack.c.l.b16 %v235
      %v447 = vpack.c.b16 %v440, %v439
      %v448 = vpack.c.b16 %v442, %v441
      %v449 = vpack.c.b16 %v444, %v443
      %v450 = vpack.c.b16 %v446, %v445
      %v456 = vsel %vm338, %v427, 0
      %v459 = vsel %vm338, %v428, 0
      %v462 = vsel %vm338, %v429, 0
      %v465 = vsel %vm338, %v430, 0
      %467 = vmatpush.bf16.msra.mxu0 0
      %468 = vmatpush.bf16.msra.mxu0 0
      %469 = vmatpush.bf16.msra.mxu0 0
      %470 = vmatpush.bf16.msra.mxu0 0
      %471 = vmatpush.bf16.msra.mxu0 %v450
      %472 = vmatpush.bf16.msra.mxu0 %v449
      %473 = vmatpush.bf16.msra.mxu0 %v448
      %474 = vmatpush.bf16.msra.mxu0 %v447
      %475 = vmatmul.bf16.gmra.mxu0 %v456
      %v476 = vpop.f32.mrf.mxu0
      %v477 = vadd.f32 0.0, %v476
      %v478 = vpop.f32.mrf.mxu0
      %v479 = vadd.f32 0.0, %v478
      %480 = vmatmul.bf16.gmra.mxu0 %v459
      %v481 = vpop.f32.mrf.mxu0
      %v482 = vadd.f32 0.0, %v481
      %v483 = vpop.f32.mrf.mxu0
      %v484 = vadd.f32 0.0, %v483
      %485 = vmatmul.bf16.gmra.mxu0 %v462
      %v486 = vpop.f32.mrf.mxu0
      %v487 = vadd.f32 0.0, %v486
      %v488 = vpop.f32.mrf.mxu0
      %v489 = vadd.f32 0.0, %v488
      %490 = vmatmul.bf16.gmra.mxu0 %v465
      %v491 = vpop.f32.mrf.mxu0
      %v492 = vadd.f32 0.0, %v491
      %v493 = vpop.f32.mrf.mxu0
      %v494 = vadd.f32 0.0, %v493
      %495 = vdwg.mxu0
      %496 = vrot.lane.b32.xlu0 %v252, 120
      %v497 = vpop.permute.xlu0 %496
      %498 = vrot.lane.b32.xlu0 %v253, 120
      %v499 = vpop.permute.xlu0 %498
      %500 = vrot.lane.b32.xlu0 %v254, 120
      %v501 = vpop.permute.xlu0 %500
      %502 = vrot.lane.b32.xlu0 %v255, 120
      %v503 = vpop.permute.xlu0 %502
      %504 = vrot.lane.b32.xlu0 %v272, 120
      %v505 = vpop.permute.xlu0 %504
      %506 = vrot.lane.b32.xlu0 %v273, 120
      %v507 = vpop.permute.xlu0 %506
      %508 = vrot.lane.b32.xlu0 %v274, 120
      %v509 = vpop.permute.xlu0 %508
      %510 = vrot.lane.b32.xlu0 %v275, 120
      %v511 = vpop.permute.xlu0 %510
      %v513 = vsel %vm276, %v497, 0
      %v516 = vsel %vm276, %v499, 0
      %v519 = vsel %vm276, %v501, 0
      %v522 = vsel %vm276, %v503, 0
      %v525 = vsel %vm276, %v505, 0
      %v528 = vsel %vm276, %v507, 0
      %v531 = vsel %vm276, %v509, 0
      %v534 = vsel %vm276, %v511, 0
      %536 = vmatpush.bf16.xpose.msra.mxu0 0
      %537 = vmatpush.bf16.xpose.msra.mxu0 0
      %538 = vmatpush.bf16.xpose.msra.mxu0 0
      %539 = vmatpush.bf16.xpose.msra.mxu0 0
      %540 = vmatpush.bf16.xpose.msra.mxu0 %v534
      %541 = vmatpush.bf16.xpose.msra.mxu0 %v531
      %542 = vmatpush.bf16.xpose.msra.mxu0 %v528
      %543 = vmatpush.bf16.xpose.msra.mxu0 %v525
      %544 = vmatmul.bf16.gmra.mxu0 %v513
      %v545 = vpop.f32.mrf.mxu0
      %v546 = vadd.f32 0.0, %v545
      %v547 = vpop.f32.mrf.mxu0
      %v548 = vadd.f32 0.0, %v547
      %549 = vmatmul.bf16.gmra.mxu0 %v516
      %v550 = vpop.f32.mrf.mxu0
      %v551 = vadd.f32 0.0, %v550
      %v552 = vpop.f32.mrf.mxu0
      %v553 = vadd.f32 0.0, %v552
      %554 = vmatmul.bf16.gmra.mxu0 %v519
      %v555 = vpop.f32.mrf.mxu0
      %v556 = vadd.f32 0.0, %v555
      %v557 = vpop.f32.mrf.mxu0
      %v558 = vadd.f32 0.0, %v557
      %559 = vmatmul.bf16.gmra.mxu0 %v522
      %v560 = vpop.f32.mrf.mxu0
      %v561 = vadd.f32 0.0, %v560
      %v562 = vpop.f32.mrf.mxu0
      %v563 = vadd.f32 0.0, %v562
      %564 = vdwg.mxu0
      %v565 = vmul.f32 %v546, 0.35355338
      %v566 = vmul.f32 %v548, 0.35355338
      %v567 = vmul.f32 %v551, 0.35355338
      %v568 = vmul.f32 %v553, 0.35355338
      %v569 = vmul.f32 %v556, 0.35355338
      %v570 = vmul.f32 %v558, 0.35355338
      %v571 = vmul.f32 %v561, 0.35355338
      %v572 = vmul.f32 %v563, 0.35355338
      %v573 = vsel %vm338, %v565, -inf
      %574 = vmax.xlane.f32.xlu0 %v573
      %v575 = vpop.xlane.xlu0 %574
      %v576 = vsel %vm338, %v566, -inf
      %577 = vmax.xlane.f32.xlu0 %v576
      %v578 = vpop.xlane.xlu0 %577
      %v579 = vsel %vm338, %v567, -inf
      %580 = vmax.xlane.f32.xlu0 %v579
      %v581 = vpop.xlane.xlu0 %580
      %v582 = vsel %vm338, %v568, -inf
      %583 = vmax.xlane.f32.xlu0 %v582
      %v584 = vpop.xlane.xlu0 %583
      %v585 = vsel %vm338, %v569, -inf
      %586 = vmax.xlane.f32.xlu0 %v585
      %v587 = vpop.xlane.xlu0 %586
      %v588 = vsel %vm338, %v570, -inf
      %589 = vmax.xlane.f32.xlu0 %v588
      %v590 = vpop.xlane.xlu0 %589
      %v591 = vsel %vm338, %v571, -inf
      %592 = vmax.xlane.f32.xlu0 %v591
      %v593 = vpop.xlane.xlu0 %592
      %v594 = vsel %vm338, %v572, -inf
      %595 = vmax.xlane.f32.xlu0 %v594
      %v596 = vpop.xlane.xlu0 %595
      %v597 = vsub.f32 %v565, %v575
      %v598 = vsub.f32 %v566, %v578
      %v599 = vsub.f32 %v567, %v581
      %v600 = vsub.f32 %v568, %v584
      %v601 = vsub.f32 %v569, %v587
      %v602 = vsub.f32 %v570, %v590
      %v603 = vsub.f32 %v571, %v593
      %v604 = vsub.f32 %v572, %v596
      %v605 = vmul.f32 %v597, 1.442695
      %v606 = vpow.pop %v605
      %v607 = vmul.f32 %v598, 1.442695
      %v608 = vpow.pop %v607
      %v609 = vmul.f32 %v599, 1.442695
      %v610 = vpow.pop %v609
      %v611 = vmul.f32 %v600, 1.442695
      %v612 = vpow.pop %v611
      %v613 = vmul.f32 %v601, 1.442695
      %v614 = vpow.pop %v613
      %v615 = vmul.f32 %v602, 1.442695
      %v616 = vpow.pop %v615
      %v617 = vmul.f32 %v603, 1.442695
      %v618 = vpow.pop %v617
      %v619 = vmul.f32 %v604, 1.442695
      %v620 = vpow.pop %v619
      %v621 = vsel %vm338, %v606, 0.0
      %622 = vadd.xlane.f32.xlu0 %v621
      %v623 = vpop.xlane.xlu0 %622
      %v624 = vsel %vm338, %v608, 0.0
      %625 = vadd.xlane.f32.xlu0 %v624
      %v626 = vpop.xlane.xlu0 %625
      %v627 = vsel %vm338, %v610, 0.0
      %628 = vadd.xlane.f32.xlu0 %v627
      %v629 = vpop.xlane.xlu0 %628
      %v630 = vsel %vm338, %v612, 0.0
      %631 = vadd.xlane.f32.xlu0 %v630
      %v632 = vpop.xlane.xlu0 %631
      %v633 = vsel %vm338, %v614, 0.0
      %634 = vadd.xlane.f32.xlu0 %v633
      %v635 = vpop.xlane.xlu0 %634
      %v636 = vsel %vm338, %v616, 0.0
      %637 = vadd.xlane.f32.xlu0 %v636
      %v638 = vpop.xlane.xlu0 %637
      %v639 = vsel %vm338, %v618, 0.0
      %640 = vadd.xlane.f32.xlu0 %v639
      %v641 = vpop.xlane.xlu0 %640
      %v642 = vsel %vm338, %v620, 0.0
      %643 = vadd.xlane.f32.xlu0 %v642
      %v644 = vpop.xlane.xlu0 %643
      %v645 = vrcp.pop %v623
      %v646 = vrcp.pop %v626
      %v647 = vrcp.pop %v629
      %v648 = vrcp.pop %v632
      %v649 = vrcp.pop %v635
      %v650 = vrcp.pop %v638
      %v651 = vrcp.pop %v641
      %v652 = vrcp.pop %v644
      %v653 = vmul.f32 %v606, %v645
      %v654 = vmul.f32 %v608, %v646
      %v655 = vmul.f32 %v610, %v647
      %v656 = vmul.f32 %v612, %v648
      %v657 = vmul.f32 %v614, %v649
      %v658 = vmul.f32 %v616, %v650
      %v659 = vmul.f32 %v618, %v651
      %v660 = vmul.f32 %v620, %v652
      %v661 = vpack.c.bf16 %v654, %v653
      %v662 = vpack.c.bf16 %v656, %v655
      %v663 = vpack.c.bf16 %v658, %v657
      %v664 = vpack.c.bf16 %v660, %v659
      %665 = vrot.lane.b32.xlu0 %v447, 120
      %v666 = vpop.permute.xlu0 %665
      %667 = vrot.lane.b32.xlu0 %v448, 120
      %v668 = vpop.permute.xlu0 %667
      %669 = vrot.lane.b32.xlu0 %v449, 120
      %v670 = vpop.permute.xlu0 %669
      %671 = vrot.lane.b32.xlu0 %v450, 120
      %v672 = vpop.permute.xlu0 %671
      %v678 = vsel %vm338, %v661, 0
      %v681 = vsel %vm338, %v662, 0
      %v684 = vsel %vm338, %v663, 0
      %v687 = vsel %vm338, %v664, 0
      %689 = vmatpush.bf16.msra.mxu0 0
      %690 = vmatpush.bf16.msra.mxu0 0
      %691 = vmatpush.bf16.msra.mxu0 0
      %692 = vmatpush.bf16.msra.mxu0 0
      %693 = vmatpush.bf16.msra.mxu0 %v672
      %694 = vmatpush.bf16.msra.mxu0 %v670
      %695 = vmatpush.bf16.msra.mxu0 %v668
      %696 = vmatpush.bf16.msra.mxu0 %v666
      %697 = vmatmul.bf16.gmra.mxu0 %v678
      %v698 = vpop.f32.mrf.mxu0
      %v699 = vadd.f32 0.0, %v698
      %v700 = vpop.f32.mrf.mxu0
      %v701 = vadd.f32 0.0, %v700
      %702 = vmatmul.bf16.gmra.mxu0 %v681
      %v703 = vpop.f32.mrf.mxu0
      %v704 = vadd.f32 0.0, %v703
      %v705 = vpop.f32.mrf.mxu0
      %v706 = vadd.f32 0.0, %v705
      %707 = vmatmul.bf16.gmra.mxu0 %v684
      %v708 = vpop.f32.mrf.mxu0
      %v709 = vadd.f32 0.0, %v708
      %v710 = vpop.f32.mrf.mxu0
      %v711 = vadd.f32 0.0, %v710
      %712 = vmatmul.bf16.gmra.mxu0 %v687
      %v713 = vpop.f32.mrf.mxu0
      %v714 = vadd.f32 0.0, %v713
      %v715 = vpop.f32.mrf.mxu0
      %v716 = vadd.f32 0.0, %v715
      %717 = vdwg.mxu0
      %718 = vrot.lane.b32.xlu0 %v252, 112
      %v719 = vpop.permute.xlu0 %718
      %720 = vrot.lane.b32.xlu0 %v253, 112
      %v721 = vpop.permute.xlu0 %720
      %722 = vrot.lane.b32.xlu0 %v254, 112
      %v723 = vpop.permute.xlu0 %722
      %724 = vrot.lane.b32.xlu0 %v255, 112
      %v725 = vpop.permute.xlu0 %724
      %726 = vrot.lane.b32.xlu0 %v272, 112
      %v727 = vpop.permute.xlu0 %726
      %728 = vrot.lane.b32.xlu0 %v273, 112
      %v729 = vpop.permute.xlu0 %728
      %730 = vrot.lane.b32.xlu0 %v274, 112
      %v731 = vpop.permute.xlu0 %730
      %732 = vrot.lane.b32.xlu0 %v275, 112
      %v733 = vpop.permute.xlu0 %732
      %v735 = vsel %vm276, %v719, 0
      %v738 = vsel %vm276, %v721, 0
      %v741 = vsel %vm276, %v723, 0
      %v744 = vsel %vm276, %v725, 0
      %v747 = vsel %vm276, %v727, 0
      %v750 = vsel %vm276, %v729, 0
      %v753 = vsel %vm276, %v731, 0
      %v756 = vsel %vm276, %v733, 0
      %758 = vmatpush.bf16.xpose.msra.mxu0 0
      %759 = vmatpush.bf16.xpose.msra.mxu0 0
      %760 = vmatpush.bf16.xpose.msra.mxu0 0
      %761 = vmatpush.bf16.xpose.msra.mxu0 0
      %762 = vmatpush.bf16.xpose.msra.mxu0 %v756
      %763 = vmatpush.bf16.xpose.msra.mxu0 %v753
      %764 = vmatpush.bf16.xpose.msra.mxu0 %v750
      %765 = vmatpush.bf16.xpose.msra.mxu0 %v747
      %766 = vmatmul.bf16.gmra.mxu0 %v735
      %v767 = vpop.f32.mrf.mxu0
      %v768 = vadd.f32 0.0, %v767
      %v769 = vpop.f32.mrf.mxu0
      %v770 = vadd.f32 0.0, %v769
      %771 = vmatmul.bf16.gmra.mxu0 %v738
      %v772 = vpop.f32.mrf.mxu0
      %v773 = vadd.f32 0.0, %v772
      %v774 = vpop.f32.mrf.mxu0
      %v775 = vadd.f32 0.0, %v774
      %776 = vmatmul.bf16.gmra.mxu0 %v741
      %v777 = vpop.f32.mrf.mxu0
      %v778 = vadd.f32 0.0, %v777
      %v779 = vpop.f32.mrf.mxu0
      %v780 = vadd.f32 0.0, %v779
      %781 = vmatmul.bf16.gmra.mxu0 %v744
      %v782 = vpop.f32.mrf.mxu0
      %v783 = vadd.f32 0.0, %v782
      %v784 = vpop.f32.mrf.mxu0
      %v785 = vadd.f32 0.0, %v784
      %786 = vdwg.mxu0
      %v787 = vmul.f32 %v768, 0.35355338
      %v788 = vmul.f32 %v770, 0.35355338
      %v789 = vmul.f32 %v773, 0.35355338
      %v790 = vmul.f32 %v775, 0.35355338
      %v791 = vmul.f32 %v778, 0.35355338
      %v792 = vmul.f32 %v780, 0.35355338
      %v793 = vmul.f32 %v783, 0.35355338
      %v794 = vmul.f32 %v785, 0.35355338
      %v795 = vsel %vm338, %v787, -inf
      %796 = vmax.xlane.f32.xlu0 %v795
      %v797 = vpop.xlane.xlu0 %796
      %v798 = vsel %vm338, %v788, -inf
      %799 = vmax.xlane.f32.xlu0 %v798
      %v800 = vpop.xlane.xlu0 %799
      %v801 = vsel %vm338, %v789, -inf
      %802 = vmax.xlane.f32.xlu0 %v801
      %v803 = vpop.xlane.xlu0 %802
      %v804 = vsel %vm338, %v790, -inf
      %805 = vmax.xlane.f32.xlu0 %v804
      %v806 = vpop.xlane.xlu0 %805
      %v807 = vsel %vm338, %v791, -inf
      %808 = vmax.xlane.f32.xlu0 %v807
      %v809 = vpop.xlane.xlu0 %808
      %v810 = vsel %vm338, %v792, -inf
      %811 = vmax.xlane.f32.xlu0 %v810
      %v812 = vpop.xlane.xlu0 %811
      %v813 = vsel %vm338, %v793, -inf
      %814 = vmax.xlane.f32.xlu0 %v813
      %v815 = vpop.xlane.xlu0 %814
      %v816 = vsel %vm338, %v794, -inf
      %817 = vmax.xlane.f32.xlu0 %v816
      %v818 = vpop.xlane.xlu0 %817
      %v819 = vsub.f32 %v787, %v797
      %v820 = vsub.f32 %v788, %v800
      %v821 = vsub.f32 %v789, %v803
      %v822 = vsub.f32 %v790, %v806
      %v823 = vsub.f32 %v791, %v809
      %v824 = vsub.f32 %v792, %v812
      %v825 = vsub.f32 %v793, %v815
      %v826 = vsub.f32 %v794, %v818
      %v827 = vmul.f32 %v819, 1.442695
      %v828 = vpow.pop %v827
      %v829 = vmul.f32 %v820, 1.442695
      %v830 = vpow.pop %v829
      %v831 = vmul.f32 %v821, 1.442695
      %v832 = vpow.pop %v831
      %v833 = vmul.f32 %v822, 1.442695
      %v834 = vpow.pop %v833
      %v835 = vmul.f32 %v823, 1.442695
      %v836 = vpow.pop %v835
      %v837 = vmul.f32 %v824, 1.442695
      %v838 = vpow.pop %v837
      %v839 = vmul.f32 %v825, 1.442695
      %v840 = vpow.pop %v839
      %v841 = vmul.f32 %v826, 1.442695
      %v842 = vpow.pop %v841
      %v843 = vsel %vm338, %v828, 0.0
      %844 = vadd.xlane.f32.xlu0 %v843
      %v845 = vpop.xlane.xlu0 %844
      %v846 = vsel %vm338, %v830, 0.0
      %847 = vadd.xlane.f32.xlu0 %v846
      %v848 = vpop.xlane.xlu0 %847
      %v849 = vsel %vm338, %v832, 0.0
      %850 = vadd.xlane.f32.xlu0 %v849
      %v851 = vpop.xlane.xlu0 %850
      %v852 = vsel %vm338, %v834, 0.0
      %853 = vadd.xlane.f32.xlu0 %v852
      %v854 = vpop.xlane.xlu0 %853
      %v855 = vsel %vm338, %v836, 0.0
      %856 = vadd.xlane.f32.xlu0 %v855
      %v857 = vpop.xlane.xlu0 %856
      %v858 = vsel %vm338, %v838, 0.0
      %859 = vadd.xlane.f32.xlu0 %v858
      %v860 = vpop.xlane.xlu0 %859
      %v861 = vsel %vm338, %v840, 0.0
      %862 = vadd.xlane.f32.xlu0 %v861
      %v863 = vpop.xlane.xlu0 %862
      %v864 = vsel %vm338, %v842, 0.0
      %865 = vadd.xlane.f32.xlu0 %v864
      %v866 = vpop.xlane.xlu0 %865
      %v867 = vrcp.pop %v845
      %v868 = vrcp.pop %v848
      %v869 = vrcp.pop %v851
      %v870 = vrcp.pop %v854
      %v871 = vrcp.pop %v857
      %v872 = vrcp.pop %v860
      %v873 = vrcp.pop %v863
      %v874 = vrcp.pop %v866
      %v875 = vmul.f32 %v828, %v867
      %v876 = vmul.f32 %v830, %v868
      %v877 = vmul.f32 %v832, %v869
      %v878 = vmul.f32 %v834, %v870
      %v879 = vmul.f32 %v836, %v871
      %v880 = vmul.f32 %v838, %v872
      %v881 = vmul.f32 %v840, %v873
      %v882 = vmul.f32 %v842, %v874
      %v883 = vpack.c.bf16 %v876, %v875
      %v884 = vpack.c.bf16 %v878, %v877
      %v885 = vpack.c.bf16 %v880, %v879
      %v886 = vpack.c.bf16 %v882, %v881
      %887 = vrot.lane.b32.xlu0 %v447, 112
      %v888 = vpop.permute.xlu0 %887
      %889 = vrot.lane.b32.xlu0 %v448, 112
      %v890 = vpop.permute.xlu0 %889
      %891 = vrot.lane.b32.xlu0 %v449, 112
      %v892 = vpop.permute.xlu0 %891
      %893 = vrot.lane.b32.xlu0 %v450, 112
      %v894 = vpop.permute.xlu0 %893
      %v900 = vsel %vm338, %v883, 0
      %v903 = vsel %vm338, %v884, 0
      %v906 = vsel %vm338, %v885, 0
      %v909 = vsel %vm338, %v886, 0
      %911 = vmatpush.bf16.msra.mxu0 0
      %912 = vmatpush.bf16.msra.mxu0 0
      %913 = vmatpush.bf16.msra.mxu0 0
      %914 = vmatpush.bf16.msra.mxu0 0
      %915 = vmatpush.bf16.msra.mxu0 %v894
      %916 = vmatpush.bf16.msra.mxu0 %v892
      %917 = vmatpush.bf16.msra.mxu0 %v890
      %918 = vmatpush.bf16.msra.mxu0 %v888
      %919 = vmatmul.bf16.gmra.mxu0 %v900
      %v920 = vpop.f32.mrf.mxu0
      %v921 = vadd.f32 0.0, %v920
      %v922 = vpop.f32.mrf.mxu0
      %v923 = vadd.f32 0.0, %v922
      %924 = vmatmul.bf16.gmra.mxu0 %v903
      %v925 = vpop.f32.mrf.mxu0
      %v926 = vadd.f32 0.0, %v925
      %v927 = vpop.f32.mrf.mxu0
      %v928 = vadd.f32 0.0, %v927
      %929 = vmatmul.bf16.gmra.mxu0 %v906
      %v930 = vpop.f32.mrf.mxu0
      %v931 = vadd.f32 0.0, %v930
      %v932 = vpop.f32.mrf.mxu0
      %v933 = vadd.f32 0.0, %v932
      %934 = vmatmul.bf16.gmra.mxu0 %v909
      %v935 = vpop.f32.mrf.mxu0
      %v936 = vadd.f32 0.0, %v935
      %v937 = vpop.f32.mrf.mxu0
      %v938 = vadd.f32 0.0, %v937
      %939 = vdwg.mxu0
      %940 = vrot.lane.b32.xlu0 %v252, 104
      %v941 = vpop.permute.xlu0 %940
      %942 = vrot.lane.b32.xlu0 %v253, 104
      %v943 = vpop.permute.xlu0 %942
      %944 = vrot.lane.b32.xlu0 %v254, 104
      %v945 = vpop.permute.xlu0 %944
      %946 = vrot.lane.b32.xlu0 %v255, 104
      %v947 = vpop.permute.xlu0 %946
      %948 = vrot.lane.b32.xlu0 %v272, 104
      %v949 = vpop.permute.xlu0 %948
      %950 = vrot.lane.b32.xlu0 %v273, 104
      %v951 = vpop.permute.xlu0 %950
      %952 = vrot.lane.b32.xlu0 %v274, 104
      %v953 = vpop.permute.xlu0 %952
      %954 = vrot.lane.b32.xlu0 %v275, 104
      %v955 = vpop.permute.xlu0 %954
      %v957 = vsel %vm276, %v941, 0
      %v960 = vsel %vm276, %v943, 0
      %v963 = vsel %vm276, %v945, 0
      %v966 = vsel %vm276, %v947, 0
      %v969 = vsel %vm276, %v949, 0
      %v972 = vsel %vm276, %v951, 0
      %v975 = vsel %vm276, %v953, 0
      %v978 = vsel %vm276, %v955, 0
      %980 = vmatpush.bf16.xpose.msra.mxu0 0
      %981 = vmatpush.bf16.xpose.msra.mxu0 0
      %982 = vmatpush.bf16.xpose.msra.mxu0 0
      %983 = vmatpush.bf16.xpose.msra.mxu0 0
      %984 = vmatpush.bf16.xpose.msra.mxu0 %v978
      %985 = vmatpush.bf16.xpose.msra.mxu0 %v975
      %986 = vmatpush.bf16.xpose.msra.mxu0 %v972
      %987 = vmatpush.bf16.xpose.msra.mxu0 %v969
      %988 = vmatmul.bf16.gmra.mxu0 %v957
      %v989 = vpop.f32.mrf.mxu0
      %v990 = vadd.f32 0.0, %v989
      %v991 = vpop.f32.mrf.mxu0
      %v992 = vadd.f32 0.0, %v991
      %993 = vmatmul.bf16.gmra.mxu0 %v960
      %v994 = vpop.f32.mrf.mxu0
      %v995 = vadd.f32 0.0, %v994
      %v996 = vpop.f32.mrf.mxu0
      %v997 = vadd.f32 0.0, %v996
      %998 = vmatmul.bf16.gmra.mxu0 %v963
      %v999 = vpop.f32.mrf.mxu0
      %v1000 = vadd.f32 0.0, %v999
      %v1001 = vpop.f32.mrf.mxu0
      %v1002 = vadd.f32 0.0, %v1001
      %1003 = vmatmul.bf16.gmra.mxu0 %v966
      %v1004 = vpop.f32.mrf.mxu0
      %v1005 = vadd.f32 0.0, %v1004
      %v1006 = vpop.f32.mrf.mxu0
      %v1007 = vadd.f32 0.0, %v1006
      %1008 = vdwg.mxu0
      %v1009 = vmul.f32 %v990, 0.35355338
      %v1010 = vmul.f32 %v992, 0.35355338
      %v1011 = vmul.f32 %v995, 0.35355338
      %v1012 = vmul.f32 %v997, 0.35355338
      %v1013 = vmul.f32 %v1000, 0.35355338
      %v1014 = vmul.f32 %v1002, 0.35355338
      %v1015 = vmul.f32 %v1005, 0.35355338
      %v1016 = vmul.f32 %v1007, 0.35355338
      %v1017 = vsel %vm338, %v1009, -inf
      %1018 = vmax.xlane.f32.xlu0 %v1017
      %v1019 = vpop.xlane.xlu0 %1018
      %v1020 = vsel %vm338, %v1010, -inf
      %1021 = vmax.xlane.f32.xlu0 %v1020
      %v1022 = vpop.xlane.xlu0 %1021
      %v1023 = vsel %vm338, %v1011, -inf
      %1024 = vmax.xlane.f32.xlu0 %v1023
      %v1025 = vpop.xlane.xlu0 %1024
      %v1026 = vsel %vm338, %v1012, -inf
      %1027 = vmax.xlane.f32.xlu0 %v1026
      %v1028 = vpop.xlane.xlu0 %1027
      %v1029 = vsel %vm338, %v1013, -inf
      %1030 = vmax.xlane.f32.xlu0 %v1029
      %v1031 = vpop.xlane.xlu0 %1030
      %v1032 = vsel %vm338, %v1014, -inf
      %1033 = vmax.xlane.f32.xlu0 %v1032
      %v1034 = vpop.xlane.xlu0 %1033
      %v1035 = vsel %vm338, %v1015, -inf
      %1036 = vmax.xlane.f32.xlu0 %v1035
      %v1037 = vpop.xlane.xlu0 %1036
      %v1038 = vsel %vm338, %v1016, -inf
      %1039 = vmax.xlane.f32.xlu0 %v1038
      %v1040 = vpop.xlane.xlu0 %1039
      %v1041 = vsub.f32 %v1009, %v1019
      %v1042 = vsub.f32 %v1010, %v1022
      %v1043 = vsub.f32 %v1011, %v1025
      %v1044 = vsub.f32 %v1012, %v1028
      %v1045 = vsub.f32 %v1013, %v1031
      %v1046 = vsub.f32 %v1014, %v1034
      %v1047 = vsub.f32 %v1015, %v1037
      %v1048 = vsub.f32 %v1016, %v1040
      %v1049 = vmul.f32 %v1041, 1.442695
      %v1050 = vpow.pop %v1049
      %v1051 = vmul.f32 %v1042, 1.442695
      %v1052 = vpow.pop %v1051
      %v1053 = vmul.f32 %v1043, 1.442695
      %v1054 = vpow.pop %v1053
      %v1055 = vmul.f32 %v1044, 1.442695
      %v1056 = vpow.pop %v1055
      %v1057 = vmul.f32 %v1045, 1.442695
      %v1058 = vpow.pop %v1057
      %v1059 = vmul.f32 %v1046, 1.442695
      %v1060 = vpow.pop %v1059
      %v1061 = vmul.f32 %v1047, 1.442695
      %v1062 = vpow.pop %v1061
      %v1063 = vmul.f32 %v1048, 1.442695
      %v1064 = vpow.pop %v1063
      %v1065 = vsel %vm338, %v1050, 0.0
      %1066 = vadd.xlane.f32.xlu0 %v1065
      %v1067 = vpop.xlane.xlu0 %1066
      %v1068 = vsel %vm338, %v1052, 0.0
      %1069 = vadd.xlane.f32.xlu0 %v1068
      %v1070 = vpop.xlane.xlu0 %1069
      %v1071 = vsel %vm338, %v1054, 0.0
      %1072 = vadd.xlane.f32.xlu0 %v1071
      %v1073 = vpop.xlane.xlu0 %1072
      %v1074 = vsel %vm338, %v1056, 0.0
      %1075 = vadd.xlane.f32.xlu0 %v1074
      %v1076 = vpop.xlane.xlu0 %1075
      %v1077 = vsel %vm338, %v1058, 0.0
      %1078 = vadd.xlane.f32.xlu0 %v1077
      %v1079 = vpop.xlane.xlu0 %1078
      %v1080 = vsel %vm338, %v1060, 0.0
      %1081 = vadd.xlane.f32.xlu0 %v1080
      %v1082 = vpop.xlane.xlu0 %1081
      %v1083 = vsel %vm338, %v1062, 0.0
      %1084 = vadd.xlane.f32.xlu0 %v1083
      %v1085 = vpop.xlane.xlu0 %1084
      %v1086 = vsel %vm338, %v1064, 0.0
      %1087 = vadd.xlane.f32.xlu0 %v1086
      %v1088 = vpop.xlane.xlu0 %1087
      %v1089 = vrcp.pop %v1067
      %v1090 = vrcp.pop %v1070
      %v1091 = vrcp.pop %v1073
      %v1092 = vrcp.pop %v1076
      %v1093 = vrcp.pop %v1079
      %v1094 = vrcp.pop %v1082
      %v1095 = vrcp.pop %v1085
      %v1096 = vrcp.pop %v1088
      %v1097 = vmul.f32 %v1050, %v1089
      %v1098 = vmul.f32 %v1052, %v1090
      %v1099 = vmul.f32 %v1054, %v1091
      %v1100 = vmul.f32 %v1056, %v1092
      %v1101 = vmul.f32 %v1058, %v1093
      %v1102 = vmul.f32 %v1060, %v1094
      %v1103 = vmul.f32 %v1062, %v1095
      %v1104 = vmul.f32 %v1064, %v1096
      %v1105 = vpack.c.bf16 %v1098, %v1097
      %v1106 = vpack.c.bf16 %v1100, %v1099
      %v1107 = vpack.c.bf16 %v1102, %v1101
      %v1108 = vpack.c.bf16 %v1104, %v1103
      %1109 = vrot.lane.b32.xlu0 %v447, 104
      %v1110 = vpop.permute.xlu0 %1109
      %1111 = vrot.lane.b32.xlu0 %v448, 104
      %v1112 = vpop.permute.xlu0 %1111
      %1113 = vrot.lane.b32.xlu0 %v449, 104
      %v1114 = vpop.permute.xlu0 %1113
      %1115 = vrot.lane.b32.xlu0 %v450, 104
      %v1116 = vpop.permute.xlu0 %1115
      %v1122 = vsel %vm338, %v1105, 0
      %v1125 = vsel %vm338, %v1106, 0
      %v1128 = vsel %vm338, %v1107, 0
      %v1131 = vsel %vm338, %v1108, 0
      %1133 = vmatpush.bf16.msra.mxu0 0
      %1134 = vmatpush.bf16.msra.mxu0 0
      %1135 = vmatpush.bf16.msra.mxu0 0
      %1136 = vmatpush.bf16.msra.mxu0 0
      %1137 = vmatpush.bf16.msra.mxu0 %v1116
      %1138 = vmatpush.bf16.msra.mxu0 %v1114
      %1139 = vmatpush.bf16.msra.mxu0 %v1112
      %1140 = vmatpush.bf16.msra.mxu0 %v1110
      %1141 = vmatmul.bf16.gmra.mxu0 %v1122
      %v1142 = vpop.f32.mrf.mxu0
      %v1143 = vadd.f32 0.0, %v1142
      %v1144 = vpop.f32.mrf.mxu0
      %v1145 = vadd.f32 0.0, %v1144
      %1146 = vmatmul.bf16.gmra.mxu0 %v1125
      %v1147 = vpop.f32.mrf.mxu0
      %v1148 = vadd.f32 0.0, %v1147
      %v1149 = vpop.f32.mrf.mxu0
      %v1150 = vadd.f32 0.0, %v1149
      %1151 = vmatmul.bf16.gmra.mxu0 %v1128
      %v1152 = vpop.f32.mrf.mxu0
      %v1153 = vadd.f32 0.0, %v1152
      %v1154 = vpop.f32.mrf.mxu0
      %v1155 = vadd.f32 0.0, %v1154
      %1156 = vmatmul.bf16.gmra.mxu0 %v1131
      %v1157 = vpop.f32.mrf.mxu0
      %v1158 = vadd.f32 0.0, %v1157
      %v1159 = vpop.f32.mrf.mxu0
      %v1160 = vadd.f32 0.0, %v1159
      %1161 = vdwg.mxu0
      %1170 = vrot.lane.b32.xlu0 %v699, 8
      %v1171 = vpop.permute.xlu0 %1170
      %1172 = vrot.lane.b32.xlu0 %v701, 8
      %v1173 = vpop.permute.xlu0 %1172
      %1174 = vrot.lane.b32.xlu0 %v704, 8
      %v1175 = vpop.permute.xlu0 %1174
      %1176 = vrot.lane.b32.xlu0 %v706, 8
      %v1177 = vpop.permute.xlu0 %1176
      %1178 = vrot.lane.b32.xlu0 %v709, 8
      %v1179 = vpop.permute.xlu0 %1178
      %1180 = vrot.lane.b32.xlu0 %v711, 8
      %v1181 = vpop.permute.xlu0 %1180
      %1182 = vrot.lane.b32.xlu0 %v714, 8
      %v1183 = vpop.permute.xlu0 %1182
      %1184 = vrot.lane.b32.xlu0 %v716, 8
      %v1185 = vpop.permute.xlu0 %1184
      %1202 = vrot.lane.b32.xlu0 %v921, 16
      %v1203 = vpop.permute.xlu0 %1202
      %1204 = vrot.lane.b32.xlu0 %v923, 16
      %v1205 = vpop.permute.xlu0 %1204
      %1206 = vrot.lane.b32.xlu0 %v926, 16
      %v1207 = vpop.permute.xlu0 %1206
      %1208 = vrot.lane.b32.xlu0 %v928, 16
      %v1209 = vpop.permute.xlu0 %1208
      %1210 = vrot.lane.b32.xlu0 %v931, 16
      %v1211 = vpop.permute.xlu0 %1210
      %1212 = vrot.lane.b32.xlu0 %v933, 16
      %v1213 = vpop.permute.xlu0 %1212
      %1214 = vrot.lane.b32.xlu0 %v936, 16
      %v1215 = vpop.permute.xlu0 %1214
      %1216 = vrot.lane.b32.xlu0 %v938, 16
      %v1217 = vpop.permute.xlu0 %1216
      %1234 = vrot.lane.b32.xlu0 %v1143, 24
      %v1235 = vpop.permute.xlu0 %1234
      %1236 = vrot.lane.b32.xlu0 %v1145, 24
      %v1237 = vpop.permute.xlu0 %1236
      %1238 = vrot.lane.b32.xlu0 %v1148, 24
      %v1239 = vpop.permute.xlu0 %1238
      %1240 = vrot.lane.b32.xlu0 %v1150, 24
      %v1241 = vpop.permute.xlu0 %1240
      %1242 = vrot.lane.b32.xlu0 %v1153, 24
      %v1243 = vpop.permute.xlu0 %1242
      %1244 = vrot.lane.b32.xlu0 %v1155, 24
      %v1245 = vpop.permute.xlu0 %1244
      %1246 = vrot.lane.b32.xlu0 %v1158, 24
      %v1247 = vpop.permute.xlu0 %1246
      %1248 = vrot.lane.b32.xlu0 %v1160, 24
      %v1249 = vpop.permute.xlu0 %1248
      %v1258 = vsel %vm276, %v477, %v1171
      %v1259 = vsel %vm276, %v479, %v1173
      %v1260 = vsel %vm276, %v482, %v1175
      %v1261 = vsel %vm276, %v484, %v1177
      %v1262 = vsel %vm276, %v487, %v1179
      %v1263 = vsel %vm276, %v489, %v1181
      %v1264 = vsel %vm276, %v492, %v1183
      %v1265 = vsel %vm276, %v494, %v1185
      %vm1266 = vcmask 130048
      %v1267 = vsel %vm1266, %v1258, %v1203
      %v1268 = vsel %vm1266, %v1259, %v1205
      %v1269 = vsel %vm1266, %v1260, %v1207
      %v1270 = vsel %vm1266, %v1261, %v1209
      %v1271 = vsel %vm1266, %v1262, %v1211
      %v1272 = vsel %vm1266, %v1263, %v1213
      %v1273 = vsel %vm1266, %v1264, %v1215
      %v1274 = vsel %vm1266, %v1265, %v1217
      %vm1275 = vcmask 195584
      %v1276 = vsel %vm1275, %v1267, %v1235
      %v1277 = vsel %vm1275, %v1268, %v1237
      %v1278 = vsel %vm1275, %v1269, %v1239
      %v1279 = vsel %vm1275, %v1270, %v1241
      %v1280 = vsel %vm1275, %v1271, %v1243
      %v1281 = vsel %vm1275, %v1272, %v1245
      %v1282 = vsel %vm1275, %v1273, %v1247
      %v1283 = vsel %vm1275, %v1274, %v1249
      %vm1284 = vcmask 261120
      %1285 = vst.msk [vmem:[%s210] sm:$0xff] %vm1284, %v1276
      %1286 = vst.msk [vmem:[%s210 + $0x8] sm:$0xff] %vm1284, %v1277
      %1287 = vst.msk [vmem:[%s210 + $0x10] sm:$0xff] %vm1284, %v1278
      %1288 = vst.msk [vmem:[%s210 + $0x18] sm:$0xff] %vm1284, %v1279
      %1289 = vst.msk [vmem:[%s210 + $0x20] sm:$0xff] %vm1284, %v1280
      %1290 = vst.msk [vmem:[%s210 + $0x28] sm:$0xff] %vm1284, %v1281
      %1291 = vst.msk [vmem:[%s210 + $0x30] sm:$0xff] %vm1284, %v1282
      %1292 = vst.msk [vmem:[%s210 + $0x38] sm:$0xff] %vm1284, %v1283
      %p1293 = scmp.lt.s32.totalorder %s14, 1
      %s1294 = scalar_select %p1293, %s14, 1
      %s1295 = smul.addr %s1294, 8
      %s1296 = smul.addr %s1295, 8
      %s1297 = scalar_lea.vmem %s3, %s1296
      // Predicated region
      $region33: #{_lambda_.38} parent=31 // pred_check
        %p1298 = pneg %p110
      $region34: #{_lambda_.38} parent=31 // pred_check_branch
        %1300 = sbr.rel (%p1298) target = $region36
      $region35: #{_lambda_.38} parent=31 // pred_region
        _
      $region36: #{_lambda_.38} parent=31 // pred_fallthru
        _
    $region32: #{_lambda_.38} parent=5 // pred_fallthru
      _
    %p1301 = scmp.le.s32.totalorder 2, %s9
    // Predicated region
    $region37: #{_lambda_.38} parent=5 // pred_check
      %p1302 = pneg %p1301
    $region38: #{_lambda_.38} parent=5 // pred_check_branch
      %1304 = sbr.rel (%p1302) target = $region40
    $region39: #{_lambda_.38} parent=5 // pred_region
      %s1305 = ssub.s32 %s9, 2
      // Predicated region
      $region41: #{_lambda_.38} parent=39 // pred_check
        %p1306 = pneg %p116
      $region42: #{_lambda_.38} parent=39 // pred_check_branch
        %1308 = sbr.rel (%p1306) target = $region44
      $region43: #{_lambda_.38} parent=39 // pred_region
        %p1309 = scmp.lt.s32.totalorder %s15, 1
        %s1310 = scalar_select %p1309, %s15, 1
        %s1311 = smul.addr %s1310, 8
        %s1312 = smul.addr %s1311, 8
        %s1313 = scalar_lea.vmem %s3, %s1312
      $region44: #{_lambda_.38} parent=39 // pred_fallthru
        _
    $region40: #{_lambda_.38} parent=5 // pred_fallthru
      _
  $region6: #{_lambda_.38} parent=0 // loop_footer
    %s13 = sadd.s32 1, %s9
  $region7: #{_lambda_.38} parent=0 // loop_footer_branch
    %8 = sbr.rel target = $region3
  $region8: #{_lambda_.38} parent=0 // loop_exit
    _

// kernel: _lambda_.41
$region0: #{_lambda_.41}
  #allocation0 [shape = 'u32[]', space=smem, size = 0x4, offset = 0x4, fixed_abs, tag = 'smem constant byte address 0x4 - core index']
  #allocation1 [shape = 'u32[72,128]{1,0:T(1,128)}', space=vmem, size = 0x9000, scoped, tag = 'internal scratch']
  #allocation2 [shape = 'f32[128,128]{1,0:T(8,128)}', space=vmem, size = 0x10000, scoped, tag = 'scratch operand']
  %s0 = inlined_call_operand.vmem [shape: bf16[128,128], index: 0, kind: input, shape index: {}]
  %s1 = inlined_call_operand.vmem [shape: bf16[128,128], index: 1, kind: input, shape index: {}]
  %s2 = inlined_call_operand.vmem [shape: f32[1,128], index: 2, kind: input, shape index: {}]
  %s3 = inlined_call_operand.vmem [shape: f32[128,128], index: 3, kind: output, shape index: {}]
  %s4 = sld [smem:[#allocation0]]
  $region30: #{_lambda_.41} parent=0
    _
  %s6 = ssub.s32 1, %s4
  %s7 = scalar_select 0, %s6, %s4
  // Predicated region
  $region2: #{_lambda_.41} parent=0 // pred_check
    _
  $region3: #{_lambda_.41} parent=0 // pred_check_branch
    %9 = sbr.rel (0) target = $region5
  $region4: #{_lambda_.41} parent=0 // pred_region
    _
  $region5: #{_lambda_.41} parent=0 // pred_fallthru
    _
  // Predicated region
  $region6: #{_lambda_.41} parent=0 // pred_check
    _
  $region7: #{_lambda_.41} parent=0 // pred_check_branch
    %11 = sbr.rel (0) target = $region9
  $region8: #{_lambda_.41} parent=0 // pred_region
    _
  $region9: #{_lambda_.41} parent=0 // pred_fallthru
    _
  // Predicated region
  $region10: #{_lambda_.41} parent=0 // pred_check
    _
  $region11: #{_lambda_.41} parent=0 // pred_check_branch
    %13 = sbr.rel (0) target = $region13
  $region12: #{_lambda_.41} parent=0 // pred_region
    _
  $region13: #{_lambda_.41} parent=0 // pred_fallthru
    _
  %p14 = scmp.eq.s32.totalorder 0, 0
  // Predicated region
  $region14: #{_lambda_.41} parent=0 // pred_check
    %p15 = pneg %p14
  $region15: #{_lambda_.41} parent=0 // pred_check_branch
    %17 = sbr.rel (%p15) target = $region17
  $region16: #{_lambda_.41} parent=0 // pred_region
    %18 = vst [vmem:[#allocation2] sm:$0xff] 0.0
    %19 = vst [vmem:[#allocation2 + $0x8] sm:$0xff] 0.0
    %20 = vst [vmem:[#allocation2 + $0x10] sm:$0xff] 0.0
    %21 = vst [vmem:[#allocation2 + $0x18] sm:$0xff] 0.0
    %22 = vst [vmem:[#allocation2 + $0x20] sm:$0xff] 0.0
    %23 = vst [vmem:[#allocation2 + $0x28] sm:$0xff] 0.0
    %24 = vst [vmem:[#allocation2 + $0x30] sm:$0xff] 0.0
    %25 = vst [vmem:[#allocation2 + $0x38] sm:$0xff] 0.0
    %26 = vst [vmem:[#allocation2 + $0x40] sm:$0xff] 0.0
    %27 = vst [vmem:[#allocation2 + $0x48] sm:$0xff] 0.0
    %28 = vst [vmem:[#allocation2 + $0x50] sm:$0xff] 0.0
    %29 = vst [vmem:[#allocation2 + $0x58] sm:$0xff] 0.0
    %30 = vst [vmem:[#allocation2 + $0x60] sm:$0xff] 0.0
    %31 = vst [vmem:[#allocation2 + $0x68] sm:$0xff] 0.0
    %32 = vst [vmem:[#allocation2 + $0x70] sm:$0xff] 0.0
    %33 = vst [vmem:[#allocation2 + $0x78] sm:$0xff] 0.0
  $region17: #{_lambda_.41} parent=0 // pred_fallthru
    _
  %v34 = vld [vmem:[#allocation2] sm:$0xff]
  %v35 = vld [vmem:[#allocation2 + $0x8] sm:$0xff]
  %v36 = vld [vmem:[#allocation2 + $0x10] sm:$0xff]
  %v37 = vld [vmem:[#allocation2 + $0x18] sm:$0xff]
  %v38 = vld [vmem:[#allocation2 + $0x20] sm:$0xff]
  %v39 = vld [vmem:[#allocation2 + $0x28] sm:$0xff]
  %v40 = vld [vmem:[#allocation2 + $0x30] sm:$0xff]
  %v41 = vld [vmem:[#allocation2 + $0x38] sm:$0xff]
  %v42 = vld [vmem:[#allocation2 + $0x40] sm:$0xff]
  %v43 = vld [vmem:[#allocation2 + $0x48] sm:$0xff]
  %v44 = vld [vmem:[#allocation2 + $0x50] sm:$0xff]
  %v45 = vld [vmem:[#allocation2 + $0x58] sm:$0xff]
  %v46 = vld [vmem:[#allocation2 + $0x60] sm:$0xff]
  %v47 = vld [vmem:[#allocation2 + $0x68] sm:$0xff]
  %v48 = vld [vmem:[#allocation2 + $0x70] sm:$0xff]
  %v49 = vld [vmem:[#allocation2 + $0x78] sm:$0xff]
  %v50 = vld [vmem:[%s0] sm:$0xf]
  %v51 = vld [vmem:[%s0 + $0x4] sm:$0xf]
  %v52 = vld [vmem:[%s0 + $0x8] sm:$0xf]
  %v53 = vld [vmem:[%s0 + $0xc] sm:$0xf]
  %v54 = vld [vmem:[%s0 + $0x10] sm:$0xf]
  %v55 = vld [vmem:[%s0 + $0x14] sm:$0xf]
  %v56 = vld [vmem:[%s0 + $0x18] sm:$0xf]
  %v57 = vld [vmem:[%s0 + $0x1c] sm:$0xf]
  %v58 = vld [vmem:[%s0 + $0x20] sm:$0xf]
  %v59 = vld [vmem:[%s0 + $0x24] sm:$0xf]
  %v60 = vld [vmem:[%s0 + $0x28] sm:$0xf]
  %v61 = vld [vmem:[%s0 + $0x2c] sm:$0xf]
  %v62 = vld [vmem:[%s0 + $0x30] sm:$0xf]
  %v63 = vld [vmem:[%s0 + $0x34] sm:$0xf]
  %v64 = vld [vmem:[%s0 + $0x38] sm:$0xf]
  %v65 = vld [vmem:[%s0 + $0x3c] sm:$0xf]
  %v66 = vld [vmem:[%s1] sm:$0xf]
  %v67 = vld [vmem:[%s1 + $0x4] sm:$0xf]
  %v68 = vld [vmem:[%s1 + $0x8] sm:$0xf]
  %v69 = vld [vmem:[%s1 + $0xc] sm:$0xf]
  %v70 = vld [vmem:[%s1 + $0x10] sm:$0xf]
  %v71 = vld [vmem:[%s1 + $0x14] sm:$0xf]
  %v72 = vld [vmem:[%s1 + $0x18] sm:$0xf]
  %v73 = vld [vmem:[%s1 + $0x1c] sm:$0xf]
  %v74 = vld [vmem:[%s1 + $0x20] sm:$0xf]
  %v75 = vld [vmem:[%s1 + $0x24] sm:$0xf]
  %v76 = vld [vmem:[%s1 + $0x28] sm:$0xf]
  %v77 = vld [vmem:[%s1 + $0x2c] sm:$0xf]
  %v78 = vld [vmem:[%s1 + $0x30] sm:$0xf]
  %v79 = vld [vmem:[%s1 + $0x34] sm:$0xf]
  %v80 = vld [vmem:[%s1 + $0x38] sm:$0xf]
  %v81 = vld [vmem:[%s1 + $0x3c] sm:$0xf]
  %v98 = vunpack.c.l.b16 %v50
  %v99 = vunpack.c.l.b16 %v51
  %v100 = vunpack.c.l.b16 %v52
  %v101 = vunpack.c.l.b16 %v53
  %v102 = vunpack.c.l.b16 %v54
  %v103 = vunpack.c.l.b16 %v55
  %v104 = vunpack.c.l.b16 %v56
  %v105 = vunpack.c.l.b16 %v57
  %v106 = vunpack.c.l.b16 %v58
  %v107 = vunpack.c.l.b16 %v59
  %v108 = vunpack.c.l.b16 %v60
  %v109 = vunpack.c.l.b16 %v61
  %v110 = vunpack.c.l.b16 %v62
  %v111 = vunpack.c.l.b16 %v63
  %v112 = vunpack.c.l.b16 %v64
  %v113 = vunpack.c.l.b16 %v65
  %v114 = vpack.c.b16 %v99, %v98
  %v115 = vpack.c.b16 %v101, %v100
  %v116 = vpack.c.b16 %v103, %v102
  %v117 = vpack.c.b16 %v105, %v104
  %v118 = vpack.c.b16 %v107, %v106
  %v119 = vpack.c.b16 %v109, %v108
  %v120 = vpack.c.b16 %v111, %v110
  %v121 = vpack.c.b16 %v113, %v112
  %v146 = vunpack.c.l.b16 %v66
  %v147 = vunpack.c.l.b16 %v67
  %v148 = vunpack.c.l.b16 %v68
  %v149 = vunpack.c.l.b16 %v69
  %v150 = vunpack.c.l.b16 %v70
  %v151 = vunpack.c.l.b16 %v71
  %v152 = vunpack.c.l.b16 %v72
  %v153 = vunpack.c.l.b16 %v73
  %v154 = vunpack.c.l.b16 %v74
  %v155 = vunpack.c.l.b16 %v75
  %v156 = vunpack.c.l.b16 %v76
  %v157 = vunpack.c.l.b16 %v77
  %v158 = vunpack.c.l.b16 %v78
  %v159 = vunpack.c.l.b16 %v79
  %v160 = vunpack.c.l.b16 %v80
  %v161 = vunpack.c.l.b16 %v81
  %v162 = vpack.c.b16 %v147, %v146
  %v163 = vpack.c.b16 %v149, %v148
  %v164 = vpack.c.b16 %v151, %v150
  %v165 = vpack.c.b16 %v153, %v152
  %v166 = vpack.c.b16 %v155, %v154
  %v167 = vpack.c.b16 %v157, %v156
  %v168 = vpack.c.b16 %v159, %v158
  %v169 = vpack.c.b16 %v161, %v160
  %178 = vmatpush.bf16.msra.mxu0 %v169
  %179 = vmatpush.bf16.msra.mxu0 %v168
  %180 = vmatpush.bf16.msra.mxu0 %v167
  %181 = vmatpush.bf16.msra.mxu0 %v166
  %182 = vmatpush.bf16.msra.mxu0 %v165
  %183 = vmatpush.bf16.msra.mxu0 %v164
  %184 = vmatpush.bf16.msra.mxu0 %v163
  %185 = vmatpush.bf16.msra.mxu0 %v162
  %186 = vmatmul.bf16.gmra.mxu0 %v114
  %v187 = vpop.f32.mrf.mxu0
  %v188 = vadd.f32 0.0, %v187
  %v189 = vpop.f32.mrf.mxu0
  %v190 = vadd.f32 0.0, %v189
  %191 = vmatmul.bf16.gmra.mxu0 %v115
  %v192 = vpop.f32.mrf.mxu0
  %v193 = vadd.f32 0.0, %v192
  %v194 = vpop.f32.mrf.mxu0
  %v195 = vadd.f32 0.0, %v194
  %196 = vmatmul.bf16.gmra.mxu0 %v116
  %v197 = vpop.f32.mrf.mxu0
  %v198 = vadd.f32 0.0, %v197
  %v199 = vpop.f32.mrf.mxu0
  %v200 = vadd.f32 0.0, %v199
  %201 = vmatmul.bf16.gmra.mxu0 %v117
  %v202 = vpop.f32.mrf.mxu0
  %v203 = vadd.f32 0.0, %v202
  %v204 = vpop.f32.mrf.mxu0
  %v205 = vadd.f32 0.0, %v204
  %206 = vmatmul.bf16.gmra.mxu0 %v118
  %v207 = vpop.f32.mrf.mxu0
  %v208 = vadd.f32 0.0, %v207
  %v209 = vpop.f32.mrf.mxu0
  %v210 = vadd.f32 0.0, %v209
  %211 = vmatmul.bf16.gmra.mxu0 %v119
  %v212 = vpop.f32.mrf.mxu0
  %v213 = vadd.f32 0.0, %v212
  %v214 = vpop.f32.mrf.mxu0
  %v215 = vadd.f32 0.0, %v214
  %216 = vmatmul.bf16.gmra.mxu0 %v120
  %v217 = vpop.f32.mrf.mxu0
  %v218 = vadd.f32 0.0, %v217
  %v219 = vpop.f32.mrf.mxu0
  %v220 = vadd.f32 0.0, %v219
  %221 = vmatmul.bf16.gmra.mxu0 %v121
  %v222 = vpop.f32.mrf.mxu0
  %v223 = vadd.f32 0.0, %v222
  %v224 = vpop.f32.mrf.mxu0
  %v225 = vadd.f32 0.0, %v224
  %226 = vdwg.mxu0
  %v227 = vadd.f32 %v34, %v188
  %v228 = vadd.f32 %v35, %v190
  %v229 = vadd.f32 %v36, %v193
  %v230 = vadd.f32 %v37, %v195
  %v231 = vadd.f32 %v38, %v198
  %v232 = vadd.f32 %v39, %v200
  %v233 = vadd.f32 %v40, %v203
  %v234 = vadd.f32 %v41, %v205
  %v235 = vadd.f32 %v42, %v208
  %v236 = vadd.f32 %v43, %v210
  %v237 = vadd.f32 %v44, %v213
  %v238 = vadd.f32 %v45, %v215
  %v239 = vadd.f32 %v46, %v218
  %v240 = vadd.f32 %v47, %v220
  %v241 = vadd.f32 %v48, %v223
  %v242 = vadd.f32 %v49, %v225
  %243 = vst [vmem:[#allocation2] sm:$0xff] %v227
  %244 = vst [vmem:[#allocation2 + $0x8] sm:$0xff] %v228
  %245 = vst [vmem:[#allocation2 + $0x10] sm:$0xff] %v229
  %246 = vst [vmem:[#allocation2 + $0x18] sm:$0xff] %v230
  %247 = vst [vmem:[#allocation2 + $0x20] sm:$0xff] %v231
  %248 = vst [vmem:[#allocation2 + $0x28] sm:$0xff] %v232
  %249 = vst [vmem:[#allocation2 + $0x30] sm:$0xff] %v233
  %250 = vst [vmem:[#allocation2 + $0x38] sm:$0xff] %v234
  %251 = vst [vmem:[#allocation2 + $0x40] sm:$0xff] %v235
  %252 = vst [vmem:[#allocation2 + $0x48] sm:$0xff] %v236
  %253 = vst [vmem:[#allocation2 + $0x50] sm:$0xff] %v237
  %254 = vst [vmem:[#allocation2 + $0x58] sm:$0xff] %v238
  %255 = vst [vmem:[#allocation2 + $0x60] sm:$0xff] %v239
  %256 = vst [vmem:[#allocation2 + $0x68] sm:$0xff] %v240
  %257 = vst [vmem:[#allocation2 + $0x70] sm:$0xff] %v241
  %258 = vst [vmem:[#allocation2 + $0x78] sm:$0xff] %v242
  // Predicated region
  $region18: #{_lambda_.41} parent=0 // pred_check
    %p259 = pneg %p14
  $region19: #{_lambda_.41} parent=0 // pred_check_branch
    %261 = sbr.rel (%p259) target = $region21
  $region20: #{_lambda_.41} parent=0 // pred_region
    %v262 = vld [vmem:[#allocation2] sm:$0xff]
    %v263 = vld [vmem:[#allocation2 + $0x8] sm:$0xff]
    %v264 = vld [vmem:[#allocation2 + $0x10] sm:$0xff]
    %v265 = vld [vmem:[#allocation2 + $0x18] sm:$0xff]
    %v266 = vld [vmem:[#allocation2 + $0x20] sm:$0xff]
    %v267 = vld [vmem:[#allocation2 + $0x28] sm:$0xff]
    %v268 = vld [vmem:[#allocation2 + $0x30] sm:$0xff]
    %v269 = vld [vmem:[#allocation2 + $0x38] sm:$0xff]
    %v270 = vld [vmem:[#allocation2 + $0x40] sm:$0xff]
    %v271 = vld [vmem:[#allocation2 + $0x48] sm:$0xff]
    %v272 = vld [vmem:[#allocation2 + $0x50] sm:$0xff]
    %v273 = vld [vmem:[#allocation2 + $0x58] sm:$0xff]
    %v274 = vld [vmem:[#allocation2 + $0x60] sm:$0xff]
    %v275 = vld [vmem:[#allocation2 + $0x68] sm:$0xff]
    %v276 = vld [vmem:[#allocation2 + $0x70] sm:$0xff]
    %v277 = vld [vmem:[#allocation2 + $0x78] sm:$0xff]
    %v278 = vld [vmem:[%s2] sm:$0x1]
    %v280 = vperm.slane %v278, 0
    %v282 = vadd.f32 %v262, %v280
    %v283 = vadd.f32 %v263, %v280
    %v284 = vadd.f32 %v264, %v280
    %v285 = vadd.f32 %v265, %v280
    %v286 = vadd.f32 %v266, %v280
    %v287 = vadd.f32 %v267, %v280
    %v288 = vadd.f32 %v268, %v280
    %v289 = vadd.f32 %v269, %v280
    %v290 = vadd.f32 %v270, %v280
    %v291 = vadd.f32 %v271, %v280
    %v292 = vadd.f32 %v272, %v280
    %v293 = vadd.f32 %v273, %v280
    %v294 = vadd.f32 %v274, %v280
    %v295 = vadd.f32 %v275, %v280
    %v296 = vadd.f32 %v276, %v280
    %v297 = vadd.f32 %v277, %v280
    %v298 = vmax.f32 %v282, 0.0
    %v299 = vmax.f32 %v283, 0.0
    %v300 = vmax.f32 %v284, 0.0
    %v301 = vmax.f32 %v285, 0.0
    %v302 = vmax.f32 %v286, 0.0
    %v303 = vmax.f32 %v287, 0.0
    %v304 = vmax.f32 %v288, 0.0
    %v305 = vmax.f32 %v289, 0.0
    %v306 = vmax.f32 %v290, 0.0
    %v307 = vmax.f32 %v291, 0.0
    %v308 = vmax.f32 %v292, 0.0
    %v309 = vmax.f32 %v293, 0.0
    %v310 = vmax.f32 %v294, 0.0
    %v311 = vmax.f32 %v295, 0.0
    %v312 = vmax.f32 %v296, 0.0
    %v313 = vmax.f32 %v297, 0.0
    %314 = vst [vmem:[%s3] sm:$0xff] %v298
    %315 = vst [vmem:[%s3 + $0x8] sm:$0xff] %v299
    %316 = vst [vmem:[%s3 + $0x10] sm:$0xff] %v300
    %317 = vst [vmem:[%s3 + $0x18] sm:$0xff] %v301
    %318 = vst [vmem:[%s3 + $0x20] sm:$0xff] %v302
    %319 = vst [vmem:[%s3 + $0x28] sm:$0xff] %v303
    %320 = vst [vmem:[%s3 + $0x30] sm:$0xff] %v304
    %321 = vst [vmem:[%s3 + $0x38] sm:$0xff] %v305
    %322 = vst [vmem:[%s3 + $0x40] sm:$0xff] %v306
    %323 = vst [vmem:[%s3 + $0x48] sm:$0xff] %v307
    %324 = vst [vmem:[%s3 + $0x50] sm:$0xff] %v308
    %325 = vst [vmem:[%s3 + $0x58] sm:$0xff] %v309
    %326 = vst [vmem:[%s3 + $0x60] sm:$0xff] %v310
    %327 = vst [vmem:[%s3 + $0x68] sm:$0xff] %v311
    %328 = vst [vmem:[%s3 + $0x70] sm:$0xff] %v312
    %329 = vst [vmem:[%s3 + $0x78] sm:$0xff] %v313
  $region21: #{_lambda_.41} parent=0 // pred_fallthru
    _
  // Predicated region
  $region22: #{_lambda_.41} parent=0 // pred_check
    _
  $region23: #{_lambda_.41} parent=0 // pred_check_branch
    %331 = sbr.rel (0) target = $region25
  $region24: #{_lambda_.41} parent=0 // pred_region
    _
  $region25: #{_lambda_.41} parent=0 // pred_fallthru
    _
  // Predicated region
  $region26: #{_lambda_.41} parent=0 // pred_check
    _
  $region27: #{_lambda_.41} parent=0 // pred_check_branch
    %333 = sbr.rel (0) target = $region29
  $region28: #{_lambda_.41} parent=0 // pred_region
    _
  $region29: #{_lambda_.41} parent=0 // pred_fallthru
    _

// kernel: _lambda_.45
$region0: #{_lambda_.45}
  #allocation0 [shape = 'u32[]', space=smem, size = 0x4, offset = 0x4, fixed_abs, tag = 'smem constant byte address 0x4 - core index']
  #allocation1 [shape = 'u32[72,128]{1,0:T(1,128)}', space=vmem, size = 0x9000, scoped, tag = 'internal scratch']
  %s0 = inlined_call_operand.vmem [shape: f32[2,32,64], index: 0, kind: input, shape index: {}]
  %s1 = inlined_call_operand.vmem [shape: f32[2,32,64], index: 1, kind: input, shape index: {}]
  %s2 = inlined_call_operand.vmem [shape: bf16[32,64], index: 2, kind: input, shape index: {}]
  %s3 = inlined_call_operand.vmem [shape: f32[32,1], index: 3, kind: input, shape index: {}]
  %s4 = inlined_call_operand.vmem [shape: f32[2,32,64], index: 4, kind: output, shape index: {}]
  %s5 = sld [smem:[#allocation0]]
  $region49: #{_lambda_.45} parent=0
    _
  %s7 = ssub.s32 1, %s5
  %s8 = scalar_select 0, %s7, %s5
  loop: start=0, step=1, limit=4
  $region2: #{_lambda_.45} parent=0 // loop_pre_header
    _
  $region3: #{_lambda_.45} parent=0 // loop_header
    %s10 = sphi 0, %s14
    %p11 = scmp.ge.s32.totalorder %s10, 4
    %s20 = sphi 0, %s22
    %s23 = sphi 0, %s20
    %s24 = sphi 0, %s23
    %s40 = sphi 0, %s24
    %s46 = sphi 0, %s48
    %s49 = sphi 0, %s46
    %s50 = sphi 0, %s49
    %s66 = sphi 0, %s50
    %s70 = sphi 0, %s70
    %s72 = sphi 0, %s70
    %s73 = sphi 0, %s72
    %s87 = sphi 0, %s73
    %s91 = sphi 0, %s91
    %s93 = sphi 0, %s91
    %s94 = sphi 0, %s93
    %s108 = sphi 0, %s94
    %s114 = sphi 0, %s116
    %s117 = sphi 0, %s114
    %s118 = sphi 0, %s117
    %s134 = sphi 0, %s118
  $region4: #{_lambda_.45} parent=0 // loop_header_branch
    %13 = sbr.rel (%p11) target = $region8
  $region5: #{_lambda_.45} parent=0 // loop_body
    %s15 = ssub.s32 %s10, 1
    %s16 = ssub.s32 %s10, 2
    %s17 = sadd.s32 %s10, 1
    %s18 = ssub.s32 %s10, %s17
    %p19 = scmp.eq.s32.totalorder %s18, 0
    %s21 = sadd.s32 %s20, 1
    %s22 = scalar_select %p19, %s20, %s21
    %p25 = pneg %p19
    %p26 = scmp.eq.s32.totalorder %s10, 1
    %p27 = por %p25, %p26
    %p28 = scmp.ne.s32.totalorder %s20, %s23
    %p29 = scmp.eq.s32.totalorder %s10, 0
    %p30 = por %p28, %p29
    %p31 = scmp.ne.s32.totalorder %s20, %s23
    %p32 = scmp.eq.s32.totalorder %s15, 1
    %p33 = por %p31, %p32
    %p34 = scmp.ne.s32.totalorder %s23, %s24
    %p35 = scmp.eq.s32.totalorder %s15, 0
    %p36 = por %p34, %p35
    %p37 = scmp.ne.s32.totalorder %s23, %s24
    %p38 = scmp.eq.s32.totalorder %s16, 1
    %p39 = por %p37, %p38
    %p41 = scmp.ne.s32.totalorder %s24, %s40
    %p42 = scmp.eq.s32.totalorder %s16, 0
    %p43 = por %p41, %p42
    %s44 = ssub.s32 %s10, %s17
    %p45 = scmp.eq.s32.totalorder %s44, 0
    %s47 = sadd.s32 %s46, 1
    %s48 = scalar_select %p45, %s46, %s47
    %p51 = pneg %p45
    %p52 = scmp.eq.s32.totalorder %s10, 1
    %p53 = por %p51, %p52
    %p54 = scmp.ne.s32.totalorder %s46, %s49
    %p55 = scmp.eq.s32.totalorder %s10, 0
    %p56 = por %p54, %p55
    %p57 = scmp.ne.s32.totalorder %s46, %s49
    %p58 = scmp.eq.s32.totalorder %s15, 1
    %p59 = por %p57, %p58
    %p60 = scmp.ne.s32.totalorder %s49, %s50
    %p61 = scmp.eq.s32.totalorder %s15, 0
    %p62 = por %p60, %p61
    %p63 = scmp.ne.s32.totalorder %s49, %s50
    %p64 = scmp.eq.s32.totalorder %s16, 1
    %p65 = por %p63, %p64
    %p67 = scmp.ne.s32.totalorder %s50, %s66
    %p68 = scmp.eq.s32.totalorder %s16, 0
    %p69 = por %p67, %p68
    %s71 = sadd.s32 %s70, 1
    %p74 = scmp.eq.s32.totalorder %s10, 1
    %p75 = scmp.ne.s32.totalorder %s70, %s72
    %p76 = scmp.eq.s32.totalorder %s10, 0
    %p77 = por %p75, %p76
    %p78 = scmp.ne.s32.totalorder %s70, %s72
    %p79 = scmp.eq.s32.totalorder %s15, 1
    %p80 = por %p78, %p79
    %p81 = scmp.ne.s32.totalorder %s72, %s73
    %p82 = scmp.eq.s32.totalorder %s15, 0
    %p83 = por %p81, %p82
    %p84 = scmp.ne.s32.totalorder %s72, %s73
    %p85 = scmp.eq.s32.totalorder %s16, 1
    %p86 = por %p84, %p85
    %p88 = scmp.ne.s32.totalorder %s73, %s87
    %p89 = scmp.eq.s32.totalorder %s16, 0
    %p90 = por %p88, %p89
    %s92 = sadd.s32 %s91, 1
    %p95 = scmp.eq.s32.totalorder %s10, 1
    %p96 = scmp.ne.s32.totalorder %s91, %s93
    %p97 = scmp.eq.s32.totalorder %s10, 0
    %p98 = por %p96, %p97
    %p99 = scmp.ne.s32.totalorder %s91, %s93
    %p100 = scmp.eq.s32.totalorder %s15, 1
    %p101 = por %p99, %p100
    %p102 = scmp.ne.s32.totalorder %s93, %s94
    %p103 = scmp.eq.s32.totalorder %s15, 0
    %p104 = por %p102, %p103
    %p105 = scmp.ne.s32.totalorder %s93, %s94
    %p106 = scmp.eq.s32.totalorder %s16, 1
    %p107 = por %p105, %p106
    %p109 = scmp.ne.s32.totalorder %s94, %s108
    %p110 = scmp.eq.s32.totalorder %s16, 0
    %p111 = por %p109, %p110
    %s112 = ssub.s32 %s10, %s17
    %p113 = scmp.eq.s32.totalorder %s112, 0
    %s115 = sadd.s32 %s114, 1
    %s116 = scalar_select %p113, %s114, %s115
    %p119 = pneg %p113
    %p120 = scmp.eq.s32.totalorder %s10, 1
    %p121 = por %p119, %p120
    %p122 = scmp.ne.s32.totalorder %s114, %s117
    %p123 = scmp.eq.s32.totalorder %s10, 0
    %p124 = por %p122, %p123
    %p125 = scmp.ne.s32.totalorder %s114, %s117
    %p126 = scmp.eq.s32.totalorder %s15, 1
    %p127 = por %p125, %p126
    %p128 = scmp.ne.s32.totalorder %s117, %s118
    %p129 = scmp.eq.s32.totalorder %s15, 0
    %p130 = por %p128, %p129
    %p131 = scmp.ne.s32.totalorder %s117, %s118
    %p132 = scmp.eq.s32.totalorder %s16, 1
    %p133 = por %p131, %p132
    %p135 = scmp.ne.s32.totalorder %s118, %s134
    %p136 = scmp.eq.s32.totalorder %s16, 0
    %p137 = por %p135, %p136
    %p138 = scmp.le.s32.totalorder 1, %s10
    %p139 = scmp.lt.s32.totalorder %s10, 3
    %p140 = pnand %p138, %p139
    %p141 = pneg %p140
    // Predicated region
    $region9: #{_lambda_.45} parent=5 // pred_check
      _
    $region10: #{_lambda_.45} parent=5 // pred_check_branch
      %143 = sbr.rel (%p140) target = $region12
    $region11: #{_lambda_.45} parent=5 // pred_region
      %s144 = ssub.s32 %s10, 1
      // Predicated region
      $region13: #{_lambda_.45} parent=11 // pred_check
        %p145 = pneg %p83
      $region14: #{_lambda_.45} parent=11 // pred_check_branch
        %147 = sbr.rel (%p145) target = $region16
      $region15: #{_lambda_.45} parent=11 // pred_region
        _
      $region16: #{_lambda_.45} parent=11 // pred_fallthru
        _
      // Predicated region
      $region17: #{_lambda_.45} parent=11 // pred_check
        %p148 = pneg %p104
      $region18: #{_lambda_.45} parent=11 // pred_check_branch
        %150 = sbr.rel (%p148) target = $region20
      $region19: #{_lambda_.45} parent=11 // pred_region
        _
      $region20: #{_lambda_.45} parent=11 // pred_fallthru
        _
    $region12: #{_lambda_.45} parent=5 // pred_fallthru
      _
    %p151 = scmp.lt.s32.totalorder %s10, 2
    // Predicated region
    $region21: #{_lambda_.45} parent=5 // pred_check
      %p152 = pneg %p151
    $region22: #{_lambda_.45} parent=5 // pred_check_branch
      %154 = sbr.rel (%p152) target = $region24
    $region23: #{_lambda_.45} parent=5 // pred_region
      // Predicated region
      $region25: #{_lambda_.45} parent=23 // pred_check
        %p155 = pneg %p30
      $region26: #{_lambda_.45} parent=23 // pred_check_branch
        %157 = sbr.rel (%p155) target = $region28
      $region27: #{_lambda_.45} parent=23 // pred_region
        %p158 = scmp.lt.s32.totalorder %s10, 1
        %s159 = scalar_select %p158, %s10, 1
        %s160 = smul.addr %s159, 4
        %s161 = smul.addr %s160, 8
        %s162 = scalar_lea.vmem %s0, %s161
      $region28: #{_lambda_.45} parent=23 // pred_fallthru
        _
      // Predicated region
      $region29: #{_lambda_.45} parent=23 // pred_check
        %p163 = pneg %p56
      $region30: #{_lambda_.45} parent=23 // pred_check_branch
        %165 = sbr.rel (%p163) target = $region32
      $region31: #{_lambda_.45} parent=23 // pred_region
        %p166 = scmp.lt.s32.totalorder %s10, 1
        %s167 = scalar_select %p166, %s10, 1
        %s168 = smul.addr %s167, 4
        %s169 = smul.addr %s168, 8
        %s170 = scalar_lea.vmem %s1, %s169
      $region32: #{_lambda_.45} parent=23 // pred_fallthru
        _
    $region24: #{_lambda_.45} parent=5 // pred_fallthru
      _
    %p171 = scmp.le.s32.totalorder 1, %s10
    %p172 = scmp.lt.s32.totalorder %s10, 3
    %p173 = pnand %p171, %p172
    %p174 = pneg %p173
    // Predicated region
    $region33: #{_lambda_.45} parent=5 // pred_check
      _
    $region34: #{_lambda_.45} parent=5 // pred_check_branch
      %176 = sbr.rel (%p173) target = $region36
    $region35: #{_lambda_.45} parent=5 // pred_region
      %s177 = ssub.s32 %s10, 1
      %p178 = scmp.lt.s32.totalorder %s15, 1
      %s179 = scalar_select %p178, %s15, 1
      %s180 = smul.addr %s179, 4
      %s181 = smul.addr %s180, 8
      %s182 = scalar_lea.vmem %s0, %s181
      %p183 = pneg %p36
      %p184 = pneg %p33
      %p185 = scmp.lt.s32.totalorder %s15, 1
      %s186 = scalar_select %p185, %s15, 1
      %s187 = smul.addr %s186, 4
      %s188 = smul.addr %s187, 8
      %s189 = scalar_lea.vmem %s1, %s188
      %p190 = pneg %p62
      %p191 = pneg %p59
      %p192 = pneg %p83
      %p193 = pneg %p80
      %p194 = pneg %p104
      %p195 = pneg %p101
      %p196 = pneg %p130
      %p197 = pneg %p127
      %p198 = scmp.lt.s32.totalorder %s15, 1
      %s199 = scalar_select %p198, %s15, 1
      %s200 = smul.addr %s199, 4
      %s201 = smul.addr %s200, 8
      %s202 = scalar_lea.vmem %s4, %s201
      %p203 = scmp.lt.s32.totalorder %s15, 1
      %s204 = scalar_select %p203, %s15, 1
      %s205 = smul.addr %s204, 4
      %s206 = smul.addr %s205, 8
      %s207 = scalar_lea.vmem %s0, %s206
      %p208 = scmp.lt.s32.totalorder %s15, 1
      %s209 = scalar_select %p208, %s15, 1
      %s210 = smul.addr %s209, 4
      %s211 = smul.addr %s210, 8
      %s212 = scalar_lea.vmem %s1, %s211
      %p213 = scmp.lt.s32.totalorder %s15, 1
      %s214 = scalar_select %p213, %s15, 1
      %s215 = smul.addr %s214, 4
      %s216 = smul.addr %s215, 8
      %s217 = scalar_lea.vmem %s4, %s216
      %v219 = vld [vmem:[%s207] sm:$0xff]
      %v220 = vld [vmem:[%s207 + $0x8] sm:$0xff]
      %v221 = vld [vmem:[%s207 + $0x10] sm:$0xff]
      %v222 = vld [vmem:[%s207 + $0x18] sm:$0xff]
      %v223 = vld [vmem:[%s212] sm:$0xff]
      %v224 = vld [vmem:[%s212 + $0x8] sm:$0xff]
      %v225 = vld [vmem:[%s212 + $0x10] sm:$0xff]
      %v226 = vld [vmem:[%s212 + $0x18] sm:$0xff]
      %v227 = vmul.f32 %v219, %v223
      %v228 = vmul.f32 %v220, %v224
      %v229 = vmul.f32 %v221, %v225
      %v230 = vmul.f32 %v222, %v226
      %vm231 = vcmask 523264
      %v232 = vsel %vm231, %v227, 0.0
      %v233 = vsel %vm231, %v228, 0.0
      %v234 = vadd.f32 %v232, %v233
      %v235 = vsel %vm231, %v229, 0.0
      %v236 = vadd.f32 %v234, %v235
      %v237 = vsel %vm231, %v230, 0.0
      %v238 = vadd.f32 %v236, %v237
      %v239 = vrot.slane %v238, 4
      %v240 = vadd.f32 %v238, %v239
      %v241 = vrot.slane %v240, 2
      %v242 = vadd.f32 %v240, %v241
      %v243 = vrot.slane %v242, 1
      %v244 = vadd.f32 %v242, %v243
      %v245 = vmul.f32 %v219, %v219
      %v246 = vmul.f32 %v220, %v220
      %v247 = vmul.f32 %v221, %v221
      %v248 = vmul.f32 %v222, %v222
      %v249 = vsel %vm231, %v245, 0.0
      %v250 = vsel %vm231, %v246, 0.0
      %v251 = vadd.f32 %v249, %v250
      %v252 = vsel %vm231, %v247, 0.0
      %v253 = vadd.f32 %v251, %v252
      %v254 = vsel %vm231, %v248, 0.0
      %v255 = vadd.f32 %v253, %v254
      %v256 = vrot.slane %v255, 4
      %v257 = vadd.f32 %v255, %v256
      %v258 = vrot.slane %v257, 2
      %v259 = vadd.f32 %v257, %v258
      %v260 = vrot.slane %v259, 1
      %v261 = vadd.f32 %v259, %v260
      %v262 = vrsqrt.pop %v261
      %v263 = vmul.f32 %v262, %v261
      %v264 = vmul.f32 %v263, %v262
      %v265 = vmul.f32 0.5, %v264
      %v266 = vsub.f32 1.5, %v265
      %v267 = vmul.f32 %v262, %v266
      %v268 = vmul.f32 %v261, %v267
      %vm269 = vcmp.eq.f32.partialorder %v261, inf
      %v270 = vsel %vm269, %v261, %v268
      %vm271 = vcmp.eq.f32.partialorder %v261, 0.0
      %v272 = vand.u32 %v261, 2147483648
      %v273 = vsel %vm271, %v272, %v270
      %v274 = vmul.f32 %v223, %v223
      %v275 = vmul.f32 %v224, %v224
      %v276 = vmul.f32 %v225, %v225
      %v277 = vmul.f32 %v226, %v226
      %v278 = vsel %vm231, %v274, 0.0
      %v279 = vsel %vm231, %v275, 0.0
      %v280 = vadd.f32 %v278, %v279
      %v281 = vsel %vm231, %v276, 0.0
      %v282 = vadd.f32 %v280, %v281
      %v283 = vsel %vm231, %v277, 0.0
      %v284 = vadd.f32 %v282, %v283
      %v285 = vrot.slane %v284, 4
      %v286 = vadd.f32 %v284, %v285
      %v287 = vrot.slane %v286, 2
      %v288 = vadd.f32 %v286, %v287
      %v289 = vrot.slane %v288, 1
      %v290 = vadd.f32 %v288, %v289
      %v291 = vrsqrt.pop %v290
      %v292 = vmul.f32 %v291, %v290
      %v293 = vmul.f32 %v292, %v291
      %v294 = vmul.f32 0.5, %v293
      %v295 = vsub.f32 1.5, %v294
      %v296 = vmul.f32 %v291, %v295
      %v297 = vmul.f32 %v290, %v296
      %vm298 = vcmp.eq.f32.partialorder %v290, inf
      %v299 = vsel %vm298, %v290, %v297
      %vm300 = vcmp.eq.f32.partialorder %v290, 0.0
      %v301 = vand.u32 %v290, 2147483648
      %v302 = vsel %vm300, %v301, %v299
      %v303 = vmax.f32 %v273, 1e-08
      %v304 = vmax.f32 %v302, 1e-08
      %v305 = vmul.f32 %v303, %v304
      %v306 = vrcp.pop %v305
      %v307 = vmul.f32 %v305, %v306
      %v308 = vsub.f32 1.0, %v307
      %v309 = vmul.f32 %v306, %v308
      %v310 = vadd.f32 %v306, %v309
      %vm311 = vweird.f32 %v305
      %vm312 = vweird.f32 %v306
      %vm313 = vmor %vm311, %vm312
      %v314 = vsel %vm313, %v306, %v310
      %v315 = vand.u32 2147483647, %v305
      %vm316 = vcmp.eq.f32.partialorder %v315, 8.507059e+37
      %v317 = vand.u32 %v305, 2147483648
      %v318 = vor.u32 1.1754944e-38, %v317
      %v319 = vsel %vm316, %v318, %v314
      %v320 = vmul.f32 %v244, %v319
      %v321 = vadd.f32 %v219, %v320
      %v322 = vadd.f32 %v220, %v320
      %v323 = vadd.f32 %v221, %v320
      %v324 = vadd.f32 %v222, %v320
      %v325 = vadd.f32 %v223, %v320
      %v326 = vadd.f32 %v224, %v320
      %v327 = vadd.f32 %v225, %v320
      %v328 = vadd.f32 %v226, %v320
      %v329 = vld [vmem:[%s2] sm:$0xf]
      %v330 = vld [vmem:[%s2 + $0x4] sm:$0xf]
      %v331 = vld [vmem:[%s2 + $0x8] sm:$0xf]
      %v332 = vld [vmem:[%s2 + $0xc] sm:$0xf]
      %v333 = vpack.c.bf16 %v322, %v321
      %v334 = vpack.c.bf16 %v324, %v323
      %v335 = vpack.c.bf16 %v326, %v325
      %v336 = vpack.c.bf16 %v328, %v327
      %v337 = vld [vmem:[%s3] sm:$0xff]
      %v338 = vld [vmem:[%s3 + $0x8] sm:$0xff]
      %v339 = vld [vmem:[%s3 + $0x10] sm:$0xff]
      %v340 = vld [vmem:[%s3 + $0x18] sm:$0xff]
      %342 = vset.pattern.permute.xlu0 0
      %343 = vperm.xlu0 %342, %v337
      %v344 = vpop.permute.xlu0 %343
      %347 = vset.pattern.permute.xlu0 0
      %348 = vperm.xlu0 %347, %v338
      %v349 = vpop.permute.xlu0 %348
      %352 = vset.pattern.permute.xlu0 0
      %353 = vperm.xlu0 %352, %v339
      %v354 = vpop.permute.xlu0 %353
      %357 = vset.pattern.permute.xlu0 0
      %358 = vperm.xlu0 %357, %v340
      %v359 = vpop.permute.xlu0 %358
      %v365 = vunpack.c.l.b16 %v329
      %v366 = vunpack.c.l.b16 %v330
      %v367 = vunpack.c.l.b16 %v331
      %v368 = vunpack.c.l.b16 %v332
      %v369 = vpack.c.b16 %v366, %v365
      %v370 = vpack.c.b16 %v368, %v367
      %v372 = vsel %vm231, %v369, 0
      %v375 = vsel %vm231, %v370, 0
      %377 = vmatpush.bf16.msra.mxu0 0
      %378 = vmatpush.bf16.msra.mxu0 0
      %379 = vmatpush.bf16.msra.mxu0 0
      %380 = vmatpush.bf16.msra.mxu0 0
      %381 = vmatpush.bf16.msra.mxu0 %v336
      %382 = vmatpush.bf16.msra.mxu0 %v335
      %383 = vmatpush.bf16.msra.mxu0 %v334
      %384 = vmatpush.bf16.msra.mxu0 %v333
      %385 = vmatmul.bf16.gmra.mxu0 %v372
      %v386 = vpop.f32.mrf.mxu0
      %v387 = vadd.f32 %v344, %v386
      %v388 = vpop.f32.mrf.mxu0
      %v389 = vadd.f32 %v349, %v388
      %390 = vmatmul.bf16.gmra.mxu0 %v375
      %v391 = vpop.f32.mrf.mxu0
      %v392 = vadd.f32 %v354, %v391
      %v393 = vpop.f32.mrf.mxu0
      %v394 = vadd.f32 %v359, %v393
      %395 = vdwg.mxu0
      %396 = vst.msk [vmem:[%s217] sm:$0xff] %vm231, %v387
      %397 = vst.msk [vmem:[%s217 + $0x8] sm:$0xff] %vm231, %v389
      %398 = vst.msk [vmem:[%s217 + $0x10] sm:$0xff] %vm231, %v392
      %399 = vst.msk [vmem:[%s217 + $0x18] sm:$0xff] %vm231, %v394
      %p400 = scmp.lt.s32.totalorder %s15, 1
      %s401 = scalar_select %p400, %s15, 1
      %s402 = smul.addr %s401, 4
      %s403 = smul.addr %s402, 8
      %s404 = scalar_lea.vmem %s4, %s403
      // Predicated region
      $region37: #{_lambda_.45} parent=35 // pred_check
        %p405 = pneg %p127
      $region38: #{_lambda_.45} parent=35 // pred_check_branch
        %407 = sbr.rel (%p405) target = $region40
      $region39: #{_lambda_.45} parent=35 // pred_region
        _
      $region40: #{_lambda_.45} parent=35 // pred_fallthru
        _
    $region36: #{_lambda_.45} parent=5 // pred_fallthru
      _
    %p408 = scmp.le.s32.totalorder 2, %s10
    // Predicated region
    $region41: #{_lambda_.45} parent=5 // pred_check
      %p409 = pneg %p408
    $region42: #{_lambda_.45} parent=5 // pred_check_branch
      %411 = sbr.rel (%p409) target = $region44
    $region43: #{_lambda_.45} parent=5 // pred_region
      %s412 = ssub.s32 %s10, 2
      // Predicated region
      $region45: #{_lambda_.45} parent=43 // pred_check
        %p413 = pneg %p133
      $region46: #{_lambda_.45} parent=43 // pred_check_branch
        %415 = sbr.rel (%p413) target = $region48
      $region47: #{_lambda_.45} parent=43 // pred_region
        %p416 = scmp.lt.s32.totalorder %s16, 1
        %s417 = scalar_select %p416, %s16, 1
        %s418 = smul.addr %s417, 4
        %s419 = smul.addr %s418, 8
        %s420 = scalar_lea.vmem %s4, %s419
      $region48: #{_lambda_.45} parent=43 // pred_fallthru
        _
    $region44: #{_lambda_.45} parent=5 // pred_fallthru
      _
  $region6: #{_lambda_.45} parent=0 // loop_footer
    %s14 = sadd.s32 1, %s10
  $region7: #{_lambda_.45} parent=0 // loop_footer_branch
    %9 = sbr.rel target = $region3
  $region8: #{_lambda_.45} parent=0 // loop_exit
    _

// kernel: _lambda_.46
$region0: #{_lambda_.46}
  #allocation0 [shape = 'u32[]', space=smem, size = 0x4, offset = 0x4, fixed_abs, tag = 'smem constant byte address 0x4 - core index']
  #allocation1 [shape = 'u32[72,128]{1,0:T(1,128)}', space=vmem, size = 0x9000, scoped, tag = 'internal scratch']
  %s0 = inlined_call_operand.vmem [shape: f32[2,32,64], index: 0, kind: input, shape index: {}]
  %s1 = inlined_call_operand.vmem [shape: bf16[16,32], index: 1, kind: input, shape index: {}]
  %s2 = inlined_call_operand.vmem [shape: f32[16,1], index: 2, kind: input, shape index: {}]
  %s3 = inlined_call_operand.vmem [shape: f32[2,16,64], index: 3, kind: output, shape index: {}]
  %s4 = sld [smem:[#allocation0]]
  $region45: #{_lambda_.46} parent=0
    _
  %s6 = ssub.s32 1, %s4
  %s7 = scalar_select 0, %s6, %s4
  loop: start=0, step=1, limit=4
  $region2: #{_lambda_.46} parent=0 // loop_pre_header
    _
  $region3: #{_lambda_.46} parent=0 // loop_header
    %s9 = sphi 0, %s13
    %p10 = scmp.ge.s32.totalorder %s9, 4
    %s19 = sphi 0, %s21
    %s22 = sphi 0, %s19
    %s23 = sphi 0, %s22
    %s39 = sphi 0, %s23
    %s43 = sphi 0, %s43
    %s45 = sphi 0, %s43
    %s46 = sphi 0, %s45
    %s60 = sphi 0, %s46
    %s64 = sphi 0, %s64
    %s66 = sphi 0, %s64
    %s67 = sphi 0, %s66
    %s81 = sphi 0, %s67
    %s87 = sphi 0, %s89
    %s90 = sphi 0, %s87
    %s91 = sphi 0, %s90
    %s107 = sphi 0, %s91
  $region4: #{_lambda_.46} parent=0 // loop_header_branch
    %12 = sbr.rel (%p10) target = $region8
  $region5: #{_lambda_.46} parent=0 // loop_body
    %s14 = ssub.s32 %s9, 1
    %s15 = ssub.s32 %s9, 2
    %s16 = sadd.s32 %s9, 1
    %s17 = ssub.s32 %s9, %s16
    %p18 = scmp.eq.s32.totalorder %s17, 0
    %s20 = sadd.s32 %s19, 1
    %s21 = scalar_select %p18, %s19, %s20
    %p24 = pneg %p18
    %p25 = scmp.eq.s32.totalorder %s9, 1
    %p26 = por %p24, %p25
    %p27 = scmp.ne.s32.totalorder %s19, %s22
    %p28 = scmp.eq.s32.totalorder %s9, 0
    %p29 = por %p27, %p28
    %p30 = scmp.ne.s32.totalorder %s19, %s22
    %p31 = scmp.eq.s32.totalorder %s14, 1
    %p32 = por %p30, %p31
    %p33 = scmp.ne.s32.totalorder %s22, %s23
    %p34 = scmp.eq.s32.totalorder %s14, 0
    %p35 = por %p33, %p34
    %p36 = scmp.ne.s32.totalorder %s22, %s23
    %p37 = scmp.eq.s32.totalorder %s15, 1
    %p38 = por %p36, %p37
    %p40 = scmp.ne.s32.totalorder %s23, %s39
    %p41 = scmp.eq.s32.totalorder %s15, 0
    %p42 = por %p40, %p41
    %s44 = sadd.s32 %s43, 1
    %p47 = scmp.eq.s32.totalorder %s9, 1
    %p48 = scmp.ne.s32.totalorder %s43, %s45
    %p49 = scmp.eq.s32.totalorder %s9, 0
    %p50 = por %p48, %p49
    %p51 = scmp.ne.s32.totalorder %s43, %s45
    %p52 = scmp.eq.s32.totalorder %s14, 1
    %p53 = por %p51, %p52
    %p54 = scmp.ne.s32.totalorder %s45, %s46
    %p55 = scmp.eq.s32.totalorder %s14, 0
    %p56 = por %p54, %p55
    %p57 = scmp.ne.s32.totalorder %s45, %s46
    %p58 = scmp.eq.s32.totalorder %s15, 1
    %p59 = por %p57, %p58
    %p61 = scmp.ne.s32.totalorder %s46, %s60
    %p62 = scmp.eq.s32.totalorder %s15, 0
    %p63 = por %p61, %p62
    %s65 = sadd.s32 %s64, 1
    %p68 = scmp.eq.s32.totalorder %s9, 1
    %p69 = scmp.ne.s32.totalorder %s64, %s66
    %p70 = scmp.eq.s32.totalorder %s9, 0
    %p71 = por %p69, %p70
    %p72 = scmp.ne.s32.totalorder %s64, %s66
    %p73 = scmp.eq.s32.totalorder %s14, 1
    %p74 = por %p72, %p73
    %p75 = scmp.ne.s32.totalorder %s66, %s67
    %p76 = scmp.eq.s32.totalorder %s14, 0
    %p77 = por %p75, %p76
    %p78 = scmp.ne.s32.totalorder %s66, %s67
    %p79 = scmp.eq.s32.totalorder %s15, 1
    %p80 = por %p78, %p79
    %p82 = scmp.ne.s32.totalorder %s67, %s81
    %p83 = scmp.eq.s32.totalorder %s15, 0
    %p84 = por %p82, %p83
    %s85 = ssub.s32 %s9, %s16
    %p86 = scmp.eq.s32.totalorder %s85, 0
    %s88 = sadd.s32 %s87, 1
    %s89 = scalar_select %p86, %s87, %s88
    %p92 = pneg %p86
    %p93 = scmp.eq.s32.totalorder %s9, 1
    %p94 = por %p92, %p93
    %p95 = scmp.ne.s32.totalorder %s87, %s90
    %p96 = scmp.eq.s32.totalorder %s9, 0
    %p97 = por %p95, %p96
    %p98 = scmp.ne.s32.totalorder %s87, %s90
    %p99 = scmp.eq.s32.totalorder %s14, 1
    %p100 = por %p98, %p99
    %p101 = scmp.ne.s32.totalorder %s90, %s91
    %p102 = scmp.eq.s32.totalorder %s14, 0
    %p103 = por %p101, %p102
    %p104 = scmp.ne.s32.totalorder %s90, %s91
    %p105 = scmp.eq.s32.totalorder %s15, 1
    %p106 = por %p104, %p105
    %p108 = scmp.ne.s32.totalorder %s91, %s107
    %p109 = scmp.eq.s32.totalorder %s15, 0
    %p110 = por %p108, %p109
    %p111 = scmp.le.s32.totalorder 1, %s9
    %p112 = scmp.lt.s32.totalorder %s9, 3
    %p113 = pnand %p111, %p112
    %p114 = pneg %p113
    // Predicated region
    $region9: #{_lambda_.46} parent=5 // pred_check
      _
    $region10: #{_lambda_.46} parent=5 // pred_check_branch
      %116 = sbr.rel (%p113) target = $region12
    $region11: #{_lambda_.46} parent=5 // pred_region
      %s117 = ssub.s32 %s9, 1
      // Predicated region
      $region13: #{_lambda_.46} parent=11 // pred_check
        %p118 = pneg %p56
      $region14: #{_lambda_.46} parent=11 // pred_check_branch
        %120 = sbr.rel (%p118) target = $region16
      $region15: #{_lambda_.46} parent=11 // pred_region
        _
      $region16: #{_lambda_.46} parent=11 // pred_fallthru
        _
      // Predicated region
      $region17: #{_lambda_.46} parent=11 // pred_check
        %p121 = pneg %p77
      $region18: #{_lambda_.46} parent=11 // pred_check_branch
        %123 = sbr.rel (%p121) target = $region20
      $region19: #{_lambda_.46} parent=11 // pred_region
        _
      $region20: #{_lambda_.46} parent=11 // pred_fallthru
        _
    $region12: #{_lambda_.46} parent=5 // pred_fallthru
      _
    %p124 = scmp.lt.s32.totalorder %s9, 2
    // Predicated region
    $region21: #{_lambda_.46} parent=5 // pred_check
      %p125 = pneg %p124
    $region22: #{_lambda_.46} parent=5 // pred_check_branch
      %127 = sbr.rel (%p125) target = $region24
    $region23: #{_lambda_.46} parent=5 // pred_region
      // Predicated region
      $region25: #{_lambda_.46} parent=23 // pred_check
        %p128 = pneg %p29
      $region26: #{_lambda_.46} parent=23 // pred_check_branch
        %130 = sbr.rel (%p128) target = $region28
      $region27: #{_lambda_.46} parent=23 // pred_region
        %p131 = scmp.lt.s32.totalorder %s9, 1
        %s132 = scalar_select %p131, %s9, 1
        %s133 = smul.addr %s132, 4
        %s134 = smul.addr %s133, 8
        %s135 = scalar_lea.vmem %s0, %s134
      $region28: #{_lambda_.46} parent=23 // pred_fallthru
        _
    $region24: #{_lambda_.46} parent=5 // pred_fallthru
      _
    %p136 = scmp.le.s32.totalorder 1, %s9
    %p137 = scmp.lt.s32.totalorder %s9, 3
    %p138 = pnand %p136, %p137
    %p139 = pneg %p138
    // Predicated region
    $region29: #{_lambda_.46} parent=5 // pred_check
      _
    $region30: #{_lambda_.46} parent=5 // pred_check_branch
      %141 = sbr.rel (%p138) target = $region32
    $region31: #{_lambda_.46} parent=5 // pred_region
      %s142 = ssub.s32 %s9, 1
      %p143 = scmp.lt.s32.totalorder %s14, 1
      %s144 = scalar_select %p143, %s14, 1
      %s145 = smul.addr %s144, 4
      %s146 = smul.addr %s145, 8
      %s147 = scalar_lea.vmem %s0, %s146
      %p148 = pneg %p35
      %p149 = pneg %p32
      %p150 = pneg %p56
      %p151 = pneg %p53
      %p152 = pneg %p77
      %p153 = pneg %p74
      %p154 = pneg %p103
      %p155 = pneg %p100
      %p156 = scmp.lt.s32.totalorder %s14, 1
      %s157 = scalar_select %p156, %s14, 1
      %s158 = smul.addr %s157, 2
      %s159 = smul.addr %s158, 8
      %s160 = scalar_lea.vmem %s3, %s159
      %p161 = scmp.lt.s32.totalorder %s14, 1
      %s162 = scalar_select %p161, %s14, 1
      %s163 = smul.addr %s162, 4
      %s164 = smul.addr %s163, 8
      %s165 = scalar_lea.vmem %s0, %s164
      %p166 = scmp.lt.s32.totalorder %s14, 1
      %s167 = scalar_select %p166, %s14, 1
      %s168 = smul.addr %s167, 2
      %s169 = smul.addr %s168, 8
      %s170 = scalar_lea.vmem %s3, %s169
      %v172 = vld [vmem:[%s165] sm:$0xff]
      %v173 = vld [vmem:[%s165 + $0x8] sm:$0xff]
      %v174 = vld [vmem:[%s165 + $0x10] sm:$0xff]
      %v175 = vld [vmem:[%s165 + $0x18] sm:$0xff]
      %v176 = vld [vmem:[%s1] sm:$0xf]
      %v177 = vld [vmem:[%s1 + $0x4] sm:$0xf]
      %v178 = vpack.c.bf16 %v173, %v172
      %v179 = vpack.c.bf16 %v175, %v174
      %v180 = vld [vmem:[%s2] sm:$0xff]
      %v181 = vld [vmem:[%s2 + $0x8] sm:$0xff]
      %183 = vset.pattern.permute.xlu0 0
      %184 = vperm.xlu0 %183, %v180
      %v185 = vpop.permute.xlu0 %184
      %188 = vset.pattern.permute.xlu0 0
      %189 = vperm.xlu0 %188, %v181
      %v190 = vpop.permute.xlu0 %189
      %v194 = vunpack.c.l.b16 %v176
      %v195 = vunpack.c.l.b16 %v177
      %v196 = vpack.c.b16 %v195, %v194
      %vm197 = vcmask 261120
      %v199 = vsel %vm197, %v196, 0
      %201 = vmatpush.bf16.msra.mxu0 0
      %202 = vmatpush.bf16.msra.mxu0 0
      %203 = vmatpush.bf16.msra.mxu0 0
      %204 = vmatpush.bf16.msra.mxu0 0
      %205 = vmatpush.bf16.msra.mxu0 0
      %206 = vmatpush.bf16.msra.mxu0 0
      %207 = vmatpush.bf16.msra.mxu0 %v179
      %208 = vmatpush.bf16.msra.mxu0 %v178
      %209 = vmatmul.bf16.gmra.mxu0 %v199
      %v210 = vpop.f32.mrf.mxu0
      %v211 = vadd.f32 %v185, %v210
      %v212 = vpop.f32.mrf.mxu0
      %v213 = vadd.f32 %v190, %v212
      %214 = vdwg.mxu0
      %v215 = vmax.f32 %v211, 0.0
      %v216 = vmax.f32 %v213, 0.0
      %vm217 = vcmask 523264
      %218 = vst.msk [vmem:[%s170] sm:$0xff] %vm217, %v215
      %219 = vst.msk [vmem:[%s170 + $0x8] sm:$0xff] %vm217, %v216
      %p220 = scmp.lt.s32.totalorder %s14, 1
      %s221 = scalar_select %p220, %s14, 1
      %s222 = smul.addr %s221, 2
      %s223 = smul.addr %s222, 8
      %s224 = scalar_lea.vmem %s3, %s223
      // Predicated region
      $region33: #{_lambda_.46} parent=31 // pred_check
        %p225 = pneg %p100
      $region34: #{_lambda_.46} parent=31 // pred_check_branch
        %227 = sbr.rel (%p225) target = $region36
      $region35: #{_lambda_.46} parent=31 // pred_region
        _
      $region36: #{_lambda_.46} parent=31 // pred_fallthru
        _
    $region32: #{_lambda_.46} parent=5 // pred_fallthru
      _
    %p228 = scmp.le.s32.totalorder 2, %s9
    // Predicated region
    $region37: #{_lambda_.46} parent=5 // pred_check
      %p229 = pneg %p228
    $region38: #{_lambda_.46} parent=5 // pred_check_branch
      %231 = sbr.rel (%p229) target = $region40
    $region39: #{_lambda_.46} parent=5 // pred_region
      %s232 = ssub.s32 %s9, 2
      // Predicated region
      $region41: #{_lambda_.46} parent=39 // pred_check
        %p233 = pneg %p106
      $region42: #{_lambda_.46} parent=39 // pred_check_branch
        %235 = sbr.rel (%p233) target = $region44
      $region43: #{_lambda_.46} parent=39 // pred_region
        %p236 = scmp.lt.s32.totalorder %s15, 1
        %s237 = scalar_select %p236, %s15, 1
        %s238 = smul.addr %s237, 2
        %s239 = smul.addr %s238, 8
        %s240 = scalar_lea.vmem %s3, %s239
      $region44: #{_lambda_.46} parent=39 // pred_fallthru
        _
    $region40: #{_lambda_.46} parent=5 // pred_fallthru
      _
  $region6: #{_lambda_.46} parent=0 // loop_footer
    %s13 = sadd.s32 1, %s9
  $region7: #{_lambda_.46} parent=0 // loop_footer_branch
    %8 = sbr.rel target = $region3
  $region8: #{_lambda_.46} parent=0 // loop_exit
    _

// kernel: _lambda_.47
$region0: #{_lambda_.47}
  #allocation0 [shape = 'u32[]', space=smem, size = 0x4, offset = 0x4, fixed_abs, tag = 'smem constant byte address 0x4 - core index']
  #allocation1 [shape = 'u32[72,128]{1,0:T(1,128)}', space=vmem, size = 0x9000, scoped, tag = 'internal scratch']
  %s0 = inlined_call_operand.vmem [shape: f32[2,144,64], index: 0, kind: input, shape index: {}]
  %s1 = inlined_call_operand.vmem [shape: bf16[16,144], index: 1, kind: input, shape index: {}]
  %s2 = inlined_call_operand.vmem [shape: f32[16,1], index: 2, kind: input, shape index: {}]
  %s3 = inlined_call_operand.vmem [shape: f32[2,16,64], index: 3, kind: output, shape index: {}]
  %s4 = sld [smem:[#allocation0]]
  $region45: #{_lambda_.47} parent=0
    _
  %s6 = ssub.s32 1, %s4
  %s7 = scalar_select 0, %s6, %s4
  loop: start=0, step=1, limit=4
  $region2: #{_lambda_.47} parent=0 // loop_pre_header
    _
  $region3: #{_lambda_.47} parent=0 // loop_header
    %s9 = sphi 0, %s13
    %p10 = scmp.ge.s32.totalorder %s9, 4
    %s19 = sphi 0, %s21
    %s22 = sphi 0, %s19
    %s23 = sphi 0, %s22
    %s39 = sphi 0, %s23
    %s43 = sphi 0, %s43
    %s45 = sphi 0, %s43
    %s46 = sphi 0, %s45
    %s60 = sphi 0, %s46
    %s64 = sphi 0, %s64
    %s66 = sphi 0, %s64
    %s67 = sphi 0, %s66
    %s81 = sphi 0, %s67
    %s87 = sphi 0, %s89
    %s90 = sphi 0, %s87
    %s91 = sphi 0, %s90
    %s107 = sphi 0, %s91
  $region4: #{_lambda_.47} parent=0 // loop_header_branch
    %12 = sbr.rel (%p10) target = $region8
  $region5: #{_lambda_.47} parent=0 // loop_body
    %s14 = ssub.s32 %s9, 1
    %s15 = ssub.s32 %s9, 2
    %s16 = sadd.s32 %s9, 1
    %s17 = ssub.s32 %s9, %s16
    %p18 = scmp.eq.s32.totalorder %s17, 0
    %s20 = sadd.s32 %s19, 1
    %s21 = scalar_select %p18, %s19, %s20
    %p24 = pneg %p18
    %p25 = scmp.eq.s32.totalorder %s9, 1
    %p26 = por %p24, %p25
    %p27 = scmp.ne.s32.totalorder %s19, %s22
    %p28 = scmp.eq.s32.totalorder %s9, 0
    %p29 = por %p27, %p28
    %p30 = scmp.ne.s32.totalorder %s19, %s22
    %p31 = scmp.eq.s32.totalorder %s14, 1
    %p32 = por %p30, %p31
    %p33 = scmp.ne.s32.totalorder %s22, %s23
    %p34 = scmp.eq.s32.totalorder %s14, 0
    %p35 = por %p33, %p34
    %p36 = scmp.ne.s32.totalorder %s22, %s23
    %p37 = scmp.eq.s32.totalorder %s15, 1
    %p38 = por %p36, %p37
    %p40 = scmp.ne.s32.totalorder %s23, %s39
    %p41 = scmp.eq.s32.totalorder %s15, 0
    %p42 = por %p40, %p41
    %s44 = sadd.s32 %s43, 1
    %p47 = scmp.eq.s32.totalorder %s9, 1
    %p48 = scmp.ne.s32.totalorder %s43, %s45
    %p49 = scmp.eq.s32.totalorder %s9, 0
    %p50 = por %p48, %p49
    %p51 = scmp.ne.s32.totalorder %s43, %s45
    %p52 = scmp.eq.s32.totalorder %s14, 1
    %p53 = por %p51, %p52
    %p54 = scmp.ne.s32.totalorder %s45, %s46
    %p55 = scmp.eq.s32.totalorder %s14, 0
    %p56 = por %p54, %p55
    %p57 = scmp.ne.s32.totalorder %s45, %s46
    %p58 = scmp.eq.s32.totalorder %s15, 1
    %p59 = por %p57, %p58
    %p61 = scmp.ne.s32.totalorder %s46, %s60
    %p62 = scmp.eq.s32.totalorder %s15, 0
    %p63 = por %p61, %p62
    %s65 = sadd.s32 %s64, 1
    %p68 = scmp.eq.s32.totalorder %s9, 1
    %p69 = scmp.ne.s32.totalorder %s64, %s66
    %p70 = scmp.eq.s32.totalorder %s9, 0
    %p71 = por %p69, %p70
    %p72 = scmp.ne.s32.totalorder %s64, %s66
    %p73 = scmp.eq.s32.totalorder %s14, 1
    %p74 = por %p72, %p73
    %p75 = scmp.ne.s32.totalorder %s66, %s67
    %p76 = scmp.eq.s32.totalorder %s14, 0
    %p77 = por %p75, %p76
    %p78 = scmp.ne.s32.totalorder %s66, %s67
    %p79 = scmp.eq.s32.totalorder %s15, 1
    %p80 = por %p78, %p79
    %p82 = scmp.ne.s32.totalorder %s67, %s81
    %p83 = scmp.eq.s32.totalorder %s15, 0
    %p84 = por %p82, %p83
    %s85 = ssub.s32 %s9, %s16
    %p86 = scmp.eq.s32.totalorder %s85, 0
    %s88 = sadd.s32 %s87, 1
    %s89 = scalar_select %p86, %s87, %s88
    %p92 = pneg %p86
    %p93 = scmp.eq.s32.totalorder %s9, 1
    %p94 = por %p92, %p93
    %p95 = scmp.ne.s32.totalorder %s87, %s90
    %p96 = scmp.eq.s32.totalorder %s9, 0
    %p97 = por %p95, %p96
    %p98 = scmp.ne.s32.totalorder %s87, %s90
    %p99 = scmp.eq.s32.totalorder %s14, 1
    %p100 = por %p98, %p99
    %p101 = scmp.ne.s32.totalorder %s90, %s91
    %p102 = scmp.eq.s32.totalorder %s14, 0
    %p103 = por %p101, %p102
    %p104 = scmp.ne.s32.totalorder %s90, %s91
    %p105 = scmp.eq.s32.totalorder %s15, 1
    %p106 = por %p104, %p105
    %p108 = scmp.ne.s32.totalorder %s91, %s107
    %p109 = scmp.eq.s32.totalorder %s15, 0
    %p110 = por %p108, %p109
    %p111 = scmp.le.s32.totalorder 1, %s9
    %p112 = scmp.lt.s32.totalorder %s9, 3
    %p113 = pnand %p111, %p112
    %p114 = pneg %p113
    // Predicated region
    $region9: #{_lambda_.47} parent=5 // pred_check
      _
    $region10: #{_lambda_.47} parent=5 // pred_check_branch
      %116 = sbr.rel (%p113) target = $region12
    $region11: #{_lambda_.47} parent=5 // pred_region
      %s117 = ssub.s32 %s9, 1
      // Predicated region
      $region13: #{_lambda_.47} parent=11 // pred_check
        %p118 = pneg %p56
      $region14: #{_lambda_.47} parent=11 // pred_check_branch
        %120 = sbr.rel (%p118) target = $region16
      $region15: #{_lambda_.47} parent=11 // pred_region
        _
      $region16: #{_lambda_.47} parent=11 // pred_fallthru
        _
      // Predicated region
      $region17: #{_lambda_.47} parent=11 // pred_check
        %p121 = pneg %p77
      $region18: #{_lambda_.47} parent=11 // pred_check_branch
        %123 = sbr.rel (%p121) target = $region20
      $region19: #{_lambda_.47} parent=11 // pred_region
        _
      $region20: #{_lambda_.47} parent=11 // pred_fallthru
        _
    $region12: #{_lambda_.47} parent=5 // pred_fallthru
      _
    %p124 = scmp.lt.s32.totalorder %s9, 2
    // Predicated region
    $region21: #{_lambda_.47} parent=5 // pred_check
      %p125 = pneg %p124
    $region22: #{_lambda_.47} parent=5 // pred_check_branch
      %127 = sbr.rel (%p125) target = $region24
    $region23: #{_lambda_.47} parent=5 // pred_region
      // Predicated region
      $region25: #{_lambda_.47} parent=23 // pred_check
        %p128 = pneg %p29
      $region26: #{_lambda_.47} parent=23 // pred_check_branch
        %130 = sbr.rel (%p128) target = $region28
      $region27: #{_lambda_.47} parent=23 // pred_region
        %p131 = scmp.lt.s32.totalorder %s9, 1
        %s132 = scalar_select %p131, %s9, 1
        %s133 = smul.addr %s132, 18
        %s134 = smul.addr %s133, 8
        %s135 = scalar_lea.vmem %s0, %s134
      $region28: #{_lambda_.47} parent=23 // pred_fallthru
        _
    $region24: #{_lambda_.47} parent=5 // pred_fallthru
      _
    %p136 = scmp.le.s32.totalorder 1, %s9
    %p137 = scmp.lt.s32.totalorder %s9, 3
    %p138 = pnand %p136, %p137
    %p139 = pneg %p138
    // Predicated region
    $region29: #{_lambda_.47} parent=5 // pred_check
      _
    $region30: #{_lambda_.47} parent=5 // pred_check_branch
      %141 = sbr.rel (%p138) target = $region32
    $region31: #{_lambda_.47} parent=5 // pred_region
      %s142 = ssub.s32 %s9, 1
      %p143 = scmp.lt.s32.totalorder %s14, 1
      %s144 = scalar_select %p143, %s14, 1
      %s145 = smul.addr %s144, 18
      %s146 = smul.addr %s145, 8
      %s147 = scalar_lea.vmem %s0, %s146
      %p148 = pneg %p35
      %p149 = pneg %p32
      %p150 = pneg %p56
      %p151 = pneg %p53
      %p152 = pneg %p77
      %p153 = pneg %p74
      %p154 = pneg %p103
      %p155 = pneg %p100
      %p156 = scmp.lt.s32.totalorder %s14, 1
      %s157 = scalar_select %p156, %s14, 1
      %s158 = smul.addr %s157, 2
      %s159 = smul.addr %s158, 8
      %s160 = scalar_lea.vmem %s3, %s159
      %p161 = scmp.lt.s32.totalorder %s14, 1
      %s162 = scalar_select %p161, %s14, 1
      %s163 = smul.addr %s162, 18
      %s164 = smul.addr %s163, 8
      %s165 = scalar_lea.vmem %s0, %s164
      %p166 = scmp.lt.s32.totalorder %s14, 1
      %s167 = scalar_select %p166, %s14, 1
      %s168 = smul.addr %s167, 2
      %s169 = smul.addr %s168, 8
      %s170 = scalar_lea.vmem %s3, %s169
      %v172 = vld [vmem:[%s165] sm:$0xff]
      %v173 = vld [vmem:[%s165 + $0x8] sm:$0xff]
      %v174 = vld [vmem:[%s165 + $0x10] sm:$0xff]
      %v175 = vld [vmem:[%s165 + $0x18] sm:$0xff]
      %v176 = vld [vmem:[%s165 + $0x20] sm:$0xff]
      %v177 = vld [vmem:[%s165 + $0x28] sm:$0xff]
      %v178 = vld [vmem:[%s165 + $0x30] sm:$0xff]
      %v179 = vld [vmem:[%s165 + $0x38] sm:$0xff]
      %v180 = vld [vmem:[%s165 + $0x40] sm:$0xff]
      %v181 = vld [vmem:[%s165 + $0x48] sm:$0xff]
      %v182 = vld [vmem:[%s165 + $0x50] sm:$0xff]
      %v183 = vld [vmem:[%s165 + $0x58] sm:$0xff]
      %v184 = vld [vmem:[%s165 + $0x60] sm:$0xff]
      %v185 = vld [vmem:[%s165 + $0x68] sm:$0xff]
      %v186 = vld [vmem:[%s165 + $0x70] sm:$0xff]
      %v187 = vld [vmem:[%s165 + $0x78] sm:$0xff]
      %v188 = vld [vmem:[%s165 + $0x80] sm:$0xff]
      %v189 = vld [vmem:[%s165 + $0x88] sm:$0xff]
      %v190 = vld [vmem:[%s1] sm:$0xff]
      %v191 = vld [vmem:[%s1 + $0x8] sm:$0xff]
      %v192 = vpack.c.bf16 %v173, %v172
      %v193 = vpack.c.bf16 %v175, %v174
      %v194 = vpack.c.bf16 %v177, %v176
      %v195 = vpack.c.bf16 %v179, %v178
      %v196 = vpack.c.bf16 %v181, %v180
      %v197 = vpack.c.bf16 %v183, %v182
      %v198 = vpack.c.bf16 %v185, %v184
      %v199 = vpack.c.bf16 %v187, %v186
      %v200 = vpack.c.bf16 %v189, %v188
      %v201 = vld [vmem:[%s2] sm:$0xff]
      %v202 = vld [vmem:[%s2 + $0x8] sm:$0xff]
      %204 = vset.pattern.permute.xlu0 0
      %205 = vperm.xlu0 %204, %v201
      %v206 = vpop.permute.xlu0 %205
      %209 = vset.pattern.permute.xlu0 0
      %210 = vperm.xlu0 %209, %v202
      %v211 = vpop.permute.xlu0 %210
      %v215 = vunpack.c.l.b16 %v190
      %v216 = vunpack.c.h.b16 %v190
      %v217 = vunpack.c.l.b16 %v191
      %v218 = vunpack.c.h.b16 %v191
      %v219 = vpack.c.b16 %v217, %v215
      %v220 = vpack.c.b16 %v218, %v216
      %vm222 = vcmask 130048
      %v224 = vsel %vm222, %v220, 0
      %226 = vmatpush.bf16.msra.mxu0 %v199
      %227 = vmatpush.bf16.msra.mxu0 %v198
      %228 = vmatpush.bf16.msra.mxu0 %v197
      %229 = vmatpush.bf16.msra.mxu0 %v196
      %230 = vmatpush.bf16.msra.mxu0 %v195
      %231 = vmatpush.bf16.msra.mxu0 %v194
      %232 = vmatpush.bf16.msra.mxu0 %v193
      %233 = vmatpush.bf16.msra.mxu0 %v192
      %234 = vmatmul.bf16.gmra.mxu0 %v219
      %v235 = vpop.f32.mrf.mxu0
      %v236 = vadd.f32 %v206, %v235
      %v237 = vpop.f32.mrf.mxu0
      %v238 = vadd.f32 %v211, %v237
      %239 = vdwg.mxu0
      %240 = vmatpush.bf16.msra.mxu0 0
      %241 = vmatpush.bf16.msra.mxu0 0
      %242 = vmatpush.bf16.msra.mxu0 0
      %243 = vmatpush.bf16.msra.mxu0 0
      %244 = vmatpush.bf16.msra.mxu0 0
      %245 = vmatpush.bf16.msra.mxu0 0
      %246 = vmatpush.bf16.msra.mxu0 0
      %247 = vmatpush.bf16.msra.mxu0 %v200
      %248 = vmatmul.bf16.gmra.mxu0 %v224
      %v249 = vpop.f32.mrf.mxu0
      %v250 = vadd.f32 %v236, %v249
      %v251 = vpop.f32.mrf.mxu0
      %v252 = vadd.f32 %v238, %v251
      %253 = vdwg.mxu0
      %v254 = vmax.f32 %v250, 0.0
      %v255 = vmax.f32 %v252, 0.0
      %vm256 = vcmask 523264
      %257 = vst.msk [vmem:[%s170] sm:$0xff] %vm256, %v254
      %258 = vst.msk [vmem:[%s170 + $0x8] sm:$0xff] %vm256, %v255
      %p259 = scmp.lt.s32.totalorder %s14, 1
      %s260 = scalar_select %p259, %s14, 1
      %s261 = smul.addr %s260, 2
      %s262 = smul.addr %s261, 8
      %s263 = scalar_lea.vmem %s3, %s262
      // Predicated region
      $region33: #{_lambda_.47} parent=31 // pred_check
        %p264 = pneg %p100
      $region34: #{_lambda_.47} parent=31 // pred_check_branch
        %266 = sbr.rel (%p264) target = $region36
      $region35: #{_lambda_.47} parent=31 // pred_region
        _
      $region36: #{_lambda_.47} parent=31 // pred_fallthru
        _
    $region32: #{_lambda_.47} parent=5 // pred_fallthru
      _
    %p267 = scmp.le.s32.totalorder 2, %s9
    // Predicated region
    $region37: #{_lambda_.47} parent=5 // pred_check
      %p268 = pneg %p267
    $region38: #{_lambda_.47} parent=5 // pred_check_branch
      %270 = sbr.rel (%p268) target = $region40
    $region39: #{_lambda_.47} parent=5 // pred_region
      %s271 = ssub.s32 %s9, 2
      // Predicated region
      $region41: #{_lambda_.47} parent=39 // pred_check
        %p272 = pneg %p106
      $region42: #{_lambda_.47} parent=39 // pred_check_branch
        %274 = sbr.rel (%p272) target = $region44
      $region43: #{_lambda_.47} parent=39 // pred_region
        %p275 = scmp.lt.s32.totalorder %s15, 1
        %s276 = scalar_select %p275, %s15, 1
        %s277 = smul.addr %s276, 2
        %s278 = smul.addr %s277, 8
        %s279 = scalar_lea.vmem %s3, %s278
      $region44: #{_lambda_.47} parent=39 // pred_fallthru
        _
    $region40: #{_lambda_.47} parent=5 // pred_fallthru
      _
  $region6: #{_lambda_.47} parent=0 // loop_footer
    %s13 = sadd.s32 1, %s9
  $region7: #{_lambda_.47} parent=0 // loop_footer_branch
    %8 = sbr.rel target = $region3
  $region8: #{_lambda_.47} parent=0 // loop_exit
    _

// kernel: _lambda_.48
$region0: #{_lambda_.48}
  #allocation0 [shape = 'u32[]', space=smem, size = 0x4, offset = 0x4, fixed_abs, tag = 'smem constant byte address 0x4 - core index']
  #allocation1 [shape = 'u32[72,128]{1,0:T(1,128)}', space=vmem, size = 0x9000, scoped, tag = 'internal scratch']
  %s0 = inlined_call_operand.vmem [shape: f32[2,16,64], index: 0, kind: input, shape index: {}]
  %s1 = inlined_call_operand.vmem [shape: bf16[32,16], index: 1, kind: input, shape index: {}]
  %s2 = inlined_call_operand.vmem [shape: f32[32,1], index: 2, kind: input, shape index: {}]
  %s3 = inlined_call_operand.vmem [shape: f32[2,32,64], index: 3, kind: input, shape index: {}]
  %s4 = inlined_call_operand.vmem [shape: f32[2,32,64], index: 4, kind: output, shape index: {}]
  %s5 = sld [smem:[#allocation0]]
  $region49: #{_lambda_.48} parent=0
    _
  %s7 = ssub.s32 1, %s5
  %s8 = scalar_select 0, %s7, %s5
  loop: start=0, step=1, limit=4
  $region2: #{_lambda_.48} parent=0 // loop_pre_header
    _
  $region3: #{_lambda_.48} parent=0 // loop_header
    %s10 = sphi 0, %s14
    %p11 = scmp.ge.s32.totalorder %s10, 4
    %s20 = sphi 0, %s22
    %s23 = sphi 0, %s20
    %s24 = sphi 0, %s23
    %s40 = sphi 0, %s24
    %s44 = sphi 0, %s44
    %s46 = sphi 0, %s44
    %s47 = sphi 0, %s46
    %s61 = sphi 0, %s47
    %s65 = sphi 0, %s65
    %s67 = sphi 0, %s65
    %s68 = sphi 0, %s67
    %s82 = sphi 0, %s68
    %s88 = sphi 0, %s90
    %s91 = sphi 0, %s88
    %s92 = sphi 0, %s91
    %s108 = sphi 0, %s92
    %s114 = sphi 0, %s116
    %s117 = sphi 0, %s114
    %s118 = sphi 0, %s117
    %s134 = sphi 0, %s118
  $region4: #{_lambda_.48} parent=0 // loop_header_branch
    %13 = sbr.rel (%p11) target = $region8
  $region5: #{_lambda_.48} parent=0 // loop_body
    %s15 = ssub.s32 %s10, 1
    %s16 = ssub.s32 %s10, 2
    %s17 = sadd.s32 %s10, 1
    %s18 = ssub.s32 %s10, %s17
    %p19 = scmp.eq.s32.totalorder %s18, 0
    %s21 = sadd.s32 %s20, 1
    %s22 = scalar_select %p19, %s20, %s21
    %p25 = pneg %p19
    %p26 = scmp.eq.s32.totalorder %s10, 1
    %p27 = por %p25, %p26
    %p28 = scmp.ne.s32.totalorder %s20, %s23
    %p29 = scmp.eq.s32.totalorder %s10, 0
    %p30 = por %p28, %p29
    %p31 = scmp.ne.s32.totalorder %s20, %s23
    %p32 = scmp.eq.s32.totalorder %s15, 1
    %p33 = por %p31, %p32
    %p34 = scmp.ne.s32.totalorder %s23, %s24
    %p35 = scmp.eq.s32.totalorder %s15, 0
    %p36 = por %p34, %p35
    %p37 = scmp.ne.s32.totalorder %s23, %s24
    %p38 = scmp.eq.s32.totalorder %s16, 1
    %p39 = por %p37, %p38
    %p41 = scmp.ne.s32.totalorder %s24, %s40
    %p42 = scmp.eq.s32.totalorder %s16, 0
    %p43 = por %p41, %p42
    %s45 = sadd.s32 %s44, 1
    %p48 = scmp.eq.s32.totalorder %s10, 1
    %p49 = scmp.ne.s32.totalorder %s44, %s46
    %p50 = scmp.eq.s32.totalorder %s10, 0
    %p51 = por %p49, %p50
    %p52 = scmp.ne.s32.totalorder %s44, %s46
    %p53 = scmp.eq.s32.totalorder %s15, 1
    %p54 = por %p52, %p53
    %p55 = scmp.ne.s32.totalorder %s46, %s47
    %p56 = scmp.eq.s32.totalorder %s15, 0
    %p57 = por %p55, %p56
    %p58 = scmp.ne.s32.totalorder %s46, %s47
    %p59 = scmp.eq.s32.totalorder %s16, 1
    %p60 = por %p58, %p59
    %p62 = scmp.ne.s32.totalorder %s47, %s61
    %p63 = scmp.eq.s32.totalorder %s16, 0
    %p64 = por %p62, %p63
    %s66 = sadd.s32 %s65, 1
    %p69 = scmp.eq.s32.totalorder %s10, 1
    %p70 = scmp.ne.s32.totalorder %s65, %s67
    %p71 = scmp.eq.s32.totalorder %s10, 0
    %p72 = por %p70, %p71
    %p73 = scmp.ne.s32.totalorder %s65, %s67
    %p74 = scmp.eq.s32.totalorder %s15, 1
    %p75 = por %p73, %p74
    %p76 = scmp.ne.s32.totalorder %s67, %s68
    %p77 = scmp.eq.s32.totalorder %s15, 0
    %p78 = por %p76, %p77
    %p79 = scmp.ne.s32.totalorder %s67, %s68
    %p80 = scmp.eq.s32.totalorder %s16, 1
    %p81 = por %p79, %p80
    %p83 = scmp.ne.s32.totalorder %s68, %s82
    %p84 = scmp.eq.s32.totalorder %s16, 0
    %p85 = por %p83, %p84
    %s86 = ssub.s32 %s10, %s17
    %p87 = scmp.eq.s32.totalorder %s86, 0
    %s89 = sadd.s32 %s88, 1
    %s90 = scalar_select %p87, %s88, %s89
    %p93 = pneg %p87
    %p94 = scmp.eq.s32.totalorder %s10, 1
    %p95 = por %p93, %p94
    %p96 = scmp.ne.s32.totalorder %s88, %s91
    %p97 = scmp.eq.s32.totalorder %s10, 0
    %p98 = por %p96, %p97
    %p99 = scmp.ne.s32.totalorder %s88, %s91
    %p100 = scmp.eq.s32.totalorder %s15, 1
    %p101 = por %p99, %p100
    %p102 = scmp.ne.s32.totalorder %s91, %s92
    %p103 = scmp.eq.s32.totalorder %s15, 0
    %p104 = por %p102, %p103
    %p105 = scmp.ne.s32.totalorder %s91, %s92
    %p106 = scmp.eq.s32.totalorder %s16, 1
    %p107 = por %p105, %p106
    %p109 = scmp.ne.s32.totalorder %s92, %s108
    %p110 = scmp.eq.s32.totalorder %s16, 0
    %p111 = por %p109, %p110
    %s112 = ssub.s32 %s10, %s17
    %p113 = scmp.eq.s32.totalorder %s112, 0
    %s115 = sadd.s32 %s114, 1
    %s116 = scalar_select %p113, %s114, %s115
    %p119 = pneg %p113
    %p120 = scmp.eq.s32.totalorder %s10, 1
    %p121 = por %p119, %p120
    %p122 = scmp.ne.s32.totalorder %s114, %s117
    %p123 = scmp.eq.s32.totalorder %s10, 0
    %p124 = por %p122, %p123
    %p125 = scmp.ne.s32.totalorder %s114, %s117
    %p126 = scmp.eq.s32.totalorder %s15, 1
    %p127 = por %p125, %p126
    %p128 = scmp.ne.s32.totalorder %s117, %s118
    %p129 = scmp.eq.s32.totalorder %s15, 0
    %p130 = por %p128, %p129
    %p131 = scmp.ne.s32.totalorder %s117, %s118
    %p132 = scmp.eq.s32.totalorder %s16, 1
    %p133 = por %p131, %p132
    %p135 = scmp.ne.s32.totalorder %s118, %s134
    %p136 = scmp.eq.s32.totalorder %s16, 0
    %p137 = por %p135, %p136
    %p138 = scmp.le.s32.totalorder 1, %s10
    %p139 = scmp.lt.s32.totalorder %s10, 3
    %p140 = pnand %p138, %p139
    %p141 = pneg %p140
    // Predicated region
    $region9: #{_lambda_.48} parent=5 // pred_check
      _
    $region10: #{_lambda_.48} parent=5 // pred_check_branch
      %143 = sbr.rel (%p140) target = $region12
    $region11: #{_lambda_.48} parent=5 // pred_region
      %s144 = ssub.s32 %s10, 1
      // Predicated region
      $region13: #{_lambda_.48} parent=11 // pred_check
        %p145 = pneg %p57
      $region14: #{_lambda_.48} parent=11 // pred_check_branch
        %147 = sbr.rel (%p145) target = $region16
      $region15: #{_lambda_.48} parent=11 // pred_region
        _
      $region16: #{_lambda_.48} parent=11 // pred_fallthru
        _
      // Predicated region
      $region17: #{_lambda_.48} parent=11 // pred_check
        %p148 = pneg %p78
      $region18: #{_lambda_.48} parent=11 // pred_check_branch
        %150 = sbr.rel (%p148) target = $region20
      $region19: #{_lambda_.48} parent=11 // pred_region
        _
      $region20: #{_lambda_.48} parent=11 // pred_fallthru
        _
    $region12: #{_lambda_.48} parent=5 // pred_fallthru
      _
    %p151 = scmp.lt.s32.totalorder %s10, 2
    // Predicated region
    $region21: #{_lambda_.48} parent=5 // pred_check
      %p152 = pneg %p151
    $region22: #{_lambda_.48} parent=5 // pred_check_branch
      %154 = sbr.rel (%p152) target = $region24
    $region23: #{_lambda_.48} parent=5 // pred_region
      // Predicated region
      $region25: #{_lambda_.48} parent=23 // pred_check
        %p155 = pneg %p30
      $region26: #{_lambda_.48} parent=23 // pred_check_branch
        %157 = sbr.rel (%p155) target = $region28
      $region27: #{_lambda_.48} parent=23 // pred_region
        %p158 = scmp.lt.s32.totalorder %s10, 1
        %s159 = scalar_select %p158, %s10, 1
        %s160 = smul.addr %s159, 2
        %s161 = smul.addr %s160, 8
        %s162 = scalar_lea.vmem %s0, %s161
      $region28: #{_lambda_.48} parent=23 // pred_fallthru
        _
      // Predicated region
      $region29: #{_lambda_.48} parent=23 // pred_check
        %p163 = pneg %p98
      $region30: #{_lambda_.48} parent=23 // pred_check_branch
        %165 = sbr.rel (%p163) target = $region32
      $region31: #{_lambda_.48} parent=23 // pred_region
        %p166 = scmp.lt.s32.totalorder %s10, 1
        %s167 = scalar_select %p166, %s10, 1
        %s168 = smul.addr %s167, 4
        %s169 = smul.addr %s168, 8
        %s170 = scalar_lea.vmem %s3, %s169
      $region32: #{_lambda_.48} parent=23 // pred_fallthru
        _
    $region24: #{_lambda_.48} parent=5 // pred_fallthru
      _
    %p171 = scmp.le.s32.totalorder 1, %s10
    %p172 = scmp.lt.s32.totalorder %s10, 3
    %p173 = pnand %p171, %p172
    %p174 = pneg %p173
    // Predicated region
    $region33: #{_lambda_.48} parent=5 // pred_check
      _
    $region34: #{_lambda_.48} parent=5 // pred_check_branch
      %176 = sbr.rel (%p173) target = $region36
    $region35: #{_lambda_.48} parent=5 // pred_region
      %s177 = ssub.s32 %s10, 1
      %p178 = scmp.lt.s32.totalorder %s15, 1
      %s179 = scalar_select %p178, %s15, 1
      %s180 = smul.addr %s179, 2
      %s181 = smul.addr %s180, 8
      %s182 = scalar_lea.vmem %s0, %s181
      %p183 = pneg %p36
      %p184 = pneg %p33
      %p185 = pneg %p57
      %p186 = pneg %p54
      %p187 = pneg %p78
      %p188 = pneg %p75
      %p189 = scmp.lt.s32.totalorder %s15, 1
      %s190 = scalar_select %p189, %s15, 1
      %s191 = smul.addr %s190, 4
      %s192 = smul.addr %s191, 8
      %s193 = scalar_lea.vmem %s3, %s192
      %p194 = pneg %p104
      %p195 = pneg %p101
      %p196 = pneg %p130
      %p197 = pneg %p127
      %p198 = scmp.lt.s32.totalorder %s15, 1
      %s199 = scalar_select %p198, %s15, 1
      %s200 = smul.addr %s199, 4
      %s201 = smul.addr %s200, 8
      %s202 = scalar_lea.vmem %s4, %s201
      %p203 = scmp.lt.s32.totalorder %s15, 1
      %s204 = scalar_select %p203, %s15, 1
      %s205 = smul.addr %s204, 2
      %s206 = smul.addr %s205, 8
      %s207 = scalar_lea.vmem %s0, %s206
      %p208 = scmp.lt.s32.totalorder %s15, 1
      %s209 = scalar_select %p208, %s15, 1
      %s210 = smul.addr %s209, 4
      %s211 = smul.addr %s210, 8
      %s212 = scalar_lea.vmem %s3, %s211
      %p213 = scmp.lt.s32.totalorder %s15, 1
      %s214 = scalar_select %p213, %s15, 1
      %s215 = smul.addr %s214, 4
      %s216 = smul.addr %s215, 8
      %s217 = scalar_lea.vmem %s4, %s216
      %v219 = vld [vmem:[%s207] sm:$0xff]
      %v220 = vld [vmem:[%s207 + $0x8] sm:$0xff]
      %v221 = vld [vmem:[%s1] sm:$0xf]
      %v222 = vld [vmem:[%s1 + $0x4] sm:$0xf]
      %v223 = vld [vmem:[%s1 + $0x8] sm:$0xf]
      %v224 = vld [vmem:[%s1 + $0xc] sm:$0xf]
      %v225 = vpack.c.bf16 %v220, %v219
      %v226 = vld [vmem:[%s2] sm:$0xff]
      %v227 = vld [vmem:[%s2 + $0x8] sm:$0xff]
      %v228 = vld [vmem:[%s2 + $0x10] sm:$0xff]
      %v229 = vld [vmem:[%s2 + $0x18] sm:$0xff]
      %231 = vset.pattern.permute.xlu0 0
      %232 = vperm.xlu0 %231, %v226
      %v233 = vpop.permute.xlu0 %232
      %236 = vset.pattern.permute.xlu0 0
      %237 = vperm.xlu0 %236, %v227
      %v238 = vpop.permute.xlu0 %237
      %241 = vset.pattern.permute.xlu0 0
      %242 = vperm.xlu0 %241, %v228
      %v243 = vpop.permute.xlu0 %242
      %246 = vset.pattern.permute.xlu0 0
      %247 = vperm.xlu0 %246, %v229
      %v248 = vpop.permute.xlu0 %247
      %v254 = vunpack.c.l.b16 %v221
      %v255 = vunpack.c.l.b16 %v222
      %v256 = vunpack.c.l.b16 %v223
      %v257 = vunpack.c.l.b16 %v224
      %v258 = vpack.c.b16 %v255, %v254
      %v259 = vpack.c.b16 %v257, %v256
      %vm260 = vcmask 130048
      %v262 = vsel %vm260, %v258, 0
      %v265 = vsel %vm260, %v259, 0
      %267 = vmatpush.bf16.msra.mxu0 0
      %268 = vmatpush.bf16.msra.mxu0 0
      %269 = vmatpush.bf16.msra.mxu0 0
      %270 = vmatpush.bf16.msra.mxu0 0
      %271 = vmatpush.bf16.msra.mxu0 0
      %272 = vmatpush.bf16.msra.mxu0 0
      %273 = vmatpush.bf16.msra.mxu0 0
      %274 = vmatpush.bf16.msra.mxu0 %v225
      %275 = vmatmul.bf16.gmra.mxu0 %v262
      %v276 = vpop.f32.mrf.mxu0
      %v277 = vadd.f32 %v233, %v276
      %v278 = vpop.f32.mrf.mxu0
      %v279 = vadd.f32 %v238, %v278
      %280 = vmatmul.bf16.gmra.mxu0 %v265
      %v281 = vpop.f32.mrf.mxu0
      %v282 = vadd.f32 %v243, %v281
      %v283 = vpop.f32.mrf.mxu0
      %v284 = vadd.f32 %v248, %v283
      %285 = vdwg.mxu0
      %v286 = vld [vmem:[%s212] sm:$0xff]
      %v287 = vld [vmem:[%s212 + $0x8] sm:$0xff]
      %v288 = vld [vmem:[%s212 + $0x10] sm:$0xff]
      %v289 = vld [vmem:[%s212 + $0x18] sm:$0xff]
      %v290 = vadd.f32 %v277, %v286
      %v291 = vadd.f32 %v279, %v287
      %v292 = vadd.f32 %v282, %v288
      %v293 = vadd.f32 %v284, %v289
      %v294 = vmax.f32 %v290, 0.0
      %v295 = vmax.f32 %v291, 0.0
      %v296 = vmax.f32 %v292, 0.0
      %v297 = vmax.f32 %v293, 0.0
      %vm298 = vcmask 523264
      %299 = vst.msk [vmem:[%s217] sm:$0xff] %vm298, %v294
      %300 = vst.msk [vmem:[%s217 + $0x8] sm:$0xff] %vm298, %v295
      %301 = vst.msk [vmem:[%s217 + $0x10] sm:$0xff] %vm298, %v296
      %302 = vst.msk [vmem:[%s217 + $0x18] sm:$0xff] %vm298, %v297
      %p303 = scmp.lt.s32.totalorder %s15, 1
      %s304 = scalar_select %p303, %s15, 1
      %s305 = smul.addr %s304, 4
      %s306 = smul.addr %s305, 8
      %s307 = scalar_lea.vmem %s4, %s306
      // Predicated region
      $region37: #{_lambda_.48} parent=35 // pred_check
        %p308 = pneg %p127
      $region38: #{_lambda_.48} parent=35 // pred_check_branch
        %310 = sbr.rel (%p308) target = $region40
      $region39: #{_lambda_.48} parent=35 // pred_region
        _
      $region40: #{_lambda_.48} parent=35 // pred_fallthru
        _
    $region36: #{_lambda_.48} parent=5 // pred_fallthru
      _
    %p311 = scmp.le.s32.totalorder 2, %s10
    // Predicated region
    $region41: #{_lambda_.48} parent=5 // pred_check
      %p312 = pneg %p311
    $region42: #{_lambda_.48} parent=5 // pred_check_branch
      %314 = sbr.rel (%p312) target = $region44
    $region43: #{_lambda_.48} parent=5 // pred_region
      %s315 = ssub.s32 %s10, 2
      // Predicated region
      $region45: #{_lambda_.48} parent=43 // pred_check
        %p316 = pneg %p133
      $region46: #{_lambda_.48} parent=43 // pred_check_branch
        %318 = sbr.rel (%p316) target = $region48
      $region47: #{_lambda_.48} parent=43 // pred_region
        %p319 = scmp.lt.s32.totalorder %s16, 1
        %s320 = scalar_select %p319, %s16, 1
        %s321 = smul.addr %s320, 4
        %s322 = smul.addr %s321, 8
        %s323 = scalar_lea.vmem %s4, %s322
      $region48: #{_lambda_.48} parent=43 // pred_fallthru
        _
    $region44: #{_lambda_.48} parent=5 // pred_fallthru
      _
  $region6: #{_lambda_.48} parent=0 // loop_footer
    %s14 = sadd.s32 1, %s10
  $region7: #{_lambda_.48} parent=0 // loop_footer_branch
    %9 = sbr.rel target = $region3
  $region8: #{_lambda_.48} parent=0 // loop_exit
    _

// kernel: _lambda_.52
$region0: #{_lambda_.52}
  #allocation0 [shape = 'u32[]', space=smem, size = 0x4, offset = 0x4, fixed_abs, tag = 'smem constant byte address 0x4 - core index']
  #allocation1 [shape = 'u32[72,128]{1,0:T(1,128)}', space=vmem, size = 0x9000, scoped, tag = 'internal scratch']
  #allocation2 [shape = 'f32[8,128]{1,0:T(8,128)}', space=vmem, size = 0x1000, scoped, tag = 'scratch operand']
  %s0 = inlined_call_operand.vmem [shape: bf16[8,128], index: 0, kind: input, shape index: {}]
  %s1 = inlined_call_operand.vmem [shape: bf16[128,128], index: 1, kind: input, shape index: {}]
  %s2 = inlined_call_operand.vmem [shape: f32[1,128], index: 2, kind: input, shape index: {}]
  %s3 = inlined_call_operand.vmem [shape: f32[8,128], index: 3, kind: output, shape index: {}]
  %s4 = sld [smem:[#allocation0]]
  $region30: #{_lambda_.52} parent=0
    _
  %s6 = ssub.s32 1, %s4
  %s7 = scalar_select 0, %s6, %s4
  // Predicated region
  $region2: #{_lambda_.52} parent=0 // pred_check
    _
  $region3: #{_lambda_.52} parent=0 // pred_check_branch
    %9 = sbr.rel (0) target = $region5
  $region4: #{_lambda_.52} parent=0 // pred_region
    _
  $region5: #{_lambda_.52} parent=0 // pred_fallthru
    _
  // Predicated region
  $region6: #{_lambda_.52} parent=0 // pred_check
    _
  $region7: #{_lambda_.52} parent=0 // pred_check_branch
    %11 = sbr.rel (0) target = $region9
  $region8: #{_lambda_.52} parent=0 // pred_region
    _
  $region9: #{_lambda_.52} parent=0 // pred_fallthru
    _
  // Predicated region
  $region10: #{_lambda_.52} parent=0 // pred_check
    _
  $region11: #{_lambda_.52} parent=0 // pred_check_branch
    %13 = sbr.rel (0) target = $region13
  $region12: #{_lambda_.52} parent=0 // pred_region
    _
  $region13: #{_lambda_.52} parent=0 // pred_fallthru
    _
  %p14 = scmp.eq.s32.totalorder 0, 0
  // Predicated region
  $region14: #{_lambda_.52} parent=0 // pred_check
    %p15 = pneg %p14
  $region15: #{_lambda_.52} parent=0 // pred_check_branch
    %17 = sbr.rel (%p15) target = $region17
  $region16: #{_lambda_.52} parent=0 // pred_region
    %18 = vst [vmem:[#allocation2] sm:$0xff] 0.0
  $region17: #{_lambda_.52} parent=0 // pred_fallthru
    _
  %v19 = vld [vmem:[#allocation2] sm:$0xff]
  %v20 = vld [vmem:[%s0] sm:$0xf]
  %v21 = vld [vmem:[%s1] sm:$0xf]
  %v22 = vld [vmem:[%s1 + $0x4] sm:$0xf]
  %v23 = vld [vmem:[%s1 + $0x8] sm:$0xf]
  %v24 = vld [vmem:[%s1 + $0xc] sm:$0xf]
  %v25 = vld [vmem:[%s1 + $0x10] sm:$0xf]
  %v26 = vld [vmem:[%s1 + $0x14] sm:$0xf]
  %v27 = vld [vmem:[%s1 + $0x18] sm:$0xf]
  %v28 = vld [vmem:[%s1 + $0x1c] sm:$0xf]
  %v29 = vld [vmem:[%s1 + $0x20] sm:$0xf]
  %v30 = vld [vmem:[%s1 + $0x24] sm:$0xf]
  %v31 = vld [vmem:[%s1 + $0x28] sm:$0xf]
  %v32 = vld [vmem:[%s1 + $0x2c] sm:$0xf]
  %v33 = vld [vmem:[%s1 + $0x30] sm:$0xf]
  %v34 = vld [vmem:[%s1 + $0x34] sm:$0xf]
  %v35 = vld [vmem:[%s1 + $0x38] sm:$0xf]
  %v36 = vld [vmem:[%s1 + $0x3c] sm:$0xf]
  %v53 = vunpack.c.l.b16 %v21
  %v54 = vunpack.c.l.b16 %v22
  %v55 = vunpack.c.l.b16 %v23
  %v56 = vunpack.c.l.b16 %v24
  %v57 = vunpack.c.l.b16 %v25
  %v58 = vunpack.c.l.b16 %v26
  %v59 = vunpack.c.l.b16 %v27
  %v60 = vunpack.c.l.b16 %v28
  %v61 = vunpack.c.l.b16 %v29
  %v62 = vunpack.c.l.b16 %v30
  %v63 = vunpack.c.l.b16 %v31
  %v64 = vunpack.c.l.b16 %v32
  %v65 = vunpack.c.l.b16 %v33
  %v66 = vunpack.c.l.b16 %v34
  %v67 = vunpack.c.l.b16 %v35
  %v68 = vunpack.c.l.b16 %v36
  %v69 = vpack.c.b16 %v54, %v53
  %v70 = vpack.c.b16 %v56, %v55
  %v71 = vpack.c.b16 %v58, %v57
  %v72 = vpack.c.b16 %v60, %v59
  %v73 = vpack.c.b16 %v62, %v61
  %v74 = vpack.c.b16 %v64, %v63
  %v75 = vpack.c.b16 %v66, %v65
  %v76 = vpack.c.b16 %v68, %v67
  %85 = vmatpush.bf16.msra.mxu0 %v76
  %86 = vmatpush.bf16.msra.mxu0 %v75
  %87 = vmatpush.bf16.msra.mxu0 %v74
  %88 = vmatpush.bf16.msra.mxu0 %v73
  %89 = vmatpush.bf16.msra.mxu0 %v72
  %90 = vmatpush.bf16.msra.mxu0 %v71
  %91 = vmatpush.bf16.msra.mxu0 %v70
  %92 = vmatpush.bf16.msra.mxu0 %v69
  %93 = vmatmul.bf16.gmra.mxu0 %v20
  %v94 = vpop.f32.mrf.mxu0
  %v95 = vadd.f32 0.0, %v94
  %v96 = vpop.f32.mrf.mxu0
  %97 = vdwg.mxu0
  %v98 = vadd.f32 %v19, %v95
  %99 = vst [vmem:[#allocation2] sm:$0xff] %v98
  // Predicated region
  $region18: #{_lambda_.52} parent=0 // pred_check
    %p100 = pneg %p14
  $region19: #{_lambda_.52} parent=0 // pred_check_branch
    %102 = sbr.rel (%p100) target = $region21
  $region20: #{_lambda_.52} parent=0 // pred_region
    %v103 = vld [vmem:[#allocation2] sm:$0xff]
    %v104 = vld [vmem:[%s2] sm:$0x1]
    %v106 = vperm.slane %v104, 0
    %v108 = vadd.f32 %v103, %v106
    %109 = vst [vmem:[%s3] sm:$0xff] %v108
  $region21: #{_lambda_.52} parent=0 // pred_fallthru
    _
  // Predicated region
  $region22: #{_lambda_.52} parent=0 // pred_check
    _
  $region23: #{_lambda_.52} parent=0 // pred_check_branch
    %111 = sbr.rel (0) target = $region25
  $region24: #{_lambda_.52} parent=0 // pred_region
    _
  $region25: #{_lambda_.52} parent=0 // pred_fallthru
    _
  // Predicated region
  $region26: #{_lambda_.52} parent=0 // pred_check
    _
  $region27: #{_lambda_.52} parent=0 // pred_check_branch
    %113 = sbr.rel (0) target = $region29
  $region28: #{_lambda_.52} parent=0 // pred_region
    _
  $region29: #{_lambda_.52} parent=0 // pred_fallthru
    _

// kernel: _lambda_.51
$region0: #{_lambda_.51}
  #allocation0 [shape = 'u32[]', space=smem, size = 0x4, offset = 0x4, fixed_abs, tag = 'smem constant byte address 0x4 - core index']
  #allocation1 [shape = 'u32[72,128]{1,0:T(1,128)}', space=vmem, size = 0x9000, scoped, tag = 'internal scratch']
  %s0 = inlined_call_operand.vmem [shape: bf16[2,1,32], index: 0, kind: input, shape index: {}]
  %s1 = inlined_call_operand.vmem [shape: bf16[2,64,32], index: 1, kind: input, shape index: {}]
  %s2 = inlined_call_operand.vmem [shape: bf16[2,64,32], index: 2, kind: input, shape index: {}]
  %s3 = inlined_call_operand.vmem [shape: f32[2,1,32], index: 3, kind: output, shape index: {}]
  %s4 = sld [smem:[#allocation0]]
  $region45: #{_lambda_.51} parent=0
    _
  %s6 = ssub.s32 1, %s4
  %s7 = scalar_select 0, %s6, %s4
  loop: start=0, step=1, limit=4
  $region2: #{_lambda_.51} parent=0 // loop_pre_header
    _
  $region3: #{_lambda_.51} parent=0 // loop_header
    %s9 = sphi 0, %s13
    %p10 = scmp.ge.s32.totalorder %s9, 4
    %s19 = sphi 0, %s21
    %s22 = sphi 0, %s19
    %s23 = sphi 0, %s22
    %s39 = sphi 0, %s23
    %s45 = sphi 0, %s47
    %s48 = sphi 0, %s45
    %s49 = sphi 0, %s48
    %s65 = sphi 0, %s49
    %s71 = sphi 0, %s73
    %s74 = sphi 0, %s71
    %s75 = sphi 0, %s74
    %s91 = sphi 0, %s75
    %s97 = sphi 0, %s99
    %s100 = sphi 0, %s97
    %s101 = sphi 0, %s100
    %s117 = sphi 0, %s101
  $region4: #{_lambda_.51} parent=0 // loop_header_branch
    %12 = sbr.rel (%p10) target = $region8
  $region5: #{_lambda_.51} parent=0 // loop_body
    %s14 = ssub.s32 %s9, 1
    %s15 = ssub.s32 %s9, 2
    %s16 = sadd.s32 %s9, 1
    %s17 = ssub.s32 %s9, %s16
    %p18 = scmp.eq.s32.totalorder %s17, 0
    %s20 = sadd.s32 %s19, 1
    %s21 = scalar_select %p18, %s19, %s20
    %p24 = pneg %p18
    %p25 = scmp.eq.s32.totalorder %s9, 1
    %p26 = por %p24, %p25
    %p27 = scmp.ne.s32.totalorder %s19, %s22
    %p28 = scmp.eq.s32.totalorder %s9, 0
    %p29 = por %p27, %p28
    %p30 = scmp.ne.s32.totalorder %s19, %s22
    %p31 = scmp.eq.s32.totalorder %s14, 1
    %p32 = por %p30, %p31
    %p33 = scmp.ne.s32.totalorder %s22, %s23
    %p34 = scmp.eq.s32.totalorder %s14, 0
    %p35 = por %p33, %p34
    %p36 = scmp.ne.s32.totalorder %s22, %s23
    %p37 = scmp.eq.s32.totalorder %s15, 1
    %p38 = por %p36, %p37
    %p40 = scmp.ne.s32.totalorder %s23, %s39
    %p41 = scmp.eq.s32.totalorder %s15, 0
    %p42 = por %p40, %p41
    %s43 = ssub.s32 %s9, %s16
    %p44 = scmp.eq.s32.totalorder %s43, 0
    %s46 = sadd.s32 %s45, 1
    %s47 = scalar_select %p44, %s45, %s46
    %p50 = pneg %p44
    %p51 = scmp.eq.s32.totalorder %s9, 1
    %p52 = por %p50, %p51
    %p53 = scmp.ne.s32.totalorder %s45, %s48
    %p54 = scmp.eq.s32.totalorder %s9, 0
    %p55 = por %p53, %p54
    %p56 = scmp.ne.s32.totalorder %s45, %s48
    %p57 = scmp.eq.s32.totalorder %s14, 1
    %p58 = por %p56, %p57
    %p59 = scmp.ne.s32.totalorder %s48, %s49
    %p60 = scmp.eq.s32.totalorder %s14, 0
    %p61 = por %p59, %p60
    %p62 = scmp.ne.s32.totalorder %s48, %s49
    %p63 = scmp.eq.s32.totalorder %s15, 1
    %p64 = por %p62, %p63
    %p66 = scmp.ne.s32.totalorder %s49, %s65
    %p67 = scmp.eq.s32.totalorder %s15, 0
    %p68 = por %p66, %p67
    %s69 = ssub.s32 %s9, %s16
    %p70 = scmp.eq.s32.totalorder %s69, 0
    %s72 = sadd.s32 %s71, 1
    %s73 = scalar_select %p70, %s71, %s72
    %p76 = pneg %p70
    %p77 = scmp.eq.s32.totalorder %s9, 1
    %p78 = por %p76, %p77
    %p79 = scmp.ne.s32.totalorder %s71, %s74
    %p80 = scmp.eq.s32.totalorder %s9, 0
    %p81 = por %p79, %p80
    %p82 = scmp.ne.s32.totalorder %s71, %s74
    %p83 = scmp.eq.s32.totalorder %s14, 1
    %p84 = por %p82, %p83
    %p85 = scmp.ne.s32.totalorder %s74, %s75
    %p86 = scmp.eq.s32.totalorder %s14, 0
    %p87 = por %p85, %p86
    %p88 = scmp.ne.s32.totalorder %s74, %s75
    %p89 = scmp.eq.s32.totalorder %s15, 1
    %p90 = por %p88, %p89
    %p92 = scmp.ne.s32.totalorder %s75, %s91
    %p93 = scmp.eq.s32.totalorder %s15, 0
    %p94 = por %p92, %p93
    %s95 = ssub.s32 %s9, %s16
    %p96 = scmp.eq.s32.totalorder %s95, 0
    %s98 = sadd.s32 %s97, 1
    %s99 = scalar_select %p96, %s97, %s98
    %p102 = pneg %p96
    %p103 = scmp.eq.s32.totalorder %s9, 1
    %p104 = por %p102, %p103
    %p105 = scmp.ne.s32.totalorder %s97, %s100
    %p106 = scmp.eq.s32.totalorder %s9, 0
    %p107 = por %p105, %p106
    %p108 = scmp.ne.s32.totalorder %s97, %s100
    %p109 = scmp.eq.s32.totalorder %s14, 1
    %p110 = por %p108, %p109
    %p111 = scmp.ne.s32.totalorder %s100, %s101
    %p112 = scmp.eq.s32.totalorder %s14, 0
    %p113 = por %p111, %p112
    %p114 = scmp.ne.s32.totalorder %s100, %s101
    %p115 = scmp.eq.s32.totalorder %s15, 1
    %p116 = por %p114, %p115
    %p118 = scmp.ne.s32.totalorder %s101, %s117
    %p119 = scmp.eq.s32.totalorder %s15, 0
    %p120 = por %p118, %p119
    %p121 = scmp.le.s32.totalorder 1, %s9
    %p122 = scmp.lt.s32.totalorder %s9, 3
    %p123 = pnand %p121, %p122
    %p124 = pneg %p123
    // Predicated region
    $region9: #{_lambda_.51} parent=5 // pred_check
      _
    $region10: #{_lambda_.51} parent=5 // pred_check_branch
      %126 = sbr.rel (%p123) target = $region12
    $region11: #{_lambda_.51} parent=5 // pred_region
      %s127 = ssub.s32 %s9, 1
    $region12: #{_lambda_.51} parent=5 // pred_fallthru
      _
    %p128 = scmp.lt.s32.totalorder %s9, 2
    // Predicated region
    $region13: #{_lambda_.51} parent=5 // pred_check
      %p129 = pneg %p128
    $region14: #{_lambda_.51} parent=5 // pred_check_branch
      %131 = sbr.rel (%p129) target = $region16
    $region15: #{_lambda_.51} parent=5 // pred_region
      // Predicated region
      $region17: #{_lambda_.51} parent=15 // pred_check
        %p132 = pneg %p29
      $region18: #{_lambda_.51} parent=15 // pred_check_branch
        %134 = sbr.rel (%p132) target = $region20
      $region19: #{_lambda_.51} parent=15 // pred_region
        %p135 = scmp.lt.s32.totalorder %s9, 1
        %s136 = scalar_select %p135, %s9, 1
        %s137 = scalar_lea.vmem %s0, %s136
      $region20: #{_lambda_.51} parent=15 // pred_fallthru
        _
      // Predicated region
      $region21: #{_lambda_.51} parent=15 // pred_check
        %p138 = pneg %p55
      $region22: #{_lambda_.51} parent=15 // pred_check_branch
        %140 = sbr.rel (%p138) target = $region24
      $region23: #{_lambda_.51} parent=15 // pred_region
        %p141 = scmp.lt.s32.totalorder %s9, 1
        %s142 = scalar_select %p141, %s9, 1
        %s143 = smul.addr %s142, 8
        %s144 = smul.addr %s143, 4
        %s145 = scalar_lea.vmem %s1, %s144
      $region24: #{_lambda_.51} parent=15 // pred_fallthru
        _
      // Predicated region
      $region25: #{_lambda_.51} parent=15 // pred_check
        %p146 = pneg %p81
      $region26: #{_lambda_.51} parent=15 // pred_check_branch
        %148 = sbr.rel (%p146) target = $region28
      $region27: #{_lambda_.51} parent=15 // pred_region
        %p149 = scmp.lt.s32.totalorder %s9, 1
        %s150 = scalar_select %p149, %s9, 1
        %s151 = smul.addr %s150, 8
        %s152 = smul.addr %s151, 4
        %s153 = scalar_lea.vmem %s2, %s152
      $region28: #{_lambda_.51} parent=15 // pred_fallthru
        _
    $region16: #{_lambda_.51} parent=5 // pred_fallthru
      _
    %p154 = scmp.le.s32.totalorder 1, %s9
    %p155 = scmp.lt.s32.totalorder %s9, 3
    %p156 = pnand %p154, %p155
    %p157 = pneg %p156
    // Predicated region
    $region29: #{_lambda_.51} parent=5 // pred_check
      _
    $region30: #{_lambda_.51} parent=5 // pred_check_branch
      %159 = sbr.rel (%p156) target = $region32
    $region31: #{_lambda_.51} parent=5 // pred_region
      %s160 = ssub.s32 %s9, 1
      %p161 = scmp.lt.s32.totalorder %s14, 1
      %s162 = scalar_select %p161, %s14, 1
      %s163 = scalar_lea.vmem %s0, %s162
      %p164 = pneg %p35
      %p165 = pneg %p32
      %p166 = scmp.lt.s32.totalorder %s14, 1
      %s167 = scalar_select %p166, %s14, 1
      %s168 = smul.addr %s167, 8
      %s169 = smul.addr %s168, 4
      %s170 = scalar_lea.vmem %s1, %s169
      %p171 = pneg %p61
      %p172 = pneg %p58
      %p173 = scmp.lt.s32.totalorder %s14, 1
      %s174 = scalar_select %p173, %s14, 1
      %s175 = smul.addr %s174, 8
      %s176 = smul.addr %s175, 4
      %s177 = scalar_lea.vmem %s2, %s176
      %p178 = pneg %p87
      %p179 = pneg %p84
      %p180 = pneg %p113
      %p181 = pneg %p110
      %p182 = scmp.lt.s32.totalorder %s14, 1
      %s183 = scalar_select %p182, %s14, 1
      %s184 = scalar_lea.vmem %s3, %s183
      %p185 = scmp.lt.s32.totalorder %s14, 1
      %s186 = scalar_select %p185, %s14, 1
      %s187 = scalar_lea.vmem %s0, %s186
      %p188 = scmp.lt.s32.totalorder %s14, 1
      %s189 = scalar_select %p188, %s14, 1
      %s190 = smul.addr %s189, 8
      %s191 = smul.addr %s190, 4
      %s192 = scalar_lea.vmem %s1, %s191
      %p193 = scmp.lt.s32.totalorder %s14, 1
      %s194 = scalar_select %p193, %s14, 1
      %s195 = smul.addr %s194, 8
      %s196 = smul.addr %s195, 4
      %s197 = scalar_lea.vmem %s2, %s196
      %p198 = scmp.lt.s32.totalorder %s14, 1
      %s199 = scalar_select %p198, %s14, 1
      %s200 = scalar_lea.vmem %s3, %s199
      %v202 = vld [vmem:[%s187] sm:$0x1]
      %v203 = vld [vmem:[%s192] sm:$0xf]
      %v204 = vld [vmem:[%s192 + $0x4] sm:$0xf]
      %v205 = vld [vmem:[%s192 + $0x8] sm:$0xf]
      %v206 = vld [vmem:[%s192 + $0xc] sm:$0xf]
      %v207 = vld [vmem:[%s192 + $0x10] sm:$0xf]
      %v208 = vld [vmem:[%s192 + $0x14] sm:$0xf]
      %v209 = vld [vmem:[%s192 + $0x18] sm:$0xf]
      %v210 = vld [vmem:[%s192 + $0x1c] sm:$0xf]
      %v211 = vld [vmem:[%s197] sm:$0xf]
      %v212 = vld [vmem:[%s197 + $0x4] sm:$0xf]
      %v213 = vld [vmem:[%s197 + $0x8] sm:$0xf]
      %v214 = vld [vmem:[%s197 + $0xc] sm:$0xf]
      %v215 = vld [vmem:[%s197 + $0x10] sm:$0xf]
      %v216 = vld [vmem:[%s197 + $0x14] sm:$0xf]
      %v217 = vld [vmem:[%s197 + $0x18] sm:$0xf]
      %v218 = vld [vmem:[%s197 + $0x1c] sm:$0xf]
      %v227 = vunpack.c.l.b16 %v203
      %v228 = vunpack.c.l.b16 %v204
      %v229 = vunpack.c.l.b16 %v205
      %v230 = vunpack.c.l.b16 %v206
      %v231 = vunpack.c.l.b16 %v207
      %v232 = vunpack.c.l.b16 %v208
      %v233 = vunpack.c.l.b16 %v209
      %v234 = vunpack.c.l.b16 %v210
      %v235 = vpack.c.b16 %v228, %v227
      %v236 = vpack.c.b16 %v230, %v229
      %v237 = vpack.c.b16 %v232, %v231
      %v238 = vpack.c.b16 %v234, %v233
      %vm239 = vcmask 64512
      %v241 = vsel %vm239, %v202, 0
      %v244 = vsel %vm239, %v235, 0
      %v247 = vsel %vm239, %v236, 0
      %v250 = vsel %vm239, %v237, 0
      %v253 = vsel %vm239, %v238, 0
      %255 = vmatpush.bf16.xpose.msra.mxu0 0
      %256 = vmatpush.bf16.xpose.msra.mxu0 0
      %257 = vmatpush.bf16.xpose.msra.mxu0 0
      %258 = vmatpush.bf16.xpose.msra.mxu0 0
      %259 = vmatpush.bf16.xpose.msra.mxu0 %v253
      %260 = vmatpush.bf16.xpose.msra.mxu0 %v250
      %261 = vmatpush.bf16.xpose.msra.mxu0 %v247
      %262 = vmatpush.bf16.xpose.msra.mxu0 %v244
      %263 = vmatmul.bf16.gmra.mxu0 %v241
      %v264 = vpop.f32.mrf.mxu0
      %v265 = vadd.f32 0.0, %v264
      %v266 = vpop.f32.mrf.mxu0
      %267 = vdwg.mxu0
      %v268 = vmul.f32 %v265, 0.35355338
      %vm269 = vcmask 516096
      %v270 = vsel %vm269, %v268, -inf
      %271 = vmax.xlane.f32.xlu0 %v270
      %v272 = vpop.xlane.xlu0 %271
      %v273 = vsub.f32 %v268, %v272
      %v274 = vmul.f32 %v273, 1.442695
      %v275 = vpow.pop %v274
      %v276 = vsel %vm269, %v275, 0.0
      %277 = vadd.xlane.f32.xlu0 %v276
      %v278 = vpop.xlane.xlu0 %277
      %v279 = vrcp.pop %v278
      %v280 = vmul.f32 %v275, %v279
      %v281 = vpack.c.bf16 %v280, %v280
      %v290 = vunpack.c.l.b16 %v211
      %v291 = vunpack.c.l.b16 %v212
      %v292 = vunpack.c.l.b16 %v213
      %v293 = vunpack.c.l.b16 %v214
      %v294 = vunpack.c.l.b16 %v215
      %v295 = vunpack.c.l.b16 %v216
      %v296 = vunpack.c.l.b16 %v217
      %v297 = vunpack.c.l.b16 %v218
      %v298 = vpack.c.b16 %v291, %v290
      %v299 = vpack.c.b16 %v293, %v292
      %v300 = vpack.c.b16 %v295, %v294
      %v301 = vpack.c.b16 %v297, %v296
      %vm306 = vcmask 523264
      %v308 = vsel %vm306, %v281, 0
      %310 = vmatpush.bf16.msra.mxu0 0
      %311 = vmatpush.bf16.msra.mxu0 0
      %312 = vmatpush.bf16.msra.mxu0 0
      %313 = vmatpush.bf16.msra.mxu0 0
      %314 = vmatpush.bf16.msra.mxu0 %v301
      %315 = vmatpush.bf16.msra.mxu0 %v300
      %316 = vmatpush.bf16.msra.mxu0 %v299
      %317 = vmatpush.bf16.msra.mxu0 %v298
      %318 = vmatmul.bf16.gmra.mxu0 %v308
      %v319 = vpop.f32.mrf.mxu0
      %v320 = vadd.f32 0.0, %v319
      %v321 = vpop.f32.mrf.mxu0
      %322 = vdwg.mxu0
      %323 = vst [vmem:[#allocation1] ss:$9 sm:$0xff] %v202
      %v324 = vld [vmem:[#allocation1] sm:$0xff]
      %326 = vrot.lane.b32.xlu0 %v324, 120
      %v327 = vpop.permute.xlu0 %326
      %328 = vrot.lane.b32.xlu0 %v235, 120
      %v329 = vpop.permute.xlu0 %328
      %330 = vrot.lane.b32.xlu0 %v236, 120
      %v331 = vpop.permute.xlu0 %330
      %332 = vrot.lane.b32.xlu0 %v237, 120
      %v333 = vpop.permute.xlu0 %332
      %334 = vrot.lane.b32.xlu0 %v238, 120
      %v335 = vpop.permute.xlu0 %334
      %v337 = vsel %vm239, %v327, 0
      %v340 = vsel %vm239, %v329, 0
      %v343 = vsel %vm239, %v331, 0
      %v346 = vsel %vm239, %v333, 0
      %v349 = vsel %vm239, %v335, 0
      %351 = vmatpush.bf16.xpose.msra.mxu0 0
      %352 = vmatpush.bf16.xpose.msra.mxu0 0
      %353 = vmatpush.bf16.xpose.msra.mxu0 0
      %354 = vmatpush.bf16.xpose.msra.mxu0 0
      %355 = vmatpush.bf16.xpose.msra.mxu0 %v349
      %356 = vmatpush.bf16.xpose.msra.mxu0 %v346
      %357 = vmatpush.bf16.xpose.msra.mxu0 %v343
      %358 = vmatpush.bf16.xpose.msra.mxu0 %v340
      %359 = vmatmul.bf16.gmra.mxu0 %v337
      %v360 = vpop.f32.mrf.mxu0
      %v361 = vadd.f32 0.0, %v360
      %v362 = vpop.f32.mrf.mxu0
      %363 = vdwg.mxu0
      %v364 = vmul.f32 %v361, 0.35355338
      %v365 = vsel %vm269, %v364, -inf
      %366 = vmax.xlane.f32.xlu0 %v365
      %v367 = vpop.xlane.xlu0 %366
      %v368 = vsub.f32 %v364, %v367
      %v369 = vmul.f32 %v368, 1.442695
      %v370 = vpow.pop %v369
      %v371 = vsel %vm269, %v370, 0.0
      %372 = vadd.xlane.f32.xlu0 %v371
      %v373 = vpop.xlane.xlu0 %372
      %v374 = vrcp.pop %v373
      %v375 = vmul.f32 %v370, %v374
      %v376 = vpack.c.bf16 %v375, %v375
      %377 = vrot.lane.b32.xlu0 %v298, 120
      %v378 = vpop.permute.xlu0 %377
      %379 = vrot.lane.b32.xlu0 %v299, 120
      %v380 = vpop.permute.xlu0 %379
      %381 = vrot.lane.b32.xlu0 %v300, 120
      %v382 = vpop.permute.xlu0 %381
      %383 = vrot.lane.b32.xlu0 %v301, 120
      %v384 = vpop.permute.xlu0 %383
      %v390 = vsel %vm306, %v376, 0
      %392 = vmatpush.bf16.msra.mxu0 0
      %393 = vmatpush.bf16.msra.mxu0 0
      %394 = vmatpush.bf16.msra.mxu0 0
      %395 = vmatpush.bf16.msra.mxu0 0
      %396 = vmatpush.bf16.msra.mxu0 %v384
      %397 = vmatpush.bf16.msra.mxu0 %v382
      %398 = vmatpush.bf16.msra.mxu0 %v380
      %399 = vmatpush.bf16.msra.mxu0 %v378
      %400 = vmatmul.bf16.gmra.mxu0 %v390
      %v401 = vpop.f32.mrf.mxu0
      %v402 = vadd.f32 0.0, %v401
      %v403 = vpop.f32.mrf.mxu0
      %404 = vdwg.mxu0
      %405 = vst [vmem:[#allocation1] ss:$9 sm:$0xff] %v202
      %v406 = vld [vmem:[#allocation1] sm:$0xff]
      %408 = vrot.lane.b32.xlu0 %v406, 112
      %v409 = vpop.permute.xlu0 %408
      %410 = vrot.lane.b32.xlu0 %v235, 112
      %v411 = vpop.permute.xlu0 %410
      %412 = vrot.lane.b32.xlu0 %v236, 112
      %v413 = vpop.permute.xlu0 %412
      %414 = vrot.lane.b32.xlu0 %v237, 112
      %v415 = vpop.permute.xlu0 %414
      %416 = vrot.lane.b32.xlu0 %v238, 112
      %v417 = vpop.permute.xlu0 %416
      %v419 = vsel %vm239, %v409, 0
      %v422 = vsel %vm239, %v411, 0
      %v425 = vsel %vm239, %v413, 0
      %v428 = vsel %vm239, %v415, 0
      %v431 = vsel %vm239, %v417, 0
      %433 = vmatpush.bf16.xpose.msra.mxu0 0
      %434 = vmatpush.bf16.xpose.msra.mxu0 0
      %435 = vmatpush.bf16.xpose.msra.mxu0 0
      %436 = vmatpush.bf16.xpose.msra.mxu0 0
      %437 = vmatpush.bf16.xpose.msra.mxu0 %v431
      %438 = vmatpush.bf16.xpose.msra.mxu0 %v428
      %439 = vmatpush.bf16.xpose.msra.mxu0 %v425
      %440 = vmatpush.bf16.xpose.msra.mxu0 %v422
      %441 = vmatmul.bf16.gmra.mxu0 %v419
      %v442 = vpop.f32.mrf.mxu0
      %v443 = vadd.f32 0.0, %v442
      %v444 = vpop.f32.mrf.mxu0
      %445 = vdwg.mxu0
      %v446 = vmul.f32 %v443, 0.35355338
      %v447 = vsel %vm269, %v446, -inf
      %448 = vmax.xlane.f32.xlu0 %v447
      %v449 = vpop.xlane.xlu0 %448
      %v450 = vsub.f32 %v446, %v449
      %v451 = vmul.f32 %v450, 1.442695
      %v452 = vpow.pop %v451
      %v453 = vsel %vm269, %v452, 0.0
      %454 = vadd.xlane.f32.xlu0 %v453
      %v455 = vpop.xlane.xlu0 %454
      %v456 = vrcp.pop %v455
      %v457 = vmul.f32 %v452, %v456
      %v458 = vpack.c.bf16 %v457, %v457
      %459 = vrot.lane.b32.xlu0 %v298, 112
      %v460 = vpop.permute.xlu0 %459
      %461 = vrot.lane.b32.xlu0 %v299, 112
      %v462 = vpop.permute.xlu0 %461
      %463 = vrot.lane.b32.xlu0 %v300, 112
      %v464 = vpop.permute.xlu0 %463
      %465 = vrot.lane.b32.xlu0 %v301, 112
      %v466 = vpop.permute.xlu0 %465
      %v472 = vsel %vm306, %v458, 0
      %474 = vmatpush.bf16.msra.mxu0 0
      %475 = vmatpush.bf16.msra.mxu0 0
      %476 = vmatpush.bf16.msra.mxu0 0
      %477 = vmatpush.bf16.msra.mxu0 0
      %478 = vmatpush.bf16.msra.mxu0 %v466
      %479 = vmatpush.bf16.msra.mxu0 %v464
      %480 = vmatpush.bf16.msra.mxu0 %v462
      %481 = vmatpush.bf16.msra.mxu0 %v460
      %482 = vmatmul.bf16.gmra.mxu0 %v472
      %v483 = vpop.f32.mrf.mxu0
      %v484 = vadd.f32 0.0, %v483
      %v485 = vpop.f32.mrf.mxu0
      %486 = vdwg.mxu0
      %487 = vst [vmem:[#allocation1] ss:$9 sm:$0xff] %v202
      %v488 = vld [vmem:[#allocation1] sm:$0xff]
      %490 = vrot.lane.b32.xlu0 %v488, 104
      %v491 = vpop.permute.xlu0 %490
      %492 = vrot.lane.b32.xlu0 %v235, 104
      %v493 = vpop.permute.xlu0 %492
      %494 = vrot.lane.b32.xlu0 %v236, 104
      %v495 = vpop.permute.xlu0 %494
      %496 = vrot.lane.b32.xlu0 %v237, 104
      %v497 = vpop.permute.xlu0 %496
      %498 = vrot.lane.b32.xlu0 %v238, 104
      %v499 = vpop.permute.xlu0 %498
      %v501 = vsel %vm239, %v491, 0
      %v504 = vsel %vm239, %v493, 0
      %v507 = vsel %vm239, %v495, 0
      %v510 = vsel %vm239, %v497, 0
      %v513 = vsel %vm239, %v499, 0
      %515 = vmatpush.bf16.xpose.msra.mxu0 0
      %516 = vmatpush.bf16.xpose.msra.mxu0 0
      %517 = vmatpush.bf16.xpose.msra.mxu0 0
      %518 = vmatpush.bf16.xpose.msra.mxu0 0
      %519 = vmatpush.bf16.xpose.msra.mxu0 %v513
      %520 = vmatpush.bf16.xpose.msra.mxu0 %v510
      %521 = vmatpush.bf16.xpose.msra.mxu0 %v507
      %522 = vmatpush.bf16.xpose.msra.mxu0 %v504
      %523 = vmatmul.bf16.gmra.mxu0 %v501
      %v524 = vpop.f32.mrf.mxu0
      %v525 = vadd.f32 0.0, %v524
      %v526 = vpop.f32.mrf.mxu0
      %527 = vdwg.mxu0
      %v528 = vmul.f32 %v525, 0.35355338
      %v529 = vsel %vm269, %v528, -inf
      %530 = vmax.xlane.f32.xlu0 %v529
      %v531 = vpop.xlane.xlu0 %530
      %v532 = vsub.f32 %v528, %v531
      %v533 = vmul.f32 %v532, 1.442695
      %v534 = vpow.pop %v533
      %v535 = vsel %vm269, %v534, 0.0
      %536 = vadd.xlane.f32.xlu0 %v535
      %v537 = vpop.xlane.xlu0 %536
      %v538 = vrcp.pop %v537
      %v539 = vmul.f32 %v534, %v538
      %v540 = vpack.c.bf16 %v539, %v539
      %541 = vrot.lane.b32.xlu0 %v298, 104
      %v542 = vpop.permute.xlu0 %541
      %543 = vrot.lane.b32.xlu0 %v299, 104
      %v544 = vpop.permute.xlu0 %543
      %545 = vrot.lane.b32.xlu0 %v300, 104
      %v546 = vpop.permute.xlu0 %545
      %547 = vrot.lane.b32.xlu0 %v301, 104
      %v548 = vpop.permute.xlu0 %547
      %v554 = vsel %vm306, %v540, 0
      %556 = vmatpush.bf16.msra.mxu0 0
      %557 = vmatpush.bf16.msra.mxu0 0
      %558 = vmatpush.bf16.msra.mxu0 0
      %559 = vmatpush.bf16.msra.mxu0 0
      %560 = vmatpush.bf16.msra.mxu0 %v548
      %561 = vmatpush.bf16.msra.mxu0 %v546
      %562 = vmatpush.bf16.msra.mxu0 %v544
      %563 = vmatpush.bf16.msra.mxu0 %v542
      %564 = vmatmul.bf16.gmra.mxu0 %v554
      %v565 = vpop.f32.mrf.mxu0
      %v566 = vadd.f32 0.0, %v565
      %v567 = vpop.f32.mrf.mxu0
      %568 = vdwg.mxu0
      %570 = vrot.lane.b32.xlu0 %v402, 8
      %v571 = vpop.permute.xlu0 %570
      %574 = vrot.lane.b32.xlu0 %v484, 16
      %v575 = vpop.permute.xlu0 %574
      %578 = vrot.lane.b32.xlu0 %v566, 24
      %v579 = vpop.permute.xlu0 %578
      %v581 = vsel %vm239, %v320, %v571
      %vm582 = vcmask 130048
      %v583 = vsel %vm582, %v581, %v575
      %vm584 = vcmask 195584
      %v585 = vsel %vm584, %v583, %v579
      %vm586 = vcmask 253952
      %587 = vst.msk [vmem:[%s200] sm:$0x1] %vm586, %v585
      %p588 = scmp.lt.s32.totalorder %s14, 1
      %s589 = scalar_select %p588, %s14, 1
      %s590 = scalar_lea.vmem %s3, %s589
      // Predicated region
      $region33: #{_lambda_.51} parent=31 // pred_check
        %p591 = pneg %p110
      $region34: #{_lambda_.51} parent=31 // pred_check_branch
        %593 = sbr.rel (%p591) target = $region36
      $region35: #{_lambda_.51} parent=31 // pred_region
        _
      $region36: #{_lambda_.51} parent=31 // pred_fallthru
        _
    $region32: #{_lambda_.51} parent=5 // pred_fallthru
      _
    %p594 = scmp.le.s32.totalorder 2, %s9
    // Predicated region
    $region37: #{_lambda_.51} parent=5 // pred_check
      %p595 = pneg %p594
    $region38: #{_lambda_.51} parent=5 // pred_check_branch
      %597 = sbr.rel (%p595) target = $region40
    $region39: #{_lambda_.51} parent=5 // pred_region
      %s598 = ssub.s32 %s9, 2
      // Predicated region
      $region41: #{_lambda_.51} parent=39 // pred_check
        %p599 = pneg %p116
      $region42: #{_lambda_.51} parent=39 // pred_check_branch
        %601 = sbr.rel (%p599) target = $region44
      $region43: #{_lambda_.51} parent=39 // pred_region
        %p602 = scmp.lt.s32.totalorder %s15, 1
        %s603 = scalar_select %p602, %s15, 1
        %s604 = scalar_lea.vmem %s3, %s603
      $region44: #{_lambda_.51} parent=39 // pred_fallthru
        _
    $region40: #{_lambda_.51} parent=5 // pred_fallthru
      _
  $region6: #{_lambda_.51} parent=0 // loop_footer
    %s13 = sadd.s32 1, %s9
  $region7: #{_lambda_.51} parent=0 // loop_footer_branch
    %8 = sbr.rel target = $region3
  $region8: #{_lambda_.51} parent=0 // loop_exit
    _

// kernel: _lambda_.53
$region0: #{_lambda_.53}
  #allocation0 [shape = 'u32[]', space=smem, size = 0x4, offset = 0x4, fixed_abs, tag = 'smem constant byte address 0x4 - core index']
  #allocation1 [shape = 'u32[72,128]{1,0:T(1,128)}', space=vmem, size = 0x9000, scoped, tag = 'internal scratch']
  %s0 = inlined_call_operand.vmem [shape: f32[8,32], index: 0, kind: input, shape index: {}]
  %s1 = inlined_call_operand.vmem [shape: f32[1,32], index: 1, kind: input, shape index: {}]
  %s2 = inlined_call_operand.vmem [shape: f32[1,32], index: 2, kind: input, shape index: {}]
  %s3 = inlined_call_operand.vmem [shape: f32[8,32], index: 3, kind: output, shape index: {}]
  %s4 = sld [smem:[#allocation0]]
  $region22: #{_lambda_.53} parent=0
    _
  %s6 = ssub.s32 1, %s4
  %s7 = scalar_select 0, %s6, %s4
  // Predicated region
  $region2: #{_lambda_.53} parent=0 // pred_check
    _
  $region3: #{_lambda_.53} parent=0 // pred_check_branch
    %9 = sbr.rel (0) target = $region5
  $region4: #{_lambda_.53} parent=0 // pred_region
    _
  $region5: #{_lambda_.53} parent=0 // pred_fallthru
    _
  // Predicated region
  $region6: #{_lambda_.53} parent=0 // pred_check
    _
  $region7: #{_lambda_.53} parent=0 // pred_check_branch
    %11 = sbr.rel (0) target = $region9
  $region8: #{_lambda_.53} parent=0 // pred_region
    _
  $region9: #{_lambda_.53} parent=0 // pred_fallthru
    _
  // Predicated region
  $region10: #{_lambda_.53} parent=0 // pred_check
    _
  $region11: #{_lambda_.53} parent=0 // pred_check_branch
    %13 = sbr.rel (0) target = $region13
  $region12: #{_lambda_.53} parent=0 // pred_region
    _
  $region13: #{_lambda_.53} parent=0 // pred_fallthru
    _
  %v14 = vld [vmem:[%s0] sm:$0xff]
  %vm15 = vcmask 261120
  %v16 = vsel %vm15, %v14, 0.0
  %17 = vadd.xlane.f32.xlu0 %v16
  %v18 = vpop.xlane.xlu0 %17
  %v19 = vrcp.pop 32.0
  %v20 = vmul.f32 32.0, %v19
  %v21 = vsub.f32 1.0, %v20
  %v22 = vmul.f32 %v19, %v21
  %v23 = vadd.f32 %v19, %v22
  %vm24 = vweird.f32 %v19
  %v25 = vsel %vm24, %v19, %v23
  %v26 = vmul.f32 %v18, %v25
  %v27 = vsub.f32 %v14, %v26
  %v28 = vmul.f32 %v27, %v27
  %v29 = vsel %vm15, %v28, 0.0
  %30 = vadd.xlane.f32.xlu0 %v29
  %v31 = vpop.xlane.xlu0 %30
  %v32 = vmul.f32 %v31, %v25
  %v33 = vadd.f32 %v32, 1e-05
  %v34 = vrsqrt.pop %v33
  %v35 = vmul.f32 %v34, %v33
  %v36 = vmul.f32 %v35, %v34
  %v37 = vmul.f32 0.5, %v36
  %v38 = vsub.f32 1.5, %v37
  %v39 = vmul.f32 %v34, %v38
  %vm40 = vweird.f32 %v33
  %vm41 = vweird.f32 %v34
  %vm42 = vmor %vm40, %vm41
  %v43 = vsel %vm42, %v34, %v39
  %v44 = vmul.f32 %v27, %v43
  %v45 = vld [vmem:[%s1] sm:$0x1]
  %v47 = vperm.slane %v45, 0
  %v49 = vmul.f32 %v44, %v47
  %v50 = vld [vmem:[%s2] sm:$0x1]
  %v52 = vperm.slane %v50, 0
  %v54 = vadd.f32 %v49, %v52
  %55 = vst.msk [vmem:[%s3] sm:$0xff] %vm15, %v54
  // Predicated region
  $region14: #{_lambda_.53} parent=0 // pred_check
    _
  $region15: #{_lambda_.53} parent=0 // pred_check_branch
    %57 = sbr.rel (0) target = $region17
  $region16: #{_lambda_.53} parent=0 // pred_region
    _
  $region17: #{_lambda_.53} parent=0 // pred_fallthru
    _
  // Predicated region
  $region18: #{_lambda_.53} parent=0 // pred_check
    _
  $region19: #{_lambda_.53} parent=0 // pred_check_branch
    %59 = sbr.rel (0) target = $region21
  $region20: #{_lambda_.53} parent=0 // pred_region
    _
  $region21: #{_lambda_.53} parent=0 // pred_fallthru
    _

</llo_original>
